<compile_context>
chip_gen: v6e
topology: v6e:2x2x1
jax: 0.10.0
libtpu: 0.0.40
codegen_flags: <defaults>
</compile_context>

<pallas_src>
import jax
import jax.numpy as jnp
from jax import lax
from jax.experimental import pallas as pl
from jax.experimental.pallas import tpu as pltpu


def _basic_block_kernel(xp_ref, xid_ref, w1_ref, s1_ref, b1_ref,
                        w2_ref, s2_ref, b2_ref, out_ref, h1s_ref):
    H = out_ref.shape[1]
    W = out_ref.shape[2]
    C = out_ref.shape[3]
    Wp = h1s_ref.shape[1]            # padded width of the h1 scratch (>= W+2)

    def conv3x3(tap, w_ref):
        # tap(di, dj) -> (H, W, C) bf16 view of the zero-padded conv input.
        # One K=3*C matmul per column tap dj; weights are (dj, di, cin)-ordered.
        acc = None
        for dj in range(3):
            slab = jnp.concatenate(
                [tap(di, dj).reshape(H * W, C) for di in range(3)], axis=-1)
            part = jnp.dot(slab, w_ref[dj * 3 * C:(dj + 1) * 3 * C, :],
                           preferred_element_type=jnp.float32)
            acc = part if acc is None else acc + part
        return acc                    # (H*W, C) f32

    # ---- conv1 + folded bn1 + dropout(eval: identity) + relu -----------------
    # Taps read straight from the padded input block (1-px zero border baked in
    # on the host), no staging copy.
    acc1 = conv3x3(lambda di, dj: xp_ref[0, di:di + H, dj:dj + W, :], w1_ref)
    h1 = jnp.maximum(acc1 * s1_ref[...] + b1_ref[...], 0.0)
    h1 = h1.astype(jnp.bfloat16).reshape(H, W, C)

    # Stage h1 into a scratch whose 1-px ring is zero (conv2's SAME padding).
    # Only the thin ring is zeroed each step; columns >= W+2 are never read.
    h1s_ref[0:1, :, :] = jnp.zeros((1, Wp, C), jnp.bfloat16)
    h1s_ref[H + 1:H + 2, :, :] = jnp.zeros((1, Wp, C), jnp.bfloat16)
    h1s_ref[1:H + 1, 0:1, :] = jnp.zeros((H, 1, C), jnp.bfloat16)
    h1s_ref[1:H + 1, W + 1:W + 2, :] = jnp.zeros((H, 1, C), jnp.bfloat16)
    h1s_ref[1:H + 1, 1:W + 1, :] = h1

    # ---- conv2 + folded bn2 + dropout(eval: identity) -------------------------
    acc2 = conv3x3(lambda di, dj: h1s_ref[di:di + H, dj:dj + W, :], w2_ref)
    out = acc2 * s2_ref[...] + b2_ref[...]

    # ---- residual add (true f32 identity) + relu ------------------------------
    identity = xid_ref[0].reshape(H * W, C)
    out = jnp.maximum(out + identity, 0.0)
    out_ref[0] = out.reshape(H, W, C).astype(out_ref.dtype)


def basic_block_pallas(x_nchw, w1_hwio, w2_hwio,
                       g1, bt1, m1, v1, g2, bt2, m2, v2,
                       eps=1e-5, out_dtype=jnp.float32):
    """x_nchw: (N, C, H, W) float32.  w*_hwio: (3, 3, Cin, Cout), Cin == Cout."""
    x = jnp.transpose(x_nchw, (0, 2, 3, 1))          # NCHW -> NHWC (f32, identity)
    N, H, W, C = x.shape
    assert w1_hwio.shape == (3, 3, C, C) and w2_hwio.shape == (3, 3, C, C), \
        "downsample is None -> in_channels must equal out_channels, stride=1"

    # 1-px zero conv border; round the padded width up to a sublane multiple.
    Wp = ((W + 2 + 7) // 8) * 8
    xpad = jnp.pad(x, ((0, 0), (1, 1), (1, Wp - W - 1), (0, 0))).astype(jnp.bfloat16)

    # Fold BatchNorm (eval, running stats) into per-channel scale/bias (f32).
    inv1 = (g1 / jnp.sqrt(v1 + eps)).astype(jnp.float32)
    s1 = inv1.reshape(1, C)
    b1 = (bt1.astype(jnp.float32) - m1.astype(jnp.float32) * inv1).reshape(1, C)
    inv2 = (g2 / jnp.sqrt(v2 + eps)).astype(jnp.float32)
    s2 = inv2.reshape(1, C)
    b2 = (bt2.astype(jnp.float32) - m2.astype(jnp.float32) * inv2).reshape(1, C)

    # (di, dj, cin, cout) -> (dj, di, cin, cout) -> (9C, C): rows grouped by dj
    # so the kernel runs 3 accumulating K=3C matmuls per conv (per-dj im2col).
    w1r = jnp.transpose(w1_hwio, (1, 0, 2, 3)).reshape(9 * C, C).astype(jnp.bfloat16)
    w2r = jnp.transpose(w2_hwio, (1, 0, 2, 3)).reshape(9 * C, C).astype(jnp.bfloat16)

    out_bytes = N * H * W * C * jnp.dtype(out_dtype).itemsize
    flops = 4 * N * H * W * 9 * C * C                 # 2 convs x 2 flops/MAC
    bytes_accessed = int(xpad.size * 2 + x.size * 4 + out_bytes
                         + (w1r.size + w2r.size) * 2)

    out_nhwc = pl.pallas_call(
        _basic_block_kernel,
        out_shape=jax.ShapeDtypeStruct((N, H, W, C), out_dtype),
        grid=(N,),                                    # whole image per step
        in_specs=[
            pl.BlockSpec((1, H + 2, Wp, C), lambda n: (n, 0, 0, 0)),  # padded bf16 x
            pl.BlockSpec((1, H, W, C), lambda n: (n, 0, 0, 0)),       # f32 identity
            pl.BlockSpec((9 * C, C), lambda n: (0, 0)),               # w1 (resident)
            pl.BlockSpec((1, C), lambda n: (0, 0)),                   # s1
            pl.BlockSpec((1, C), lambda n: (0, 0)),                   # b1
            pl.BlockSpec((9 * C, C), lambda n: (0, 0)),               # w2 (resident)
            pl.BlockSpec((1, C), lambda n: (0, 0)),                   # s2
            pl.BlockSpec((1, C), lambda n: (0, 0)),                   # b2
        ],
        out_specs=pl.BlockSpec((1, H, W, C), lambda n: (n, 0, 0, 0)),
        scratch_shapes=[pltpu.VMEM((H + 2, Wp, C), jnp.bfloat16)],    # zero-ring h1
        compiler_params=pltpu.CompilerParams(
            # N>=2 keeps both v7x TensorCores busy (demo uses N=2).
            dimension_semantics=("parallel",),
            vmem_limit_bytes=32 * 1024 * 1024,        # <= v7x 64 MiB physical
        ),
        cost_estimate=pl.CostEstimate(flops=flops, transcendentals=0,
                                      bytes_accessed=bytes_accessed),
    )(xpad, x, w1r, s1, b1, w2r, s2, b2)

    return jnp.transpose(out_nhwc, (0, 3, 1, 2))      # NHWC -> NCHW


def _reference(x_nchw, w1, w2, g1, bt1, m1, v1, g2, bt2, m2, v2, eps=1e-5):
    # Mirrors the kernel's mixed precision: bf16 conv operands, f32 accumulate,
    # folded-BN epilogue in f32, residual add with the original f32 input.
    f32 = jnp.float32
    x = jnp.transpose(x_nchw, (0, 2, 3, 1))
    xb = x.astype(jnp.bfloat16).astype(f32)
    w1 = w1.astype(jnp.bfloat16).astype(f32)
    w2 = w2.astype(jnp.bfloat16).astype(f32)

    def conv(h, w):
        return lax.conv_general_dilated(h, w, (1, 1), 'SAME',
                                        dimension_numbers=('NHWC', 'HWIO', 'NHWC'))

    def bn(h, g, b, m, v):
        s = g / jnp.sqrt(v + eps)
        return h * s + (b - m * s)

    h = jnp.maximum(bn(conv(xb, w1), g1, bt1, m1, v1), 0.0)
    h = h.astype(jnp.bfloat16).astype(f32)
    h = bn(conv(h, w2), g2, bt2, m2, v2)
    out = jnp.maximum(h + x, 0.0)
    return jnp.transpose(out, (0, 3, 1, 2))


if __name__ == "__main__":
    key = jax.random.PRNGKey(0)
    ks = jax.random.split(key, 11)

    # Small but ResNet-18-consistent shapes (layer-2 width), lane-dense C=128.
    N, C, H, W = 2, 128, 16, 16
    x = jax.random.normal(ks[0], (N, C, H, W), jnp.float32)

    w1 = jax.random.normal(ks[1], (3, 3, C, C), jnp.float32) * 0.05   # HWIO
    w2 = jax.random.normal(ks[2], (3, 3, C, C), jnp.float32) * 0.05

    g1 = 1.0 + 0.1 * jax.random.normal(ks[3], (C,), jnp.float32)
    bt1 = 0.1 * jax.random.normal(ks[4], (C,), jnp.float32)
    m1 = 0.1 * jax.random.normal(ks[5], (C,), jnp.float32)
    v1 = 1.0 + 0.1 * jax.random.uniform(ks[6], (C,), jnp.float32)

    g2 = 1.0 + 0.1 * jax.random.normal(ks[7], (C,), jnp.float32)
    bt2 = 0.1 * jax.random.normal(ks[8], (C,), jnp.float32)
    m2 = 0.1 * jax.random.normal(ks[9], (C,), jnp.float32)
    v2 = 1.0 + 0.1 * jax.random.uniform(ks[10], (C,), jnp.float32)

    out = basic_block_pallas(x, w1, w2, g1, bt1, m1, v1, g2, bt2, m2, v2)
    out = jax.block_until_ready(out)

    ref = _reference(x, w1, w2, g1, bt1, m1, v1, g2, bt2, m2, v2)
    assert out.shape == (N, C, H, W)
    err = float(jnp.max(jnp.abs(out - ref)))
    assert jnp.allclose(out, ref, atol=3e-3, rtol=3e-3), f"mismatch vs ref, max err {err}"

    print("KERNEL_OK")
</pallas_src>

<mosaic_0001>
module attributes {stable_mosaic.version = 11 : i64} {
  func.func @_basic_block_kernel(%arg0: i32, %arg1: memref<1x18x24x128xbf16, #tpu.memory_space<vmem>>, %arg2: memref<1x16x16x128xf32, #tpu.memory_space<vmem>>, %arg3: memref<1152x128xbf16, #tpu.memory_space<vmem>>, %arg4: memref<1x128xf32, #tpu.memory_space<vmem>>, %arg5: memref<1x128xf32, #tpu.memory_space<vmem>>, %arg6: memref<1152x128xbf16, #tpu.memory_space<vmem>>, %arg7: memref<1x128xf32, #tpu.memory_space<vmem>>, %arg8: memref<1x128xf32, #tpu.memory_space<vmem>>, %arg9: memref<1x16x16x128xf32, #tpu.memory_space<vmem>>, %arg10: memref<18x24x128xbf16, #tpu.memory_space<vmem>>) attributes {dimension_semantics = [#tpu.dimension_semantics<parallel>], iteration_bounds = array<i64: 2>, scalar_prefetch = 0 : i64, scratch_operands = 1 : i64, tpu.core_type = #tpu.core_type<tc>, window_params = [{transform_indices = @transform_0, window_bounds = array<i64: 1, 18, 24, 128>}, {transform_indices = @transform_1, window_bounds = array<i64: 1, 16, 16, 128>}, {pipeline_mode = #tpu.pipeline_mode<synchronous>, transform_indices = @transform_2, window_bounds = array<i64: 1152, 128>}, {pipeline_mode = #tpu.pipeline_mode<synchronous>, transform_indices = @transform_3, window_bounds = array<i64: 1, 128>}, {pipeline_mode = #tpu.pipeline_mode<synchronous>, transform_indices = @transform_4, window_bounds = array<i64: 1, 128>}, {pipeline_mode = #tpu.pipeline_mode<synchronous>, transform_indices = @transform_5, window_bounds = array<i64: 1152, 128>}, {pipeline_mode = #tpu.pipeline_mode<synchronous>, transform_indices = @transform_6, window_bounds = array<i64: 1, 128>}, {pipeline_mode = #tpu.pipeline_mode<synchronous>, transform_indices = @transform_7, window_bounds = array<i64: 1, 128>}, {transform_indices = @transform_8, window_bounds = array<i64: 1, 16, 16, 128>}]} {
    %c0 = arith.constant 0 : index
    %c0_0 = arith.constant 0 : index
    %c0_1 = arith.constant 0 : index
    %c0_2 = arith.constant 0 : index
    %0 = vector.load %arg1[%c0, %c0_0, %c0_1, %c0_2] : memref<1x18x24x128xbf16, #tpu.memory_space<vmem>>, vector<1x16x16x128xbf16>
    %1 = vector.shape_cast %0 : vector<1x16x16x128xbf16> to vector<16x16x128xbf16>
    %2 = vector.shape_cast %1 : vector<16x16x128xbf16> to vector<256x128xbf16>
    %c0_3 = arith.constant 0 : index
    %c1 = arith.constant 1 : index
    %c0_4 = arith.constant 0 : index
    %c0_5 = arith.constant 0 : index
    %3 = vector.load %arg1[%c0_3, %c1, %c0_4, %c0_5] : memref<1x18x24x128xbf16, #tpu.memory_space<vmem>>, vector<1x16x16x128xbf16>
    %4 = vector.shape_cast %3 : vector<1x16x16x128xbf16> to vector<16x16x128xbf16>
    %5 = vector.shape_cast %4 : vector<16x16x128xbf16> to vector<256x128xbf16>
    %c0_6 = arith.constant 0 : index
    %c2 = arith.constant 2 : index
    %c0_7 = arith.constant 0 : index
    %c0_8 = arith.constant 0 : index
    %6 = vector.load %arg1[%c0_6, %c2, %c0_7, %c0_8] : memref<1x18x24x128xbf16, #tpu.memory_space<vmem>>, vector<1x16x16x128xbf16>
    %7 = vector.shape_cast %6 : vector<1x16x16x128xbf16> to vector<16x16x128xbf16>
    %8 = vector.shape_cast %7 : vector<16x16x128xbf16> to vector<256x128xbf16>
    %9 = tpu.concatenate %2, %5, %8 in 1 : vector<256x128xbf16>, vector<256x128xbf16>, vector<256x128xbf16> -> vector<256x384xbf16>
    %c0_9 = arith.constant 0 : index
    %c0_10 = arith.constant 0 : index
    %10 = vector.load %arg3[%c0_9, %c0_10] : memref<1152x128xbf16, #tpu.memory_space<vmem>>, vector<384x128xbf16>
    %cst = arith.constant dense<0.000000e+00> : vector<256x128xf32>
    %11 = tpu.matmul %9, %10, %cst {dimension_numbers = #tpu.dot_dimension_numbers<[1], [0], [0], [1], [0, 0, 1, 1], [], []>} : vector<256x384xbf16>, vector<384x128xbf16>, vector<256x128xf32> -> vector<256x128xf32>
    %c0_11 = arith.constant 0 : index
    %c0_12 = arith.constant 0 : index
    %c1_13 = arith.constant 1 : index
    %c0_14 = arith.constant 0 : index
    %12 = vector.load %arg1[%c0_11, %c0_12, %c1_13, %c0_14] : memref<1x18x24x128xbf16, #tpu.memory_space<vmem>>, vector<1x16x16x128xbf16>
    %13 = vector.shape_cast %12 : vector<1x16x16x128xbf16> to vector<16x16x128xbf16>
    %14 = vector.shape_cast %13 : vector<16x16x128xbf16> to vector<256x128xbf16>
    %c0_15 = arith.constant 0 : index
    %c1_16 = arith.constant 1 : index
    %c1_17 = arith.constant 1 : index
    %c0_18 = arith.constant 0 : index
    %15 = vector.load %arg1[%c0_15, %c1_16, %c1_17, %c0_18] : memref<1x18x24x128xbf16, #tpu.memory_space<vmem>>, vector<1x16x16x128xbf16>
    %16 = vector.shape_cast %15 : vector<1x16x16x128xbf16> to vector<16x16x128xbf16>
    %17 = vector.shape_cast %16 : vector<16x16x128xbf16> to vector<256x128xbf16>
    %c0_19 = arith.constant 0 : index
    %c2_20 = arith.constant 2 : index
    %c1_21 = arith.constant 1 : index
    %c0_22 = arith.constant 0 : index
    %18 = vector.load %arg1[%c0_19, %c2_20, %c1_21, %c0_22] : memref<1x18x24x128xbf16, #tpu.memory_space<vmem>>, vector<1x16x16x128xbf16>
    %19 = vector.shape_cast %18 : vector<1x16x16x128xbf16> to vector<16x16x128xbf16>
    %20 = vector.shape_cast %19 : vector<16x16x128xbf16> to vector<256x128xbf16>
    %21 = tpu.concatenate %14, %17, %20 in 1 : vector<256x128xbf16>, vector<256x128xbf16>, vector<256x128xbf16> -> vector<256x384xbf16>
    %c384 = arith.constant 384 : index
    %c0_23 = arith.constant 0 : index
    %22 = vector.load %arg3[%c384, %c0_23] : memref<1152x128xbf16, #tpu.memory_space<vmem>>, vector<384x128xbf16>
    %cst_24 = arith.constant dense<0.000000e+00> : vector<256x128xf32>
    %23 = tpu.matmul %21, %22, %cst_24 {dimension_numbers = #tpu.dot_dimension_numbers<[1], [0], [0], [1], [0, 0, 1, 1], [], []>} : vector<256x384xbf16>, vector<384x128xbf16>, vector<256x128xf32> -> vector<256x128xf32>
    %24 = arith.addf %11, %23 : vector<256x128xf32>
    %c0_25 = arith.constant 0 : index
    %c0_26 = arith.constant 0 : index
    %c2_27 = arith.constant 2 : index
    %c0_28 = arith.constant 0 : index
    %25 = vector.load %arg1[%c0_25, %c0_26, %c2_27, %c0_28] : memref<1x18x24x128xbf16, #tpu.memory_space<vmem>>, vector<1x16x16x128xbf16>
    %26 = vector.shape_cast %25 : vector<1x16x16x128xbf16> to vector<16x16x128xbf16>
    %27 = vector.shape_cast %26 : vector<16x16x128xbf16> to vector<256x128xbf16>
    %c0_29 = arith.constant 0 : index
    %c1_30 = arith.constant 1 : index
    %c2_31 = arith.constant 2 : index
    %c0_32 = arith.constant 0 : index
    %28 = vector.load %arg1[%c0_29, %c1_30, %c2_31, %c0_32] : memref<1x18x24x128xbf16, #tpu.memory_space<vmem>>, vector<1x16x16x128xbf16>
    %29 = vector.shape_cast %28 : vector<1x16x16x128xbf16> to vector<16x16x128xbf16>
    %30 = vector.shape_cast %29 : vector<16x16x128xbf16> to vector<256x128xbf16>
    %c0_33 = arith.constant 0 : index
    %c2_34 = arith.constant 2 : index
    %c2_35 = arith.constant 2 : index
    %c0_36 = arith.constant 0 : index
    %31 = vector.load %arg1[%c0_33, %c2_34, %c2_35, %c0_36] : memref<1x18x24x128xbf16, #tpu.memory_space<vmem>>, vector<1x16x16x128xbf16>
    %32 = vector.shape_cast %31 : vector<1x16x16x128xbf16> to vector<16x16x128xbf16>
    %33 = vector.shape_cast %32 : vector<16x16x128xbf16> to vector<256x128xbf16>
    %34 = tpu.concatenate %27, %30, %33 in 1 : vector<256x128xbf16>, vector<256x128xbf16>, vector<256x128xbf16> -> vector<256x384xbf16>
    %c768 = arith.constant 768 : index
    %c0_37 = arith.constant 0 : index
    %35 = vector.load %arg3[%c768, %c0_37] : memref<1152x128xbf16, #tpu.memory_space<vmem>>, vector<384x128xbf16>
    %cst_38 = arith.constant dense<0.000000e+00> : vector<256x128xf32>
    %36 = tpu.matmul %34, %35, %cst_38 {dimension_numbers = #tpu.dot_dimension_numbers<[1], [0], [0], [1], [0, 0, 1, 1], [], []>} : vector<256x384xbf16>, vector<384x128xbf16>, vector<256x128xf32> -> vector<256x128xf32>
    %37 = arith.addf %24, %36 : vector<256x128xf32>
    %c0_39 = arith.constant 0 : index
    %c0_40 = arith.constant 0 : index
    %38 = vector.load %arg4[%c0_39, %c0_40] : memref<1x128xf32, #tpu.memory_space<vmem>>, vector<1x128xf32>
    %39 = vector.broadcast %38 : vector<1x128xf32> to vector<256x128xf32>
    %40 = arith.mulf %37, %39 : vector<256x128xf32>
    %c0_41 = arith.constant 0 : index
    %c0_42 = arith.constant 0 : index
    %41 = vector.load %arg5[%c0_41, %c0_42] : memref<1x128xf32, #tpu.memory_space<vmem>>, vector<1x128xf32>
    %42 = vector.broadcast %41 : vector<1x128xf32> to vector<256x128xf32>
    %43 = arith.addf %40, %42 : vector<256x128xf32>
    %cst_43 = arith.constant 0.000000e+00 : f32
    %44 = vector.broadcast %cst_43 : f32 to vector<256x128xf32>
    %45 = arith.maximumf %43, %44 : vector<256x128xf32>
    %46 = arith.truncf %45 : vector<256x128xf32> to vector<256x128xbf16>
    %47 = vector.shape_cast %46 : vector<256x128xbf16> to vector<16x16x128xbf16>
    %cst_44 = arith.constant 0.000000e+00 : bf16
    %48 = vector.broadcast %cst_44 : bf16 to vector<1x24x128xbf16>
    %c0_45 = arith.constant 0 : index
    %c0_46 = arith.constant 0 : index
    %c0_47 = arith.constant 0 : index
    %49 = vector.load %arg10[%c0_45, %c0_46, %c0_47] : memref<18x24x128xbf16, #tpu.memory_space<vmem>>, vector<1x24x128xbf16>
    tpu.vector_store %arg10[%c0_45, %c0_46, %c0_47], %48 {strides = array<i32>} : memref<18x24x128xbf16, #tpu.memory_space<vmem>>, vector<1x24x128xbf16>,
    %cst_48 = arith.constant 0.000000e+00 : bf16
    %50 = vector.broadcast %cst_48 : bf16 to vector<1x24x128xbf16>
    %c17 = arith.constant 17 : index
    %c0_49 = arith.constant 0 : index
    %c0_50 = arith.constant 0 : index
    %51 = vector.load %arg10[%c17, %c0_49, %c0_50] : memref<18x24x128xbf16, #tpu.memory_space<vmem>>, vector<1x24x128xbf16>
    tpu.vector_store %arg10[%c17, %c0_49, %c0_50], %50 {strides = array<i32>} : memref<18x24x128xbf16, #tpu.memory_space<vmem>>, vector<1x24x128xbf16>,
    %cst_51 = arith.constant 0.000000e+00 : bf16
    %52 = vector.broadcast %cst_51 : bf16 to vector<16x1x128xbf16>
    %c1_52 = arith.constant 1 : index
    %c0_53 = arith.constant 0 : index
    %c0_54 = arith.constant 0 : index
    %53 = vector.load %arg10[%c1_52, %c0_53, %c0_54] : memref<18x24x128xbf16, #tpu.memory_space<vmem>>, vector<16x1x128xbf16>
    tpu.vector_store %arg10[%c1_52, %c0_53, %c0_54], %52 {strides = array<i32>} : memref<18x24x128xbf16, #tpu.memory_space<vmem>>, vector<16x1x128xbf16>,
    %cst_55 = arith.constant 0.000000e+00 : bf16
    %54 = vector.broadcast %cst_55 : bf16 to vector<16x1x128xbf16>
    %c1_56 = arith.constant 1 : index
    %c17_57 = arith.constant 17 : index
    %c0_58 = arith.constant 0 : index
    %55 = vector.load %arg10[%c1_56, %c17_57, %c0_58] : memref<18x24x128xbf16, #tpu.memory_space<vmem>>, vector<16x1x128xbf16>
    tpu.vector_store %arg10[%c1_56, %c17_57, %c0_58], %54 {strides = array<i32>} : memref<18x24x128xbf16, #tpu.memory_space<vmem>>, vector<16x1x128xbf16>,
    %c1_59 = arith.constant 1 : index
    %c1_60 = arith.constant 1 : index
    %c0_61 = arith.constant 0 : index
    %56 = vector.load %arg10[%c1_59, %c1_60, %c0_61] : memref<18x24x128xbf16, #tpu.memory_space<vmem>>, vector<16x16x128xbf16>
    tpu.vector_store %arg10[%c1_59, %c1_60, %c0_61], %47 {strides = array<i32>} : memref<18x24x128xbf16, #tpu.memory_space<vmem>>, vector<16x16x128xbf16>,
    %c0_62 = arith.constant 0 : index
    %c0_63 = arith.constant 0 : index
    %c0_64 = arith.constant 0 : index
    %57 = vector.load %arg10[%c0_62, %c0_63, %c0_64] : memref<18x24x128xbf16, #tpu.memory_space<vmem>>, vector<16x16x128xbf16>
    %58 = vector.shape_cast %57 : vector<16x16x128xbf16> to vector<256x128xbf16>
    %c1_65 = arith.constant 1 : index
    %c0_66 = arith.constant 0 : index
    %c0_67 = arith.constant 0 : index
    %59 = vector.load %arg10[%c1_65, %c0_66, %c0_67] : memref<18x24x128xbf16, #tpu.memory_space<vmem>>, vector<16x16x128xbf16>
    %60 = vector.shape_cast %59 : vector<16x16x128xbf16> to vector<256x128xbf16>
    %c2_68 = arith.constant 2 : index
    %c0_69 = arith.constant 0 : index
    %c0_70 = arith.constant 0 : index
    %61 = vector.load %arg10[%c2_68, %c0_69, %c0_70] : memref<18x24x128xbf16, #tpu.memory_space<vmem>>, vector<16x16x128xbf16>
    %62 = vector.shape_cast %61 : vector<16x16x128xbf16> to vector<256x128xbf16>
    %63 = tpu.concatenate %58, %60, %62 in 1 : vector<256x128xbf16>, vector<256x128xbf16>, vector<256x128xbf16> -> vector<256x384xbf16>
    %c0_71 = arith.constant 0 : index
    %c0_72 = arith.constant 0 : index
    %64 = vector.load %arg6[%c0_71, %c0_72] : memref<1152x128xbf16, #tpu.memory_space<vmem>>, vector<384x128xbf16>
    %cst_73 = arith.constant dense<0.000000e+00> : vector<256x128xf32>
    %65 = tpu.matmul %63, %64, %cst_73 {dimension_numbers = #tpu.dot_dimension_numbers<[1], [0], [0], [1], [0, 0, 1, 1], [], []>} : vector<256x384xbf16>, vector<384x128xbf16>, vector<256x128xf32> -> vector<256x128xf32>
    %c0_74 = arith.constant 0 : index
    %c1_75 = arith.constant 1 : index
    %c0_76 = arith.constant 0 : index
    %66 = vector.load %arg10[%c0_74, %c1_75, %c0_76] : memref<18x24x128xbf16, #tpu.memory_space<vmem>>, vector<16x16x128xbf16>
    %67 = vector.shape_cast %66 : vector<16x16x128xbf16> to vector<256x128xbf16>
    %c1_77 = arith.constant 1 : index
    %c1_78 = arith.constant 1 : index
    %c0_79 = arith.constant 0 : index
    %68 = vector.load %arg10[%c1_77, %c1_78, %c0_79] : memref<18x24x128xbf16, #tpu.memory_space<vmem>>, vector<16x16x128xbf16>
    %69 = vector.shape_cast %68 : vector<16x16x128xbf16> to vector<256x128xbf16>
    %c2_80 = arith.constant 2 : index
    %c1_81 = arith.constant 1 : index
    %c0_82 = arith.constant 0 : index
    %70 = vector.load %arg10[%c2_80, %c1_81, %c0_82] : memref<18x24x128xbf16, #tpu.memory_space<vmem>>, vector<16x16x128xbf16>
    %71 = vector.shape_cast %70 : vector<16x16x128xbf16> to vector<256x128xbf16>
    %72 = tpu.concatenate %67, %69, %71 in 1 : vector<256x128xbf16>, vector<256x128xbf16>, vector<256x128xbf16> -> vector<256x384xbf16>
    %c384_83 = arith.constant 384 : index
    %c0_84 = arith.constant 0 : index
    %73 = vector.load %arg6[%c384_83, %c0_84] : memref<1152x128xbf16, #tpu.memory_space<vmem>>, vector<384x128xbf16>
    %cst_85 = arith.constant dense<0.000000e+00> : vector<256x128xf32>
    %74 = tpu.matmul %72, %73, %cst_85 {dimension_numbers = #tpu.dot_dimension_numbers<[1], [0], [0], [1], [0, 0, 1, 1], [], []>} : vector<256x384xbf16>, vector<384x128xbf16>, vector<256x128xf32> -> vector<256x128xf32>
    %75 = arith.addf %65, %74 : vector<256x128xf32>
    %c0_86 = arith.constant 0 : index
    %c2_87 = arith.constant 2 : index
    %c0_88 = arith.constant 0 : index
    %76 = vector.load %arg10[%c0_86, %c2_87, %c0_88] : memref<18x24x128xbf16, #tpu.memory_space<vmem>>, vector<16x16x128xbf16>
    %77 = vector.shape_cast %76 : vector<16x16x128xbf16> to vector<256x128xbf16>
    %c1_89 = arith.constant 1 : index
    %c2_90 = arith.constant 2 : index
    %c0_91 = arith.constant 0 : index
    %78 = vector.load %arg10[%c1_89, %c2_90, %c0_91] : memref<18x24x128xbf16, #tpu.memory_space<vmem>>, vector<16x16x128xbf16>
    %79 = vector.shape_cast %78 : vector<16x16x128xbf16> to vector<256x128xbf16>
    %c2_92 = arith.constant 2 : index
    %c2_93 = arith.constant 2 : index
    %c0_94 = arith.constant 0 : index
    %80 = vector.load %arg10[%c2_92, %c2_93, %c0_94] : memref<18x24x128xbf16, #tpu.memory_space<vmem>>, vector<16x16x128xbf16>
    %81 = vector.shape_cast %80 : vector<16x16x128xbf16> to vector<256x128xbf16>
    %82 = tpu.concatenate %77, %79, %81 in 1 : vector<256x128xbf16>, vector<256x128xbf16>, vector<256x128xbf16> -> vector<256x384xbf16>
    %c768_95 = arith.constant 768 : index
    %c0_96 = arith.constant 0 : index
    %83 = vector.load %arg6[%c768_95, %c0_96] : memref<1152x128xbf16, #tpu.memory_space<vmem>>, vector<384x128xbf16>
    %cst_97 = arith.constant dense<0.000000e+00> : vector<256x128xf32>
    %84 = tpu.matmul %82, %83, %cst_97 {dimension_numbers = #tpu.dot_dimension_numbers<[1], [0], [0], [1], [0, 0, 1, 1], [], []>} : vector<256x384xbf16>, vector<384x128xbf16>, vector<256x128xf32> -> vector<256x128xf32>
    %85 = arith.addf %75, %84 : vector<256x128xf32>
    %c0_98 = arith.constant 0 : index
    %c0_99 = arith.constant 0 : index
    %86 = vector.load %arg7[%c0_98, %c0_99] : memref<1x128xf32, #tpu.memory_space<vmem>>, vector<1x128xf32>
    %87 = vector.broadcast %86 : vector<1x128xf32> to vector<256x128xf32>
    %88 = arith.mulf %85, %87 : vector<256x128xf32>
    %c0_100 = arith.constant 0 : index
    %c0_101 = arith.constant 0 : index
    %89 = vector.load %arg8[%c0_100, %c0_101] : memref<1x128xf32, #tpu.memory_space<vmem>>, vector<1x128xf32>
    %90 = vector.broadcast %89 : vector<1x128xf32> to vector<256x128xf32>
    %91 = arith.addf %88, %90 : vector<256x128xf32>
    %c0_102 = arith.constant 0 : index
    %c0_103 = arith.constant 0 : index
    %c0_104 = arith.constant 0 : index
    %c0_105 = arith.constant 0 : index
    %92 = vector.load %arg2[%c0_102, %c0_103, %c0_104, %c0_105] : memref<1x16x16x128xf32, #tpu.memory_space<vmem>>, vector<1x16x16x128xf32>
    %93 = vector.shape_cast %92 : vector<1x16x16x128xf32> to vector<16x16x128xf32>
    %94 = vector.shape_cast %93 : vector<16x16x128xf32> to vector<256x128xf32>
    %95 = arith.addf %91, %94 : vector<256x128xf32>
    %cst_106 = arith.constant 0.000000e+00 : f32
    %96 = vector.broadcast %cst_106 : f32 to vector<256x128xf32>
    %97 = arith.maximumf %95, %96 : vector<256x128xf32>
    %98 = vector.shape_cast %97 : vector<256x128xf32> to vector<16x16x128xf32>
    %c0_107 = arith.constant 0 : index
    %c0_108 = arith.constant 0 : index
    %c0_109 = arith.constant 0 : index
    %c0_110 = arith.constant 0 : index
    %99 = vector.load %arg9[%c0_107, %c0_108, %c0_109, %c0_110] : memref<1x16x16x128xf32, #tpu.memory_space<vmem>>, vector<1x16x16x128xf32>
    %100 = vector.shape_cast %99 : vector<1x16x16x128xf32> to vector<16x16x128xf32>
    %101 = vector.shape_cast %98 : vector<16x16x128xf32> to vector<1x16x16x128xf32>
    tpu.vector_store %arg9[%c0_107, %c0_108, %c0_109, %c0_110], %101 {strides = array<i32>} : memref<1x16x16x128xf32, #tpu.memory_space<vmem>>, vector<1x16x16x128xf32>,
    return
  }
  func.func @transform_0(%arg0: i32) -> (i32, i32, i32, i32) {
    %c0_i32 = arith.constant 0 : i32
    %c0_i32_0 = arith.constant 0 : i32
    %c0_i32_1 = arith.constant 0 : i32
    %c0_i32_2 = arith.constant 0 : i32
    return %arg0, %c0_i32, %c0_i32_0, %c0_i32_1 : i32, i32, i32, i32
  }
  func.func @transform_1(%arg0: i32) -> (i32, i32, i32, i32) {
    %c0_i32 = arith.constant 0 : i32
    %c0_i32_0 = arith.constant 0 : i32
    %c0_i32_1 = arith.constant 0 : i32
    %c0_i32_2 = arith.constant 0 : i32
    return %arg0, %c0_i32, %c0_i32_0, %c0_i32_1 : i32, i32, i32, i32
  }
  func.func @transform_2(%arg0: i32) -> (i32, i32) {
    %c0_i32 = arith.constant 0 : i32
    %c0_i32_0 = arith.constant 0 : i32
    %c0_i32_1 = arith.constant 0 : i32
    return %c0_i32, %c0_i32_0 : i32, i32
  }
  func.func @transform_3(%arg0: i32) -> (i32, i32) {
    %c0_i32 = arith.constant 0 : i32
    %c0_i32_0 = arith.constant 0 : i32
    %c0_i32_1 = arith.constant 0 : i32
    return %c0_i32, %c0_i32_0 : i32, i32
  }
  func.func @transform_4(%arg0: i32) -> (i32, i32) {
    %c0_i32 = arith.constant 0 : i32
    %c0_i32_0 = arith.constant 0 : i32
    %c0_i32_1 = arith.constant 0 : i32
    return %c0_i32, %c0_i32_0 : i32, i32
  }
  func.func @transform_5(%arg0: i32) -> (i32, i32) {
    %c0_i32 = arith.constant 0 : i32
    %c0_i32_0 = arith.constant 0 : i32
    %c0_i32_1 = arith.constant 0 : i32
    return %c0_i32, %c0_i32_0 : i32, i32
  }
  func.func @transform_6(%arg0: i32) -> (i32, i32) {
    %c0_i32 = arith.constant 0 : i32
    %c0_i32_0 = arith.constant 0 : i32
    %c0_i32_1 = arith.constant 0 : i32
    return %c0_i32, %c0_i32_0 : i32, i32
  }
  func.func @transform_7(%arg0: i32) -> (i32, i32) {
    %c0_i32 = arith.constant 0 : i32
    %c0_i32_0 = arith.constant 0 : i32
    %c0_i32_1 = arith.constant 0 : i32
    return %c0_i32, %c0_i32_0 : i32, i32
  }
  func.func @transform_8(%arg0: i32) -> (i32, i32, i32, i32) {
    %c0_i32 = arith.constant 0 : i32
    %c0_i32_0 = arith.constant 0 : i32
    %c0_i32_1 = arith.constant 0 : i32
    %c0_i32_2 = arith.constant 0 : i32
    return %arg0, %c0_i32, %c0_i32_0, %c0_i32_1 : i32, i32, i32, i32
  }
}

</mosaic_0001>

<llo_original>
// kernel: tpu_custom_call.1
$region0: #{tpu_custom_call.1}
  #allocation0 [shape = 'u32[]', space=smem, size = 0x4, offset = 0x4, fixed_abs, tag = 'smem constant byte address 0x4 - core index']
  #allocation1 [shape = 'u32[144,128]{1,0:T(1,128)}', space=vmem, size = 0x12000, scoped, tag = 'internal scratch']
  #allocation2 [shape = 'bf16[18,24,128]{2,1,0:T(8,128)(2,1)}', space=vmem, size = 0x1b000, scoped, tag = 'scratch operand']
  %s0 = inlined_call_operand.hbm [shape: bf16[2,18,24,128], index: 0, kind: input, shape index: {}]
  %s1 = inlined_call_operand.hbm [shape: f32[2,16,16,128], index: 1, kind: input, shape index: {}]
  %s2 = inlined_call_operand.hbm [shape: bf16[1152,128], index: 2, kind: input, shape index: {}]
  %s3 = inlined_call_operand.vmem [shape: f32[1,128], index: 3, kind: input, shape index: {}]
  %s4 = inlined_call_operand.vmem [shape: f32[1,128], index: 4, kind: input, shape index: {}]
  %s5 = inlined_call_operand.hbm [shape: bf16[1152,128], index: 5, kind: input, shape index: {}]
  %s6 = inlined_call_operand.vmem [shape: f32[1,128], index: 6, kind: input, shape index: {}]
  %s7 = inlined_call_operand.vmem [shape: f32[1,128], index: 7, kind: input, shape index: {}]
  %s8 = inlined_call_operand.hbm [shape: f32[2,16,16,128], index: 8, kind: output, shape index: {}]
  %s9 = sld [smem:[#allocation0]]
  $region81: #{tpu_custom_call.1} parent=0
    _
  %s11 = ssub.s32 1, %s9
  %s12 = scalar_select 0, %s11, %s9
  $region1: #{tpu_custom_call.1} parent=0
    #allocation3 [shape = 'u8[221184]{0}', space=vmem, size = 0x36000, scoped, tag = 'input window, operand 0']
    #allocation4 [shape = 's32[2]{0}', space=sflag, size = 0x8, scoped, tag = 'scoped memory for tpu_custom_call.1']
    #allocation5 [shape = 's32[2]{0}', space=sflag, size = 0x8, scoped, tag = 'scoped memory for tpu_custom_call.1']
    #allocation6 [shape = 'u8[262144]{0}', space=vmem, size = 0x40000, scoped, tag = 'input window, operand 1']
    #allocation7 [shape = 's32[2]{0}', space=sflag, size = 0x8, scoped, tag = 'scoped memory for tpu_custom_call.1']
    #allocation8 [shape = 'u8[294912]{0}', space=vmem, size = 0x48000, scoped, tag = 'input window, operand 2, single buffered']
    #allocation9 [shape = 'u8[294912]{0}', space=vmem, size = 0x48000, scoped, tag = 'input window, operand 5, single buffered']
    #allocation10 [shape = 's32[1]{0}', space=sflag, size = 0x4, scoped, tag = 'scoped memory for tpu_custom_call.1']
    #allocation11 [shape = 'u8[262144]{0}', space=vmem, size = 0x40000, scoped, tag = 'output window, operand 0']
    %13 = vsyncpa [#allocation4], 0
    %s14 = scalar_lea.sflag [#allocation4], 1
    %15 = vsyncpa %s14, 0
    %16 = vsyncpa [#allocation7], 0
    %s17 = scalar_lea.sflag [#allocation7], 1
    %18 = vsyncpa %s17, 0
    %19 = vsyncpa [#allocation10], 0
    %20 = vsyncpa [#allocation5], 0
    %s21 = scalar_lea.sflag [#allocation5], 1
    %22 = vsyncpa %s21, 0
    loop: start=0, step=1, limit=4
    $region2: #{tpu_custom_call.1} parent=1 // loop_pre_header
      _
    $region3: #{tpu_custom_call.1} parent=1 // loop_header
      %s24 = sphi 0, %s28
      %p25 = scmp.ge.s32.totalorder %s24, 4
      %s34 = sphi 0, %s36
      %s37 = sphi 0, %s34
      %s38 = sphi 0, %s37
      %s54 = sphi 0, %s38
      %s60 = sphi 0, %s62
      %s63 = sphi 0, %s60
      %s64 = sphi 0, %s63
      %s80 = sphi 0, %s64
      %s84 = sphi 0, %s84
      %s86 = sphi 0, %s84
      %s87 = sphi 0, %s86
      %s101 = sphi 0, %s87
      %s105 = sphi 0, %s105
      %s107 = sphi 0, %s105
      %s108 = sphi 0, %s107
      %s122 = sphi 0, %s108
      %s126 = sphi 0, %s126
      %s128 = sphi 0, %s126
      %s129 = sphi 0, %s128
      %s143 = sphi 0, %s129
      %s147 = sphi 0, %s147
      %s149 = sphi 0, %s147
      %s150 = sphi 0, %s149
      %s164 = sphi 0, %s150
      %s168 = sphi 0, %s168
      %s170 = sphi 0, %s168
      %s171 = sphi 0, %s170
      %s185 = sphi 0, %s171
      %s189 = sphi 0, %s189
      %s191 = sphi 0, %s189
      %s192 = sphi 0, %s191
      %s206 = sphi 0, %s192
      %s212 = sphi 0, %s214
      %s215 = sphi 0, %s212
      %s216 = sphi 0, %s215
      %s232 = sphi 0, %s216
    $region4: #{tpu_custom_call.1} parent=1 // loop_header_branch
      %27 = sbr.rel (%p25) target = $region8
    $region5: #{tpu_custom_call.1} parent=1 // loop_body
      %s29 = ssub.s32 %s24, 1
      %s30 = ssub.s32 %s24, 2
      %s31 = sadd.s32 %s24, 1
      %s32 = ssub.s32 %s24, %s31
      %p33 = scmp.eq.s32.totalorder %s32, 0
      %s35 = sadd.s32 %s34, 1
      %s36 = scalar_select %p33, %s34, %s35
      %p39 = pneg %p33
      %p40 = scmp.eq.s32.totalorder %s24, 1
      %p41 = por %p39, %p40
      %p42 = scmp.ne.s32.totalorder %s34, %s37
      %p43 = scmp.eq.s32.totalorder %s24, 0
      %p44 = por %p42, %p43
      %p45 = scmp.ne.s32.totalorder %s34, %s37
      %p46 = scmp.eq.s32.totalorder %s29, 1
      %p47 = por %p45, %p46
      %p48 = scmp.ne.s32.totalorder %s37, %s38
      %p49 = scmp.eq.s32.totalorder %s29, 0
      %p50 = por %p48, %p49
      %p51 = scmp.ne.s32.totalorder %s37, %s38
      %p52 = scmp.eq.s32.totalorder %s30, 1
      %p53 = por %p51, %p52
      %p55 = scmp.ne.s32.totalorder %s38, %s54
      %p56 = scmp.eq.s32.totalorder %s30, 0
      %p57 = por %p55, %p56
      %s58 = ssub.s32 %s24, %s31
      %p59 = scmp.eq.s32.totalorder %s58, 0
      %s61 = sadd.s32 %s60, 1
      %s62 = scalar_select %p59, %s60, %s61
      %p65 = pneg %p59
      %p66 = scmp.eq.s32.totalorder %s24, 1
      %p67 = por %p65, %p66
      %p68 = scmp.ne.s32.totalorder %s60, %s63
      %p69 = scmp.eq.s32.totalorder %s24, 0
      %p70 = por %p68, %p69
      %p71 = scmp.ne.s32.totalorder %s60, %s63
      %p72 = scmp.eq.s32.totalorder %s29, 1
      %p73 = por %p71, %p72
      %p74 = scmp.ne.s32.totalorder %s63, %s64
      %p75 = scmp.eq.s32.totalorder %s29, 0
      %p76 = por %p74, %p75
      %p77 = scmp.ne.s32.totalorder %s63, %s64
      %p78 = scmp.eq.s32.totalorder %s30, 1
      %p79 = por %p77, %p78
      %p81 = scmp.ne.s32.totalorder %s64, %s80
      %p82 = scmp.eq.s32.totalorder %s30, 0
      %p83 = por %p81, %p82
      %s85 = sadd.s32 %s84, 1
      %p88 = scmp.eq.s32.totalorder %s24, 1
      %p89 = scmp.ne.s32.totalorder %s84, %s86
      %p90 = scmp.eq.s32.totalorder %s24, 0
      %p91 = por %p89, %p90
      %p92 = scmp.ne.s32.totalorder %s84, %s86
      %p93 = scmp.eq.s32.totalorder %s29, 1
      %p94 = por %p92, %p93
      %p95 = scmp.ne.s32.totalorder %s86, %s87
      %p96 = scmp.eq.s32.totalorder %s29, 0
      %p97 = por %p95, %p96
      %p98 = scmp.ne.s32.totalorder %s86, %s87
      %p99 = scmp.eq.s32.totalorder %s30, 1
      %p100 = por %p98, %p99
      %p102 = scmp.ne.s32.totalorder %s87, %s101
      %p103 = scmp.eq.s32.totalorder %s30, 0
      %p104 = por %p102, %p103
      %s106 = sadd.s32 %s105, 1
      %p109 = scmp.eq.s32.totalorder %s24, 1
      %p110 = scmp.ne.s32.totalorder %s105, %s107
      %p111 = scmp.eq.s32.totalorder %s24, 0
      %p112 = por %p110, %p111
      %p113 = scmp.ne.s32.totalorder %s105, %s107
      %p114 = scmp.eq.s32.totalorder %s29, 1
      %p115 = por %p113, %p114
      %p116 = scmp.ne.s32.totalorder %s107, %s108
      %p117 = scmp.eq.s32.totalorder %s29, 0
      %p118 = por %p116, %p117
      %p119 = scmp.ne.s32.totalorder %s107, %s108
      %p120 = scmp.eq.s32.totalorder %s30, 1
      %p121 = por %p119, %p120
      %p123 = scmp.ne.s32.totalorder %s108, %s122
      %p124 = scmp.eq.s32.totalorder %s30, 0
      %p125 = por %p123, %p124
      %s127 = sadd.s32 %s126, 1
      %p130 = scmp.eq.s32.totalorder %s24, 1
      %p131 = scmp.ne.s32.totalorder %s126, %s128
      %p132 = scmp.eq.s32.totalorder %s24, 0
      %p133 = por %p131, %p132
      %p134 = scmp.ne.s32.totalorder %s126, %s128
      %p135 = scmp.eq.s32.totalorder %s29, 1
      %p136 = por %p134, %p135
      %p137 = scmp.ne.s32.totalorder %s128, %s129
      %p138 = scmp.eq.s32.totalorder %s29, 0
      %p139 = por %p137, %p138
      %p140 = scmp.ne.s32.totalorder %s128, %s129
      %p141 = scmp.eq.s32.totalorder %s30, 1
      %p142 = por %p140, %p141
      %p144 = scmp.ne.s32.totalorder %s129, %s143
      %p145 = scmp.eq.s32.totalorder %s30, 0
      %p146 = por %p144, %p145
      %s148 = sadd.s32 %s147, 1
      %p151 = scmp.eq.s32.totalorder %s24, 1
      %p152 = scmp.ne.s32.totalorder %s147, %s149
      %p153 = scmp.eq.s32.totalorder %s24, 0
      %p154 = por %p152, %p153
      %p155 = scmp.ne.s32.totalorder %s147, %s149
      %p156 = scmp.eq.s32.totalorder %s29, 1
      %p157 = por %p155, %p156
      %p158 = scmp.ne.s32.totalorder %s149, %s150
      %p159 = scmp.eq.s32.totalorder %s29, 0
      %p160 = por %p158, %p159
      %p161 = scmp.ne.s32.totalorder %s149, %s150
      %p162 = scmp.eq.s32.totalorder %s30, 1
      %p163 = por %p161, %p162
      %p165 = scmp.ne.s32.totalorder %s150, %s164
      %p166 = scmp.eq.s32.totalorder %s30, 0
      %p167 = por %p165, %p166
      %s169 = sadd.s32 %s168, 1
      %p172 = scmp.eq.s32.totalorder %s24, 1
      %p173 = scmp.ne.s32.totalorder %s168, %s170
      %p174 = scmp.eq.s32.totalorder %s24, 0
      %p175 = por %p173, %p174
      %p176 = scmp.ne.s32.totalorder %s168, %s170
      %p177 = scmp.eq.s32.totalorder %s29, 1
      %p178 = por %p176, %p177
      %p179 = scmp.ne.s32.totalorder %s170, %s171
      %p180 = scmp.eq.s32.totalorder %s29, 0
      %p181 = por %p179, %p180
      %p182 = scmp.ne.s32.totalorder %s170, %s171
      %p183 = scmp.eq.s32.totalorder %s30, 1
      %p184 = por %p182, %p183
      %p186 = scmp.ne.s32.totalorder %s171, %s185
      %p187 = scmp.eq.s32.totalorder %s30, 0
      %p188 = por %p186, %p187
      %s190 = sadd.s32 %s189, 1
      %p193 = scmp.eq.s32.totalorder %s24, 1
      %p194 = scmp.ne.s32.totalorder %s189, %s191
      %p195 = scmp.eq.s32.totalorder %s24, 0
      %p196 = por %p194, %p195
      %p197 = scmp.ne.s32.totalorder %s189, %s191
      %p198 = scmp.eq.s32.totalorder %s29, 1
      %p199 = por %p197, %p198
      %p200 = scmp.ne.s32.totalorder %s191, %s192
      %p201 = scmp.eq.s32.totalorder %s29, 0
      %p202 = por %p200, %p201
      %p203 = scmp.ne.s32.totalorder %s191, %s192
      %p204 = scmp.eq.s32.totalorder %s30, 1
      %p205 = por %p203, %p204
      %p207 = scmp.ne.s32.totalorder %s192, %s206
      %p208 = scmp.eq.s32.totalorder %s30, 0
      %p209 = por %p207, %p208
      %s210 = ssub.s32 %s24, %s31
      %p211 = scmp.eq.s32.totalorder %s210, 0
      %s213 = sadd.s32 %s212, 1
      %s214 = scalar_select %p211, %s212, %s213
      %p217 = pneg %p211
      %p218 = scmp.eq.s32.totalorder %s24, 1
      %p219 = por %p217, %p218
      %p220 = scmp.ne.s32.totalorder %s212, %s215
      %p221 = scmp.eq.s32.totalorder %s24, 0
      %p222 = por %p220, %p221
      %p223 = scmp.ne.s32.totalorder %s212, %s215
      %p224 = scmp.eq.s32.totalorder %s29, 1
      %p225 = por %p223, %p224
      %p226 = scmp.ne.s32.totalorder %s215, %s216
      %p227 = scmp.eq.s32.totalorder %s29, 0
      %p228 = por %p226, %p227
      %p229 = scmp.ne.s32.totalorder %s215, %s216
      %p230 = scmp.eq.s32.totalorder %s30, 1
      %p231 = por %p229, %p230
      %p233 = scmp.ne.s32.totalorder %s216, %s232
      %p234 = scmp.eq.s32.totalorder %s30, 0
      %p235 = por %p233, %p234
      %p236 = scmp.le.s32.totalorder 1, %s24
      %p237 = scmp.lt.s32.totalorder %s24, 3
      %p238 = pnand %p236, %p237
      %p239 = pneg %p238
      // Predicated region
      $region9: #{tpu_custom_call.1} parent=5 // pred_check
        _
      $region10: #{tpu_custom_call.1} parent=5 // pred_check_branch
        %241 = sbr.rel (%p238) target = $region12
      $region11: #{tpu_custom_call.1} parent=5 // pred_region
        %s242 = ssub.s32 %s24, 1
        // Predicated region
        $region13: #{tpu_custom_call.1} parent=11 // pred_check
          %p243 = pneg %p97
        $region14: #{tpu_custom_call.1} parent=11 // pred_check_branch
          %245 = sbr.rel (%p243) target = $region16
        $region15: #{tpu_custom_call.1} parent=11 // pred_region
          %s247 = ssub.s32 9216, 9216
          %248 = vsyncadd [#allocation7], %s247
          %s249 = sshll.u32 [#allocation8], 4
          %s250 = int_to_ptr.vmem [resolvable:$true] %s249
          %255 = dma.hbm_to_vmem [thread:$0]  %s2, 9216, %s250, [#allocation7], 64, 64, 4
        $region16: #{tpu_custom_call.1} parent=11 // pred_fallthru
          _
        // Predicated region
        $region17: #{tpu_custom_call.1} parent=11 // pred_check
          %p256 = pneg %p118
        $region18: #{tpu_custom_call.1} parent=11 // pred_check_branch
          %258 = sbr.rel (%p256) target = $region20
        $region19: #{tpu_custom_call.1} parent=11 // pred_region
          _
        $region20: #{tpu_custom_call.1} parent=11 // pred_fallthru
          _
        // Predicated region
        $region21: #{tpu_custom_call.1} parent=11 // pred_check
          %p259 = pneg %p139
        $region22: #{tpu_custom_call.1} parent=11 // pred_check_branch
          %261 = sbr.rel (%p259) target = $region24
        $region23: #{tpu_custom_call.1} parent=11 // pred_region
          _
        $region24: #{tpu_custom_call.1} parent=11 // pred_fallthru
          _
        // Predicated region
        $region25: #{tpu_custom_call.1} parent=11 // pred_check
          %p262 = pneg %p160
        $region26: #{tpu_custom_call.1} parent=11 // pred_check_branch
          %264 = sbr.rel (%p262) target = $region28
        $region27: #{tpu_custom_call.1} parent=11 // pred_region
          %s266 = ssub.s32 9216, 9216
          %267 = vsyncadd [#allocation10], %s266
          %s268 = sshll.u32 [#allocation9], 4
          %s269 = int_to_ptr.vmem [resolvable:$true] %s268
          %274 = dma.hbm_to_vmem [thread:$0]  %s5, 9216, %s269, [#allocation10], 64, 64, 4
        $region28: #{tpu_custom_call.1} parent=11 // pred_fallthru
          _
        // Predicated region
        $region29: #{tpu_custom_call.1} parent=11 // pred_check
          %p275 = pneg %p181
        $region30: #{tpu_custom_call.1} parent=11 // pred_check_branch
          %277 = sbr.rel (%p275) target = $region32
        $region31: #{tpu_custom_call.1} parent=11 // pred_region
          _
        $region32: #{tpu_custom_call.1} parent=11 // pred_fallthru
          _
        // Predicated region
        $region33: #{tpu_custom_call.1} parent=11 // pred_check
          %p278 = pneg %p202
        $region34: #{tpu_custom_call.1} parent=11 // pred_check_branch
          %280 = sbr.rel (%p278) target = $region36
        $region35: #{tpu_custom_call.1} parent=11 // pred_region
          _
        $region36: #{tpu_custom_call.1} parent=11 // pred_fallthru
          _
      $region12: #{tpu_custom_call.1} parent=5 // pred_fallthru
        _
      %p281 = scmp.lt.s32.totalorder %s24, 2
      // Predicated region
      $region37: #{tpu_custom_call.1} parent=5 // pred_check
        %p282 = pneg %p281
      $region38: #{tpu_custom_call.1} parent=5 // pred_check_branch
        %284 = sbr.rel (%p282) target = $region40
      $region39: #{tpu_custom_call.1} parent=5 // pred_region
        // Predicated region
        $region41: #{tpu_custom_call.1} parent=39 // pred_check
          %p285 = pneg %p44
        $region42: #{tpu_custom_call.1} parent=39 // pred_check_branch
          %287 = sbr.rel (%p285) target = $region44
        $region43: #{tpu_custom_call.1} parent=39 // pred_region
          %s288 = sand.u32 %s34, 1
          %s289 = scalar_lea.sflag [#allocation4], %s288
          %s290 = sand.u32 %s34, 1
          %s291 = smul.addr %s290, 216
          %s292 = scalar_lea.vmem [#allocation3], %s291
          %s294 = ssub.s32 3456, 3456
          %295 = vsyncadd %s289, %s294
          %s296 = smul.addr %s24, 54
          %s297 = smul.addr %s296, 64
          %s298 = scalar_lea.hbm %s0, %s297
          %s299 = sshll.u32 %s292, 4
          %s300 = int_to_ptr.vmem [resolvable:$true] %s299
          %305 = dma.hbm_to_vmem [thread:$0]  %s298, 3456, %s300, %s289, 64, 64, 4
        $region44: #{tpu_custom_call.1} parent=39 // pred_fallthru
          _
        // Predicated region
        $region45: #{tpu_custom_call.1} parent=39 // pred_check
          %p306 = pneg %p70
        $region46: #{tpu_custom_call.1} parent=39 // pred_check_branch
          %308 = sbr.rel (%p306) target = $region48
        $region47: #{tpu_custom_call.1} parent=39 // pred_region
          %s309 = sand.u32 %s24, 1
          %s310 = scalar_lea.sflag [#allocation7], %s309
          %s311 = sand.u32 %s60, 1
          %s312 = smul.addr %s311, 256
          %s313 = scalar_lea.vmem [#allocation6], %s312
          %s315 = ssub.s32 4096, 4096
          %316 = vsyncadd %s310, %s315
          %s317 = smul.addr %s24, 32
          %s318 = smul.addr %s317, 128
          %s319 = scalar_lea.hbm %s1, %s318
          %s320 = sshll.u32 %s313, 4
          %s321 = int_to_ptr.vmem [resolvable:$true] %s320
          %326 = dma.hbm_to_vmem [thread:$0]  %s319, 4096, %s321, %s310, 128, 128, 8
        $region48: #{tpu_custom_call.1} parent=39 // pred_fallthru
          _
      $region40: #{tpu_custom_call.1} parent=5 // pred_fallthru
        _
      %p327 = scmp.le.s32.totalorder 1, %s24
      %p328 = scmp.lt.s32.totalorder %s24, 3
      %p329 = pnand %p327, %p328
      %p330 = pneg %p329
      // Predicated region
      $region49: #{tpu_custom_call.1} parent=5 // pred_check
        _
      $region50: #{tpu_custom_call.1} parent=5 // pred_check_branch
        %332 = sbr.rel (%p329) target = $region52
      $region51: #{tpu_custom_call.1} parent=5 // pred_region
        %s333 = ssub.s32 %s24, 1
        %s334 = sand.u32 %s37, 1
        %s335 = scalar_lea.sflag [#allocation4], %s334
        %s336 = sand.u32 %s37, 1
        %s337 = smul.addr %s336, 216
        %s338 = scalar_lea.vmem [#allocation3], %s337
        // Predicated region
        $region53: #{tpu_custom_call.1} parent=51 // pred_check
          %p339 = pneg %p50
        $region54: #{tpu_custom_call.1} parent=51 // pred_check_branch
          %341 = sbr.rel (%p339) target = $region56
        $region55: #{tpu_custom_call.1} parent=51 // pred_region
          %342 = dma.done %s335, 3456
        $region56: #{tpu_custom_call.1} parent=51 // pred_fallthru
          _
        %s343 = sand.u32 %s29, 1
        %s344 = scalar_lea.sflag [#allocation7], %s343
        %s345 = sand.u32 %s63, 1
        %s346 = smul.addr %s345, 256
        %s347 = scalar_lea.vmem [#allocation6], %s346
        // Predicated region
        $region57: #{tpu_custom_call.1} parent=51 // pred_check
          %p348 = pneg %p76
        $region58: #{tpu_custom_call.1} parent=51 // pred_check_branch
          %350 = sbr.rel (%p348) target = $region60
        $region59: #{tpu_custom_call.1} parent=51 // pred_region
          %351 = dma.done %s344, 4096
        $region60: #{tpu_custom_call.1} parent=51 // pred_fallthru
          _
        // Predicated region
        $region61: #{tpu_custom_call.1} parent=51 // pred_check
          %p352 = pneg %p97
        $region62: #{tpu_custom_call.1} parent=51 // pred_check_branch
          %354 = sbr.rel (%p352) target = $region64
        $region63: #{tpu_custom_call.1} parent=51 // pred_region
          %355 = dma.done [#allocation7], 9216
        $region64: #{tpu_custom_call.1} parent=51 // pred_fallthru
          _
        // Predicated region
        $region65: #{tpu_custom_call.1} parent=51 // pred_check
          %p356 = pneg %p160
        $region66: #{tpu_custom_call.1} parent=51 // pred_check_branch
          %358 = sbr.rel (%p356) target = $region68
        $region67: #{tpu_custom_call.1} parent=51 // pred_region
          %359 = dma.done [#allocation10], 9216
        $region68: #{tpu_custom_call.1} parent=51 // pred_fallthru
          _
        %s360 = sand.u32 %s37, 1
        %s361 = scalar_lea.sflag [#allocation4], %s360
        %s362 = sand.u32 %s37, 1
        %s363 = smul.addr %s362, 216
        %s364 = scalar_lea.vmem [#allocation3], %s363
        %p365 = pneg %p50
        %p366 = pneg %p47
        %s367 = sand.u32 %s29, 1
        %s368 = scalar_lea.sflag [#allocation7], %s367
        %s369 = sand.u32 %s63, 1
        %s370 = smul.addr %s369, 256
        %s371 = scalar_lea.vmem [#allocation6], %s370
        %p372 = pneg %p76
        %p373 = pneg %p73
        %p374 = pneg %p97
        %p375 = pneg %p94
        %p376 = pneg %p118
        %p377 = pneg %p115
        %p378 = pneg %p139
        %p379 = pneg %p136
        %p380 = pneg %p160
        %p381 = pneg %p157
        %p382 = pneg %p181
        %p383 = pneg %p178
        %p384 = pneg %p202
        %p385 = pneg %p199
        %p386 = pneg %p228
        %p387 = pneg %p225
        %s388 = sand.u32 %s215, 1
        %s389 = scalar_lea.sflag [#allocation5], %s388
        %s390 = sand.u32 %s215, 1
        %s391 = smul.addr %s390, 256
        %s392 = scalar_lea.vmem [#allocation11], %s391
        %v394 = vld [vmem:[%s338] sm:$0xf]
        %v395 = vld [vmem:[%s338 + $0x4] sm:$0xf]
        %v396 = vld [vmem:[%s338 + $0xc] sm:$0xf]
        %v397 = vld [vmem:[%s338 + $0x10] sm:$0xf]
        %v398 = vld [vmem:[%s338 + $0x18] sm:$0xf]
        %v399 = vld [vmem:[%s338 + $0x1c] sm:$0xf]
        %v400 = vld [vmem:[%s338 + $0x24] sm:$0xf]
        %v401 = vld [vmem:[%s338 + $0x28] sm:$0xf]
        %v402 = vld [vmem:[%s338 + $0x30] sm:$0xf]
        %v403 = vld [vmem:[%s338 + $0x34] sm:$0xf]
        %v404 = vld [vmem:[%s338 + $0x3c] sm:$0xf]
        %v405 = vld [vmem:[%s338 + $0x40] sm:$0xf]
        %v406 = vld [vmem:[%s338 + $0x48] sm:$0xf]
        %v407 = vld [vmem:[%s338 + $0x4c] sm:$0xf]
        %v408 = vld [vmem:[%s338 + $0x54] sm:$0xf]
        %v409 = vld [vmem:[%s338 + $0x58] sm:$0xf]
        %v410 = vld [vmem:[%s338 + $0x60] sm:$0xf]
        %v411 = vld [vmem:[%s338 + $0x64] sm:$0xf]
        %v412 = vld [vmem:[%s338 + $0x6c] sm:$0xf]
        %v413 = vld [vmem:[%s338 + $0x70] sm:$0xf]
        %v414 = vld [vmem:[%s338 + $0x78] sm:$0xf]
        %v415 = vld [vmem:[%s338 + $0x7c] sm:$0xf]
        %v416 = vld [vmem:[%s338 + $0x84] sm:$0xf]
        %v417 = vld [vmem:[%s338 + $0x88] sm:$0xf]
        %v418 = vld [vmem:[%s338 + $0x90] sm:$0xf]
        %v419 = vld [vmem:[%s338 + $0x94] sm:$0xf]
        %v420 = vld [vmem:[%s338 + $0x9c] sm:$0xf]
        %v421 = vld [vmem:[%s338 + $0xa0] sm:$0xf]
        %v422 = vld [vmem:[%s338 + $0xa8] sm:$0xf]
        %v423 = vld [vmem:[%s338 + $0xac] sm:$0xf]
        %v424 = vld [vmem:[%s338 + $0xb4] sm:$0xf]
        %v425 = vld [vmem:[%s338 + $0xb8] sm:$0xf]
        %s426 = scalar_lea.vmem %s338, 12 [#allocation3]
        %v427 = vld [vmem:[%s426] sm:$0xf]
        %v428 = vld [vmem:[%s426 + $0x4] sm:$0xf]
        %v429 = vld [vmem:[%s426 + $0xc] sm:$0xf]
        %v430 = vld [vmem:[%s426 + $0x10] sm:$0xf]
        %v431 = vld [vmem:[%s426 + $0x18] sm:$0xf]
        %v432 = vld [vmem:[%s426 + $0x1c] sm:$0xf]
        %v433 = vld [vmem:[%s426 + $0x24] sm:$0xf]
        %v434 = vld [vmem:[%s426 + $0x28] sm:$0xf]
        %v435 = vld [vmem:[%s426 + $0x30] sm:$0xf]
        %v436 = vld [vmem:[%s426 + $0x34] sm:$0xf]
        %v437 = vld [vmem:[%s426 + $0x3c] sm:$0xf]
        %v438 = vld [vmem:[%s426 + $0x40] sm:$0xf]
        %v439 = vld [vmem:[%s426 + $0x48] sm:$0xf]
        %v440 = vld [vmem:[%s426 + $0x4c] sm:$0xf]
        %v441 = vld [vmem:[%s426 + $0x54] sm:$0xf]
        %v442 = vld [vmem:[%s426 + $0x58] sm:$0xf]
        %v443 = vld [vmem:[%s426 + $0x60] sm:$0xf]
        %v444 = vld [vmem:[%s426 + $0x64] sm:$0xf]
        %v445 = vld [vmem:[%s426 + $0x6c] sm:$0xf]
        %v446 = vld [vmem:[%s426 + $0x70] sm:$0xf]
        %v447 = vld [vmem:[%s426 + $0x78] sm:$0xf]
        %v448 = vld [vmem:[%s426 + $0x7c] sm:$0xf]
        %v449 = vld [vmem:[%s426 + $0x84] sm:$0xf]
        %v450 = vld [vmem:[%s426 + $0x88] sm:$0xf]
        %v451 = vld [vmem:[%s426 + $0x90] sm:$0xf]
        %v452 = vld [vmem:[%s426 + $0x94] sm:$0xf]
        %v453 = vld [vmem:[%s426 + $0x9c] sm:$0xf]
        %v454 = vld [vmem:[%s426 + $0xa0] sm:$0xf]
        %v455 = vld [vmem:[%s426 + $0xa8] sm:$0xf]
        %v456 = vld [vmem:[%s426 + $0xac] sm:$0xf]
        %v457 = vld [vmem:[%s426 + $0xb4] sm:$0xf]
        %v458 = vld [vmem:[%s426 + $0xb8] sm:$0xf]
        %s459 = scalar_lea.vmem %s338, 24 [#allocation3]
        %v460 = vld [vmem:[%s459] sm:$0xf]
        %v461 = vld [vmem:[%s459 + $0x4] sm:$0xf]
        %v462 = vld [vmem:[%s459 + $0xc] sm:$0xf]
        %v463 = vld [vmem:[%s459 + $0x10] sm:$0xf]
        %v464 = vld [vmem:[%s459 + $0x18] sm:$0xf]
        %v465 = vld [vmem:[%s459 + $0x1c] sm:$0xf]
        %v466 = vld [vmem:[%s459 + $0x24] sm:$0xf]
        %v467 = vld [vmem:[%s459 + $0x28] sm:$0xf]
        %v468 = vld [vmem:[%s459 + $0x30] sm:$0xf]
        %v469 = vld [vmem:[%s459 + $0x34] sm:$0xf]
        %v470 = vld [vmem:[%s459 + $0x3c] sm:$0xf]
        %v471 = vld [vmem:[%s459 + $0x40] sm:$0xf]
        %v472 = vld [vmem:[%s459 + $0x48] sm:$0xf]
        %v473 = vld [vmem:[%s459 + $0x4c] sm:$0xf]
        %v474 = vld [vmem:[%s459 + $0x54] sm:$0xf]
        %v475 = vld [vmem:[%s459 + $0x58] sm:$0xf]
        %v476 = vld [vmem:[%s459 + $0x60] sm:$0xf]
        %v477 = vld [vmem:[%s459 + $0x64] sm:$0xf]
        %v478 = vld [vmem:[%s459 + $0x6c] sm:$0xf]
        %v479 = vld [vmem:[%s459 + $0x70] sm:$0xf]
        %v480 = vld [vmem:[%s459 + $0x78] sm:$0xf]
        %v481 = vld [vmem:[%s459 + $0x7c] sm:$0xf]
        %v482 = vld [vmem:[%s459 + $0x84] sm:$0xf]
        %v483 = vld [vmem:[%s459 + $0x88] sm:$0xf]
        %v484 = vld [vmem:[%s459 + $0x90] sm:$0xf]
        %v485 = vld [vmem:[%s459 + $0x94] sm:$0xf]
        %v486 = vld [vmem:[%s459 + $0x9c] sm:$0xf]
        %v487 = vld [vmem:[%s459 + $0xa0] sm:$0xf]
        %v488 = vld [vmem:[%s459 + $0xa8] sm:$0xf]
        %v489 = vld [vmem:[%s459 + $0xac] sm:$0xf]
        %v490 = vld [vmem:[%s459 + $0xb4] sm:$0xf]
        %v491 = vld [vmem:[%s459 + $0xb8] sm:$0xf]
        %v524 = vunpack.c.l.b16 %v394
        %v525 = vunpack.c.l.b16 %v395
        %v526 = vunpack.c.l.b16 %v396
        %v527 = vunpack.c.l.b16 %v397
        %v528 = vunpack.c.l.b16 %v398
        %v529 = vunpack.c.l.b16 %v399
        %v530 = vunpack.c.l.b16 %v400
        %v531 = vunpack.c.l.b16 %v401
        %v532 = vunpack.c.l.b16 %v402
        %v533 = vunpack.c.l.b16 %v403
        %v534 = vunpack.c.l.b16 %v404
        %v535 = vunpack.c.l.b16 %v405
        %v536 = vunpack.c.l.b16 %v406
        %v537 = vunpack.c.l.b16 %v407
        %v538 = vunpack.c.l.b16 %v408
        %v539 = vunpack.c.l.b16 %v409
        %v540 = vunpack.c.l.b16 %v410
        %v541 = vunpack.c.l.b16 %v411
        %v542 = vunpack.c.l.b16 %v412
        %v543 = vunpack.c.l.b16 %v413
        %v544 = vunpack.c.l.b16 %v414
        %v545 = vunpack.c.l.b16 %v415
        %v546 = vunpack.c.l.b16 %v416
        %v547 = vunpack.c.l.b16 %v417
        %v548 = vunpack.c.l.b16 %v418
        %v549 = vunpack.c.l.b16 %v419
        %v550 = vunpack.c.l.b16 %v420
        %v551 = vunpack.c.l.b16 %v421
        %v552 = vunpack.c.l.b16 %v422
        %v553 = vunpack.c.l.b16 %v423
        %v554 = vunpack.c.l.b16 %v424
        %v555 = vunpack.c.l.b16 %v425
        %v556 = vpack.c.b16 %v525, %v524
        %v557 = vpack.c.b16 %v527, %v526
        %v558 = vpack.c.b16 %v529, %v528
        %v559 = vpack.c.b16 %v531, %v530
        %v560 = vpack.c.b16 %v533, %v532
        %v561 = vpack.c.b16 %v535, %v534
        %v562 = vpack.c.b16 %v537, %v536
        %v563 = vpack.c.b16 %v539, %v538
        %v564 = vpack.c.b16 %v541, %v540
        %v565 = vpack.c.b16 %v543, %v542
        %v566 = vpack.c.b16 %v545, %v544
        %v567 = vpack.c.b16 %v547, %v546
        %v568 = vpack.c.b16 %v549, %v548
        %v569 = vpack.c.b16 %v551, %v550
        %v570 = vpack.c.b16 %v553, %v552
        %v571 = vpack.c.b16 %v555, %v554
        %v620 = vunpack.c.l.b16 %v427
        %v621 = vunpack.c.l.b16 %v428
        %v622 = vunpack.c.l.b16 %v429
        %v623 = vunpack.c.l.b16 %v430
        %v624 = vunpack.c.l.b16 %v431
        %v625 = vunpack.c.l.b16 %v432
        %v626 = vunpack.c.l.b16 %v433
        %v627 = vunpack.c.l.b16 %v434
        %v628 = vunpack.c.l.b16 %v435
        %v629 = vunpack.c.l.b16 %v436
        %v630 = vunpack.c.l.b16 %v437
        %v631 = vunpack.c.l.b16 %v438
        %v632 = vunpack.c.l.b16 %v439
        %v633 = vunpack.c.l.b16 %v440
        %v634 = vunpack.c.l.b16 %v441
        %v635 = vunpack.c.l.b16 %v442
        %v636 = vunpack.c.l.b16 %v443
        %v637 = vunpack.c.l.b16 %v444
        %v638 = vunpack.c.l.b16 %v445
        %v639 = vunpack.c.l.b16 %v446
        %v640 = vunpack.c.l.b16 %v447
        %v641 = vunpack.c.l.b16 %v448
        %v642 = vunpack.c.l.b16 %v449
        %v643 = vunpack.c.l.b16 %v450
        %v644 = vunpack.c.l.b16 %v451
        %v645 = vunpack.c.l.b16 %v452
        %v646 = vunpack.c.l.b16 %v453
        %v647 = vunpack.c.l.b16 %v454
        %v648 = vunpack.c.l.b16 %v455
        %v649 = vunpack.c.l.b16 %v456
        %v650 = vunpack.c.l.b16 %v457
        %v651 = vunpack.c.l.b16 %v458
        %v652 = vpack.c.b16 %v621, %v620
        %v653 = vpack.c.b16 %v623, %v622
        %v654 = vpack.c.b16 %v625, %v624
        %v655 = vpack.c.b16 %v627, %v626
        %v656 = vpack.c.b16 %v629, %v628
        %v657 = vpack.c.b16 %v631, %v630
        %v658 = vpack.c.b16 %v633, %v632
        %v659 = vpack.c.b16 %v635, %v634
        %v660 = vpack.c.b16 %v637, %v636
        %v661 = vpack.c.b16 %v639, %v638
        %v662 = vpack.c.b16 %v641, %v640
        %v663 = vpack.c.b16 %v643, %v642
        %v664 = vpack.c.b16 %v645, %v644
        %v665 = vpack.c.b16 %v647, %v646
        %v666 = vpack.c.b16 %v649, %v648
        %v667 = vpack.c.b16 %v651, %v650
        %v716 = vunpack.c.l.b16 %v460
        %v717 = vunpack.c.l.b16 %v461
        %v718 = vunpack.c.l.b16 %v462
        %v719 = vunpack.c.l.b16 %v463
        %v720 = vunpack.c.l.b16 %v464
        %v721 = vunpack.c.l.b16 %v465
        %v722 = vunpack.c.l.b16 %v466
        %v723 = vunpack.c.l.b16 %v467
        %v724 = vunpack.c.l.b16 %v468
        %v725 = vunpack.c.l.b16 %v469
        %v726 = vunpack.c.l.b16 %v470
        %v727 = vunpack.c.l.b16 %v471
        %v728 = vunpack.c.l.b16 %v472
        %v729 = vunpack.c.l.b16 %v473
        %v730 = vunpack.c.l.b16 %v474
        %v731 = vunpack.c.l.b16 %v475
        %v732 = vunpack.c.l.b16 %v476
        %v733 = vunpack.c.l.b16 %v477
        %v734 = vunpack.c.l.b16 %v478
        %v735 = vunpack.c.l.b16 %v479
        %v736 = vunpack.c.l.b16 %v480
        %v737 = vunpack.c.l.b16 %v481
        %v738 = vunpack.c.l.b16 %v482
        %v739 = vunpack.c.l.b16 %v483
        %v740 = vunpack.c.l.b16 %v484
        %v741 = vunpack.c.l.b16 %v485
        %v742 = vunpack.c.l.b16 %v486
        %v743 = vunpack.c.l.b16 %v487
        %v744 = vunpack.c.l.b16 %v488
        %v745 = vunpack.c.l.b16 %v489
        %v746 = vunpack.c.l.b16 %v490
        %v747 = vunpack.c.l.b16 %v491
        %v748 = vpack.c.b16 %v717, %v716
        %v749 = vpack.c.b16 %v719, %v718
        %v750 = vpack.c.b16 %v721, %v720
        %v751 = vpack.c.b16 %v723, %v722
        %v752 = vpack.c.b16 %v725, %v724
        %v753 = vpack.c.b16 %v727, %v726
        %v754 = vpack.c.b16 %v729, %v728
        %v755 = vpack.c.b16 %v731, %v730
        %v756 = vpack.c.b16 %v733, %v732
        %v757 = vpack.c.b16 %v735, %v734
        %v758 = vpack.c.b16 %v737, %v736
        %v759 = vpack.c.b16 %v739, %v738
        %v760 = vpack.c.b16 %v741, %v740
        %v761 = vpack.c.b16 %v743, %v742
        %v762 = vpack.c.b16 %v745, %v744
        %v763 = vpack.c.b16 %v747, %v746
        %v780 = vld [vmem:[#allocation8] sm:$0xf]
        %v781 = vld [vmem:[#allocation8 + $0x4] sm:$0xf]
        %v782 = vld [vmem:[#allocation8 + $0x8] sm:$0xf]
        %v783 = vld [vmem:[#allocation8 + $0xc] sm:$0xf]
        %v784 = vld [vmem:[#allocation8 + $0x10] sm:$0xf]
        %v785 = vld [vmem:[#allocation8 + $0x14] sm:$0xf]
        %v786 = vld [vmem:[#allocation8 + $0x18] sm:$0xf]
        %v787 = vld [vmem:[#allocation8 + $0x1c] sm:$0xf]
        %v788 = vld [vmem:[#allocation8 + $0x20] sm:$0xf]
        %v789 = vld [vmem:[#allocation8 + $0x24] sm:$0xf]
        %v790 = vld [vmem:[#allocation8 + $0x28] sm:$0xf]
        %v791 = vld [vmem:[#allocation8 + $0x2c] sm:$0xf]
        %v792 = vld [vmem:[#allocation8 + $0x30] sm:$0xf]
        %v793 = vld [vmem:[#allocation8 + $0x34] sm:$0xf]
        %v794 = vld [vmem:[#allocation8 + $0x38] sm:$0xf]
        %v795 = vld [vmem:[#allocation8 + $0x3c] sm:$0xf]
        %v796 = vld [vmem:[#allocation8 + $0x40] sm:$0xf]
        %v797 = vld [vmem:[#allocation8 + $0x44] sm:$0xf]
        %v798 = vld [vmem:[#allocation8 + $0x48] sm:$0xf]
        %v799 = vld [vmem:[#allocation8 + $0x4c] sm:$0xf]
        %v800 = vld [vmem:[#allocation8 + $0x50] sm:$0xf]
        %v801 = vld [vmem:[#allocation8 + $0x54] sm:$0xf]
        %v802 = vld [vmem:[#allocation8 + $0x58] sm:$0xf]
        %v803 = vld [vmem:[#allocation8 + $0x5c] sm:$0xf]
        %v804 = vld [vmem:[#allocation8 + $0x60] sm:$0xf]
        %v805 = vld [vmem:[#allocation8 + $0x64] sm:$0xf]
        %v806 = vld [vmem:[#allocation8 + $0x68] sm:$0xf]
        %v807 = vld [vmem:[#allocation8 + $0x6c] sm:$0xf]
        %v808 = vld [vmem:[#allocation8 + $0x70] sm:$0xf]
        %v809 = vld [vmem:[#allocation8 + $0x74] sm:$0xf]
        %v810 = vld [vmem:[#allocation8 + $0x78] sm:$0xf]
        %v811 = vld [vmem:[#allocation8 + $0x7c] sm:$0xf]
        %v812 = vld [vmem:[#allocation8 + $0x80] sm:$0xf]
        %v813 = vld [vmem:[#allocation8 + $0x84] sm:$0xf]
        %v814 = vld [vmem:[#allocation8 + $0x88] sm:$0xf]
        %v815 = vld [vmem:[#allocation8 + $0x8c] sm:$0xf]
        %v816 = vld [vmem:[#allocation8 + $0x90] sm:$0xf]
        %v817 = vld [vmem:[#allocation8 + $0x94] sm:$0xf]
        %v818 = vld [vmem:[#allocation8 + $0x98] sm:$0xf]
        %v819 = vld [vmem:[#allocation8 + $0x9c] sm:$0xf]
        %v820 = vld [vmem:[#allocation8 + $0xa0] sm:$0xf]
        %v821 = vld [vmem:[#allocation8 + $0xa4] sm:$0xf]
        %v822 = vld [vmem:[#allocation8 + $0xa8] sm:$0xf]
        %v823 = vld [vmem:[#allocation8 + $0xac] sm:$0xf]
        %v824 = vld [vmem:[#allocation8 + $0xb0] sm:$0xf]
        %v825 = vld [vmem:[#allocation8 + $0xb4] sm:$0xf]
        %v826 = vld [vmem:[#allocation8 + $0xb8] sm:$0xf]
        %v827 = vld [vmem:[#allocation8 + $0xbc] sm:$0xf]
        %v828 = vld [vmem:[%s338 + $0x8] sm:$0x1]
        %v829 = vld [vmem:[%s338 + $0x14] sm:$0x1]
        %v830 = vld [vmem:[%s338 + $0x20] sm:$0x1]
        %v831 = vld [vmem:[%s338 + $0x2c] sm:$0x1]
        %v832 = vld [vmem:[%s338 + $0x38] sm:$0x1]
        %v833 = vld [vmem:[%s338 + $0x44] sm:$0x1]
        %v834 = vld [vmem:[%s338 + $0x50] sm:$0x1]
        %v835 = vld [vmem:[%s338 + $0x5c] sm:$0x1]
        %v836 = vld [vmem:[%s338 + $0x68] sm:$0x1]
        %v837 = vld [vmem:[%s338 + $0x74] sm:$0x1]
        %v838 = vld [vmem:[%s338 + $0x80] sm:$0x1]
        %v839 = vld [vmem:[%s338 + $0x8c] sm:$0x1]
        %v840 = vld [vmem:[%s338 + $0x98] sm:$0x1]
        %v841 = vld [vmem:[%s338 + $0xa4] sm:$0x1]
        %v842 = vld [vmem:[%s338 + $0xb0] sm:$0x1]
        %v843 = vld [vmem:[%s338 + $0xbc] sm:$0x1]
        %vm844 = vsmask.f32 3328
        %vm845 = vsmask.f32 7440
        %vm846 = vmor %vm844, %vm845
        %v848 = vshrl.u32 %v394, 16
        %v850 = vrot.slane %v848, 4
        %v851 = vshll.u32 %v394, 16
        %v853 = vrot.slane %v851, 5
        %v854 = vor.u32 %v850, %v853
        %v855 = vrot.slane %v854, 4
        %v857 = vshll.u32 %v395, 16
        %v859 = vrot.slane %v857, 5
        %v860 = vsel %vm846, %v855, %v859
        %v861 = vshrl.u32 %v395, 16
        %v863 = vrot.slane %v861, 4
        %v864 = vor.u32 %v863, %v859
        %v865 = vrot.slane %v864, 4
        %v867 = vshll.u32 %v828, 16
        %v869 = vrot.slane %v867, 5
        %v870 = vsel %vm846, %v865, %v869
        %v872 = vshrl.u32 %v396, 16
        %v874 = vrot.slane %v872, 4
        %v875 = vshll.u32 %v396, 16
        %v877 = vrot.slane %v875, 5
        %v878 = vor.u32 %v874, %v877
        %v879 = vrot.slane %v878, 4
        %v881 = vshll.u32 %v397, 16
        %v883 = vrot.slane %v881, 5
        %v884 = vsel %vm846, %v879, %v883
        %v885 = vshrl.u32 %v397, 16
        %v887 = vrot.slane %v885, 4
        %v888 = vor.u32 %v887, %v883
        %v889 = vrot.slane %v888, 4
        %v891 = vshll.u32 %v829, 16
        %v893 = vrot.slane %v891, 5
        %v894 = vsel %vm846, %v889, %v893
        %v896 = vshrl.u32 %v398, 16
        %v898 = vrot.slane %v896, 4
        %v899 = vshll.u32 %v398, 16
        %v901 = vrot.slane %v899, 5
        %v902 = vor.u32 %v898, %v901
        %v903 = vrot.slane %v902, 4
        %v905 = vshll.u32 %v399, 16
        %v907 = vrot.slane %v905, 5
        %v908 = vsel %vm846, %v903, %v907
        %v909 = vshrl.u32 %v399, 16
        %v911 = vrot.slane %v909, 4
        %v912 = vor.u32 %v911, %v907
        %v913 = vrot.slane %v912, 4
        %v915 = vshll.u32 %v830, 16
        %v917 = vrot.slane %v915, 5
        %v918 = vsel %vm846, %v913, %v917
        %v920 = vshrl.u32 %v400, 16
        %v922 = vrot.slane %v920, 4
        %v923 = vshll.u32 %v400, 16
        %v925 = vrot.slane %v923, 5
        %v926 = vor.u32 %v922, %v925
        %v927 = vrot.slane %v926, 4
        %v929 = vshll.u32 %v401, 16
        %v931 = vrot.slane %v929, 5
        %v932 = vsel %vm846, %v927, %v931
        %v933 = vshrl.u32 %v401, 16
        %v935 = vrot.slane %v933, 4
        %v936 = vor.u32 %v935, %v931
        %v937 = vrot.slane %v936, 4
        %v939 = vshll.u32 %v831, 16
        %v941 = vrot.slane %v939, 5
        %v942 = vsel %vm846, %v937, %v941
        %v944 = vshrl.u32 %v402, 16
        %v946 = vrot.slane %v944, 4
        %v947 = vshll.u32 %v402, 16
        %v949 = vrot.slane %v947, 5
        %v950 = vor.u32 %v946, %v949
        %v951 = vrot.slane %v950, 4
        %v953 = vshll.u32 %v403, 16
        %v955 = vrot.slane %v953, 5
        %v956 = vsel %vm846, %v951, %v955
        %v957 = vshrl.u32 %v403, 16
        %v959 = vrot.slane %v957, 4
        %v960 = vor.u32 %v959, %v955
        %v961 = vrot.slane %v960, 4
        %v963 = vshll.u32 %v832, 16
        %v965 = vrot.slane %v963, 5
        %v966 = vsel %vm846, %v961, %v965
        %v968 = vshrl.u32 %v404, 16
        %v970 = vrot.slane %v968, 4
        %v971 = vshll.u32 %v404, 16
        %v973 = vrot.slane %v971, 5
        %v974 = vor.u32 %v970, %v973
        %v975 = vrot.slane %v974, 4
        %v977 = vshll.u32 %v405, 16
        %v979 = vrot.slane %v977, 5
        %v980 = vsel %vm846, %v975, %v979
        %v981 = vshrl.u32 %v405, 16
        %v983 = vrot.slane %v981, 4
        %v984 = vor.u32 %v983, %v979
        %v985 = vrot.slane %v984, 4
        %v987 = vshll.u32 %v833, 16
        %v989 = vrot.slane %v987, 5
        %v990 = vsel %vm846, %v985, %v989
        %v992 = vshrl.u32 %v406, 16
        %v994 = vrot.slane %v992, 4
        %v995 = vshll.u32 %v406, 16
        %v997 = vrot.slane %v995, 5
        %v998 = vor.u32 %v994, %v997
        %v999 = vrot.slane %v998, 4
        %v1001 = vshll.u32 %v407, 16
        %v1003 = vrot.slane %v1001, 5
        %v1004 = vsel %vm846, %v999, %v1003
        %v1005 = vshrl.u32 %v407, 16
        %v1007 = vrot.slane %v1005, 4
        %v1008 = vor.u32 %v1007, %v1003
        %v1009 = vrot.slane %v1008, 4
        %v1011 = vshll.u32 %v834, 16
        %v1013 = vrot.slane %v1011, 5
        %v1014 = vsel %vm846, %v1009, %v1013
        %v1016 = vshrl.u32 %v408, 16
        %v1018 = vrot.slane %v1016, 4
        %v1019 = vshll.u32 %v408, 16
        %v1021 = vrot.slane %v1019, 5
        %v1022 = vor.u32 %v1018, %v1021
        %v1023 = vrot.slane %v1022, 4
        %v1025 = vshll.u32 %v409, 16
        %v1027 = vrot.slane %v1025, 5
        %v1028 = vsel %vm846, %v1023, %v1027
        %v1029 = vshrl.u32 %v409, 16
        %v1031 = vrot.slane %v1029, 4
        %v1032 = vor.u32 %v1031, %v1027
        %v1033 = vrot.slane %v1032, 4
        %v1035 = vshll.u32 %v835, 16
        %v1037 = vrot.slane %v1035, 5
        %v1038 = vsel %vm846, %v1033, %v1037
        %v1040 = vshrl.u32 %v410, 16
        %v1042 = vrot.slane %v1040, 4
        %v1043 = vshll.u32 %v410, 16
        %v1045 = vrot.slane %v1043, 5
        %v1046 = vor.u32 %v1042, %v1045
        %v1047 = vrot.slane %v1046, 4
        %v1049 = vshll.u32 %v411, 16
        %v1051 = vrot.slane %v1049, 5
        %v1052 = vsel %vm846, %v1047, %v1051
        %v1053 = vshrl.u32 %v411, 16
        %v1055 = vrot.slane %v1053, 4
        %v1056 = vor.u32 %v1055, %v1051
        %v1057 = vrot.slane %v1056, 4
        %v1059 = vshll.u32 %v836, 16
        %v1061 = vrot.slane %v1059, 5
        %v1062 = vsel %vm846, %v1057, %v1061
        %v1064 = vshrl.u32 %v412, 16
        %v1066 = vrot.slane %v1064, 4
        %v1067 = vshll.u32 %v412, 16
        %v1069 = vrot.slane %v1067, 5
        %v1070 = vor.u32 %v1066, %v1069
        %v1071 = vrot.slane %v1070, 4
        %v1073 = vshll.u32 %v413, 16
        %v1075 = vrot.slane %v1073, 5
        %v1076 = vsel %vm846, %v1071, %v1075
        %v1077 = vshrl.u32 %v413, 16
        %v1079 = vrot.slane %v1077, 4
        %v1080 = vor.u32 %v1079, %v1075
        %v1081 = vrot.slane %v1080, 4
        %v1083 = vshll.u32 %v837, 16
        %v1085 = vrot.slane %v1083, 5
        %v1086 = vsel %vm846, %v1081, %v1085
        %v1088 = vshrl.u32 %v414, 16
        %v1090 = vrot.slane %v1088, 4
        %v1091 = vshll.u32 %v414, 16
        %v1093 = vrot.slane %v1091, 5
        %v1094 = vor.u32 %v1090, %v1093
        %v1095 = vrot.slane %v1094, 4
        %v1097 = vshll.u32 %v415, 16
        %v1099 = vrot.slane %v1097, 5
        %v1100 = vsel %vm846, %v1095, %v1099
        %v1101 = vshrl.u32 %v415, 16
        %v1103 = vrot.slane %v1101, 4
        %v1104 = vor.u32 %v1103, %v1099
        %v1105 = vrot.slane %v1104, 4
        %v1107 = vshll.u32 %v838, 16
        %v1109 = vrot.slane %v1107, 5
        %v1110 = vsel %vm846, %v1105, %v1109
        %v1112 = vshrl.u32 %v416, 16
        %v1114 = vrot.slane %v1112, 4
        %v1115 = vshll.u32 %v416, 16
        %v1117 = vrot.slane %v1115, 5
        %v1118 = vor.u32 %v1114, %v1117
        %v1119 = vrot.slane %v1118, 4
        %v1121 = vshll.u32 %v417, 16
        %v1123 = vrot.slane %v1121, 5
        %v1124 = vsel %vm846, %v1119, %v1123
        %v1125 = vshrl.u32 %v417, 16
        %v1127 = vrot.slane %v1125, 4
        %v1128 = vor.u32 %v1127, %v1123
        %v1129 = vrot.slane %v1128, 4
        %v1131 = vshll.u32 %v839, 16
        %v1133 = vrot.slane %v1131, 5
        %v1134 = vsel %vm846, %v1129, %v1133
        %v1136 = vshrl.u32 %v418, 16
        %v1138 = vrot.slane %v1136, 4
        %v1139 = vshll.u32 %v418, 16
        %v1141 = vrot.slane %v1139, 5
        %v1142 = vor.u32 %v1138, %v1141
        %v1143 = vrot.slane %v1142, 4
        %v1145 = vshll.u32 %v419, 16
        %v1147 = vrot.slane %v1145, 5
        %v1148 = vsel %vm846, %v1143, %v1147
        %v1149 = vshrl.u32 %v419, 16
        %v1151 = vrot.slane %v1149, 4
        %v1152 = vor.u32 %v1151, %v1147
        %v1153 = vrot.slane %v1152, 4
        %v1155 = vshll.u32 %v840, 16
        %v1157 = vrot.slane %v1155, 5
        %v1158 = vsel %vm846, %v1153, %v1157
        %v1160 = vshrl.u32 %v420, 16
        %v1162 = vrot.slane %v1160, 4
        %v1163 = vshll.u32 %v420, 16
        %v1165 = vrot.slane %v1163, 5
        %v1166 = vor.u32 %v1162, %v1165
        %v1167 = vrot.slane %v1166, 4
        %v1169 = vshll.u32 %v421, 16
        %v1171 = vrot.slane %v1169, 5
        %v1172 = vsel %vm846, %v1167, %v1171
        %v1173 = vshrl.u32 %v421, 16
        %v1175 = vrot.slane %v1173, 4
        %v1176 = vor.u32 %v1175, %v1171
        %v1177 = vrot.slane %v1176, 4
        %v1179 = vshll.u32 %v841, 16
        %v1181 = vrot.slane %v1179, 5
        %v1182 = vsel %vm846, %v1177, %v1181
        %v1184 = vshrl.u32 %v422, 16
        %v1186 = vrot.slane %v1184, 4
        %v1187 = vshll.u32 %v422, 16
        %v1189 = vrot.slane %v1187, 5
        %v1190 = vor.u32 %v1186, %v1189
        %v1191 = vrot.slane %v1190, 4
        %v1193 = vshll.u32 %v423, 16
        %v1195 = vrot.slane %v1193, 5
        %v1196 = vsel %vm846, %v1191, %v1195
        %v1197 = vshrl.u32 %v423, 16
        %v1199 = vrot.slane %v1197, 4
        %v1200 = vor.u32 %v1199, %v1195
        %v1201 = vrot.slane %v1200, 4
        %v1203 = vshll.u32 %v842, 16
        %v1205 = vrot.slane %v1203, 5
        %v1206 = vsel %vm846, %v1201, %v1205
        %v1208 = vshrl.u32 %v424, 16
        %v1210 = vrot.slane %v1208, 4
        %v1211 = vshll.u32 %v424, 16
        %v1213 = vrot.slane %v1211, 5
        %v1214 = vor.u32 %v1210, %v1213
        %v1215 = vrot.slane %v1214, 4
        %v1217 = vshll.u32 %v425, 16
        %v1219 = vrot.slane %v1217, 5
        %v1220 = vsel %vm846, %v1215, %v1219
        %v1221 = vshrl.u32 %v425, 16
        %v1223 = vrot.slane %v1221, 4
        %v1224 = vor.u32 %v1223, %v1219
        %v1225 = vrot.slane %v1224, 4
        %v1227 = vshll.u32 %v843, 16
        %v1229 = vrot.slane %v1227, 5
        %v1230 = vsel %vm846, %v1225, %v1229
        %v1231 = vld [vmem:[%s426 + $0x8] sm:$0x1]
        %v1232 = vld [vmem:[%s426 + $0x14] sm:$0x1]
        %v1233 = vld [vmem:[%s426 + $0x20] sm:$0x1]
        %v1234 = vld [vmem:[%s426 + $0x2c] sm:$0x1]
        %v1235 = vld [vmem:[%s426 + $0x38] sm:$0x1]
        %v1236 = vld [vmem:[%s426 + $0x44] sm:$0x1]
        %v1237 = vld [vmem:[%s426 + $0x50] sm:$0x1]
        %v1238 = vld [vmem:[%s426 + $0x5c] sm:$0x1]
        %v1239 = vld [vmem:[%s426 + $0x68] sm:$0x1]
        %v1240 = vld [vmem:[%s426 + $0x74] sm:$0x1]
        %v1241 = vld [vmem:[%s426 + $0x80] sm:$0x1]
        %v1242 = vld [vmem:[%s426 + $0x8c] sm:$0x1]
        %v1243 = vld [vmem:[%s426 + $0x98] sm:$0x1]
        %v1244 = vld [vmem:[%s426 + $0xa4] sm:$0x1]
        %v1245 = vld [vmem:[%s426 + $0xb0] sm:$0x1]
        %v1246 = vld [vmem:[%s426 + $0xbc] sm:$0x1]
        %v1248 = vshrl.u32 %v427, 16
        %v1250 = vrot.slane %v1248, 4
        %v1251 = vshll.u32 %v427, 16
        %v1253 = vrot.slane %v1251, 5
        %v1254 = vor.u32 %v1250, %v1253
        %v1255 = vrot.slane %v1254, 4
        %v1257 = vshll.u32 %v428, 16
        %v1259 = vrot.slane %v1257, 5
        %v1260 = vsel %vm846, %v1255, %v1259
        %v1261 = vshrl.u32 %v428, 16
        %v1263 = vrot.slane %v1261, 4
        %v1264 = vor.u32 %v1263, %v1259
        %v1265 = vrot.slane %v1264, 4
        %v1267 = vshll.u32 %v1231, 16
        %v1269 = vrot.slane %v1267, 5
        %v1270 = vsel %vm846, %v1265, %v1269
        %v1272 = vshrl.u32 %v429, 16
        %v1274 = vrot.slane %v1272, 4
        %v1275 = vshll.u32 %v429, 16
        %v1277 = vrot.slane %v1275, 5
        %v1278 = vor.u32 %v1274, %v1277
        %v1279 = vrot.slane %v1278, 4
        %v1281 = vshll.u32 %v430, 16
        %v1283 = vrot.slane %v1281, 5
        %v1284 = vsel %vm846, %v1279, %v1283
        %v1285 = vshrl.u32 %v430, 16
        %v1287 = vrot.slane %v1285, 4
        %v1288 = vor.u32 %v1287, %v1283
        %v1289 = vrot.slane %v1288, 4
        %v1291 = vshll.u32 %v1232, 16
        %v1293 = vrot.slane %v1291, 5
        %v1294 = vsel %vm846, %v1289, %v1293
        %v1296 = vshrl.u32 %v431, 16
        %v1298 = vrot.slane %v1296, 4
        %v1299 = vshll.u32 %v431, 16
        %v1301 = vrot.slane %v1299, 5
        %v1302 = vor.u32 %v1298, %v1301
        %v1303 = vrot.slane %v1302, 4
        %v1305 = vshll.u32 %v432, 16
        %v1307 = vrot.slane %v1305, 5
        %v1308 = vsel %vm846, %v1303, %v1307
        %v1309 = vshrl.u32 %v432, 16
        %v1311 = vrot.slane %v1309, 4
        %v1312 = vor.u32 %v1311, %v1307
        %v1313 = vrot.slane %v1312, 4
        %v1315 = vshll.u32 %v1233, 16
        %v1317 = vrot.slane %v1315, 5
        %v1318 = vsel %vm846, %v1313, %v1317
        %v1320 = vshrl.u32 %v433, 16
        %v1322 = vrot.slane %v1320, 4
        %v1323 = vshll.u32 %v433, 16
        %v1325 = vrot.slane %v1323, 5
        %v1326 = vor.u32 %v1322, %v1325
        %v1327 = vrot.slane %v1326, 4
        %v1329 = vshll.u32 %v434, 16
        %v1331 = vrot.slane %v1329, 5
        %v1332 = vsel %vm846, %v1327, %v1331
        %v1333 = vshrl.u32 %v434, 16
        %v1335 = vrot.slane %v1333, 4
        %v1336 = vor.u32 %v1335, %v1331
        %v1337 = vrot.slane %v1336, 4
        %v1339 = vshll.u32 %v1234, 16
        %v1341 = vrot.slane %v1339, 5
        %v1342 = vsel %vm846, %v1337, %v1341
        %v1344 = vshrl.u32 %v435, 16
        %v1346 = vrot.slane %v1344, 4
        %v1347 = vshll.u32 %v435, 16
        %v1349 = vrot.slane %v1347, 5
        %v1350 = vor.u32 %v1346, %v1349
        %v1351 = vrot.slane %v1350, 4
        %v1353 = vshll.u32 %v436, 16
        %v1355 = vrot.slane %v1353, 5
        %v1356 = vsel %vm846, %v1351, %v1355
        %v1357 = vshrl.u32 %v436, 16
        %v1359 = vrot.slane %v1357, 4
        %v1360 = vor.u32 %v1359, %v1355
        %v1361 = vrot.slane %v1360, 4
        %v1363 = vshll.u32 %v1235, 16
        %v1365 = vrot.slane %v1363, 5
        %v1366 = vsel %vm846, %v1361, %v1365
        %v1368 = vshrl.u32 %v437, 16
        %v1370 = vrot.slane %v1368, 4
        %v1371 = vshll.u32 %v437, 16
        %v1373 = vrot.slane %v1371, 5
        %v1374 = vor.u32 %v1370, %v1373
        %v1375 = vrot.slane %v1374, 4
        %v1377 = vshll.u32 %v438, 16
        %v1379 = vrot.slane %v1377, 5
        %v1380 = vsel %vm846, %v1375, %v1379
        %v1381 = vshrl.u32 %v438, 16
        %v1383 = vrot.slane %v1381, 4
        %v1384 = vor.u32 %v1383, %v1379
        %v1385 = vrot.slane %v1384, 4
        %v1387 = vshll.u32 %v1236, 16
        %v1389 = vrot.slane %v1387, 5
        %v1390 = vsel %vm846, %v1385, %v1389
        %v1392 = vshrl.u32 %v439, 16
        %v1394 = vrot.slane %v1392, 4
        %v1395 = vshll.u32 %v439, 16
        %v1397 = vrot.slane %v1395, 5
        %v1398 = vor.u32 %v1394, %v1397
        %v1399 = vrot.slane %v1398, 4
        %v1401 = vshll.u32 %v440, 16
        %v1403 = vrot.slane %v1401, 5
        %v1404 = vsel %vm846, %v1399, %v1403
        %v1405 = vshrl.u32 %v440, 16
        %v1407 = vrot.slane %v1405, 4
        %v1408 = vor.u32 %v1407, %v1403
        %v1409 = vrot.slane %v1408, 4
        %v1411 = vshll.u32 %v1237, 16
        %v1413 = vrot.slane %v1411, 5
        %v1414 = vsel %vm846, %v1409, %v1413
        %v1416 = vshrl.u32 %v441, 16
        %v1418 = vrot.slane %v1416, 4
        %v1419 = vshll.u32 %v441, 16
        %v1421 = vrot.slane %v1419, 5
        %v1422 = vor.u32 %v1418, %v1421
        %v1423 = vrot.slane %v1422, 4
        %v1425 = vshll.u32 %v442, 16
        %v1427 = vrot.slane %v1425, 5
        %v1428 = vsel %vm846, %v1423, %v1427
        %v1429 = vshrl.u32 %v442, 16
        %v1431 = vrot.slane %v1429, 4
        %v1432 = vor.u32 %v1431, %v1427
        %v1433 = vrot.slane %v1432, 4
        %v1435 = vshll.u32 %v1238, 16
        %v1437 = vrot.slane %v1435, 5
        %v1438 = vsel %vm846, %v1433, %v1437
        %v1440 = vshrl.u32 %v443, 16
        %v1442 = vrot.slane %v1440, 4
        %v1443 = vshll.u32 %v443, 16
        %v1445 = vrot.slane %v1443, 5
        %v1446 = vor.u32 %v1442, %v1445
        %v1447 = vrot.slane %v1446, 4
        %v1449 = vshll.u32 %v444, 16
        %v1451 = vrot.slane %v1449, 5
        %v1452 = vsel %vm846, %v1447, %v1451
        %v1453 = vshrl.u32 %v444, 16
        %v1455 = vrot.slane %v1453, 4
        %v1456 = vor.u32 %v1455, %v1451
        %v1457 = vrot.slane %v1456, 4
        %v1459 = vshll.u32 %v1239, 16
        %v1461 = vrot.slane %v1459, 5
        %v1462 = vsel %vm846, %v1457, %v1461
        %v1464 = vshrl.u32 %v445, 16
        %v1466 = vrot.slane %v1464, 4
        %v1467 = vshll.u32 %v445, 16
        %v1469 = vrot.slane %v1467, 5
        %v1470 = vor.u32 %v1466, %v1469
        %v1471 = vrot.slane %v1470, 4
        %v1473 = vshll.u32 %v446, 16
        %v1475 = vrot.slane %v1473, 5
        %v1476 = vsel %vm846, %v1471, %v1475
        %v1477 = vshrl.u32 %v446, 16
        %v1479 = vrot.slane %v1477, 4
        %v1480 = vor.u32 %v1479, %v1475
        %v1481 = vrot.slane %v1480, 4
        %v1483 = vshll.u32 %v1240, 16
        %v1485 = vrot.slane %v1483, 5
        %v1486 = vsel %vm846, %v1481, %v1485
        %v1488 = vshrl.u32 %v447, 16
        %v1490 = vrot.slane %v1488, 4
        %v1491 = vshll.u32 %v447, 16
        %v1493 = vrot.slane %v1491, 5
        %v1494 = vor.u32 %v1490, %v1493
        %v1495 = vrot.slane %v1494, 4
        %v1497 = vshll.u32 %v448, 16
        %v1499 = vrot.slane %v1497, 5
        %v1500 = vsel %vm846, %v1495, %v1499
        %v1501 = vshrl.u32 %v448, 16
        %v1503 = vrot.slane %v1501, 4
        %v1504 = vor.u32 %v1503, %v1499
        %v1505 = vrot.slane %v1504, 4
        %v1507 = vshll.u32 %v1241, 16
        %v1509 = vrot.slane %v1507, 5
        %v1510 = vsel %vm846, %v1505, %v1509
        %v1512 = vshrl.u32 %v449, 16
        %v1514 = vrot.slane %v1512, 4
        %v1515 = vshll.u32 %v449, 16
        %v1517 = vrot.slane %v1515, 5
        %v1518 = vor.u32 %v1514, %v1517
        %v1519 = vrot.slane %v1518, 4
        %v1521 = vshll.u32 %v450, 16
        %v1523 = vrot.slane %v1521, 5
        %v1524 = vsel %vm846, %v1519, %v1523
        %v1525 = vshrl.u32 %v450, 16
        %v1527 = vrot.slane %v1525, 4
        %v1528 = vor.u32 %v1527, %v1523
        %v1529 = vrot.slane %v1528, 4
        %v1531 = vshll.u32 %v1242, 16
        %v1533 = vrot.slane %v1531, 5
        %v1534 = vsel %vm846, %v1529, %v1533
        %v1536 = vshrl.u32 %v451, 16
        %v1538 = vrot.slane %v1536, 4
        %v1539 = vshll.u32 %v451, 16
        %v1541 = vrot.slane %v1539, 5
        %v1542 = vor.u32 %v1538, %v1541
        %v1543 = vrot.slane %v1542, 4
        %v1545 = vshll.u32 %v452, 16
        %v1547 = vrot.slane %v1545, 5
        %v1548 = vsel %vm846, %v1543, %v1547
        %v1549 = vshrl.u32 %v452, 16
        %v1551 = vrot.slane %v1549, 4
        %v1552 = vor.u32 %v1551, %v1547
        %v1553 = vrot.slane %v1552, 4
        %v1555 = vshll.u32 %v1243, 16
        %v1557 = vrot.slane %v1555, 5
        %v1558 = vsel %vm846, %v1553, %v1557
        %v1560 = vshrl.u32 %v453, 16
        %v1562 = vrot.slane %v1560, 4
        %v1563 = vshll.u32 %v453, 16
        %v1565 = vrot.slane %v1563, 5
        %v1566 = vor.u32 %v1562, %v1565
        %v1567 = vrot.slane %v1566, 4
        %v1569 = vshll.u32 %v454, 16
        %v1571 = vrot.slane %v1569, 5
        %v1572 = vsel %vm846, %v1567, %v1571
        %v1573 = vshrl.u32 %v454, 16
        %v1575 = vrot.slane %v1573, 4
        %v1576 = vor.u32 %v1575, %v1571
        %v1577 = vrot.slane %v1576, 4
        %v1579 = vshll.u32 %v1244, 16
        %v1581 = vrot.slane %v1579, 5
        %v1582 = vsel %vm846, %v1577, %v1581
        %v1584 = vshrl.u32 %v455, 16
        %v1586 = vrot.slane %v1584, 4
        %v1587 = vshll.u32 %v455, 16
        %v1589 = vrot.slane %v1587, 5
        %v1590 = vor.u32 %v1586, %v1589
        %v1591 = vrot.slane %v1590, 4
        %v1593 = vshll.u32 %v456, 16
        %v1595 = vrot.slane %v1593, 5
        %v1596 = vsel %vm846, %v1591, %v1595
        %v1597 = vshrl.u32 %v456, 16
        %v1599 = vrot.slane %v1597, 4
        %v1600 = vor.u32 %v1599, %v1595
        %v1601 = vrot.slane %v1600, 4
        %v1603 = vshll.u32 %v1245, 16
        %v1605 = vrot.slane %v1603, 5
        %v1606 = vsel %vm846, %v1601, %v1605
        %v1608 = vshrl.u32 %v457, 16
        %v1610 = vrot.slane %v1608, 4
        %v1611 = vshll.u32 %v457, 16
        %v1613 = vrot.slane %v1611, 5
        %v1614 = vor.u32 %v1610, %v1613
        %v1615 = vrot.slane %v1614, 4
        %v1617 = vshll.u32 %v458, 16
        %v1619 = vrot.slane %v1617, 5
        %v1620 = vsel %vm846, %v1615, %v1619
        %v1621 = vshrl.u32 %v458, 16
        %v1623 = vrot.slane %v1621, 4
        %v1624 = vor.u32 %v1623, %v1619
        %v1625 = vrot.slane %v1624, 4
        %v1627 = vshll.u32 %v1246, 16
        %v1629 = vrot.slane %v1627, 5
        %v1630 = vsel %vm846, %v1625, %v1629
        %v1631 = vld [vmem:[%s459 + $0x8] sm:$0x1]
        %v1632 = vld [vmem:[%s459 + $0x14] sm:$0x1]
        %v1633 = vld [vmem:[%s459 + $0x20] sm:$0x1]
        %v1634 = vld [vmem:[%s459 + $0x2c] sm:$0x1]
        %v1635 = vld [vmem:[%s459 + $0x38] sm:$0x1]
        %v1636 = vld [vmem:[%s459 + $0x44] sm:$0x1]
        %v1637 = vld [vmem:[%s459 + $0x50] sm:$0x1]
        %v1638 = vld [vmem:[%s459 + $0x5c] sm:$0x1]
        %v1639 = vld [vmem:[%s459 + $0x68] sm:$0x1]
        %v1640 = vld [vmem:[%s459 + $0x74] sm:$0x1]
        %v1641 = vld [vmem:[%s459 + $0x80] sm:$0x1]
        %v1642 = vld [vmem:[%s459 + $0x8c] sm:$0x1]
        %v1643 = vld [vmem:[%s459 + $0x98] sm:$0x1]
        %v1644 = vld [vmem:[%s459 + $0xa4] sm:$0x1]
        %v1645 = vld [vmem:[%s459 + $0xb0] sm:$0x1]
        %v1646 = vld [vmem:[%s459 + $0xbc] sm:$0x1]
        %v1648 = vshrl.u32 %v460, 16
        %v1650 = vrot.slane %v1648, 4
        %v1651 = vshll.u32 %v460, 16
        %v1653 = vrot.slane %v1651, 5
        %v1654 = vor.u32 %v1650, %v1653
        %v1655 = vrot.slane %v1654, 4
        %v1657 = vshll.u32 %v461, 16
        %v1659 = vrot.slane %v1657, 5
        %v1660 = vsel %vm846, %v1655, %v1659
        %v1661 = vshrl.u32 %v461, 16
        %v1663 = vrot.slane %v1661, 4
        %v1664 = vor.u32 %v1663, %v1659
        %v1665 = vrot.slane %v1664, 4
        %v1667 = vshll.u32 %v1631, 16
        %v1669 = vrot.slane %v1667, 5
        %v1670 = vsel %vm846, %v1665, %v1669
        %v1672 = vshrl.u32 %v462, 16
        %v1674 = vrot.slane %v1672, 4
        %v1675 = vshll.u32 %v462, 16
        %v1677 = vrot.slane %v1675, 5
        %v1678 = vor.u32 %v1674, %v1677
        %v1679 = vrot.slane %v1678, 4
        %v1681 = vshll.u32 %v463, 16
        %v1683 = vrot.slane %v1681, 5
        %v1684 = vsel %vm846, %v1679, %v1683
        %v1685 = vshrl.u32 %v463, 16
        %v1687 = vrot.slane %v1685, 4
        %v1688 = vor.u32 %v1687, %v1683
        %v1689 = vrot.slane %v1688, 4
        %v1691 = vshll.u32 %v1632, 16
        %v1693 = vrot.slane %v1691, 5
        %v1694 = vsel %vm846, %v1689, %v1693
        %v1696 = vshrl.u32 %v464, 16
        %v1698 = vrot.slane %v1696, 4
        %v1699 = vshll.u32 %v464, 16
        %v1701 = vrot.slane %v1699, 5
        %v1702 = vor.u32 %v1698, %v1701
        %v1703 = vrot.slane %v1702, 4
        %v1705 = vshll.u32 %v465, 16
        %v1707 = vrot.slane %v1705, 5
        %v1708 = vsel %vm846, %v1703, %v1707
        %v1709 = vshrl.u32 %v465, 16
        %v1711 = vrot.slane %v1709, 4
        %v1712 = vor.u32 %v1711, %v1707
        %v1713 = vrot.slane %v1712, 4
        %v1715 = vshll.u32 %v1633, 16
        %v1717 = vrot.slane %v1715, 5
        %v1718 = vsel %vm846, %v1713, %v1717
        %v1720 = vshrl.u32 %v466, 16
        %v1722 = vrot.slane %v1720, 4
        %v1723 = vshll.u32 %v466, 16
        %v1725 = vrot.slane %v1723, 5
        %v1726 = vor.u32 %v1722, %v1725
        %v1727 = vrot.slane %v1726, 4
        %v1729 = vshll.u32 %v467, 16
        %v1731 = vrot.slane %v1729, 5
        %v1732 = vsel %vm846, %v1727, %v1731
        %v1733 = vshrl.u32 %v467, 16
        %v1735 = vrot.slane %v1733, 4
        %v1736 = vor.u32 %v1735, %v1731
        %v1737 = vrot.slane %v1736, 4
        %v1739 = vshll.u32 %v1634, 16
        %v1741 = vrot.slane %v1739, 5
        %v1742 = vsel %vm846, %v1737, %v1741
        %v1744 = vshrl.u32 %v468, 16
        %v1746 = vrot.slane %v1744, 4
        %v1747 = vshll.u32 %v468, 16
        %v1749 = vrot.slane %v1747, 5
        %v1750 = vor.u32 %v1746, %v1749
        %v1751 = vrot.slane %v1750, 4
        %v1753 = vshll.u32 %v469, 16
        %v1755 = vrot.slane %v1753, 5
        %v1756 = vsel %vm846, %v1751, %v1755
        %v1757 = vshrl.u32 %v469, 16
        %v1759 = vrot.slane %v1757, 4
        %v1760 = vor.u32 %v1759, %v1755
        %v1761 = vrot.slane %v1760, 4
        %v1763 = vshll.u32 %v1635, 16
        %v1765 = vrot.slane %v1763, 5
        %v1766 = vsel %vm846, %v1761, %v1765
        %v1768 = vshrl.u32 %v470, 16
        %v1770 = vrot.slane %v1768, 4
        %v1771 = vshll.u32 %v470, 16
        %v1773 = vrot.slane %v1771, 5
        %v1774 = vor.u32 %v1770, %v1773
        %v1775 = vrot.slane %v1774, 4
        %v1777 = vshll.u32 %v471, 16
        %v1779 = vrot.slane %v1777, 5
        %v1780 = vsel %vm846, %v1775, %v1779
        %v1781 = vshrl.u32 %v471, 16
        %v1783 = vrot.slane %v1781, 4
        %v1784 = vor.u32 %v1783, %v1779
        %v1785 = vrot.slane %v1784, 4
        %v1787 = vshll.u32 %v1636, 16
        %v1789 = vrot.slane %v1787, 5
        %v1790 = vsel %vm846, %v1785, %v1789
        %v1792 = vshrl.u32 %v472, 16
        %v1794 = vrot.slane %v1792, 4
        %v1795 = vshll.u32 %v472, 16
        %v1797 = vrot.slane %v1795, 5
        %v1798 = vor.u32 %v1794, %v1797
        %v1799 = vrot.slane %v1798, 4
        %v1801 = vshll.u32 %v473, 16
        %v1803 = vrot.slane %v1801, 5
        %v1804 = vsel %vm846, %v1799, %v1803
        %v1805 = vshrl.u32 %v473, 16
        %v1807 = vrot.slane %v1805, 4
        %v1808 = vor.u32 %v1807, %v1803
        %v1809 = vrot.slane %v1808, 4
        %v1811 = vshll.u32 %v1637, 16
        %v1813 = vrot.slane %v1811, 5
        %v1814 = vsel %vm846, %v1809, %v1813
        %v1816 = vshrl.u32 %v474, 16
        %v1818 = vrot.slane %v1816, 4
        %v1819 = vshll.u32 %v474, 16
        %v1821 = vrot.slane %v1819, 5
        %v1822 = vor.u32 %v1818, %v1821
        %v1823 = vrot.slane %v1822, 4
        %v1825 = vshll.u32 %v475, 16
        %v1827 = vrot.slane %v1825, 5
        %v1828 = vsel %vm846, %v1823, %v1827
        %v1829 = vshrl.u32 %v475, 16
        %v1831 = vrot.slane %v1829, 4
        %v1832 = vor.u32 %v1831, %v1827
        %v1833 = vrot.slane %v1832, 4
        %v1835 = vshll.u32 %v1638, 16
        %v1837 = vrot.slane %v1835, 5
        %v1838 = vsel %vm846, %v1833, %v1837
        %v1840 = vshrl.u32 %v476, 16
        %v1842 = vrot.slane %v1840, 4
        %v1843 = vshll.u32 %v476, 16
        %v1845 = vrot.slane %v1843, 5
        %v1846 = vor.u32 %v1842, %v1845
        %v1847 = vrot.slane %v1846, 4
        %v1849 = vshll.u32 %v477, 16
        %v1851 = vrot.slane %v1849, 5
        %v1852 = vsel %vm846, %v1847, %v1851
        %v1853 = vshrl.u32 %v477, 16
        %v1855 = vrot.slane %v1853, 4
        %v1856 = vor.u32 %v1855, %v1851
        %v1857 = vrot.slane %v1856, 4
        %v1859 = vshll.u32 %v1639, 16
        %v1861 = vrot.slane %v1859, 5
        %v1862 = vsel %vm846, %v1857, %v1861
        %v1864 = vshrl.u32 %v478, 16
        %v1866 = vrot.slane %v1864, 4
        %v1867 = vshll.u32 %v478, 16
        %v1869 = vrot.slane %v1867, 5
        %v1870 = vor.u32 %v1866, %v1869
        %v1871 = vrot.slane %v1870, 4
        %v1873 = vshll.u32 %v479, 16
        %v1875 = vrot.slane %v1873, 5
        %v1876 = vsel %vm846, %v1871, %v1875
        %v1877 = vshrl.u32 %v479, 16
        %v1879 = vrot.slane %v1877, 4
        %v1880 = vor.u32 %v1879, %v1875
        %v1881 = vrot.slane %v1880, 4
        %v1883 = vshll.u32 %v1640, 16
        %v1885 = vrot.slane %v1883, 5
        %v1886 = vsel %vm846, %v1881, %v1885
        %v1888 = vshrl.u32 %v480, 16
        %v1890 = vrot.slane %v1888, 4
        %v1891 = vshll.u32 %v480, 16
        %v1893 = vrot.slane %v1891, 5
        %v1894 = vor.u32 %v1890, %v1893
        %v1895 = vrot.slane %v1894, 4
        %v1897 = vshll.u32 %v481, 16
        %v1899 = vrot.slane %v1897, 5
        %v1900 = vsel %vm846, %v1895, %v1899
        %v1901 = vshrl.u32 %v481, 16
        %v1903 = vrot.slane %v1901, 4
        %v1904 = vor.u32 %v1903, %v1899
        %v1905 = vrot.slane %v1904, 4
        %v1907 = vshll.u32 %v1641, 16
        %v1909 = vrot.slane %v1907, 5
        %v1910 = vsel %vm846, %v1905, %v1909
        %v1912 = vshrl.u32 %v482, 16
        %v1914 = vrot.slane %v1912, 4
        %v1915 = vshll.u32 %v482, 16
        %v1917 = vrot.slane %v1915, 5
        %v1918 = vor.u32 %v1914, %v1917
        %v1919 = vrot.slane %v1918, 4
        %v1921 = vshll.u32 %v483, 16
        %v1923 = vrot.slane %v1921, 5
        %v1924 = vsel %vm846, %v1919, %v1923
        %v1925 = vshrl.u32 %v483, 16
        %v1927 = vrot.slane %v1925, 4
        %v1928 = vor.u32 %v1927, %v1923
        %v1929 = vrot.slane %v1928, 4
        %v1931 = vshll.u32 %v1642, 16
        %v1933 = vrot.slane %v1931, 5
        %v1934 = vsel %vm846, %v1929, %v1933
        %v1936 = vshrl.u32 %v484, 16
        %v1938 = vrot.slane %v1936, 4
        %v1939 = vshll.u32 %v484, 16
        %v1941 = vrot.slane %v1939, 5
        %v1942 = vor.u32 %v1938, %v1941
        %v1943 = vrot.slane %v1942, 4
        %v1945 = vshll.u32 %v485, 16
        %v1947 = vrot.slane %v1945, 5
        %v1948 = vsel %vm846, %v1943, %v1947
        %v1949 = vshrl.u32 %v485, 16
        %v1951 = vrot.slane %v1949, 4
        %v1952 = vor.u32 %v1951, %v1947
        %v1953 = vrot.slane %v1952, 4
        %v1955 = vshll.u32 %v1643, 16
        %v1957 = vrot.slane %v1955, 5
        %v1958 = vsel %vm846, %v1953, %v1957
        %v1960 = vshrl.u32 %v486, 16
        %v1962 = vrot.slane %v1960, 4
        %v1963 = vshll.u32 %v486, 16
        %v1965 = vrot.slane %v1963, 5
        %v1966 = vor.u32 %v1962, %v1965
        %v1967 = vrot.slane %v1966, 4
        %v1969 = vshll.u32 %v487, 16
        %v1971 = vrot.slane %v1969, 5
        %v1972 = vsel %vm846, %v1967, %v1971
        %v1973 = vshrl.u32 %v487, 16
        %v1975 = vrot.slane %v1973, 4
        %v1976 = vor.u32 %v1975, %v1971
        %v1977 = vrot.slane %v1976, 4
        %v1979 = vshll.u32 %v1644, 16
        %v1981 = vrot.slane %v1979, 5
        %v1982 = vsel %vm846, %v1977, %v1981
        %v1984 = vshrl.u32 %v488, 16
        %v1986 = vrot.slane %v1984, 4
        %v1987 = vshll.u32 %v488, 16
        %v1989 = vrot.slane %v1987, 5
        %v1990 = vor.u32 %v1986, %v1989
        %v1991 = vrot.slane %v1990, 4
        %v1993 = vshll.u32 %v489, 16
        %v1995 = vrot.slane %v1993, 5
        %v1996 = vsel %vm846, %v1991, %v1995
        %v1997 = vshrl.u32 %v489, 16
        %v1999 = vrot.slane %v1997, 4
        %v2000 = vor.u32 %v1999, %v1995
        %v2001 = vrot.slane %v2000, 4
        %v2003 = vshll.u32 %v1645, 16
        %v2005 = vrot.slane %v2003, 5
        %v2006 = vsel %vm846, %v2001, %v2005
        %v2008 = vshrl.u32 %v490, 16
        %v2010 = vrot.slane %v2008, 4
        %v2011 = vshll.u32 %v490, 16
        %v2013 = vrot.slane %v2011, 5
        %v2014 = vor.u32 %v2010, %v2013
        %v2015 = vrot.slane %v2014, 4
        %v2017 = vshll.u32 %v491, 16
        %v2019 = vrot.slane %v2017, 5
        %v2020 = vsel %vm846, %v2015, %v2019
        %v2021 = vshrl.u32 %v491, 16
        %v2023 = vrot.slane %v2021, 4
        %v2024 = vor.u32 %v2023, %v2019
        %v2025 = vrot.slane %v2024, 4
        %v2027 = vshll.u32 %v1646, 16
        %v2029 = vrot.slane %v2027, 5
        %v2030 = vsel %vm846, %v2025, %v2029
        %v2031 = vunpack.c.l.b16 %v860
        %v2032 = vunpack.c.l.b16 %v870
        %v2033 = vunpack.c.l.b16 %v884
        %v2034 = vunpack.c.l.b16 %v894
        %v2035 = vunpack.c.l.b16 %v908
        %v2036 = vunpack.c.l.b16 %v918
        %v2037 = vunpack.c.l.b16 %v932
        %v2038 = vunpack.c.l.b16 %v942
        %v2039 = vunpack.c.l.b16 %v956
        %v2040 = vunpack.c.l.b16 %v966
        %v2041 = vunpack.c.l.b16 %v980
        %v2042 = vunpack.c.l.b16 %v990
        %v2043 = vunpack.c.l.b16 %v1004
        %v2044 = vunpack.c.l.b16 %v1014
        %v2045 = vunpack.c.l.b16 %v1028
        %v2046 = vunpack.c.l.b16 %v1038
        %v2047 = vunpack.c.l.b16 %v1052
        %v2048 = vunpack.c.l.b16 %v1062
        %v2049 = vunpack.c.l.b16 %v1076
        %v2050 = vunpack.c.l.b16 %v1086
        %v2051 = vunpack.c.l.b16 %v1100
        %v2052 = vunpack.c.l.b16 %v1110
        %v2053 = vunpack.c.l.b16 %v1124
        %v2054 = vunpack.c.l.b16 %v1134
        %v2055 = vunpack.c.l.b16 %v1148
        %v2056 = vunpack.c.l.b16 %v1158
        %v2057 = vunpack.c.l.b16 %v1172
        %v2058 = vunpack.c.l.b16 %v1182
        %v2059 = vunpack.c.l.b16 %v1196
        %v2060 = vunpack.c.l.b16 %v1206
        %v2061 = vunpack.c.l.b16 %v1220
        %v2062 = vunpack.c.l.b16 %v1230
        %v2063 = vpack.c.b16 %v2032, %v2031
        %v2064 = vpack.c.b16 %v2034, %v2033
        %v2065 = vpack.c.b16 %v2036, %v2035
        %v2066 = vpack.c.b16 %v2038, %v2037
        %v2067 = vpack.c.b16 %v2040, %v2039
        %v2068 = vpack.c.b16 %v2042, %v2041
        %v2069 = vpack.c.b16 %v2044, %v2043
        %v2070 = vpack.c.b16 %v2046, %v2045
        %v2071 = vpack.c.b16 %v2048, %v2047
        %v2072 = vpack.c.b16 %v2050, %v2049
        %v2073 = vpack.c.b16 %v2052, %v2051
        %v2074 = vpack.c.b16 %v2054, %v2053
        %v2075 = vpack.c.b16 %v2056, %v2055
        %v2076 = vpack.c.b16 %v2058, %v2057
        %v2077 = vpack.c.b16 %v2060, %v2059
        %v2078 = vpack.c.b16 %v2062, %v2061
        %v2095 = vunpack.c.l.b16 %v1260
        %v2096 = vunpack.c.l.b16 %v1270
        %v2097 = vunpack.c.l.b16 %v1284
        %v2098 = vunpack.c.l.b16 %v1294
        %v2099 = vunpack.c.l.b16 %v1308
        %v2100 = vunpack.c.l.b16 %v1318
        %v2101 = vunpack.c.l.b16 %v1332
        %v2102 = vunpack.c.l.b16 %v1342
        %v2103 = vunpack.c.l.b16 %v1356
        %v2104 = vunpack.c.l.b16 %v1366
        %v2105 = vunpack.c.l.b16 %v1380
        %v2106 = vunpack.c.l.b16 %v1390
        %v2107 = vunpack.c.l.b16 %v1404
        %v2108 = vunpack.c.l.b16 %v1414
        %v2109 = vunpack.c.l.b16 %v1428
        %v2110 = vunpack.c.l.b16 %v1438
        %v2111 = vunpack.c.l.b16 %v1452
        %v2112 = vunpack.c.l.b16 %v1462
        %v2113 = vunpack.c.l.b16 %v1476
        %v2114 = vunpack.c.l.b16 %v1486
        %v2115 = vunpack.c.l.b16 %v1500
        %v2116 = vunpack.c.l.b16 %v1510
        %v2117 = vunpack.c.l.b16 %v1524
        %v2118 = vunpack.c.l.b16 %v1534
        %v2119 = vunpack.c.l.b16 %v1548
        %v2120 = vunpack.c.l.b16 %v1558
        %v2121 = vunpack.c.l.b16 %v1572
        %v2122 = vunpack.c.l.b16 %v1582
        %v2123 = vunpack.c.l.b16 %v1596
        %v2124 = vunpack.c.l.b16 %v1606
        %v2125 = vunpack.c.l.b16 %v1620
        %v2126 = vunpack.c.l.b16 %v1630
        %v2127 = vpack.c.b16 %v2096, %v2095
        %v2128 = vpack.c.b16 %v2098, %v2097
        %v2129 = vpack.c.b16 %v2100, %v2099
        %v2130 = vpack.c.b16 %v2102, %v2101
        %v2131 = vpack.c.b16 %v2104, %v2103
        %v2132 = vpack.c.b16 %v2106, %v2105
        %v2133 = vpack.c.b16 %v2108, %v2107
        %v2134 = vpack.c.b16 %v2110, %v2109
        %v2135 = vpack.c.b16 %v2112, %v2111
        %v2136 = vpack.c.b16 %v2114, %v2113
        %v2137 = vpack.c.b16 %v2116, %v2115
        %v2138 = vpack.c.b16 %v2118, %v2117
        %v2139 = vpack.c.b16 %v2120, %v2119
        %v2140 = vpack.c.b16 %v2122, %v2121
        %v2141 = vpack.c.b16 %v2124, %v2123
        %v2142 = vpack.c.b16 %v2126, %v2125
        %v2159 = vunpack.c.l.b16 %v1660
        %v2160 = vunpack.c.l.b16 %v1670
        %v2161 = vunpack.c.l.b16 %v1684
        %v2162 = vunpack.c.l.b16 %v1694
        %v2163 = vunpack.c.l.b16 %v1708
        %v2164 = vunpack.c.l.b16 %v1718
        %v2165 = vunpack.c.l.b16 %v1732
        %v2166 = vunpack.c.l.b16 %v1742
        %v2167 = vunpack.c.l.b16 %v1756
        %v2168 = vunpack.c.l.b16 %v1766
        %v2169 = vunpack.c.l.b16 %v1780
        %v2170 = vunpack.c.l.b16 %v1790
        %v2171 = vunpack.c.l.b16 %v1804
        %v2172 = vunpack.c.l.b16 %v1814
        %v2173 = vunpack.c.l.b16 %v1828
        %v2174 = vunpack.c.l.b16 %v1838
        %v2175 = vunpack.c.l.b16 %v1852
        %v2176 = vunpack.c.l.b16 %v1862
        %v2177 = vunpack.c.l.b16 %v1876
        %v2178 = vunpack.c.l.b16 %v1886
        %v2179 = vunpack.c.l.b16 %v1900
        %v2180 = vunpack.c.l.b16 %v1910
        %v2181 = vunpack.c.l.b16 %v1924
        %v2182 = vunpack.c.l.b16 %v1934
        %v2183 = vunpack.c.l.b16 %v1948
        %v2184 = vunpack.c.l.b16 %v1958
        %v2185 = vunpack.c.l.b16 %v1972
        %v2186 = vunpack.c.l.b16 %v1982
        %v2187 = vunpack.c.l.b16 %v1996
        %v2188 = vunpack.c.l.b16 %v2006
        %v2189 = vunpack.c.l.b16 %v2020
        %v2190 = vunpack.c.l.b16 %v2030
        %v2191 = vpack.c.b16 %v2160, %v2159
        %v2192 = vpack.c.b16 %v2162, %v2161
        %v2193 = vpack.c.b16 %v2164, %v2163
        %v2194 = vpack.c.b16 %v2166, %v2165
        %v2195 = vpack.c.b16 %v2168, %v2167
        %v2196 = vpack.c.b16 %v2170, %v2169
        %v2197 = vpack.c.b16 %v2172, %v2171
        %v2198 = vpack.c.b16 %v2174, %v2173
        %v2199 = vpack.c.b16 %v2176, %v2175
        %v2200 = vpack.c.b16 %v2178, %v2177
        %v2201 = vpack.c.b16 %v2180, %v2179
        %v2202 = vpack.c.b16 %v2182, %v2181
        %v2203 = vpack.c.b16 %v2184, %v2183
        %v2204 = vpack.c.b16 %v2186, %v2185
        %v2205 = vpack.c.b16 %v2188, %v2187
        %v2206 = vpack.c.b16 %v2190, %v2189
        %v2223 = vld [vmem:[#allocation8 + $0xc0] sm:$0xf]
        %v2224 = vld [vmem:[#allocation8 + $0xc4] sm:$0xf]
        %v2225 = vld [vmem:[#allocation8 + $0xc8] sm:$0xf]
        %v2226 = vld [vmem:[#allocation8 + $0xcc] sm:$0xf]
        %v2227 = vld [vmem:[#allocation8 + $0xd0] sm:$0xf]
        %v2228 = vld [vmem:[#allocation8 + $0xd4] sm:$0xf]
        %v2229 = vld [vmem:[#allocation8 + $0xd8] sm:$0xf]
        %v2230 = vld [vmem:[#allocation8 + $0xdc] sm:$0xf]
        %v2231 = vld [vmem:[#allocation8 + $0xe0] sm:$0xf]
        %v2232 = vld [vmem:[#allocation8 + $0xe4] sm:$0xf]
        %v2233 = vld [vmem:[#allocation8 + $0xe8] sm:$0xf]
        %v2234 = vld [vmem:[#allocation8 + $0xec] sm:$0xf]
        %v2235 = vld [vmem:[#allocation8 + $0xf0] sm:$0xf]
        %v2236 = vld [vmem:[#allocation8 + $0xf4] sm:$0xf]
        %v2237 = vld [vmem:[#allocation8 + $0xf8] sm:$0xf]
        %v2238 = vld [vmem:[#allocation8 + $0xfc] sm:$0xf]
        %v2239 = vld [vmem:[#allocation8 + $0x100] sm:$0xf]
        %v2240 = vld [vmem:[#allocation8 + $0x104] sm:$0xf]
        %v2241 = vld [vmem:[#allocation8 + $0x108] sm:$0xf]
        %v2242 = vld [vmem:[#allocation8 + $0x10c] sm:$0xf]
        %v2243 = vld [vmem:[#allocation8 + $0x110] sm:$0xf]
        %v2244 = vld [vmem:[#allocation8 + $0x114] sm:$0xf]
        %v2245 = vld [vmem:[#allocation8 + $0x118] sm:$0xf]
        %v2246 = vld [vmem:[#allocation8 + $0x11c] sm:$0xf]
        %v2247 = vld [vmem:[#allocation8 + $0x120] sm:$0xf]
        %v2248 = vld [vmem:[#allocation8 + $0x124] sm:$0xf]
        %v2249 = vld [vmem:[#allocation8 + $0x128] sm:$0xf]
        %v2250 = vld [vmem:[#allocation8 + $0x12c] sm:$0xf]
        %v2251 = vld [vmem:[#allocation8 + $0x130] sm:$0xf]
        %v2252 = vld [vmem:[#allocation8 + $0x134] sm:$0xf]
        %v2253 = vld [vmem:[#allocation8 + $0x138] sm:$0xf]
        %v2254 = vld [vmem:[#allocation8 + $0x13c] sm:$0xf]
        %v2255 = vld [vmem:[#allocation8 + $0x140] sm:$0xf]
        %v2256 = vld [vmem:[#allocation8 + $0x144] sm:$0xf]
        %v2257 = vld [vmem:[#allocation8 + $0x148] sm:$0xf]
        %v2258 = vld [vmem:[#allocation8 + $0x14c] sm:$0xf]
        %v2259 = vld [vmem:[#allocation8 + $0x150] sm:$0xf]
        %v2260 = vld [vmem:[#allocation8 + $0x154] sm:$0xf]
        %v2261 = vld [vmem:[#allocation8 + $0x158] sm:$0xf]
        %v2262 = vld [vmem:[#allocation8 + $0x15c] sm:$0xf]
        %v2263 = vld [vmem:[#allocation8 + $0x160] sm:$0xf]
        %v2264 = vld [vmem:[#allocation8 + $0x164] sm:$0xf]
        %v2265 = vld [vmem:[#allocation8 + $0x168] sm:$0xf]
        %v2266 = vld [vmem:[#allocation8 + $0x16c] sm:$0xf]
        %v2267 = vld [vmem:[#allocation8 + $0x170] sm:$0xf]
        %v2268 = vld [vmem:[#allocation8 + $0x174] sm:$0xf]
        %v2269 = vld [vmem:[#allocation8 + $0x178] sm:$0xf]
        %v2270 = vld [vmem:[#allocation8 + $0x17c] sm:$0xf]
        %v2319 = vunpack.c.l.b16 %v2223
        %v2320 = vunpack.c.l.b16 %v2224
        %v2321 = vunpack.c.l.b16 %v2225
        %v2322 = vunpack.c.l.b16 %v2226
        %v2323 = vunpack.c.l.b16 %v2227
        %v2324 = vunpack.c.l.b16 %v2228
        %v2325 = vunpack.c.l.b16 %v2229
        %v2326 = vunpack.c.l.b16 %v2230
        %v2327 = vunpack.c.l.b16 %v2231
        %v2328 = vunpack.c.l.b16 %v2232
        %v2329 = vunpack.c.l.b16 %v2233
        %v2330 = vunpack.c.l.b16 %v2234
        %v2331 = vunpack.c.l.b16 %v2235
        %v2332 = vunpack.c.l.b16 %v2236
        %v2333 = vunpack.c.l.b16 %v2237
        %v2334 = vunpack.c.l.b16 %v2238
        %v2335 = vunpack.c.l.b16 %v2239
        %v2336 = vunpack.c.l.b16 %v2240
        %v2337 = vunpack.c.l.b16 %v2241
        %v2338 = vunpack.c.l.b16 %v2242
        %v2339 = vunpack.c.l.b16 %v2243
        %v2340 = vunpack.c.l.b16 %v2244
        %v2341 = vunpack.c.l.b16 %v2245
        %v2342 = vunpack.c.l.b16 %v2246
        %v2343 = vunpack.c.l.b16 %v2247
        %v2344 = vunpack.c.l.b16 %v2248
        %v2345 = vunpack.c.l.b16 %v2249
        %v2346 = vunpack.c.l.b16 %v2250
        %v2347 = vunpack.c.l.b16 %v2251
        %v2348 = vunpack.c.l.b16 %v2252
        %v2349 = vunpack.c.l.b16 %v2253
        %v2350 = vunpack.c.l.b16 %v2254
        %v2351 = vunpack.c.l.b16 %v2255
        %v2352 = vunpack.c.l.b16 %v2256
        %v2353 = vunpack.c.l.b16 %v2257
        %v2354 = vunpack.c.l.b16 %v2258
        %v2355 = vunpack.c.l.b16 %v2259
        %v2356 = vunpack.c.l.b16 %v2260
        %v2357 = vunpack.c.l.b16 %v2261
        %v2358 = vunpack.c.l.b16 %v2262
        %v2359 = vunpack.c.l.b16 %v2263
        %v2360 = vunpack.c.l.b16 %v2264
        %v2361 = vunpack.c.l.b16 %v2265
        %v2362 = vunpack.c.l.b16 %v2266
        %v2363 = vunpack.c.l.b16 %v2267
        %v2364 = vunpack.c.l.b16 %v2268
        %v2365 = vunpack.c.l.b16 %v2269
        %v2366 = vunpack.c.l.b16 %v2270
        %v2367 = vpack.c.b16 %v2320, %v2319
        %v2368 = vpack.c.b16 %v2322, %v2321
        %v2369 = vpack.c.b16 %v2324, %v2323
        %v2370 = vpack.c.b16 %v2326, %v2325
        %v2371 = vpack.c.b16 %v2328, %v2327
        %v2372 = vpack.c.b16 %v2330, %v2329
        %v2373 = vpack.c.b16 %v2332, %v2331
        %v2374 = vpack.c.b16 %v2334, %v2333
        %v2375 = vpack.c.b16 %v2336, %v2335
        %v2376 = vpack.c.b16 %v2338, %v2337
        %v2377 = vpack.c.b16 %v2340, %v2339
        %v2378 = vpack.c.b16 %v2342, %v2341
        %v2379 = vpack.c.b16 %v2344, %v2343
        %v2380 = vpack.c.b16 %v2346, %v2345
        %v2381 = vpack.c.b16 %v2348, %v2347
        %v2382 = vpack.c.b16 %v2350, %v2349
        %v2383 = vpack.c.b16 %v2352, %v2351
        %v2384 = vpack.c.b16 %v2354, %v2353
        %v2385 = vpack.c.b16 %v2356, %v2355
        %v2386 = vpack.c.b16 %v2358, %v2357
        %v2387 = vpack.c.b16 %v2360, %v2359
        %v2388 = vpack.c.b16 %v2362, %v2361
        %v2389 = vpack.c.b16 %v2364, %v2363
        %v2390 = vpack.c.b16 %v2366, %v2365
        %2415 = vmatprep.subr.bf16.mxu0 0
        %2416 = vmatpush1.bf16.msra.mxu0 %v2374
        %2417 = vmatprep.subr.bf16.mxu0 0
        %2418 = vmatpush1.bf16.msra.mxu0 %v2373
        %2419 = vmatprep.subr.bf16.mxu0 0
        %2420 = vmatpush1.bf16.msra.mxu0 %v2372
        %2421 = vmatprep.subr.bf16.mxu0 0
        %2422 = vmatpush1.bf16.msra.mxu0 %v2371
        %2423 = vmatprep.subr.bf16.mxu0 0
        %2424 = vmatpush1.bf16.msra.mxu0 %v2370
        %2425 = vmatprep.subr.bf16.mxu0 0
        %2426 = vmatpush1.bf16.msra.mxu0 %v2369
        %2427 = vmatprep.subr.bf16.mxu0 0
        %2428 = vmatpush1.bf16.msra.mxu0 %v2368
        %2429 = vmatprep.subr.bf16.mxu0 0
        %2430 = vmatpush1.bf16.msra.mxu0 %v2367
        %2431 = vmatprep.subr.bf16.mxu0 0
        %2432 = vmatpush2.bf16.msra.mxu0 %v2382
        %2433 = vmatprep.subr.bf16.mxu0 0
        %2434 = vmatpush2.bf16.msra.mxu0 %v2381
        %2435 = vmatprep.subr.bf16.mxu0 0
        %2436 = vmatpush2.bf16.msra.mxu0 %v2380
        %2437 = vmatprep.subr.bf16.mxu0 0
        %2438 = vmatpush2.bf16.msra.mxu0 %v2379
        %2439 = vmatprep.subr.bf16.mxu0 0
        %2440 = vmatpush2.bf16.msra.mxu0 %v2378
        %2441 = vmatprep.subr.bf16.mxu0 0
        %2442 = vmatpush2.bf16.msra.mxu0 %v2377
        %2443 = vmatprep.subr.bf16.mxu0 0
        %2444 = vmatpush2.bf16.msra.mxu0 %v2376
        %2445 = vmatprep.subr.bf16.mxu0 0
        %2446 = vmatpush2.bf16.msra.mxu0 %v2375
        %2447 = vmatprep.mubr.bf16.mxu0 %v2127
        %2448 = vmatmul.mubr.bf16.gmra.mxu0 %v2063
        %v2449 = vpop.f32.mrf.mxu0
        %v2450 = vadd.f32 0.0, %v2449
        %v2451 = vpop.f32.mrf.mxu0
        %v2452 = vpop.f32.mrf.mxu0
        %v2453 = vadd.f32 0.0, %v2452
        %v2454 = vpop.f32.mrf.mxu0
        %2455 = vmatprep.mubr.bf16.mxu0 %v2128
        %2456 = vmatmul.mubr.bf16.gmra.mxu0 %v2064
        %v2457 = vpop.f32.mrf.mxu0
        %v2458 = vadd.f32 0.0, %v2457
        %v2459 = vpop.f32.mrf.mxu0
        %v2460 = vpop.f32.mrf.mxu0
        %v2461 = vadd.f32 0.0, %v2460
        %v2462 = vpop.f32.mrf.mxu0
        %2463 = vmatprep.mubr.bf16.mxu0 %v2129
        %2464 = vmatmul.mubr.bf16.gmra.mxu0 %v2065
        %v2465 = vpop.f32.mrf.mxu0
        %v2466 = vadd.f32 0.0, %v2465
        %v2467 = vpop.f32.mrf.mxu0
        %v2468 = vpop.f32.mrf.mxu0
        %v2469 = vadd.f32 0.0, %v2468
        %v2470 = vpop.f32.mrf.mxu0
        %2471 = vmatprep.mubr.bf16.mxu0 %v2130
        %2472 = vmatmul.mubr.bf16.gmra.mxu0 %v2066
        %v2473 = vpop.f32.mrf.mxu0
        %v2474 = vadd.f32 0.0, %v2473
        %v2475 = vpop.f32.mrf.mxu0
        %v2476 = vpop.f32.mrf.mxu0
        %v2477 = vadd.f32 0.0, %v2476
        %v2478 = vpop.f32.mrf.mxu0
        %2479 = vmatprep.mubr.bf16.mxu0 %v2131
        %2480 = vmatmul.mubr.bf16.gmra.mxu0 %v2067
        %v2481 = vpop.f32.mrf.mxu0
        %v2482 = vadd.f32 0.0, %v2481
        %v2483 = vpop.f32.mrf.mxu0
        %v2484 = vpop.f32.mrf.mxu0
        %v2485 = vadd.f32 0.0, %v2484
        %v2486 = vpop.f32.mrf.mxu0
        %2487 = vmatprep.mubr.bf16.mxu0 %v2132
        %2488 = vmatmul.mubr.bf16.gmra.mxu0 %v2068
        %v2489 = vpop.f32.mrf.mxu0
        %v2490 = vadd.f32 0.0, %v2489
        %v2491 = vpop.f32.mrf.mxu0
        %v2492 = vpop.f32.mrf.mxu0
        %v2493 = vadd.f32 0.0, %v2492
        %v2494 = vpop.f32.mrf.mxu0
        %2495 = vmatprep.mubr.bf16.mxu0 %v2133
        %2496 = vmatmul.mubr.bf16.gmra.mxu0 %v2069
        %v2497 = vpop.f32.mrf.mxu0
        %v2498 = vadd.f32 0.0, %v2497
        %v2499 = vpop.f32.mrf.mxu0
        %v2500 = vpop.f32.mrf.mxu0
        %v2501 = vadd.f32 0.0, %v2500
        %v2502 = vpop.f32.mrf.mxu0
        %2503 = vmatprep.mubr.bf16.mxu0 %v2134
        %2504 = vmatmul.mubr.bf16.gmra.mxu0 %v2070
        %v2505 = vpop.f32.mrf.mxu0
        %v2506 = vadd.f32 0.0, %v2505
        %v2507 = vpop.f32.mrf.mxu0
        %v2508 = vpop.f32.mrf.mxu0
        %v2509 = vadd.f32 0.0, %v2508
        %v2510 = vpop.f32.mrf.mxu0
        %2511 = vmatprep.mubr.bf16.mxu0 %v2135
        %2512 = vmatmul.mubr.bf16.gmra.mxu0 %v2071
        %v2513 = vpop.f32.mrf.mxu0
        %v2514 = vadd.f32 0.0, %v2513
        %v2515 = vpop.f32.mrf.mxu0
        %v2516 = vpop.f32.mrf.mxu0
        %v2517 = vadd.f32 0.0, %v2516
        %v2518 = vpop.f32.mrf.mxu0
        %2519 = vmatprep.mubr.bf16.mxu0 %v2136
        %2520 = vmatmul.mubr.bf16.gmra.mxu0 %v2072
        %v2521 = vpop.f32.mrf.mxu0
        %v2522 = vadd.f32 0.0, %v2521
        %v2523 = vpop.f32.mrf.mxu0
        %v2524 = vpop.f32.mrf.mxu0
        %v2525 = vadd.f32 0.0, %v2524
        %v2526 = vpop.f32.mrf.mxu0
        %2527 = vmatprep.mubr.bf16.mxu0 %v2137
        %2528 = vmatmul.mubr.bf16.gmra.mxu0 %v2073
        %v2529 = vpop.f32.mrf.mxu0
        %v2530 = vadd.f32 0.0, %v2529
        %v2531 = vpop.f32.mrf.mxu0
        %v2532 = vpop.f32.mrf.mxu0
        %v2533 = vadd.f32 0.0, %v2532
        %v2534 = vpop.f32.mrf.mxu0
        %2535 = vmatprep.mubr.bf16.mxu0 %v2138
        %2536 = vmatmul.mubr.bf16.gmra.mxu0 %v2074
        %v2537 = vpop.f32.mrf.mxu0
        %v2538 = vadd.f32 0.0, %v2537
        %v2539 = vpop.f32.mrf.mxu0
        %v2540 = vpop.f32.mrf.mxu0
        %v2541 = vadd.f32 0.0, %v2540
        %v2542 = vpop.f32.mrf.mxu0
        %2543 = vmatprep.mubr.bf16.mxu0 %v2139
        %2544 = vmatmul.mubr.bf16.gmra.mxu0 %v2075
        %v2545 = vpop.f32.mrf.mxu0
        %v2546 = vadd.f32 0.0, %v2545
        %v2547 = vpop.f32.mrf.mxu0
        %v2548 = vpop.f32.mrf.mxu0
        %v2549 = vadd.f32 0.0, %v2548
        %v2550 = vpop.f32.mrf.mxu0
        %2551 = vmatprep.mubr.bf16.mxu0 %v2140
        %2552 = vmatmul.mubr.bf16.gmra.mxu0 %v2076
        %v2553 = vpop.f32.mrf.mxu0
        %v2554 = vadd.f32 0.0, %v2553
        %v2555 = vpop.f32.mrf.mxu0
        %v2556 = vpop.f32.mrf.mxu0
        %v2557 = vadd.f32 0.0, %v2556
        %v2558 = vpop.f32.mrf.mxu0
        %2559 = vmatprep.mubr.bf16.mxu0 %v2141
        %2560 = vmatmul.mubr.bf16.gmra.mxu0 %v2077
        %v2561 = vpop.f32.mrf.mxu0
        %v2562 = vadd.f32 0.0, %v2561
        %v2563 = vpop.f32.mrf.mxu0
        %v2564 = vpop.f32.mrf.mxu0
        %v2565 = vadd.f32 0.0, %v2564
        %v2566 = vpop.f32.mrf.mxu0
        %2567 = vmatprep.mubr.bf16.mxu0 %v2142
        %2568 = vmatmul.mubr.bf16.gmra.mxu0 %v2078
        %v2569 = vpop.f32.mrf.mxu0
        %v2570 = vadd.f32 0.0, %v2569
        %v2571 = vpop.f32.mrf.mxu0
        %v2572 = vpop.f32.mrf.mxu0
        %v2573 = vadd.f32 0.0, %v2572
        %v2574 = vpop.f32.mrf.mxu0
        %2575 = vdwg.mxu0
        %2576 = vmatprep.subr.bf16.mxu0 0
        %2577 = vmatpush1.bf16.msra.mxu0 %v2390
        %2578 = vmatprep.subr.bf16.mxu0 0
        %2579 = vmatpush1.bf16.msra.mxu0 %v2389
        %2580 = vmatprep.subr.bf16.mxu0 0
        %2581 = vmatpush1.bf16.msra.mxu0 %v2388
        %2582 = vmatprep.subr.bf16.mxu0 0
        %2583 = vmatpush1.bf16.msra.mxu0 %v2387
        %2584 = vmatprep.subr.bf16.mxu0 0
        %2585 = vmatpush1.bf16.msra.mxu0 %v2386
        %2586 = vmatprep.subr.bf16.mxu0 0
        %2587 = vmatpush1.bf16.msra.mxu0 %v2385
        %2588 = vmatprep.subr.bf16.mxu0 0
        %2589 = vmatpush1.bf16.msra.mxu0 %v2384
        %2590 = vmatprep.subr.bf16.mxu0 0
        %2591 = vmatpush1.bf16.msra.mxu0 %v2383
        %2592 = vmatprep.subr.bf16.mxu0 0
        %2593 = vmatpush2.bf16.msra.mxu0 0
        %2594 = vmatprep.subr.bf16.mxu0 0
        %2595 = vmatpush2.bf16.msra.mxu0 0
        %2596 = vmatprep.subr.bf16.mxu0 0
        %2597 = vmatpush2.bf16.msra.mxu0 0
        %2598 = vmatprep.subr.bf16.mxu0 0
        %2599 = vmatpush2.bf16.msra.mxu0 0
        %2600 = vmatprep.subr.bf16.mxu0 0
        %2601 = vmatpush2.bf16.msra.mxu0 0
        %2602 = vmatprep.subr.bf16.mxu0 0
        %2603 = vmatpush2.bf16.msra.mxu0 0
        %2604 = vmatprep.subr.bf16.mxu0 0
        %2605 = vmatpush2.bf16.msra.mxu0 0
        %2606 = vmatprep.subr.bf16.mxu0 0
        %2607 = vmatpush2.bf16.msra.mxu0 0
        %2608 = vmatprep.mubr.bf16.mxu0 0
        %2609 = vmatmul.mubr.bf16.gmra.mxu0 %v2191
        %v2610 = vpop.f32.mrf.mxu0
        %v2611 = vadd.f32 %v2450, %v2610
        %v2612 = vpop.f32.mrf.mxu0
        %v2613 = vpop.f32.mrf.mxu0
        %v2614 = vadd.f32 %v2453, %v2613
        %v2615 = vpop.f32.mrf.mxu0
        %2616 = vmatprep.mubr.bf16.mxu0 0
        %2617 = vmatmul.mubr.bf16.gmra.mxu0 %v2192
        %v2618 = vpop.f32.mrf.mxu0
        %v2619 = vadd.f32 %v2458, %v2618
        %v2620 = vpop.f32.mrf.mxu0
        %v2621 = vpop.f32.mrf.mxu0
        %v2622 = vadd.f32 %v2461, %v2621
        %v2623 = vpop.f32.mrf.mxu0
        %2624 = vmatprep.mubr.bf16.mxu0 0
        %2625 = vmatmul.mubr.bf16.gmra.mxu0 %v2193
        %v2626 = vpop.f32.mrf.mxu0
        %v2627 = vadd.f32 %v2466, %v2626
        %v2628 = vpop.f32.mrf.mxu0
        %v2629 = vpop.f32.mrf.mxu0
        %v2630 = vadd.f32 %v2469, %v2629
        %v2631 = vpop.f32.mrf.mxu0
        %2632 = vmatprep.mubr.bf16.mxu0 0
        %2633 = vmatmul.mubr.bf16.gmra.mxu0 %v2194
        %v2634 = vpop.f32.mrf.mxu0
        %v2635 = vadd.f32 %v2474, %v2634
        %v2636 = vpop.f32.mrf.mxu0
        %v2637 = vpop.f32.mrf.mxu0
        %v2638 = vadd.f32 %v2477, %v2637
        %v2639 = vpop.f32.mrf.mxu0
        %2640 = vmatprep.mubr.bf16.mxu0 0
        %2641 = vmatmul.mubr.bf16.gmra.mxu0 %v2195
        %v2642 = vpop.f32.mrf.mxu0
        %v2643 = vadd.f32 %v2482, %v2642
        %v2644 = vpop.f32.mrf.mxu0
        %v2645 = vpop.f32.mrf.mxu0
        %v2646 = vadd.f32 %v2485, %v2645
        %v2647 = vpop.f32.mrf.mxu0
        %2648 = vmatprep.mubr.bf16.mxu0 0
        %2649 = vmatmul.mubr.bf16.gmra.mxu0 %v2196
        %v2650 = vpop.f32.mrf.mxu0
        %v2651 = vadd.f32 %v2490, %v2650
        %v2652 = vpop.f32.mrf.mxu0
        %v2653 = vpop.f32.mrf.mxu0
        %v2654 = vadd.f32 %v2493, %v2653
        %v2655 = vpop.f32.mrf.mxu0
        %2656 = vmatprep.mubr.bf16.mxu0 0
        %2657 = vmatmul.mubr.bf16.gmra.mxu0 %v2197
        %v2658 = vpop.f32.mrf.mxu0
        %v2659 = vadd.f32 %v2498, %v2658
        %v2660 = vpop.f32.mrf.mxu0
        %v2661 = vpop.f32.mrf.mxu0
        %v2662 = vadd.f32 %v2501, %v2661
        %v2663 = vpop.f32.mrf.mxu0
        %2664 = vmatprep.mubr.bf16.mxu0 0
        %2665 = vmatmul.mubr.bf16.gmra.mxu0 %v2198
        %v2666 = vpop.f32.mrf.mxu0
        %v2667 = vadd.f32 %v2506, %v2666
        %v2668 = vpop.f32.mrf.mxu0
        %v2669 = vpop.f32.mrf.mxu0
        %v2670 = vadd.f32 %v2509, %v2669
        %v2671 = vpop.f32.mrf.mxu0
        %2672 = vmatprep.mubr.bf16.mxu0 0
        %2673 = vmatmul.mubr.bf16.gmra.mxu0 %v2199
        %v2674 = vpop.f32.mrf.mxu0
        %v2675 = vadd.f32 %v2514, %v2674
        %v2676 = vpop.f32.mrf.mxu0
        %v2677 = vpop.f32.mrf.mxu0
        %v2678 = vadd.f32 %v2517, %v2677
        %v2679 = vpop.f32.mrf.mxu0
        %2680 = vmatprep.mubr.bf16.mxu0 0
        %2681 = vmatmul.mubr.bf16.gmra.mxu0 %v2200
        %v2682 = vpop.f32.mrf.mxu0
        %v2683 = vadd.f32 %v2522, %v2682
        %v2684 = vpop.f32.mrf.mxu0
        %v2685 = vpop.f32.mrf.mxu0
        %v2686 = vadd.f32 %v2525, %v2685
        %v2687 = vpop.f32.mrf.mxu0
        %2688 = vmatprep.mubr.bf16.mxu0 0
        %2689 = vmatmul.mubr.bf16.gmra.mxu0 %v2201
        %v2690 = vpop.f32.mrf.mxu0
        %v2691 = vadd.f32 %v2530, %v2690
        %v2692 = vpop.f32.mrf.mxu0
        %v2693 = vpop.f32.mrf.mxu0
        %v2694 = vadd.f32 %v2533, %v2693
        %v2695 = vpop.f32.mrf.mxu0
        %2696 = vmatprep.mubr.bf16.mxu0 0
        %2697 = vmatmul.mubr.bf16.gmra.mxu0 %v2202
        %v2698 = vpop.f32.mrf.mxu0
        %v2699 = vadd.f32 %v2538, %v2698
        %v2700 = vpop.f32.mrf.mxu0
        %v2701 = vpop.f32.mrf.mxu0
        %v2702 = vadd.f32 %v2541, %v2701
        %v2703 = vpop.f32.mrf.mxu0
        %2704 = vmatprep.mubr.bf16.mxu0 0
        %2705 = vmatmul.mubr.bf16.gmra.mxu0 %v2203
        %v2706 = vpop.f32.mrf.mxu0
        %v2707 = vadd.f32 %v2546, %v2706
        %v2708 = vpop.f32.mrf.mxu0
        %v2709 = vpop.f32.mrf.mxu0
        %v2710 = vadd.f32 %v2549, %v2709
        %v2711 = vpop.f32.mrf.mxu0
        %2712 = vmatprep.mubr.bf16.mxu0 0
        %2713 = vmatmul.mubr.bf16.gmra.mxu0 %v2204
        %v2714 = vpop.f32.mrf.mxu0
        %v2715 = vadd.f32 %v2554, %v2714
        %v2716 = vpop.f32.mrf.mxu0
        %v2717 = vpop.f32.mrf.mxu0
        %v2718 = vadd.f32 %v2557, %v2717
        %v2719 = vpop.f32.mrf.mxu0
        %2720 = vmatprep.mubr.bf16.mxu0 0
        %2721 = vmatmul.mubr.bf16.gmra.mxu0 %v2205
        %v2722 = vpop.f32.mrf.mxu0
        %v2723 = vadd.f32 %v2562, %v2722
        %v2724 = vpop.f32.mrf.mxu0
        %v2725 = vpop.f32.mrf.mxu0
        %v2726 = vadd.f32 %v2565, %v2725
        %v2727 = vpop.f32.mrf.mxu0
        %2728 = vmatprep.mubr.bf16.mxu0 0
        %2729 = vmatmul.mubr.bf16.gmra.mxu0 %v2206
        %v2730 = vpop.f32.mrf.mxu0
        %v2731 = vadd.f32 %v2570, %v2730
        %v2732 = vpop.f32.mrf.mxu0
        %v2733 = vpop.f32.mrf.mxu0
        %v2734 = vadd.f32 %v2573, %v2733
        %v2735 = vpop.f32.mrf.mxu0
        %2736 = vdwg.mxu0
        %v2785 = vunpack.c.l.b16 %v780
        %v2786 = vunpack.c.l.b16 %v781
        %v2787 = vunpack.c.l.b16 %v782
        %v2788 = vunpack.c.l.b16 %v783
        %v2789 = vunpack.c.l.b16 %v784
        %v2790 = vunpack.c.l.b16 %v785
        %v2791 = vunpack.c.l.b16 %v786
        %v2792 = vunpack.c.l.b16 %v787
        %v2793 = vunpack.c.l.b16 %v788
        %v2794 = vunpack.c.l.b16 %v789
        %v2795 = vunpack.c.l.b16 %v790
        %v2796 = vunpack.c.l.b16 %v791
        %v2797 = vunpack.c.l.b16 %v792
        %v2798 = vunpack.c.l.b16 %v793
        %v2799 = vunpack.c.l.b16 %v794
        %v2800 = vunpack.c.l.b16 %v795
        %v2801 = vunpack.c.l.b16 %v796
        %v2802 = vunpack.c.l.b16 %v797
        %v2803 = vunpack.c.l.b16 %v798
        %v2804 = vunpack.c.l.b16 %v799
        %v2805 = vunpack.c.l.b16 %v800
        %v2806 = vunpack.c.l.b16 %v801
        %v2807 = vunpack.c.l.b16 %v802
        %v2808 = vunpack.c.l.b16 %v803
        %v2809 = vunpack.c.l.b16 %v804
        %v2810 = vunpack.c.l.b16 %v805
        %v2811 = vunpack.c.l.b16 %v806
        %v2812 = vunpack.c.l.b16 %v807
        %v2813 = vunpack.c.l.b16 %v808
        %v2814 = vunpack.c.l.b16 %v809
        %v2815 = vunpack.c.l.b16 %v810
        %v2816 = vunpack.c.l.b16 %v811
        %v2817 = vunpack.c.l.b16 %v812
        %v2818 = vunpack.c.l.b16 %v813
        %v2819 = vunpack.c.l.b16 %v814
        %v2820 = vunpack.c.l.b16 %v815
        %v2821 = vunpack.c.l.b16 %v816
        %v2822 = vunpack.c.l.b16 %v817
        %v2823 = vunpack.c.l.b16 %v818
        %v2824 = vunpack.c.l.b16 %v819
        %v2825 = vunpack.c.l.b16 %v820
        %v2826 = vunpack.c.l.b16 %v821
        %v2827 = vunpack.c.l.b16 %v822
        %v2828 = vunpack.c.l.b16 %v823
        %v2829 = vunpack.c.l.b16 %v824
        %v2830 = vunpack.c.l.b16 %v825
        %v2831 = vunpack.c.l.b16 %v826
        %v2832 = vunpack.c.l.b16 %v827
        %v2833 = vpack.c.b16 %v2786, %v2785
        %v2834 = vpack.c.b16 %v2788, %v2787
        %v2835 = vpack.c.b16 %v2790, %v2789
        %v2836 = vpack.c.b16 %v2792, %v2791
        %v2837 = vpack.c.b16 %v2794, %v2793
        %v2838 = vpack.c.b16 %v2796, %v2795
        %v2839 = vpack.c.b16 %v2798, %v2797
        %v2840 = vpack.c.b16 %v2800, %v2799
        %v2841 = vpack.c.b16 %v2802, %v2801
        %v2842 = vpack.c.b16 %v2804, %v2803
        %v2843 = vpack.c.b16 %v2806, %v2805
        %v2844 = vpack.c.b16 %v2808, %v2807
        %v2845 = vpack.c.b16 %v2810, %v2809
        %v2846 = vpack.c.b16 %v2812, %v2811
        %v2847 = vpack.c.b16 %v2814, %v2813
        %v2848 = vpack.c.b16 %v2816, %v2815
        %v2849 = vpack.c.b16 %v2818, %v2817
        %v2850 = vpack.c.b16 %v2820, %v2819
        %v2851 = vpack.c.b16 %v2822, %v2821
        %v2852 = vpack.c.b16 %v2824, %v2823
        %v2853 = vpack.c.b16 %v2826, %v2825
        %v2854 = vpack.c.b16 %v2828, %v2827
        %v2855 = vpack.c.b16 %v2830, %v2829
        %v2856 = vpack.c.b16 %v2832, %v2831
        %2881 = vmatprep.subr.bf16.mxu0 0
        %2882 = vmatpush1.bf16.msra.mxu0 %v2840
        %2883 = vmatprep.subr.bf16.mxu0 0
        %2884 = vmatpush1.bf16.msra.mxu0 %v2839
        %2885 = vmatprep.subr.bf16.mxu0 0
        %2886 = vmatpush1.bf16.msra.mxu0 %v2838
        %2887 = vmatprep.subr.bf16.mxu0 0
        %2888 = vmatpush1.bf16.msra.mxu0 %v2837
        %2889 = vmatprep.subr.bf16.mxu0 0
        %2890 = vmatpush1.bf16.msra.mxu0 %v2836
        %2891 = vmatprep.subr.bf16.mxu0 0
        %2892 = vmatpush1.bf16.msra.mxu0 %v2835
        %2893 = vmatprep.subr.bf16.mxu0 0
        %2894 = vmatpush1.bf16.msra.mxu0 %v2834
        %2895 = vmatprep.subr.bf16.mxu0 0
        %2896 = vmatpush1.bf16.msra.mxu0 %v2833
        %2897 = vmatprep.subr.bf16.mxu0 0
        %2898 = vmatpush2.bf16.msra.mxu0 %v2848
        %2899 = vmatprep.subr.bf16.mxu0 0
        %2900 = vmatpush2.bf16.msra.mxu0 %v2847
        %2901 = vmatprep.subr.bf16.mxu0 0
        %2902 = vmatpush2.bf16.msra.mxu0 %v2846
        %2903 = vmatprep.subr.bf16.mxu0 0
        %2904 = vmatpush2.bf16.msra.mxu0 %v2845
        %2905 = vmatprep.subr.bf16.mxu0 0
        %2906 = vmatpush2.bf16.msra.mxu0 %v2844
        %2907 = vmatprep.subr.bf16.mxu0 0
        %2908 = vmatpush2.bf16.msra.mxu0 %v2843
        %2909 = vmatprep.subr.bf16.mxu0 0
        %2910 = vmatpush2.bf16.msra.mxu0 %v2842
        %2911 = vmatprep.subr.bf16.mxu0 0
        %2912 = vmatpush2.bf16.msra.mxu0 %v2841
        %2913 = vmatprep.mubr.bf16.mxu0 %v652
        %2914 = vmatmul.mubr.bf16.gmra.mxu0 %v556
        %v2915 = vpop.f32.mrf.mxu0
        %v2916 = vadd.f32 %v2611, %v2915
        %v2917 = vpop.f32.mrf.mxu0
        %v2918 = vpop.f32.mrf.mxu0
        %v2919 = vadd.f32 %v2614, %v2918
        %v2920 = vpop.f32.mrf.mxu0
        %2921 = vmatprep.mubr.bf16.mxu0 %v653
        %2922 = vmatmul.mubr.bf16.gmra.mxu0 %v557
        %v2923 = vpop.f32.mrf.mxu0
        %v2924 = vadd.f32 %v2619, %v2923
        %v2925 = vpop.f32.mrf.mxu0
        %v2926 = vpop.f32.mrf.mxu0
        %v2927 = vadd.f32 %v2622, %v2926
        %v2928 = vpop.f32.mrf.mxu0
        %2929 = vmatprep.mubr.bf16.mxu0 %v654
        %2930 = vmatmul.mubr.bf16.gmra.mxu0 %v558
        %v2931 = vpop.f32.mrf.mxu0
        %v2932 = vadd.f32 %v2627, %v2931
        %v2933 = vpop.f32.mrf.mxu0
        %v2934 = vpop.f32.mrf.mxu0
        %v2935 = vadd.f32 %v2630, %v2934
        %v2936 = vpop.f32.mrf.mxu0
        %2937 = vmatprep.mubr.bf16.mxu0 %v655
        %2938 = vmatmul.mubr.bf16.gmra.mxu0 %v559
        %v2939 = vpop.f32.mrf.mxu0
        %v2940 = vadd.f32 %v2635, %v2939
        %v2941 = vpop.f32.mrf.mxu0
        %v2942 = vpop.f32.mrf.mxu0
        %v2943 = vadd.f32 %v2638, %v2942
        %v2944 = vpop.f32.mrf.mxu0
        %2945 = vmatprep.mubr.bf16.mxu0 %v656
        %2946 = vmatmul.mubr.bf16.gmra.mxu0 %v560
        %v2947 = vpop.f32.mrf.mxu0
        %v2948 = vadd.f32 %v2643, %v2947
        %v2949 = vpop.f32.mrf.mxu0
        %v2950 = vpop.f32.mrf.mxu0
        %v2951 = vadd.f32 %v2646, %v2950
        %v2952 = vpop.f32.mrf.mxu0
        %2953 = vmatprep.mubr.bf16.mxu0 %v657
        %2954 = vmatmul.mubr.bf16.gmra.mxu0 %v561
        %v2955 = vpop.f32.mrf.mxu0
        %v2956 = vadd.f32 %v2651, %v2955
        %v2957 = vpop.f32.mrf.mxu0
        %v2958 = vpop.f32.mrf.mxu0
        %v2959 = vadd.f32 %v2654, %v2958
        %v2960 = vpop.f32.mrf.mxu0
        %2961 = vmatprep.mubr.bf16.mxu0 %v658
        %2962 = vmatmul.mubr.bf16.gmra.mxu0 %v562
        %v2963 = vpop.f32.mrf.mxu0
        %v2964 = vadd.f32 %v2659, %v2963
        %v2965 = vpop.f32.mrf.mxu0
        %v2966 = vpop.f32.mrf.mxu0
        %v2967 = vadd.f32 %v2662, %v2966
        %v2968 = vpop.f32.mrf.mxu0
        %2969 = vmatprep.mubr.bf16.mxu0 %v659
        %2970 = vmatmul.mubr.bf16.gmra.mxu0 %v563
        %v2971 = vpop.f32.mrf.mxu0
        %v2972 = vadd.f32 %v2667, %v2971
        %v2973 = vpop.f32.mrf.mxu0
        %v2974 = vpop.f32.mrf.mxu0
        %v2975 = vadd.f32 %v2670, %v2974
        %v2976 = vpop.f32.mrf.mxu0
        %2977 = vmatprep.mubr.bf16.mxu0 %v660
        %2978 = vmatmul.mubr.bf16.gmra.mxu0 %v564
        %v2979 = vpop.f32.mrf.mxu0
        %v2980 = vadd.f32 %v2675, %v2979
        %v2981 = vpop.f32.mrf.mxu0
        %v2982 = vpop.f32.mrf.mxu0
        %v2983 = vadd.f32 %v2678, %v2982
        %v2984 = vpop.f32.mrf.mxu0
        %2985 = vmatprep.mubr.bf16.mxu0 %v661
        %2986 = vmatmul.mubr.bf16.gmra.mxu0 %v565
        %v2987 = vpop.f32.mrf.mxu0
        %v2988 = vadd.f32 %v2683, %v2987
        %v2989 = vpop.f32.mrf.mxu0
        %v2990 = vpop.f32.mrf.mxu0
        %v2991 = vadd.f32 %v2686, %v2990
        %v2992 = vpop.f32.mrf.mxu0
        %2993 = vmatprep.mubr.bf16.mxu0 %v662
        %2994 = vmatmul.mubr.bf16.gmra.mxu0 %v566
        %v2995 = vpop.f32.mrf.mxu0
        %v2996 = vadd.f32 %v2691, %v2995
        %v2997 = vpop.f32.mrf.mxu0
        %v2998 = vpop.f32.mrf.mxu0
        %v2999 = vadd.f32 %v2694, %v2998
        %v3000 = vpop.f32.mrf.mxu0
        %3001 = vmatprep.mubr.bf16.mxu0 %v663
        %3002 = vmatmul.mubr.bf16.gmra.mxu0 %v567
        %v3003 = vpop.f32.mrf.mxu0
        %v3004 = vadd.f32 %v2699, %v3003
        %v3005 = vpop.f32.mrf.mxu0
        %v3006 = vpop.f32.mrf.mxu0
        %v3007 = vadd.f32 %v2702, %v3006
        %v3008 = vpop.f32.mrf.mxu0
        %3009 = vmatprep.mubr.bf16.mxu0 %v664
        %3010 = vmatmul.mubr.bf16.gmra.mxu0 %v568
        %v3011 = vpop.f32.mrf.mxu0
        %v3012 = vadd.f32 %v2707, %v3011
        %v3013 = vpop.f32.mrf.mxu0
        %v3014 = vpop.f32.mrf.mxu0
        %v3015 = vadd.f32 %v2710, %v3014
        %v3016 = vpop.f32.mrf.mxu0
        %3017 = vmatprep.mubr.bf16.mxu0 %v665
        %3018 = vmatmul.mubr.bf16.gmra.mxu0 %v569
        %v3019 = vpop.f32.mrf.mxu0
        %v3020 = vadd.f32 %v2715, %v3019
        %v3021 = vpop.f32.mrf.mxu0
        %v3022 = vpop.f32.mrf.mxu0
        %v3023 = vadd.f32 %v2718, %v3022
        %v3024 = vpop.f32.mrf.mxu0
        %3025 = vmatprep.mubr.bf16.mxu0 %v666
        %3026 = vmatmul.mubr.bf16.gmra.mxu0 %v570
        %v3027 = vpop.f32.mrf.mxu0
        %v3028 = vadd.f32 %v2723, %v3027
        %v3029 = vpop.f32.mrf.mxu0
        %v3030 = vpop.f32.mrf.mxu0
        %v3031 = vadd.f32 %v2726, %v3030
        %v3032 = vpop.f32.mrf.mxu0
        %3033 = vmatprep.mubr.bf16.mxu0 %v667
        %3034 = vmatmul.mubr.bf16.gmra.mxu0 %v571
        %v3035 = vpop.f32.mrf.mxu0
        %v3036 = vadd.f32 %v2731, %v3035
        %v3037 = vpop.f32.mrf.mxu0
        %v3038 = vpop.f32.mrf.mxu0
        %v3039 = vadd.f32 %v2734, %v3038
        %v3040 = vpop.f32.mrf.mxu0
        %3041 = vdwg.mxu0
        %3042 = vmatprep.subr.bf16.mxu0 0
        %3043 = vmatpush1.bf16.msra.mxu0 %v2856
        %3044 = vmatprep.subr.bf16.mxu0 0
        %3045 = vmatpush1.bf16.msra.mxu0 %v2855
        %3046 = vmatprep.subr.bf16.mxu0 0
        %3047 = vmatpush1.bf16.msra.mxu0 %v2854
        %3048 = vmatprep.subr.bf16.mxu0 0
        %3049 = vmatpush1.bf16.msra.mxu0 %v2853
        %3050 = vmatprep.subr.bf16.mxu0 0
        %3051 = vmatpush1.bf16.msra.mxu0 %v2852
        %3052 = vmatprep.subr.bf16.mxu0 0
        %3053 = vmatpush1.bf16.msra.mxu0 %v2851
        %3054 = vmatprep.subr.bf16.mxu0 0
        %3055 = vmatpush1.bf16.msra.mxu0 %v2850
        %3056 = vmatprep.subr.bf16.mxu0 0
        %3057 = vmatpush1.bf16.msra.mxu0 %v2849
        %3058 = vmatprep.subr.bf16.mxu0 0
        %3059 = vmatpush2.bf16.msra.mxu0 0
        %3060 = vmatprep.subr.bf16.mxu0 0
        %3061 = vmatpush2.bf16.msra.mxu0 0
        %3062 = vmatprep.subr.bf16.mxu0 0
        %3063 = vmatpush2.bf16.msra.mxu0 0
        %3064 = vmatprep.subr.bf16.mxu0 0
        %3065 = vmatpush2.bf16.msra.mxu0 0
        %3066 = vmatprep.subr.bf16.mxu0 0
        %3067 = vmatpush2.bf16.msra.mxu0 0
        %3068 = vmatprep.subr.bf16.mxu0 0
        %3069 = vmatpush2.bf16.msra.mxu0 0
        %3070 = vmatprep.subr.bf16.mxu0 0
        %3071 = vmatpush2.bf16.msra.mxu0 0
        %3072 = vmatprep.subr.bf16.mxu0 0
        %3073 = vmatpush2.bf16.msra.mxu0 0
        %3074 = vmatprep.mubr.bf16.mxu0 0
        %3075 = vmatmul.mubr.bf16.gmra.mxu0 %v748
        %v3076 = vpop.f32.mrf.mxu0
        %v3077 = vadd.f32 %v2916, %v3076
        %v3078 = vpop.f32.mrf.mxu0
        %v3079 = vpop.f32.mrf.mxu0
        %v3080 = vadd.f32 %v2919, %v3079
        %v3081 = vpop.f32.mrf.mxu0
        %3082 = vmatprep.mubr.bf16.mxu0 0
        %3083 = vmatmul.mubr.bf16.gmra.mxu0 %v749
        %v3084 = vpop.f32.mrf.mxu0
        %v3085 = vadd.f32 %v2924, %v3084
        %v3086 = vpop.f32.mrf.mxu0
        %v3087 = vpop.f32.mrf.mxu0
        %v3088 = vadd.f32 %v2927, %v3087
        %v3089 = vpop.f32.mrf.mxu0
        %3090 = vmatprep.mubr.bf16.mxu0 0
        %3091 = vmatmul.mubr.bf16.gmra.mxu0 %v750
        %v3092 = vpop.f32.mrf.mxu0
        %v3093 = vadd.f32 %v2932, %v3092
        %v3094 = vpop.f32.mrf.mxu0
        %v3095 = vpop.f32.mrf.mxu0
        %v3096 = vadd.f32 %v2935, %v3095
        %v3097 = vpop.f32.mrf.mxu0
        %3098 = vmatprep.mubr.bf16.mxu0 0
        %3099 = vmatmul.mubr.bf16.gmra.mxu0 %v751
        %v3100 = vpop.f32.mrf.mxu0
        %v3101 = vadd.f32 %v2940, %v3100
        %v3102 = vpop.f32.mrf.mxu0
        %v3103 = vpop.f32.mrf.mxu0
        %v3104 = vadd.f32 %v2943, %v3103
        %v3105 = vpop.f32.mrf.mxu0
        %3106 = vmatprep.mubr.bf16.mxu0 0
        %3107 = vmatmul.mubr.bf16.gmra.mxu0 %v752
        %v3108 = vpop.f32.mrf.mxu0
        %v3109 = vadd.f32 %v2948, %v3108
        %v3110 = vpop.f32.mrf.mxu0
        %v3111 = vpop.f32.mrf.mxu0
        %v3112 = vadd.f32 %v2951, %v3111
        %v3113 = vpop.f32.mrf.mxu0
        %3114 = vmatprep.mubr.bf16.mxu0 0
        %3115 = vmatmul.mubr.bf16.gmra.mxu0 %v753
        %v3116 = vpop.f32.mrf.mxu0
        %v3117 = vadd.f32 %v2956, %v3116
        %v3118 = vpop.f32.mrf.mxu0
        %v3119 = vpop.f32.mrf.mxu0
        %v3120 = vadd.f32 %v2959, %v3119
        %v3121 = vpop.f32.mrf.mxu0
        %3122 = vmatprep.mubr.bf16.mxu0 0
        %3123 = vmatmul.mubr.bf16.gmra.mxu0 %v754
        %v3124 = vpop.f32.mrf.mxu0
        %v3125 = vadd.f32 %v2964, %v3124
        %v3126 = vpop.f32.mrf.mxu0
        %v3127 = vpop.f32.mrf.mxu0
        %v3128 = vadd.f32 %v2967, %v3127
        %v3129 = vpop.f32.mrf.mxu0
        %3130 = vmatprep.mubr.bf16.mxu0 0
        %3131 = vmatmul.mubr.bf16.gmra.mxu0 %v755
        %v3132 = vpop.f32.mrf.mxu0
        %v3133 = vadd.f32 %v2972, %v3132
        %v3134 = vpop.f32.mrf.mxu0
        %v3135 = vpop.f32.mrf.mxu0
        %v3136 = vadd.f32 %v2975, %v3135
        %v3137 = vpop.f32.mrf.mxu0
        %3138 = vmatprep.mubr.bf16.mxu0 0
        %3139 = vmatmul.mubr.bf16.gmra.mxu0 %v756
        %v3140 = vpop.f32.mrf.mxu0
        %v3141 = vadd.f32 %v2980, %v3140
        %v3142 = vpop.f32.mrf.mxu0
        %v3143 = vpop.f32.mrf.mxu0
        %v3144 = vadd.f32 %v2983, %v3143
        %v3145 = vpop.f32.mrf.mxu0
        %3146 = vmatprep.mubr.bf16.mxu0 0
        %3147 = vmatmul.mubr.bf16.gmra.mxu0 %v757
        %v3148 = vpop.f32.mrf.mxu0
        %v3149 = vadd.f32 %v2988, %v3148
        %v3150 = vpop.f32.mrf.mxu0
        %v3151 = vpop.f32.mrf.mxu0
        %v3152 = vadd.f32 %v2991, %v3151
        %v3153 = vpop.f32.mrf.mxu0
        %3154 = vmatprep.mubr.bf16.mxu0 0
        %3155 = vmatmul.mubr.bf16.gmra.mxu0 %v758
        %v3156 = vpop.f32.mrf.mxu0
        %v3157 = vadd.f32 %v2996, %v3156
        %v3158 = vpop.f32.mrf.mxu0
        %v3159 = vpop.f32.mrf.mxu0
        %v3160 = vadd.f32 %v2999, %v3159
        %v3161 = vpop.f32.mrf.mxu0
        %3162 = vmatprep.mubr.bf16.mxu0 0
        %3163 = vmatmul.mubr.bf16.gmra.mxu0 %v759
        %v3164 = vpop.f32.mrf.mxu0
        %v3165 = vadd.f32 %v3004, %v3164
        %v3166 = vpop.f32.mrf.mxu0
        %v3167 = vpop.f32.mrf.mxu0
        %v3168 = vadd.f32 %v3007, %v3167
        %v3169 = vpop.f32.mrf.mxu0
        %3170 = vmatprep.mubr.bf16.mxu0 0
        %3171 = vmatmul.mubr.bf16.gmra.mxu0 %v760
        %v3172 = vpop.f32.mrf.mxu0
        %v3173 = vadd.f32 %v3012, %v3172
        %v3174 = vpop.f32.mrf.mxu0
        %v3175 = vpop.f32.mrf.mxu0
        %v3176 = vadd.f32 %v3015, %v3175
        %v3177 = vpop.f32.mrf.mxu0
        %3178 = vmatprep.mubr.bf16.mxu0 0
        %3179 = vmatmul.mubr.bf16.gmra.mxu0 %v761
        %v3180 = vpop.f32.mrf.mxu0
        %v3181 = vadd.f32 %v3020, %v3180
        %v3182 = vpop.f32.mrf.mxu0
        %v3183 = vpop.f32.mrf.mxu0
        %v3184 = vadd.f32 %v3023, %v3183
        %v3185 = vpop.f32.mrf.mxu0
        %3186 = vmatprep.mubr.bf16.mxu0 0
        %3187 = vmatmul.mubr.bf16.gmra.mxu0 %v762
        %v3188 = vpop.f32.mrf.mxu0
        %v3189 = vadd.f32 %v3028, %v3188
        %v3190 = vpop.f32.mrf.mxu0
        %v3191 = vpop.f32.mrf.mxu0
        %v3192 = vadd.f32 %v3031, %v3191
        %v3193 = vpop.f32.mrf.mxu0
        %3194 = vmatprep.mubr.bf16.mxu0 0
        %3195 = vmatmul.mubr.bf16.gmra.mxu0 %v763
        %v3196 = vpop.f32.mrf.mxu0
        %v3197 = vadd.f32 %v3036, %v3196
        %v3198 = vpop.f32.mrf.mxu0
        %v3199 = vpop.f32.mrf.mxu0
        %v3200 = vadd.f32 %v3039, %v3199
        %v3201 = vpop.f32.mrf.mxu0
        %3202 = vdwg.mxu0
        %v3203 = vld [vmem:[%s338] sm:$0xe]
        %v3204 = vld [vmem:[%s338 + $0xc] sm:$0xe]
        %v3205 = vld [vmem:[%s338 + $0x18] sm:$0xe]
        %v3206 = vld [vmem:[%s338 + $0x24] sm:$0xe]
        %v3207 = vld [vmem:[%s338 + $0x30] sm:$0xe]
        %v3208 = vld [vmem:[%s338 + $0x3c] sm:$0xe]
        %v3209 = vld [vmem:[%s338 + $0x48] sm:$0xe]
        %v3210 = vld [vmem:[%s338 + $0x54] sm:$0xe]
        %v3211 = vld [vmem:[%s338 + $0x60] sm:$0xe]
        %v3212 = vld [vmem:[%s338 + $0x6c] sm:$0xe]
        %v3213 = vld [vmem:[%s338 + $0x78] sm:$0xe]
        %v3214 = vld [vmem:[%s338 + $0x84] sm:$0xe]
        %v3215 = vld [vmem:[%s338 + $0x90] sm:$0xe]
        %v3216 = vld [vmem:[%s338 + $0x9c] sm:$0xe]
        %v3217 = vld [vmem:[%s338 + $0xa8] sm:$0xe]
        %v3218 = vld [vmem:[%s338 + $0xb4] sm:$0xe]
        %vm3251 = vcmask 1042432
        %vm3252 = vcmask 1046532
        %vm3253 = vmor %vm3251, %vm3252
        %v3254 = vrot.slane %v3203, 5
        %v3255 = vrot.slane %v3254, 4
        %v3256 = vrot.slane %v395, 5
        %v3257 = vsel %vm3253, %v3255, %v3256
        %v3258 = vrot.slane %v3256, 4
        %v3259 = vrot.slane %v828, 5
        %v3260 = vsel %vm3253, %v3258, %v3259
        %v3261 = vrot.slane %v3204, 5
        %v3262 = vrot.slane %v3261, 4
        %v3263 = vrot.slane %v397, 5
        %v3264 = vsel %vm3253, %v3262, %v3263
        %v3265 = vrot.slane %v3263, 4
        %v3266 = vrot.slane %v829, 5
        %v3267 = vsel %vm3253, %v3265, %v3266
        %v3268 = vrot.slane %v3205, 5
        %v3269 = vrot.slane %v3268, 4
        %v3270 = vrot.slane %v399, 5
        %v3271 = vsel %vm3253, %v3269, %v3270
        %v3272 = vrot.slane %v3270, 4
        %v3273 = vrot.slane %v830, 5
        %v3274 = vsel %vm3253, %v3272, %v3273
        %v3275 = vrot.slane %v3206, 5
        %v3276 = vrot.slane %v3275, 4
        %v3277 = vrot.slane %v401, 5
        %v3278 = vsel %vm3253, %v3276, %v3277
        %v3279 = vrot.slane %v3277, 4
        %v3280 = vrot.slane %v831, 5
        %v3281 = vsel %vm3253, %v3279, %v3280
        %v3282 = vrot.slane %v3207, 5
        %v3283 = vrot.slane %v3282, 4
        %v3284 = vrot.slane %v403, 5
        %v3285 = vsel %vm3253, %v3283, %v3284
        %v3286 = vrot.slane %v3284, 4
        %v3287 = vrot.slane %v832, 5
        %v3288 = vsel %vm3253, %v3286, %v3287
        %v3289 = vrot.slane %v3208, 5
        %v3290 = vrot.slane %v3289, 4
        %v3291 = vrot.slane %v405, 5
        %v3292 = vsel %vm3253, %v3290, %v3291
        %v3293 = vrot.slane %v3291, 4
        %v3294 = vrot.slane %v833, 5
        %v3295 = vsel %vm3253, %v3293, %v3294
        %v3296 = vrot.slane %v3209, 5
        %v3297 = vrot.slane %v3296, 4
        %v3298 = vrot.slane %v407, 5
        %v3299 = vsel %vm3253, %v3297, %v3298
        %v3300 = vrot.slane %v3298, 4
        %v3301 = vrot.slane %v834, 5
        %v3302 = vsel %vm3253, %v3300, %v3301
        %v3303 = vrot.slane %v3210, 5
        %v3304 = vrot.slane %v3303, 4
        %v3305 = vrot.slane %v409, 5
        %v3306 = vsel %vm3253, %v3304, %v3305
        %v3307 = vrot.slane %v3305, 4
        %v3308 = vrot.slane %v835, 5
        %v3309 = vsel %vm3253, %v3307, %v3308
        %v3310 = vrot.slane %v3211, 5
        %v3311 = vrot.slane %v3310, 4
        %v3312 = vrot.slane %v411, 5
        %v3313 = vsel %vm3253, %v3311, %v3312
        %v3314 = vrot.slane %v3312, 4
        %v3315 = vrot.slane %v836, 5
        %v3316 = vsel %vm3253, %v3314, %v3315
        %v3317 = vrot.slane %v3212, 5
        %v3318 = vrot.slane %v3317, 4
        %v3319 = vrot.slane %v413, 5
        %v3320 = vsel %vm3253, %v3318, %v3319
        %v3321 = vrot.slane %v3319, 4
        %v3322 = vrot.slane %v837, 5
        %v3323 = vsel %vm3253, %v3321, %v3322
        %v3324 = vrot.slane %v3213, 5
        %v3325 = vrot.slane %v3324, 4
        %v3326 = vrot.slane %v415, 5
        %v3327 = vsel %vm3253, %v3325, %v3326
        %v3328 = vrot.slane %v3326, 4
        %v3329 = vrot.slane %v838, 5
        %v3330 = vsel %vm3253, %v3328, %v3329
        %v3331 = vrot.slane %v3214, 5
        %v3332 = vrot.slane %v3331, 4
        %v3333 = vrot.slane %v417, 5
        %v3334 = vsel %vm3253, %v3332, %v3333
        %v3335 = vrot.slane %v3333, 4
        %v3336 = vrot.slane %v839, 5
        %v3337 = vsel %vm3253, %v3335, %v3336
        %v3338 = vrot.slane %v3215, 5
        %v3339 = vrot.slane %v3338, 4
        %v3340 = vrot.slane %v419, 5
        %v3341 = vsel %vm3253, %v3339, %v3340
        %v3342 = vrot.slane %v3340, 4
        %v3343 = vrot.slane %v840, 5
        %v3344 = vsel %vm3253, %v3342, %v3343
        %v3345 = vrot.slane %v3216, 5
        %v3346 = vrot.slane %v3345, 4
        %v3347 = vrot.slane %v421, 5
        %v3348 = vsel %vm3253, %v3346, %v3347
        %v3349 = vrot.slane %v3347, 4
        %v3350 = vrot.slane %v841, 5
        %v3351 = vsel %vm3253, %v3349, %v3350
        %v3352 = vrot.slane %v3217, 5
        %v3353 = vrot.slane %v3352, 4
        %v3354 = vrot.slane %v423, 5
        %v3355 = vsel %vm3253, %v3353, %v3354
        %v3356 = vrot.slane %v3354, 4
        %v3357 = vrot.slane %v842, 5
        %v3358 = vsel %vm3253, %v3356, %v3357
        %v3359 = vrot.slane %v3218, 5
        %v3360 = vrot.slane %v3359, 4
        %v3361 = vrot.slane %v425, 5
        %v3362 = vsel %vm3253, %v3360, %v3361
        %v3363 = vrot.slane %v3361, 4
        %v3364 = vrot.slane %v843, 5
        %v3365 = vsel %vm3253, %v3363, %v3364
        %v3366 = vld [vmem:[%s426] sm:$0xe]
        %v3367 = vld [vmem:[%s426 + $0xc] sm:$0xe]
        %v3368 = vld [vmem:[%s426 + $0x18] sm:$0xe]
        %v3369 = vld [vmem:[%s426 + $0x24] sm:$0xe]
        %v3370 = vld [vmem:[%s426 + $0x30] sm:$0xe]
        %v3371 = vld [vmem:[%s426 + $0x3c] sm:$0xe]
        %v3372 = vld [vmem:[%s426 + $0x48] sm:$0xe]
        %v3373 = vld [vmem:[%s426 + $0x54] sm:$0xe]
        %v3374 = vld [vmem:[%s426 + $0x60] sm:$0xe]
        %v3375 = vld [vmem:[%s426 + $0x6c] sm:$0xe]
        %v3376 = vld [vmem:[%s426 + $0x78] sm:$0xe]
        %v3377 = vld [vmem:[%s426 + $0x84] sm:$0xe]
        %v3378 = vld [vmem:[%s426 + $0x90] sm:$0xe]
        %v3379 = vld [vmem:[%s426 + $0x9c] sm:$0xe]
        %v3380 = vld [vmem:[%s426 + $0xa8] sm:$0xe]
        %v3381 = vld [vmem:[%s426 + $0xb4] sm:$0xe]
        %v3414 = vrot.slane %v3366, 5
        %v3415 = vrot.slane %v3414, 4
        %v3416 = vrot.slane %v428, 5
        %v3417 = vsel %vm3253, %v3415, %v3416
        %v3418 = vrot.slane %v3416, 4
        %v3419 = vrot.slane %v1231, 5
        %v3420 = vsel %vm3253, %v3418, %v3419
        %v3421 = vrot.slane %v3367, 5
        %v3422 = vrot.slane %v3421, 4
        %v3423 = vrot.slane %v430, 5
        %v3424 = vsel %vm3253, %v3422, %v3423
        %v3425 = vrot.slane %v3423, 4
        %v3426 = vrot.slane %v1232, 5
        %v3427 = vsel %vm3253, %v3425, %v3426
        %v3428 = vrot.slane %v3368, 5
        %v3429 = vrot.slane %v3428, 4
        %v3430 = vrot.slane %v432, 5
        %v3431 = vsel %vm3253, %v3429, %v3430
        %v3432 = vrot.slane %v3430, 4
        %v3433 = vrot.slane %v1233, 5
        %v3434 = vsel %vm3253, %v3432, %v3433
        %v3435 = vrot.slane %v3369, 5
        %v3436 = vrot.slane %v3435, 4
        %v3437 = vrot.slane %v434, 5
        %v3438 = vsel %vm3253, %v3436, %v3437
        %v3439 = vrot.slane %v3437, 4
        %v3440 = vrot.slane %v1234, 5
        %v3441 = vsel %vm3253, %v3439, %v3440
        %v3442 = vrot.slane %v3370, 5
        %v3443 = vrot.slane %v3442, 4
        %v3444 = vrot.slane %v436, 5
        %v3445 = vsel %vm3253, %v3443, %v3444
        %v3446 = vrot.slane %v3444, 4
        %v3447 = vrot.slane %v1235, 5
        %v3448 = vsel %vm3253, %v3446, %v3447
        %v3449 = vrot.slane %v3371, 5
        %v3450 = vrot.slane %v3449, 4
        %v3451 = vrot.slane %v438, 5
        %v3452 = vsel %vm3253, %v3450, %v3451
        %v3453 = vrot.slane %v3451, 4
        %v3454 = vrot.slane %v1236, 5
        %v3455 = vsel %vm3253, %v3453, %v3454
        %v3456 = vrot.slane %v3372, 5
        %v3457 = vrot.slane %v3456, 4
        %v3458 = vrot.slane %v440, 5
        %v3459 = vsel %vm3253, %v3457, %v3458
        %v3460 = vrot.slane %v3458, 4
        %v3461 = vrot.slane %v1237, 5
        %v3462 = vsel %vm3253, %v3460, %v3461
        %v3463 = vrot.slane %v3373, 5
        %v3464 = vrot.slane %v3463, 4
        %v3465 = vrot.slane %v442, 5
        %v3466 = vsel %vm3253, %v3464, %v3465
        %v3467 = vrot.slane %v3465, 4
        %v3468 = vrot.slane %v1238, 5
        %v3469 = vsel %vm3253, %v3467, %v3468
        %v3470 = vrot.slane %v3374, 5
        %v3471 = vrot.slane %v3470, 4
        %v3472 = vrot.slane %v444, 5
        %v3473 = vsel %vm3253, %v3471, %v3472
        %v3474 = vrot.slane %v3472, 4
        %v3475 = vrot.slane %v1239, 5
        %v3476 = vsel %vm3253, %v3474, %v3475
        %v3477 = vrot.slane %v3375, 5
        %v3478 = vrot.slane %v3477, 4
        %v3479 = vrot.slane %v446, 5
        %v3480 = vsel %vm3253, %v3478, %v3479
        %v3481 = vrot.slane %v3479, 4
        %v3482 = vrot.slane %v1240, 5
        %v3483 = vsel %vm3253, %v3481, %v3482
        %v3484 = vrot.slane %v3376, 5
        %v3485 = vrot.slane %v3484, 4
        %v3486 = vrot.slane %v448, 5
        %v3487 = vsel %vm3253, %v3485, %v3486
        %v3488 = vrot.slane %v3486, 4
        %v3489 = vrot.slane %v1241, 5
        %v3490 = vsel %vm3253, %v3488, %v3489
        %v3491 = vrot.slane %v3377, 5
        %v3492 = vrot.slane %v3491, 4
        %v3493 = vrot.slane %v450, 5
        %v3494 = vsel %vm3253, %v3492, %v3493
        %v3495 = vrot.slane %v3493, 4
        %v3496 = vrot.slane %v1242, 5
        %v3497 = vsel %vm3253, %v3495, %v3496
        %v3498 = vrot.slane %v3378, 5
        %v3499 = vrot.slane %v3498, 4
        %v3500 = vrot.slane %v452, 5
        %v3501 = vsel %vm3253, %v3499, %v3500
        %v3502 = vrot.slane %v3500, 4
        %v3503 = vrot.slane %v1243, 5
        %v3504 = vsel %vm3253, %v3502, %v3503
        %v3505 = vrot.slane %v3379, 5
        %v3506 = vrot.slane %v3505, 4
        %v3507 = vrot.slane %v454, 5
        %v3508 = vsel %vm3253, %v3506, %v3507
        %v3509 = vrot.slane %v3507, 4
        %v3510 = vrot.slane %v1244, 5
        %v3511 = vsel %vm3253, %v3509, %v3510
        %v3512 = vrot.slane %v3380, 5
        %v3513 = vrot.slane %v3512, 4
        %v3514 = vrot.slane %v456, 5
        %v3515 = vsel %vm3253, %v3513, %v3514
        %v3516 = vrot.slane %v3514, 4
        %v3517 = vrot.slane %v1245, 5
        %v3518 = vsel %vm3253, %v3516, %v3517
        %v3519 = vrot.slane %v3381, 5
        %v3520 = vrot.slane %v3519, 4
        %v3521 = vrot.slane %v458, 5
        %v3522 = vsel %vm3253, %v3520, %v3521
        %v3523 = vrot.slane %v3521, 4
        %v3524 = vrot.slane %v1246, 5
        %v3525 = vsel %vm3253, %v3523, %v3524
        %v3526 = vld [vmem:[%s459] sm:$0xe]
        %v3527 = vld [vmem:[%s459 + $0xc] sm:$0xe]
        %v3528 = vld [vmem:[%s459 + $0x18] sm:$0xe]
        %v3529 = vld [vmem:[%s459 + $0x24] sm:$0xe]
        %v3530 = vld [vmem:[%s459 + $0x30] sm:$0xe]
        %v3531 = vld [vmem:[%s459 + $0x3c] sm:$0xe]
        %v3532 = vld [vmem:[%s459 + $0x48] sm:$0xe]
        %v3533 = vld [vmem:[%s459 + $0x54] sm:$0xe]
        %v3534 = vld [vmem:[%s459 + $0x60] sm:$0xe]
        %v3535 = vld [vmem:[%s459 + $0x6c] sm:$0xe]
        %v3536 = vld [vmem:[%s459 + $0x78] sm:$0xe]
        %v3537 = vld [vmem:[%s459 + $0x84] sm:$0xe]
        %v3538 = vld [vmem:[%s459 + $0x90] sm:$0xe]
        %v3539 = vld [vmem:[%s459 + $0x9c] sm:$0xe]
        %v3540 = vld [vmem:[%s459 + $0xa8] sm:$0xe]
        %v3541 = vld [vmem:[%s459 + $0xb4] sm:$0xe]
        %v3574 = vrot.slane %v3526, 5
        %v3575 = vrot.slane %v3574, 4
        %v3576 = vrot.slane %v461, 5
        %v3577 = vsel %vm3253, %v3575, %v3576
        %v3578 = vrot.slane %v3576, 4
        %v3579 = vrot.slane %v1631, 5
        %v3580 = vsel %vm3253, %v3578, %v3579
        %v3581 = vrot.slane %v3527, 5
        %v3582 = vrot.slane %v3581, 4
        %v3583 = vrot.slane %v463, 5
        %v3584 = vsel %vm3253, %v3582, %v3583
        %v3585 = vrot.slane %v3583, 4
        %v3586 = vrot.slane %v1632, 5
        %v3587 = vsel %vm3253, %v3585, %v3586
        %v3588 = vrot.slane %v3528, 5
        %v3589 = vrot.slane %v3588, 4
        %v3590 = vrot.slane %v465, 5
        %v3591 = vsel %vm3253, %v3589, %v3590
        %v3592 = vrot.slane %v3590, 4
        %v3593 = vrot.slane %v1633, 5
        %v3594 = vsel %vm3253, %v3592, %v3593
        %v3595 = vrot.slane %v3529, 5
        %v3596 = vrot.slane %v3595, 4
        %v3597 = vrot.slane %v467, 5
        %v3598 = vsel %vm3253, %v3596, %v3597
        %v3599 = vrot.slane %v3597, 4
        %v3600 = vrot.slane %v1634, 5
        %v3601 = vsel %vm3253, %v3599, %v3600
        %v3602 = vrot.slane %v3530, 5
        %v3603 = vrot.slane %v3602, 4
        %v3604 = vrot.slane %v469, 5
        %v3605 = vsel %vm3253, %v3603, %v3604
        %v3606 = vrot.slane %v3604, 4
        %v3607 = vrot.slane %v1635, 5
        %v3608 = vsel %vm3253, %v3606, %v3607
        %v3609 = vrot.slane %v3531, 5
        %v3610 = vrot.slane %v3609, 4
        %v3611 = vrot.slane %v471, 5
        %v3612 = vsel %vm3253, %v3610, %v3611
        %v3613 = vrot.slane %v3611, 4
        %v3614 = vrot.slane %v1636, 5
        %v3615 = vsel %vm3253, %v3613, %v3614
        %v3616 = vrot.slane %v3532, 5
        %v3617 = vrot.slane %v3616, 4
        %v3618 = vrot.slane %v473, 5
        %v3619 = vsel %vm3253, %v3617, %v3618
        %v3620 = vrot.slane %v3618, 4
        %v3621 = vrot.slane %v1637, 5
        %v3622 = vsel %vm3253, %v3620, %v3621
        %v3623 = vrot.slane %v3533, 5
        %v3624 = vrot.slane %v3623, 4
        %v3625 = vrot.slane %v475, 5
        %v3626 = vsel %vm3253, %v3624, %v3625
        %v3627 = vrot.slane %v3625, 4
        %v3628 = vrot.slane %v1638, 5
        %v3629 = vsel %vm3253, %v3627, %v3628
        %v3630 = vrot.slane %v3534, 5
        %v3631 = vrot.slane %v3630, 4
        %v3632 = vrot.slane %v477, 5
        %v3633 = vsel %vm3253, %v3631, %v3632
        %v3634 = vrot.slane %v3632, 4
        %v3635 = vrot.slane %v1639, 5
        %v3636 = vsel %vm3253, %v3634, %v3635
        %v3637 = vrot.slane %v3535, 5
        %v3638 = vrot.slane %v3637, 4
        %v3639 = vrot.slane %v479, 5
        %v3640 = vsel %vm3253, %v3638, %v3639
        %v3641 = vrot.slane %v3639, 4
        %v3642 = vrot.slane %v1640, 5
        %v3643 = vsel %vm3253, %v3641, %v3642
        %v3644 = vrot.slane %v3536, 5
        %v3645 = vrot.slane %v3644, 4
        %v3646 = vrot.slane %v481, 5
        %v3647 = vsel %vm3253, %v3645, %v3646
        %v3648 = vrot.slane %v3646, 4
        %v3649 = vrot.slane %v1641, 5
        %v3650 = vsel %vm3253, %v3648, %v3649
        %v3651 = vrot.slane %v3537, 5
        %v3652 = vrot.slane %v3651, 4
        %v3653 = vrot.slane %v483, 5
        %v3654 = vsel %vm3253, %v3652, %v3653
        %v3655 = vrot.slane %v3653, 4
        %v3656 = vrot.slane %v1642, 5
        %v3657 = vsel %vm3253, %v3655, %v3656
        %v3658 = vrot.slane %v3538, 5
        %v3659 = vrot.slane %v3658, 4
        %v3660 = vrot.slane %v485, 5
        %v3661 = vsel %vm3253, %v3659, %v3660
        %v3662 = vrot.slane %v3660, 4
        %v3663 = vrot.slane %v1643, 5
        %v3664 = vsel %vm3253, %v3662, %v3663
        %v3665 = vrot.slane %v3539, 5
        %v3666 = vrot.slane %v3665, 4
        %v3667 = vrot.slane %v487, 5
        %v3668 = vsel %vm3253, %v3666, %v3667
        %v3669 = vrot.slane %v3667, 4
        %v3670 = vrot.slane %v1644, 5
        %v3671 = vsel %vm3253, %v3669, %v3670
        %v3672 = vrot.slane %v3540, 5
        %v3673 = vrot.slane %v3672, 4
        %v3674 = vrot.slane %v489, 5
        %v3675 = vsel %vm3253, %v3673, %v3674
        %v3676 = vrot.slane %v3674, 4
        %v3677 = vrot.slane %v1645, 5
        %v3678 = vsel %vm3253, %v3676, %v3677
        %v3679 = vrot.slane %v3541, 5
        %v3680 = vrot.slane %v3679, 4
        %v3681 = vrot.slane %v491, 5
        %v3682 = vsel %vm3253, %v3680, %v3681
        %v3683 = vrot.slane %v3681, 4
        %v3684 = vrot.slane %v1646, 5
        %v3685 = vsel %vm3253, %v3683, %v3684
        %v3686 = vunpack.c.l.b16 %v3257
        %v3687 = vunpack.c.l.b16 %v3260
        %v3688 = vunpack.c.l.b16 %v3264
        %v3689 = vunpack.c.l.b16 %v3267
        %v3690 = vunpack.c.l.b16 %v3271
        %v3691 = vunpack.c.l.b16 %v3274
        %v3692 = vunpack.c.l.b16 %v3278
        %v3693 = vunpack.c.l.b16 %v3281
        %v3694 = vunpack.c.l.b16 %v3285
        %v3695 = vunpack.c.l.b16 %v3288
        %v3696 = vunpack.c.l.b16 %v3292
        %v3697 = vunpack.c.l.b16 %v3295
        %v3698 = vunpack.c.l.b16 %v3299
        %v3699 = vunpack.c.l.b16 %v3302
        %v3700 = vunpack.c.l.b16 %v3306
        %v3701 = vunpack.c.l.b16 %v3309
        %v3702 = vunpack.c.l.b16 %v3313
        %v3703 = vunpack.c.l.b16 %v3316
        %v3704 = vunpack.c.l.b16 %v3320
        %v3705 = vunpack.c.l.b16 %v3323
        %v3706 = vunpack.c.l.b16 %v3327
        %v3707 = vunpack.c.l.b16 %v3330
        %v3708 = vunpack.c.l.b16 %v3334
        %v3709 = vunpack.c.l.b16 %v3337
        %v3710 = vunpack.c.l.b16 %v3341
        %v3711 = vunpack.c.l.b16 %v3344
        %v3712 = vunpack.c.l.b16 %v3348
        %v3713 = vunpack.c.l.b16 %v3351
        %v3714 = vunpack.c.l.b16 %v3355
        %v3715 = vunpack.c.l.b16 %v3358
        %v3716 = vunpack.c.l.b16 %v3362
        %v3717 = vunpack.c.l.b16 %v3365
        %v3718 = vpack.c.b16 %v3687, %v3686
        %v3719 = vpack.c.b16 %v3689, %v3688
        %v3720 = vpack.c.b16 %v3691, %v3690
        %v3721 = vpack.c.b16 %v3693, %v3692
        %v3722 = vpack.c.b16 %v3695, %v3694
        %v3723 = vpack.c.b16 %v3697, %v3696
        %v3724 = vpack.c.b16 %v3699, %v3698
        %v3725 = vpack.c.b16 %v3701, %v3700
        %v3726 = vpack.c.b16 %v3703, %v3702
        %v3727 = vpack.c.b16 %v3705, %v3704
        %v3728 = vpack.c.b16 %v3707, %v3706
        %v3729 = vpack.c.b16 %v3709, %v3708
        %v3730 = vpack.c.b16 %v3711, %v3710
        %v3731 = vpack.c.b16 %v3713, %v3712
        %v3732 = vpack.c.b16 %v3715, %v3714
        %v3733 = vpack.c.b16 %v3717, %v3716
        %v3750 = vunpack.c.l.b16 %v3417
        %v3751 = vunpack.c.l.b16 %v3420
        %v3752 = vunpack.c.l.b16 %v3424
        %v3753 = vunpack.c.l.b16 %v3427
        %v3754 = vunpack.c.l.b16 %v3431
        %v3755 = vunpack.c.l.b16 %v3434
        %v3756 = vunpack.c.l.b16 %v3438
        %v3757 = vunpack.c.l.b16 %v3441
        %v3758 = vunpack.c.l.b16 %v3445
        %v3759 = vunpack.c.l.b16 %v3448
        %v3760 = vunpack.c.l.b16 %v3452
        %v3761 = vunpack.c.l.b16 %v3455
        %v3762 = vunpack.c.l.b16 %v3459
        %v3763 = vunpack.c.l.b16 %v3462
        %v3764 = vunpack.c.l.b16 %v3466
        %v3765 = vunpack.c.l.b16 %v3469
        %v3766 = vunpack.c.l.b16 %v3473
        %v3767 = vunpack.c.l.b16 %v3476
        %v3768 = vunpack.c.l.b16 %v3480
        %v3769 = vunpack.c.l.b16 %v3483
        %v3770 = vunpack.c.l.b16 %v3487
        %v3771 = vunpack.c.l.b16 %v3490
        %v3772 = vunpack.c.l.b16 %v3494
        %v3773 = vunpack.c.l.b16 %v3497
        %v3774 = vunpack.c.l.b16 %v3501
        %v3775 = vunpack.c.l.b16 %v3504
        %v3776 = vunpack.c.l.b16 %v3508
        %v3777 = vunpack.c.l.b16 %v3511
        %v3778 = vunpack.c.l.b16 %v3515
        %v3779 = vunpack.c.l.b16 %v3518
        %v3780 = vunpack.c.l.b16 %v3522
        %v3781 = vunpack.c.l.b16 %v3525
        %v3782 = vpack.c.b16 %v3751, %v3750
        %v3783 = vpack.c.b16 %v3753, %v3752
        %v3784 = vpack.c.b16 %v3755, %v3754
        %v3785 = vpack.c.b16 %v3757, %v3756
        %v3786 = vpack.c.b16 %v3759, %v3758
        %v3787 = vpack.c.b16 %v3761, %v3760
        %v3788 = vpack.c.b16 %v3763, %v3762
        %v3789 = vpack.c.b16 %v3765, %v3764
        %v3790 = vpack.c.b16 %v3767, %v3766
        %v3791 = vpack.c.b16 %v3769, %v3768
        %v3792 = vpack.c.b16 %v3771, %v3770
        %v3793 = vpack.c.b16 %v3773, %v3772
        %v3794 = vpack.c.b16 %v3775, %v3774
        %v3795 = vpack.c.b16 %v3777, %v3776
        %v3796 = vpack.c.b16 %v3779, %v3778
        %v3797 = vpack.c.b16 %v3781, %v3780
        %v3814 = vunpack.c.l.b16 %v3577
        %v3815 = vunpack.c.l.b16 %v3580
        %v3816 = vunpack.c.l.b16 %v3584
        %v3817 = vunpack.c.l.b16 %v3587
        %v3818 = vunpack.c.l.b16 %v3591
        %v3819 = vunpack.c.l.b16 %v3594
        %v3820 = vunpack.c.l.b16 %v3598
        %v3821 = vunpack.c.l.b16 %v3601
        %v3822 = vunpack.c.l.b16 %v3605
        %v3823 = vunpack.c.l.b16 %v3608
        %v3824 = vunpack.c.l.b16 %v3612
        %v3825 = vunpack.c.l.b16 %v3615
        %v3826 = vunpack.c.l.b16 %v3619
        %v3827 = vunpack.c.l.b16 %v3622
        %v3828 = vunpack.c.l.b16 %v3626
        %v3829 = vunpack.c.l.b16 %v3629
        %v3830 = vunpack.c.l.b16 %v3633
        %v3831 = vunpack.c.l.b16 %v3636
        %v3832 = vunpack.c.l.b16 %v3640
        %v3833 = vunpack.c.l.b16 %v3643
        %v3834 = vunpack.c.l.b16 %v3647
        %v3835 = vunpack.c.l.b16 %v3650
        %v3836 = vunpack.c.l.b16 %v3654
        %v3837 = vunpack.c.l.b16 %v3657
        %v3838 = vunpack.c.l.b16 %v3661
        %v3839 = vunpack.c.l.b16 %v3664
        %v3840 = vunpack.c.l.b16 %v3668
        %v3841 = vunpack.c.l.b16 %v3671
        %v3842 = vunpack.c.l.b16 %v3675
        %v3843 = vunpack.c.l.b16 %v3678
        %v3844 = vunpack.c.l.b16 %v3682
        %v3845 = vunpack.c.l.b16 %v3685
        %v3846 = vpack.c.b16 %v3815, %v3814
        %v3847 = vpack.c.b16 %v3817, %v3816
        %v3848 = vpack.c.b16 %v3819, %v3818
        %v3849 = vpack.c.b16 %v3821, %v3820
        %v3850 = vpack.c.b16 %v3823, %v3822
        %v3851 = vpack.c.b16 %v3825, %v3824
        %v3852 = vpack.c.b16 %v3827, %v3826
        %v3853 = vpack.c.b16 %v3829, %v3828
        %v3854 = vpack.c.b16 %v3831, %v3830
        %v3855 = vpack.c.b16 %v3833, %v3832
        %v3856 = vpack.c.b16 %v3835, %v3834
        %v3857 = vpack.c.b16 %v3837, %v3836
        %v3858 = vpack.c.b16 %v3839, %v3838
        %v3859 = vpack.c.b16 %v3841, %v3840
        %v3860 = vpack.c.b16 %v3843, %v3842
        %v3861 = vpack.c.b16 %v3845, %v3844
        %v3878 = vld [vmem:[#allocation8 + $0x180] sm:$0xf]
        %v3879 = vld [vmem:[#allocation8 + $0x184] sm:$0xf]
        %v3880 = vld [vmem:[#allocation8 + $0x188] sm:$0xf]
        %v3881 = vld [vmem:[#allocation8 + $0x18c] sm:$0xf]
        %v3882 = vld [vmem:[#allocation8 + $0x190] sm:$0xf]
        %v3883 = vld [vmem:[#allocation8 + $0x194] sm:$0xf]
        %v3884 = vld [vmem:[#allocation8 + $0x198] sm:$0xf]
        %v3885 = vld [vmem:[#allocation8 + $0x19c] sm:$0xf]
        %v3886 = vld [vmem:[#allocation8 + $0x1a0] sm:$0xf]
        %v3887 = vld [vmem:[#allocation8 + $0x1a4] sm:$0xf]
        %v3888 = vld [vmem:[#allocation8 + $0x1a8] sm:$0xf]
        %v3889 = vld [vmem:[#allocation8 + $0x1ac] sm:$0xf]
        %v3890 = vld [vmem:[#allocation8 + $0x1b0] sm:$0xf]
        %v3891 = vld [vmem:[#allocation8 + $0x1b4] sm:$0xf]
        %v3892 = vld [vmem:[#allocation8 + $0x1b8] sm:$0xf]
        %v3893 = vld [vmem:[#allocation8 + $0x1bc] sm:$0xf]
        %v3894 = vld [vmem:[#allocation8 + $0x1c0] sm:$0xf]
        %v3895 = vld [vmem:[#allocation8 + $0x1c4] sm:$0xf]
        %v3896 = vld [vmem:[#allocation8 + $0x1c8] sm:$0xf]
        %v3897 = vld [vmem:[#allocation8 + $0x1cc] sm:$0xf]
        %v3898 = vld [vmem:[#allocation8 + $0x1d0] sm:$0xf]
        %v3899 = vld [vmem:[#allocation8 + $0x1d4] sm:$0xf]
        %v3900 = vld [vmem:[#allocation8 + $0x1d8] sm:$0xf]
        %v3901 = vld [vmem:[#allocation8 + $0x1dc] sm:$0xf]
        %v3902 = vld [vmem:[#allocation8 + $0x1e0] sm:$0xf]
        %v3903 = vld [vmem:[#allocation8 + $0x1e4] sm:$0xf]
        %v3904 = vld [vmem:[#allocation8 + $0x1e8] sm:$0xf]
        %v3905 = vld [vmem:[#allocation8 + $0x1ec] sm:$0xf]
        %v3906 = vld [vmem:[#allocation8 + $0x1f0] sm:$0xf]
        %v3907 = vld [vmem:[#allocation8 + $0x1f4] sm:$0xf]
        %v3908 = vld [vmem:[#allocation8 + $0x1f8] sm:$0xf]
        %v3909 = vld [vmem:[#allocation8 + $0x1fc] sm:$0xf]
        %v3910 = vld [vmem:[#allocation8 + $0x200] sm:$0xf]
        %v3911 = vld [vmem:[#allocation8 + $0x204] sm:$0xf]
        %v3912 = vld [vmem:[#allocation8 + $0x208] sm:$0xf]
        %v3913 = vld [vmem:[#allocation8 + $0x20c] sm:$0xf]
        %v3914 = vld [vmem:[#allocation8 + $0x210] sm:$0xf]
        %v3915 = vld [vmem:[#allocation8 + $0x214] sm:$0xf]
        %v3916 = vld [vmem:[#allocation8 + $0x218] sm:$0xf]
        %v3917 = vld [vmem:[#allocation8 + $0x21c] sm:$0xf]
        %v3918 = vld [vmem:[#allocation8 + $0x220] sm:$0xf]
        %v3919 = vld [vmem:[#allocation8 + $0x224] sm:$0xf]
        %v3920 = vld [vmem:[#allocation8 + $0x228] sm:$0xf]
        %v3921 = vld [vmem:[#allocation8 + $0x22c] sm:$0xf]
        %v3922 = vld [vmem:[#allocation8 + $0x230] sm:$0xf]
        %v3923 = vld [vmem:[#allocation8 + $0x234] sm:$0xf]
        %v3924 = vld [vmem:[#allocation8 + $0x238] sm:$0xf]
        %v3925 = vld [vmem:[#allocation8 + $0x23c] sm:$0xf]
        %v3974 = vunpack.c.l.b16 %v3878
        %v3975 = vunpack.c.l.b16 %v3879
        %v3976 = vunpack.c.l.b16 %v3880
        %v3977 = vunpack.c.l.b16 %v3881
        %v3978 = vunpack.c.l.b16 %v3882
        %v3979 = vunpack.c.l.b16 %v3883
        %v3980 = vunpack.c.l.b16 %v3884
        %v3981 = vunpack.c.l.b16 %v3885
        %v3982 = vunpack.c.l.b16 %v3886
        %v3983 = vunpack.c.l.b16 %v3887
        %v3984 = vunpack.c.l.b16 %v3888
        %v3985 = vunpack.c.l.b16 %v3889
        %v3986 = vunpack.c.l.b16 %v3890
        %v3987 = vunpack.c.l.b16 %v3891
        %v3988 = vunpack.c.l.b16 %v3892
        %v3989 = vunpack.c.l.b16 %v3893
        %v3990 = vunpack.c.l.b16 %v3894
        %v3991 = vunpack.c.l.b16 %v3895
        %v3992 = vunpack.c.l.b16 %v3896
        %v3993 = vunpack.c.l.b16 %v3897
        %v3994 = vunpack.c.l.b16 %v3898
        %v3995 = vunpack.c.l.b16 %v3899
        %v3996 = vunpack.c.l.b16 %v3900
        %v3997 = vunpack.c.l.b16 %v3901
        %v3998 = vunpack.c.l.b16 %v3902
        %v3999 = vunpack.c.l.b16 %v3903
        %v4000 = vunpack.c.l.b16 %v3904
        %v4001 = vunpack.c.l.b16 %v3905
        %v4002 = vunpack.c.l.b16 %v3906
        %v4003 = vunpack.c.l.b16 %v3907
        %v4004 = vunpack.c.l.b16 %v3908
        %v4005 = vunpack.c.l.b16 %v3909
        %v4006 = vunpack.c.l.b16 %v3910
        %v4007 = vunpack.c.l.b16 %v3911
        %v4008 = vunpack.c.l.b16 %v3912
        %v4009 = vunpack.c.l.b16 %v3913
        %v4010 = vunpack.c.l.b16 %v3914
        %v4011 = vunpack.c.l.b16 %v3915
        %v4012 = vunpack.c.l.b16 %v3916
        %v4013 = vunpack.c.l.b16 %v3917
        %v4014 = vunpack.c.l.b16 %v3918
        %v4015 = vunpack.c.l.b16 %v3919
        %v4016 = vunpack.c.l.b16 %v3920
        %v4017 = vunpack.c.l.b16 %v3921
        %v4018 = vunpack.c.l.b16 %v3922
        %v4019 = vunpack.c.l.b16 %v3923
        %v4020 = vunpack.c.l.b16 %v3924
        %v4021 = vunpack.c.l.b16 %v3925
        %v4022 = vpack.c.b16 %v3975, %v3974
        %v4023 = vpack.c.b16 %v3977, %v3976
        %v4024 = vpack.c.b16 %v3979, %v3978
        %v4025 = vpack.c.b16 %v3981, %v3980
        %v4026 = vpack.c.b16 %v3983, %v3982
        %v4027 = vpack.c.b16 %v3985, %v3984
        %v4028 = vpack.c.b16 %v3987, %v3986
        %v4029 = vpack.c.b16 %v3989, %v3988
        %v4030 = vpack.c.b16 %v3991, %v3990
        %v4031 = vpack.c.b16 %v3993, %v3992
        %v4032 = vpack.c.b16 %v3995, %v3994
        %v4033 = vpack.c.b16 %v3997, %v3996
        %v4034 = vpack.c.b16 %v3999, %v3998
        %v4035 = vpack.c.b16 %v4001, %v4000
        %v4036 = vpack.c.b16 %v4003, %v4002
        %v4037 = vpack.c.b16 %v4005, %v4004
        %v4038 = vpack.c.b16 %v4007, %v4006
        %v4039 = vpack.c.b16 %v4009, %v4008
        %v4040 = vpack.c.b16 %v4011, %v4010
        %v4041 = vpack.c.b16 %v4013, %v4012
        %v4042 = vpack.c.b16 %v4015, %v4014
        %v4043 = vpack.c.b16 %v4017, %v4016
        %v4044 = vpack.c.b16 %v4019, %v4018
        %v4045 = vpack.c.b16 %v4021, %v4020
        %4070 = vmatprep.subr.bf16.mxu0 0
        %4071 = vmatpush1.bf16.msra.mxu0 %v4029
        %4072 = vmatprep.subr.bf16.mxu0 0
        %4073 = vmatpush1.bf16.msra.mxu0 %v4028
        %4074 = vmatprep.subr.bf16.mxu0 0
        %4075 = vmatpush1.bf16.msra.mxu0 %v4027
        %4076 = vmatprep.subr.bf16.mxu0 0
        %4077 = vmatpush1.bf16.msra.mxu0 %v4026
        %4078 = vmatprep.subr.bf16.mxu0 0
        %4079 = vmatpush1.bf16.msra.mxu0 %v4025
        %4080 = vmatprep.subr.bf16.mxu0 0
        %4081 = vmatpush1.bf16.msra.mxu0 %v4024
        %4082 = vmatprep.subr.bf16.mxu0 0
        %4083 = vmatpush1.bf16.msra.mxu0 %v4023
        %4084 = vmatprep.subr.bf16.mxu0 0
        %4085 = vmatpush1.bf16.msra.mxu0 %v4022
        %4086 = vmatprep.subr.bf16.mxu0 0
        %4087 = vmatpush2.bf16.msra.mxu0 %v4037
        %4088 = vmatprep.subr.bf16.mxu0 0
        %4089 = vmatpush2.bf16.msra.mxu0 %v4036
        %4090 = vmatprep.subr.bf16.mxu0 0
        %4091 = vmatpush2.bf16.msra.mxu0 %v4035
        %4092 = vmatprep.subr.bf16.mxu0 0
        %4093 = vmatpush2.bf16.msra.mxu0 %v4034
        %4094 = vmatprep.subr.bf16.mxu0 0
        %4095 = vmatpush2.bf16.msra.mxu0 %v4033
        %4096 = vmatprep.subr.bf16.mxu0 0
        %4097 = vmatpush2.bf16.msra.mxu0 %v4032
        %4098 = vmatprep.subr.bf16.mxu0 0
        %4099 = vmatpush2.bf16.msra.mxu0 %v4031
        %4100 = vmatprep.subr.bf16.mxu0 0
        %4101 = vmatpush2.bf16.msra.mxu0 %v4030
        %4102 = vmatprep.mubr.bf16.mxu0 %v3782
        %4103 = vmatmul.mubr.bf16.gmra.mxu0 %v3718
        %v4104 = vpop.f32.mrf.mxu0
        %v4105 = vadd.f32 0.0, %v4104
        %v4106 = vpop.f32.mrf.mxu0
        %v4107 = vpop.f32.mrf.mxu0
        %v4108 = vadd.f32 0.0, %v4107
        %v4109 = vpop.f32.mrf.mxu0
        %4110 = vmatprep.mubr.bf16.mxu0 %v3783
        %4111 = vmatmul.mubr.bf16.gmra.mxu0 %v3719
        %v4112 = vpop.f32.mrf.mxu0
        %v4113 = vadd.f32 0.0, %v4112
        %v4114 = vpop.f32.mrf.mxu0
        %v4115 = vpop.f32.mrf.mxu0
        %v4116 = vadd.f32 0.0, %v4115
        %v4117 = vpop.f32.mrf.mxu0
        %4118 = vmatprep.mubr.bf16.mxu0 %v3784
        %4119 = vmatmul.mubr.bf16.gmra.mxu0 %v3720
        %v4120 = vpop.f32.mrf.mxu0
        %v4121 = vadd.f32 0.0, %v4120
        %v4122 = vpop.f32.mrf.mxu0
        %v4123 = vpop.f32.mrf.mxu0
        %v4124 = vadd.f32 0.0, %v4123
        %v4125 = vpop.f32.mrf.mxu0
        %4126 = vmatprep.mubr.bf16.mxu0 %v3785
        %4127 = vmatmul.mubr.bf16.gmra.mxu0 %v3721
        %v4128 = vpop.f32.mrf.mxu0
        %v4129 = vadd.f32 0.0, %v4128
        %v4130 = vpop.f32.mrf.mxu0
        %v4131 = vpop.f32.mrf.mxu0
        %v4132 = vadd.f32 0.0, %v4131
        %v4133 = vpop.f32.mrf.mxu0
        %4134 = vmatprep.mubr.bf16.mxu0 %v3786
        %4135 = vmatmul.mubr.bf16.gmra.mxu0 %v3722
        %v4136 = vpop.f32.mrf.mxu0
        %v4137 = vadd.f32 0.0, %v4136
        %v4138 = vpop.f32.mrf.mxu0
        %v4139 = vpop.f32.mrf.mxu0
        %v4140 = vadd.f32 0.0, %v4139
        %v4141 = vpop.f32.mrf.mxu0
        %4142 = vmatprep.mubr.bf16.mxu0 %v3787
        %4143 = vmatmul.mubr.bf16.gmra.mxu0 %v3723
        %v4144 = vpop.f32.mrf.mxu0
        %v4145 = vadd.f32 0.0, %v4144
        %v4146 = vpop.f32.mrf.mxu0
        %v4147 = vpop.f32.mrf.mxu0
        %v4148 = vadd.f32 0.0, %v4147
        %v4149 = vpop.f32.mrf.mxu0
        %4150 = vmatprep.mubr.bf16.mxu0 %v3788
        %4151 = vmatmul.mubr.bf16.gmra.mxu0 %v3724
        %v4152 = vpop.f32.mrf.mxu0
        %v4153 = vadd.f32 0.0, %v4152
        %v4154 = vpop.f32.mrf.mxu0
        %v4155 = vpop.f32.mrf.mxu0
        %v4156 = vadd.f32 0.0, %v4155
        %v4157 = vpop.f32.mrf.mxu0
        %4158 = vmatprep.mubr.bf16.mxu0 %v3789
        %4159 = vmatmul.mubr.bf16.gmra.mxu0 %v3725
        %v4160 = vpop.f32.mrf.mxu0
        %v4161 = vadd.f32 0.0, %v4160
        %v4162 = vpop.f32.mrf.mxu0
        %v4163 = vpop.f32.mrf.mxu0
        %v4164 = vadd.f32 0.0, %v4163
        %v4165 = vpop.f32.mrf.mxu0
        %4166 = vmatprep.mubr.bf16.mxu0 %v3790
        %4167 = vmatmul.mubr.bf16.gmra.mxu0 %v3726
        %v4168 = vpop.f32.mrf.mxu0
        %v4169 = vadd.f32 0.0, %v4168
        %v4170 = vpop.f32.mrf.mxu0
        %v4171 = vpop.f32.mrf.mxu0
        %v4172 = vadd.f32 0.0, %v4171
        %v4173 = vpop.f32.mrf.mxu0
        %4174 = vmatprep.mubr.bf16.mxu0 %v3791
        %4175 = vmatmul.mubr.bf16.gmra.mxu0 %v3727
        %v4176 = vpop.f32.mrf.mxu0
        %v4177 = vadd.f32 0.0, %v4176
        %v4178 = vpop.f32.mrf.mxu0
        %v4179 = vpop.f32.mrf.mxu0
        %v4180 = vadd.f32 0.0, %v4179
        %v4181 = vpop.f32.mrf.mxu0
        %4182 = vmatprep.mubr.bf16.mxu0 %v3792
        %4183 = vmatmul.mubr.bf16.gmra.mxu0 %v3728
        %v4184 = vpop.f32.mrf.mxu0
        %v4185 = vadd.f32 0.0, %v4184
        %v4186 = vpop.f32.mrf.mxu0
        %v4187 = vpop.f32.mrf.mxu0
        %v4188 = vadd.f32 0.0, %v4187
        %v4189 = vpop.f32.mrf.mxu0
        %4190 = vmatprep.mubr.bf16.mxu0 %v3793
        %4191 = vmatmul.mubr.bf16.gmra.mxu0 %v3729
        %v4192 = vpop.f32.mrf.mxu0
        %v4193 = vadd.f32 0.0, %v4192
        %v4194 = vpop.f32.mrf.mxu0
        %v4195 = vpop.f32.mrf.mxu0
        %v4196 = vadd.f32 0.0, %v4195
        %v4197 = vpop.f32.mrf.mxu0
        %4198 = vmatprep.mubr.bf16.mxu0 %v3794
        %4199 = vmatmul.mubr.bf16.gmra.mxu0 %v3730
        %v4200 = vpop.f32.mrf.mxu0
        %v4201 = vadd.f32 0.0, %v4200
        %v4202 = vpop.f32.mrf.mxu0
        %v4203 = vpop.f32.mrf.mxu0
        %v4204 = vadd.f32 0.0, %v4203
        %v4205 = vpop.f32.mrf.mxu0
        %4206 = vmatprep.mubr.bf16.mxu0 %v3795
        %4207 = vmatmul.mubr.bf16.gmra.mxu0 %v3731
        %v4208 = vpop.f32.mrf.mxu0
        %v4209 = vadd.f32 0.0, %v4208
        %v4210 = vpop.f32.mrf.mxu0
        %v4211 = vpop.f32.mrf.mxu0
        %v4212 = vadd.f32 0.0, %v4211
        %v4213 = vpop.f32.mrf.mxu0
        %4214 = vmatprep.mubr.bf16.mxu0 %v3796
        %4215 = vmatmul.mubr.bf16.gmra.mxu0 %v3732
        %v4216 = vpop.f32.mrf.mxu0
        %v4217 = vadd.f32 0.0, %v4216
        %v4218 = vpop.f32.mrf.mxu0
        %v4219 = vpop.f32.mrf.mxu0
        %v4220 = vadd.f32 0.0, %v4219
        %v4221 = vpop.f32.mrf.mxu0
        %4222 = vmatprep.mubr.bf16.mxu0 %v3797
        %4223 = vmatmul.mubr.bf16.gmra.mxu0 %v3733
        %v4224 = vpop.f32.mrf.mxu0
        %v4225 = vadd.f32 0.0, %v4224
        %v4226 = vpop.f32.mrf.mxu0
        %v4227 = vpop.f32.mrf.mxu0
        %v4228 = vadd.f32 0.0, %v4227
        %v4229 = vpop.f32.mrf.mxu0
        %4230 = vdwg.mxu0
        %4231 = vmatprep.subr.bf16.mxu0 0
        %4232 = vmatpush1.bf16.msra.mxu0 %v4045
        %4233 = vmatprep.subr.bf16.mxu0 0
        %4234 = vmatpush1.bf16.msra.mxu0 %v4044
        %4235 = vmatprep.subr.bf16.mxu0 0
        %4236 = vmatpush1.bf16.msra.mxu0 %v4043
        %4237 = vmatprep.subr.bf16.mxu0 0
        %4238 = vmatpush1.bf16.msra.mxu0 %v4042
        %4239 = vmatprep.subr.bf16.mxu0 0
        %4240 = vmatpush1.bf16.msra.mxu0 %v4041
        %4241 = vmatprep.subr.bf16.mxu0 0
        %4242 = vmatpush1.bf16.msra.mxu0 %v4040
        %4243 = vmatprep.subr.bf16.mxu0 0
        %4244 = vmatpush1.bf16.msra.mxu0 %v4039
        %4245 = vmatprep.subr.bf16.mxu0 0
        %4246 = vmatpush1.bf16.msra.mxu0 %v4038
        %4247 = vmatprep.subr.bf16.mxu0 0
        %4248 = vmatpush2.bf16.msra.mxu0 0
        %4249 = vmatprep.subr.bf16.mxu0 0
        %4250 = vmatpush2.bf16.msra.mxu0 0
        %4251 = vmatprep.subr.bf16.mxu0 0
        %4252 = vmatpush2.bf16.msra.mxu0 0
        %4253 = vmatprep.subr.bf16.mxu0 0
        %4254 = vmatpush2.bf16.msra.mxu0 0
        %4255 = vmatprep.subr.bf16.mxu0 0
        %4256 = vmatpush2.bf16.msra.mxu0 0
        %4257 = vmatprep.subr.bf16.mxu0 0
        %4258 = vmatpush2.bf16.msra.mxu0 0
        %4259 = vmatprep.subr.bf16.mxu0 0
        %4260 = vmatpush2.bf16.msra.mxu0 0
        %4261 = vmatprep.subr.bf16.mxu0 0
        %4262 = vmatpush2.bf16.msra.mxu0 0
        %4263 = vmatprep.mubr.bf16.mxu0 0
        %4264 = vmatmul.mubr.bf16.gmra.mxu0 %v3846
        %v4265 = vpop.f32.mrf.mxu0
        %v4266 = vadd.f32 %v4105, %v4265
        %v4267 = vpop.f32.mrf.mxu0
        %v4268 = vpop.f32.mrf.mxu0
        %v4269 = vadd.f32 %v4108, %v4268
        %v4270 = vpop.f32.mrf.mxu0
        %4271 = vmatprep.mubr.bf16.mxu0 0
        %4272 = vmatmul.mubr.bf16.gmra.mxu0 %v3847
        %v4273 = vpop.f32.mrf.mxu0
        %v4274 = vadd.f32 %v4113, %v4273
        %v4275 = vpop.f32.mrf.mxu0
        %v4276 = vpop.f32.mrf.mxu0
        %v4277 = vadd.f32 %v4116, %v4276
        %v4278 = vpop.f32.mrf.mxu0
        %4279 = vmatprep.mubr.bf16.mxu0 0
        %4280 = vmatmul.mubr.bf16.gmra.mxu0 %v3848
        %v4281 = vpop.f32.mrf.mxu0
        %v4282 = vadd.f32 %v4121, %v4281
        %v4283 = vpop.f32.mrf.mxu0
        %v4284 = vpop.f32.mrf.mxu0
        %v4285 = vadd.f32 %v4124, %v4284
        %v4286 = vpop.f32.mrf.mxu0
        %4287 = vmatprep.mubr.bf16.mxu0 0
        %4288 = vmatmul.mubr.bf16.gmra.mxu0 %v3849
        %v4289 = vpop.f32.mrf.mxu0
        %v4290 = vadd.f32 %v4129, %v4289
        %v4291 = vpop.f32.mrf.mxu0
        %v4292 = vpop.f32.mrf.mxu0
        %v4293 = vadd.f32 %v4132, %v4292
        %v4294 = vpop.f32.mrf.mxu0
        %4295 = vmatprep.mubr.bf16.mxu0 0
        %4296 = vmatmul.mubr.bf16.gmra.mxu0 %v3850
        %v4297 = vpop.f32.mrf.mxu0
        %v4298 = vadd.f32 %v4137, %v4297
        %v4299 = vpop.f32.mrf.mxu0
        %v4300 = vpop.f32.mrf.mxu0
        %v4301 = vadd.f32 %v4140, %v4300
        %v4302 = vpop.f32.mrf.mxu0
        %4303 = vmatprep.mubr.bf16.mxu0 0
        %4304 = vmatmul.mubr.bf16.gmra.mxu0 %v3851
        %v4305 = vpop.f32.mrf.mxu0
        %v4306 = vadd.f32 %v4145, %v4305
        %v4307 = vpop.f32.mrf.mxu0
        %v4308 = vpop.f32.mrf.mxu0
        %v4309 = vadd.f32 %v4148, %v4308
        %v4310 = vpop.f32.mrf.mxu0
        %4311 = vmatprep.mubr.bf16.mxu0 0
        %4312 = vmatmul.mubr.bf16.gmra.mxu0 %v3852
        %v4313 = vpop.f32.mrf.mxu0
        %v4314 = vadd.f32 %v4153, %v4313
        %v4315 = vpop.f32.mrf.mxu0
        %v4316 = vpop.f32.mrf.mxu0
        %v4317 = vadd.f32 %v4156, %v4316
        %v4318 = vpop.f32.mrf.mxu0
        %4319 = vmatprep.mubr.bf16.mxu0 0
        %4320 = vmatmul.mubr.bf16.gmra.mxu0 %v3853
        %v4321 = vpop.f32.mrf.mxu0
        %v4322 = vadd.f32 %v4161, %v4321
        %v4323 = vpop.f32.mrf.mxu0
        %v4324 = vpop.f32.mrf.mxu0
        %v4325 = vadd.f32 %v4164, %v4324
        %v4326 = vpop.f32.mrf.mxu0
        %4327 = vmatprep.mubr.bf16.mxu0 0
        %4328 = vmatmul.mubr.bf16.gmra.mxu0 %v3854
        %v4329 = vpop.f32.mrf.mxu0
        %v4330 = vadd.f32 %v4169, %v4329
        %v4331 = vpop.f32.mrf.mxu0
        %v4332 = vpop.f32.mrf.mxu0
        %v4333 = vadd.f32 %v4172, %v4332
        %v4334 = vpop.f32.mrf.mxu0
        %4335 = vmatprep.mubr.bf16.mxu0 0
        %4336 = vmatmul.mubr.bf16.gmra.mxu0 %v3855
        %v4337 = vpop.f32.mrf.mxu0
        %v4338 = vadd.f32 %v4177, %v4337
        %v4339 = vpop.f32.mrf.mxu0
        %v4340 = vpop.f32.mrf.mxu0
        %v4341 = vadd.f32 %v4180, %v4340
        %v4342 = vpop.f32.mrf.mxu0
        %4343 = vmatprep.mubr.bf16.mxu0 0
        %4344 = vmatmul.mubr.bf16.gmra.mxu0 %v3856
        %v4345 = vpop.f32.mrf.mxu0
        %v4346 = vadd.f32 %v4185, %v4345
        %v4347 = vpop.f32.mrf.mxu0
        %v4348 = vpop.f32.mrf.mxu0
        %v4349 = vadd.f32 %v4188, %v4348
        %v4350 = vpop.f32.mrf.mxu0
        %4351 = vmatprep.mubr.bf16.mxu0 0
        %4352 = vmatmul.mubr.bf16.gmra.mxu0 %v3857
        %v4353 = vpop.f32.mrf.mxu0
        %v4354 = vadd.f32 %v4193, %v4353
        %v4355 = vpop.f32.mrf.mxu0
        %v4356 = vpop.f32.mrf.mxu0
        %v4357 = vadd.f32 %v4196, %v4356
        %v4358 = vpop.f32.mrf.mxu0
        %4359 = vmatprep.mubr.bf16.mxu0 0
        %4360 = vmatmul.mubr.bf16.gmra.mxu0 %v3858
        %v4361 = vpop.f32.mrf.mxu0
        %v4362 = vadd.f32 %v4201, %v4361
        %v4363 = vpop.f32.mrf.mxu0
        %v4364 = vpop.f32.mrf.mxu0
        %v4365 = vadd.f32 %v4204, %v4364
        %v4366 = vpop.f32.mrf.mxu0
        %4367 = vmatprep.mubr.bf16.mxu0 0
        %4368 = vmatmul.mubr.bf16.gmra.mxu0 %v3859
        %v4369 = vpop.f32.mrf.mxu0
        %v4370 = vadd.f32 %v4209, %v4369
        %v4371 = vpop.f32.mrf.mxu0
        %v4372 = vpop.f32.mrf.mxu0
        %v4373 = vadd.f32 %v4212, %v4372
        %v4374 = vpop.f32.mrf.mxu0
        %4375 = vmatprep.mubr.bf16.mxu0 0
        %4376 = vmatmul.mubr.bf16.gmra.mxu0 %v3860
        %v4377 = vpop.f32.mrf.mxu0
        %v4378 = vadd.f32 %v4217, %v4377
        %v4379 = vpop.f32.mrf.mxu0
        %v4380 = vpop.f32.mrf.mxu0
        %v4381 = vadd.f32 %v4220, %v4380
        %v4382 = vpop.f32.mrf.mxu0
        %4383 = vmatprep.mubr.bf16.mxu0 0
        %4384 = vmatmul.mubr.bf16.gmra.mxu0 %v3861
        %v4385 = vpop.f32.mrf.mxu0
        %v4386 = vadd.f32 %v4225, %v4385
        %v4387 = vpop.f32.mrf.mxu0
        %v4388 = vpop.f32.mrf.mxu0
        %v4389 = vadd.f32 %v4228, %v4388
        %v4390 = vpop.f32.mrf.mxu0
        %4391 = vdwg.mxu0
        %v4392 = vadd.f32 %v3077, %v4266
        %v4393 = vadd.f32 %v3080, %v4269
        %v4394 = vadd.f32 %v3085, %v4274
        %v4395 = vadd.f32 %v3088, %v4277
        %v4396 = vadd.f32 %v3093, %v4282
        %v4397 = vadd.f32 %v3096, %v4285
        %v4398 = vadd.f32 %v3101, %v4290
        %v4399 = vadd.f32 %v3104, %v4293
        %v4400 = vadd.f32 %v3109, %v4298
        %v4401 = vadd.f32 %v3112, %v4301
        %v4402 = vadd.f32 %v3117, %v4306
        %v4403 = vadd.f32 %v3120, %v4309
        %v4404 = vadd.f32 %v3125, %v4314
        %v4405 = vadd.f32 %v3128, %v4317
        %v4406 = vadd.f32 %v3133, %v4322
        %v4407 = vadd.f32 %v3136, %v4325
        %v4408 = vadd.f32 %v3141, %v4330
        %v4409 = vadd.f32 %v3144, %v4333
        %v4410 = vadd.f32 %v3149, %v4338
        %v4411 = vadd.f32 %v3152, %v4341
        %v4412 = vadd.f32 %v3157, %v4346
        %v4413 = vadd.f32 %v3160, %v4349
        %v4414 = vadd.f32 %v3165, %v4354
        %v4415 = vadd.f32 %v3168, %v4357
        %v4416 = vadd.f32 %v3173, %v4362
        %v4417 = vadd.f32 %v3176, %v4365
        %v4418 = vadd.f32 %v3181, %v4370
        %v4419 = vadd.f32 %v3184, %v4373
        %v4420 = vadd.f32 %v3189, %v4378
        %v4421 = vadd.f32 %v3192, %v4381
        %v4422 = vadd.f32 %v3197, %v4386
        %v4423 = vadd.f32 %v3200, %v4389
        %v4424 = vld [vmem:[%s3] sm:$0x1]
        %v4426 = vlaneseq
        %v4427 = vshrl.u32 %v4426, 7
        %v4428 = vsub.s32 0, %v4427
        %v4429 = vrot.slane %v4424, %v4428
        %v4431 = vmul.f32 %v4392, %v4429
        %v4432 = vmul.f32 %v4393, %v4429
        %v4433 = vmul.f32 %v4394, %v4429
        %v4434 = vmul.f32 %v4395, %v4429
        %v4435 = vmul.f32 %v4396, %v4429
        %v4436 = vmul.f32 %v4397, %v4429
        %v4437 = vmul.f32 %v4398, %v4429
        %v4438 = vmul.f32 %v4399, %v4429
        %v4439 = vmul.f32 %v4400, %v4429
        %v4440 = vmul.f32 %v4401, %v4429
        %v4441 = vmul.f32 %v4402, %v4429
        %v4442 = vmul.f32 %v4403, %v4429
        %v4443 = vmul.f32 %v4404, %v4429
        %v4444 = vmul.f32 %v4405, %v4429
        %v4445 = vmul.f32 %v4406, %v4429
        %v4446 = vmul.f32 %v4407, %v4429
        %v4447 = vmul.f32 %v4408, %v4429
        %v4448 = vmul.f32 %v4409, %v4429
        %v4449 = vmul.f32 %v4410, %v4429
        %v4450 = vmul.f32 %v4411, %v4429
        %v4451 = vmul.f32 %v4412, %v4429
        %v4452 = vmul.f32 %v4413, %v4429
        %v4453 = vmul.f32 %v4414, %v4429
        %v4454 = vmul.f32 %v4415, %v4429
        %v4455 = vmul.f32 %v4416, %v4429
        %v4456 = vmul.f32 %v4417, %v4429
        %v4457 = vmul.f32 %v4418, %v4429
        %v4458 = vmul.f32 %v4419, %v4429
        %v4459 = vmul.f32 %v4420, %v4429
        %v4460 = vmul.f32 %v4421, %v4429
        %v4461 = vmul.f32 %v4422, %v4429
        %v4462 = vmul.f32 %v4423, %v4429
        %v4463 = vld [vmem:[%s4] sm:$0x1]
        %v4465 = vlaneseq
        %v4466 = vshrl.u32 %v4465, 7
        %v4467 = vsub.s32 0, %v4466
        %v4468 = vrot.slane %v4463, %v4467
        %v4470 = vadd.f32 %v4431, %v4468
        %v4471 = vadd.f32 %v4432, %v4468
        %v4472 = vadd.f32 %v4433, %v4468
        %v4473 = vadd.f32 %v4434, %v4468
        %v4474 = vadd.f32 %v4435, %v4468
        %v4475 = vadd.f32 %v4436, %v4468
        %v4476 = vadd.f32 %v4437, %v4468
        %v4477 = vadd.f32 %v4438, %v4468
        %v4478 = vadd.f32 %v4439, %v4468
        %v4479 = vadd.f32 %v4440, %v4468
        %v4480 = vadd.f32 %v4441, %v4468
        %v4481 = vadd.f32 %v4442, %v4468
        %v4482 = vadd.f32 %v4443, %v4468
        %v4483 = vadd.f32 %v4444, %v4468
        %v4484 = vadd.f32 %v4445, %v4468
        %v4485 = vadd.f32 %v4446, %v4468
        %v4486 = vadd.f32 %v4447, %v4468
        %v4487 = vadd.f32 %v4448, %v4468
        %v4488 = vadd.f32 %v4449, %v4468
        %v4489 = vadd.f32 %v4450, %v4468
        %v4490 = vadd.f32 %v4451, %v4468
        %v4491 = vadd.f32 %v4452, %v4468
        %v4492 = vadd.f32 %v4453, %v4468
        %v4493 = vadd.f32 %v4454, %v4468
        %v4494 = vadd.f32 %v4455, %v4468
        %v4495 = vadd.f32 %v4456, %v4468
        %v4496 = vadd.f32 %v4457, %v4468
        %v4497 = vadd.f32 %v4458, %v4468
        %v4498 = vadd.f32 %v4459, %v4468
        %v4499 = vadd.f32 %v4460, %v4468
        %v4500 = vadd.f32 %v4461, %v4468
        %v4501 = vadd.f32 %v4462, %v4468
        %v4502 = vmax.f32 %v4470, 0.0
        %v4503 = vmax.f32 %v4471, 0.0
        %v4504 = vmax.f32 %v4472, 0.0
        %v4505 = vmax.f32 %v4473, 0.0
        %v4506 = vmax.f32 %v4474, 0.0
        %v4507 = vmax.f32 %v4475, 0.0
        %v4508 = vmax.f32 %v4476, 0.0
        %v4509 = vmax.f32 %v4477, 0.0
        %v4510 = vmax.f32 %v4478, 0.0
        %v4511 = vmax.f32 %v4479, 0.0
        %v4512 = vmax.f32 %v4480, 0.0
        %v4513 = vmax.f32 %v4481, 0.0
        %v4514 = vmax.f32 %v4482, 0.0
        %v4515 = vmax.f32 %v4483, 0.0
        %v4516 = vmax.f32 %v4484, 0.0
        %v4517 = vmax.f32 %v4485, 0.0
        %v4518 = vmax.f32 %v4486, 0.0
        %v4519 = vmax.f32 %v4487, 0.0
        %v4520 = vmax.f32 %v4488, 0.0
        %v4521 = vmax.f32 %v4489, 0.0
        %v4522 = vmax.f32 %v4490, 0.0
        %v4523 = vmax.f32 %v4491, 0.0
        %v4524 = vmax.f32 %v4492, 0.0
        %v4525 = vmax.f32 %v4493, 0.0
        %v4526 = vmax.f32 %v4494, 0.0
        %v4527 = vmax.f32 %v4495, 0.0
        %v4528 = vmax.f32 %v4496, 0.0
        %v4529 = vmax.f32 %v4497, 0.0
        %v4530 = vmax.f32 %v4498, 0.0
        %v4531 = vmax.f32 %v4499, 0.0
        %v4532 = vmax.f32 %v4500, 0.0
        %v4533 = vmax.f32 %v4501, 0.0
        %v4534 = vpack.c.bf16 %v4503, %v4502
        %v4535 = vpack.c.bf16 %v4505, %v4504
        %v4536 = vpack.c.bf16 %v4507, %v4506
        %v4537 = vpack.c.bf16 %v4509, %v4508
        %v4538 = vpack.c.bf16 %v4511, %v4510
        %v4539 = vpack.c.bf16 %v4513, %v4512
        %v4540 = vpack.c.bf16 %v4515, %v4514
        %v4541 = vpack.c.bf16 %v4517, %v4516
        %v4542 = vpack.c.bf16 %v4519, %v4518
        %v4543 = vpack.c.bf16 %v4521, %v4520
        %v4544 = vpack.c.bf16 %v4523, %v4522
        %v4545 = vpack.c.bf16 %v4525, %v4524
        %v4546 = vpack.c.bf16 %v4527, %v4526
        %v4547 = vpack.c.bf16 %v4529, %v4528
        %v4548 = vpack.c.bf16 %v4531, %v4530
        %v4549 = vpack.c.bf16 %v4533, %v4532
        %4550 = vst [vmem:[#allocation2] sm:$0xf] 0
        %4551 = vst [vmem:[#allocation2 + $0x4] sm:$0xf] 0
        %4552 = vst [vmem:[#allocation2 + $0x8] sm:$0xf] 0
        %s4553 = scalar_lea.vmem [#allocation2], 204
        %4554 = vst [vmem:[%s4553] sm:$0xf] 0
        %4555 = vst [vmem:[%s4553 + $0x4] sm:$0xf] 0
        %4556 = vst [vmem:[%s4553 + $0x8] sm:$0xf] 0
        %s4557 = scalar_lea.vmem [#allocation2], 12
        %vm4558 = vcmask 1040384
        %vm4559 = vsmask.f32 256
        %vm4560 = vmand %vm4558, %vm4559
        %v4561 = vld [vmem:[%s4557] sm:$0x1]
        %v4562 = vsel %vm4560, 0, %v4561
        %4563 = vst [vmem:[%s4557] sm:$0x1] %v4562
        %v4564 = vld [vmem:[%s4557 + $0xc] sm:$0x1]
        %v4565 = vsel %vm4560, 0, %v4564
        %4566 = vst [vmem:[%s4557 + $0xc] sm:$0x1] %v4565
        %v4567 = vld [vmem:[%s4557 + $0x18] sm:$0x1]
        %v4568 = vsel %vm4560, 0, %v4567
        %4569 = vst [vmem:[%s4557 + $0x18] sm:$0x1] %v4568
        %v4570 = vld [vmem:[%s4557 + $0x24] sm:$0x1]
        %v4571 = vsel %vm4560, 0, %v4570
        %4572 = vst [vmem:[%s4557 + $0x24] sm:$0x1] %v4571
        %v4573 = vld [vmem:[%s4557 + $0x30] sm:$0x1]
        %v4574 = vsel %vm4560, 0, %v4573
        %4575 = vst [vmem:[%s4557 + $0x30] sm:$0x1] %v4574
        %v4576 = vld [vmem:[%s4557 + $0x3c] sm:$0x1]
        %v4577 = vsel %vm4560, 0, %v4576
        %4578 = vst [vmem:[%s4557 + $0x3c] sm:$0x1] %v4577
        %v4579 = vld [vmem:[%s4557 + $0x48] sm:$0x1]
        %v4580 = vsel %vm4560, 0, %v4579
        %4581 = vst [vmem:[%s4557 + $0x48] sm:$0x1] %v4580
        %v4582 = vld [vmem:[%s4557 + $0x54] sm:$0x1]
        %v4583 = vsel %vm4560, 0, %v4582
        %4584 = vst [vmem:[%s4557 + $0x54] sm:$0x1] %v4583
        %v4585 = vld [vmem:[%s4557 + $0x60] sm:$0x1]
        %v4586 = vsel %vm4560, 0, %v4585
        %4587 = vst [vmem:[%s4557 + $0x60] sm:$0x1] %v4586
        %v4588 = vld [vmem:[%s4557 + $0x6c] sm:$0x1]
        %v4589 = vsel %vm4560, 0, %v4588
        %4590 = vst [vmem:[%s4557 + $0x6c] sm:$0x1] %v4589
        %v4591 = vld [vmem:[%s4557 + $0x78] sm:$0x1]
        %v4592 = vsel %vm4560, 0, %v4591
        %4593 = vst [vmem:[%s4557 + $0x78] sm:$0x1] %v4592
        %v4594 = vld [vmem:[%s4557 + $0x84] sm:$0x1]
        %v4595 = vsel %vm4560, 0, %v4594
        %4596 = vst [vmem:[%s4557 + $0x84] sm:$0x1] %v4595
        %v4597 = vld [vmem:[%s4557 + $0x90] sm:$0x1]
        %v4598 = vsel %vm4560, 0, %v4597
        %4599 = vst [vmem:[%s4557 + $0x90] sm:$0x1] %v4598
        %v4600 = vld [vmem:[%s4557 + $0x9c] sm:$0x1]
        %v4601 = vsel %vm4560, 0, %v4600
        %4602 = vst [vmem:[%s4557 + $0x9c] sm:$0x1] %v4601
        %v4603 = vld [vmem:[%s4557 + $0xa8] sm:$0x1]
        %v4604 = vsel %vm4560, 0, %v4603
        %4605 = vst [vmem:[%s4557 + $0xa8] sm:$0x1] %v4604
        %v4606 = vld [vmem:[%s4557 + $0xb4] sm:$0x1]
        %v4607 = vsel %vm4560, 0, %v4606
        %4608 = vst [vmem:[%s4557 + $0xb4] sm:$0x1] %v4607
        %vm4609 = vsmask.f32 7938
        %vm4610 = vmand %vm4558, %vm4609
        %v4611 = vld [vmem:[%s4557 + $0x8] sm:$0x1]
        %v4612 = vsel %vm4610, 0, %v4611
        %4613 = vst [vmem:[%s4557 + $0x8] sm:$0x1] %v4612
        %v4614 = vld [vmem:[%s4557 + $0x14] sm:$0x1]
        %v4615 = vsel %vm4610, 0, %v4614
        %4616 = vst [vmem:[%s4557 + $0x14] sm:$0x1] %v4615
        %v4617 = vld [vmem:[%s4557 + $0x20] sm:$0x1]
        %v4618 = vsel %vm4610, 0, %v4617
        %4619 = vst [vmem:[%s4557 + $0x20] sm:$0x1] %v4618
        %v4620 = vld [vmem:[%s4557 + $0x2c] sm:$0x1]
        %v4621 = vsel %vm4610, 0, %v4620
        %4622 = vst [vmem:[%s4557 + $0x2c] sm:$0x1] %v4621
        %v4623 = vld [vmem:[%s4557 + $0x38] sm:$0x1]
        %v4624 = vsel %vm4610, 0, %v4623
        %4625 = vst [vmem:[%s4557 + $0x38] sm:$0x1] %v4624
        %v4626 = vld [vmem:[%s4557 + $0x44] sm:$0x1]
        %v4627 = vsel %vm4610, 0, %v4626
        %4628 = vst [vmem:[%s4557 + $0x44] sm:$0x1] %v4627
        %v4629 = vld [vmem:[%s4557 + $0x50] sm:$0x1]
        %v4630 = vsel %vm4610, 0, %v4629
        %4631 = vst [vmem:[%s4557 + $0x50] sm:$0x1] %v4630
        %v4632 = vld [vmem:[%s4557 + $0x5c] sm:$0x1]
        %v4633 = vsel %vm4610, 0, %v4632
        %4634 = vst [vmem:[%s4557 + $0x5c] sm:$0x1] %v4633
        %v4635 = vld [vmem:[%s4557 + $0x68] sm:$0x1]
        %v4636 = vsel %vm4610, 0, %v4635
        %4637 = vst [vmem:[%s4557 + $0x68] sm:$0x1] %v4636
        %v4638 = vld [vmem:[%s4557 + $0x74] sm:$0x1]
        %v4639 = vsel %vm4610, 0, %v4638
        %4640 = vst [vmem:[%s4557 + $0x74] sm:$0x1] %v4639
        %v4641 = vld [vmem:[%s4557 + $0x80] sm:$0x1]
        %v4642 = vsel %vm4610, 0, %v4641
        %4643 = vst [vmem:[%s4557 + $0x80] sm:$0x1] %v4642
        %v4644 = vld [vmem:[%s4557 + $0x8c] sm:$0x1]
        %v4645 = vsel %vm4610, 0, %v4644
        %4646 = vst [vmem:[%s4557 + $0x8c] sm:$0x1] %v4645
        %v4647 = vld [vmem:[%s4557 + $0x98] sm:$0x1]
        %v4648 = vsel %vm4610, 0, %v4647
        %4649 = vst [vmem:[%s4557 + $0x98] sm:$0x1] %v4648
        %v4650 = vld [vmem:[%s4557 + $0xa4] sm:$0x1]
        %v4651 = vsel %vm4610, 0, %v4650
        %4652 = vst [vmem:[%s4557 + $0xa4] sm:$0x1] %v4651
        %v4653 = vld [vmem:[%s4557 + $0xb0] sm:$0x1]
        %v4654 = vsel %vm4610, 0, %v4653
        %4655 = vst [vmem:[%s4557 + $0xb0] sm:$0x1] %v4654
        %v4656 = vld [vmem:[%s4557 + $0xbc] sm:$0x1]
        %v4657 = vsel %vm4610, 0, %v4656
        %4658 = vst [vmem:[%s4557 + $0xbc] sm:$0x1] %v4657
        %v4675 = vunpack.c.l.b16 %v4534
        %v4676 = vunpack.c.h.b16 %v4534
        %v4677 = vunpack.c.l.b16 %v4535
        %v4678 = vunpack.c.h.b16 %v4535
        %v4679 = vunpack.c.l.b16 %v4536
        %v4680 = vunpack.c.h.b16 %v4536
        %v4681 = vunpack.c.l.b16 %v4537
        %v4682 = vunpack.c.h.b16 %v4537
        %v4683 = vunpack.c.l.b16 %v4538
        %v4684 = vunpack.c.h.b16 %v4538
        %v4685 = vunpack.c.l.b16 %v4539
        %v4686 = vunpack.c.h.b16 %v4539
        %v4687 = vunpack.c.l.b16 %v4540
        %v4688 = vunpack.c.h.b16 %v4540
        %v4689 = vunpack.c.l.b16 %v4541
        %v4690 = vunpack.c.h.b16 %v4541
        %v4691 = vunpack.c.l.b16 %v4542
        %v4692 = vunpack.c.h.b16 %v4542
        %v4693 = vunpack.c.l.b16 %v4543
        %v4694 = vunpack.c.h.b16 %v4543
        %v4695 = vunpack.c.l.b16 %v4544
        %v4696 = vunpack.c.h.b16 %v4544
        %v4697 = vunpack.c.l.b16 %v4545
        %v4698 = vunpack.c.h.b16 %v4545
        %v4699 = vunpack.c.l.b16 %v4546
        %v4700 = vunpack.c.h.b16 %v4546
        %v4701 = vunpack.c.l.b16 %v4547
        %v4702 = vunpack.c.h.b16 %v4547
        %v4703 = vunpack.c.l.b16 %v4548
        %v4704 = vunpack.c.h.b16 %v4548
        %v4705 = vunpack.c.l.b16 %v4549
        %v4706 = vunpack.c.h.b16 %v4549
        %v4707 = vpack.c.b16 %v4675, %v4675
        %v4708 = vpack.c.b16 %v4676, %v4676
        %v4709 = vpack.c.b16 %v4677, %v4677
        %v4710 = vpack.c.b16 %v4678, %v4678
        %v4711 = vpack.c.b16 %v4679, %v4679
        %v4712 = vpack.c.b16 %v4680, %v4680
        %v4713 = vpack.c.b16 %v4681, %v4681
        %v4714 = vpack.c.b16 %v4682, %v4682
        %v4715 = vpack.c.b16 %v4683, %v4683
        %v4716 = vpack.c.b16 %v4684, %v4684
        %v4717 = vpack.c.b16 %v4685, %v4685
        %v4718 = vpack.c.b16 %v4686, %v4686
        %v4719 = vpack.c.b16 %v4687, %v4687
        %v4720 = vpack.c.b16 %v4688, %v4688
        %v4721 = vpack.c.b16 %v4689, %v4689
        %v4722 = vpack.c.b16 %v4690, %v4690
        %v4723 = vpack.c.b16 %v4691, %v4691
        %v4724 = vpack.c.b16 %v4692, %v4692
        %v4725 = vpack.c.b16 %v4693, %v4693
        %v4726 = vpack.c.b16 %v4694, %v4694
        %v4727 = vpack.c.b16 %v4695, %v4695
        %v4728 = vpack.c.b16 %v4696, %v4696
        %v4729 = vpack.c.b16 %v4697, %v4697
        %v4730 = vpack.c.b16 %v4698, %v4698
        %v4731 = vpack.c.b16 %v4699, %v4699
        %v4732 = vpack.c.b16 %v4700, %v4700
        %v4733 = vpack.c.b16 %v4701, %v4701
        %v4734 = vpack.c.b16 %v4702, %v4702
        %v4735 = vpack.c.b16 %v4703, %v4703
        %v4736 = vpack.c.b16 %v4704, %v4704
        %v4737 = vpack.c.b16 %v4705, %v4705
        %v4738 = vpack.c.b16 %v4706, %v4706
        %vm4739 = vsmask.f32 4368
        %vm4740 = vmor %vm4559, %vm4739
        %v4742 = vshrl.u32 %v4707, 16
        %v4744 = vrot.slane %v4742, 7
        %v4745 = vshll.u32 %v4707, 16
        %v4747 = vor.u32 %v4744, %v4745
        %v4748 = vrot.slane %v4744, 4
        %v4750 = vshrl.u32 %v4708, 16
        %v4752 = vrot.slane %v4750, 7
        %v4753 = vshll.u32 %v4708, 16
        %v4755 = vor.u32 %v4752, %v4753
        %v4756 = vsel %vm4740, %v4748, %v4755
        %v4757 = vrot.slane %v4752, 4
        %v4759 = vshrl.u32 %v4709, 16
        %v4761 = vrot.slane %v4759, 7
        %v4762 = vshll.u32 %v4709, 16
        %v4764 = vor.u32 %v4761, %v4762
        %v4765 = vrot.slane %v4761, 4
        %v4767 = vshrl.u32 %v4710, 16
        %v4769 = vrot.slane %v4767, 7
        %v4770 = vshll.u32 %v4710, 16
        %v4772 = vor.u32 %v4769, %v4770
        %v4773 = vsel %vm4740, %v4765, %v4772
        %v4774 = vrot.slane %v4769, 4
        %v4776 = vshrl.u32 %v4711, 16
        %v4778 = vrot.slane %v4776, 7
        %v4779 = vshll.u32 %v4711, 16
        %v4781 = vor.u32 %v4778, %v4779
        %v4782 = vrot.slane %v4778, 4
        %v4784 = vshrl.u32 %v4712, 16
        %v4786 = vrot.slane %v4784, 7
        %v4787 = vshll.u32 %v4712, 16
        %v4789 = vor.u32 %v4786, %v4787
        %v4790 = vsel %vm4740, %v4782, %v4789
        %v4791 = vrot.slane %v4786, 4
        %v4793 = vshrl.u32 %v4713, 16
        %v4795 = vrot.slane %v4793, 7
        %v4796 = vshll.u32 %v4713, 16
        %v4798 = vor.u32 %v4795, %v4796
        %v4799 = vrot.slane %v4795, 4
        %v4801 = vshrl.u32 %v4714, 16
        %v4803 = vrot.slane %v4801, 7
        %v4804 = vshll.u32 %v4714, 16
        %v4806 = vor.u32 %v4803, %v4804
        %v4807 = vsel %vm4740, %v4799, %v4806
        %v4808 = vrot.slane %v4803, 4
        %v4810 = vshrl.u32 %v4715, 16
        %v4812 = vrot.slane %v4810, 7
        %v4813 = vshll.u32 %v4715, 16
        %v4815 = vor.u32 %v4812, %v4813
        %v4816 = vrot.slane %v4812, 4
        %v4818 = vshrl.u32 %v4716, 16
        %v4820 = vrot.slane %v4818, 7
        %v4821 = vshll.u32 %v4716, 16
        %v4823 = vor.u32 %v4820, %v4821
        %v4824 = vsel %vm4740, %v4816, %v4823
        %v4825 = vrot.slane %v4820, 4
        %v4827 = vshrl.u32 %v4717, 16
        %v4829 = vrot.slane %v4827, 7
        %v4830 = vshll.u32 %v4717, 16
        %v4832 = vor.u32 %v4829, %v4830
        %v4833 = vrot.slane %v4829, 4
        %v4835 = vshrl.u32 %v4718, 16
        %v4837 = vrot.slane %v4835, 7
        %v4838 = vshll.u32 %v4718, 16
        %v4840 = vor.u32 %v4837, %v4838
        %v4841 = vsel %vm4740, %v4833, %v4840
        %v4842 = vrot.slane %v4837, 4
        %v4844 = vshrl.u32 %v4719, 16
        %v4846 = vrot.slane %v4844, 7
        %v4847 = vshll.u32 %v4719, 16
        %v4849 = vor.u32 %v4846, %v4847
        %v4850 = vrot.slane %v4846, 4
        %v4852 = vshrl.u32 %v4720, 16
        %v4854 = vrot.slane %v4852, 7
        %v4855 = vshll.u32 %v4720, 16
        %v4857 = vor.u32 %v4854, %v4855
        %v4858 = vsel %vm4740, %v4850, %v4857
        %v4859 = vrot.slane %v4854, 4
        %v4861 = vshrl.u32 %v4721, 16
        %v4863 = vrot.slane %v4861, 7
        %v4864 = vshll.u32 %v4721, 16
        %v4866 = vor.u32 %v4863, %v4864
        %v4867 = vrot.slane %v4863, 4
        %v4869 = vshrl.u32 %v4722, 16
        %v4871 = vrot.slane %v4869, 7
        %v4872 = vshll.u32 %v4722, 16
        %v4874 = vor.u32 %v4871, %v4872
        %v4875 = vsel %vm4740, %v4867, %v4874
        %v4876 = vrot.slane %v4871, 4
        %v4878 = vshrl.u32 %v4723, 16
        %v4880 = vrot.slane %v4878, 7
        %v4881 = vshll.u32 %v4723, 16
        %v4883 = vor.u32 %v4880, %v4881
        %v4884 = vrot.slane %v4880, 4
        %v4886 = vshrl.u32 %v4724, 16
        %v4888 = vrot.slane %v4886, 7
        %v4889 = vshll.u32 %v4724, 16
        %v4891 = vor.u32 %v4888, %v4889
        %v4892 = vsel %vm4740, %v4884, %v4891
        %v4893 = vrot.slane %v4888, 4
        %v4895 = vshrl.u32 %v4725, 16
        %v4897 = vrot.slane %v4895, 7
        %v4898 = vshll.u32 %v4725, 16
        %v4900 = vor.u32 %v4897, %v4898
        %v4901 = vrot.slane %v4897, 4
        %v4903 = vshrl.u32 %v4726, 16
        %v4905 = vrot.slane %v4903, 7
        %v4906 = vshll.u32 %v4726, 16
        %v4908 = vor.u32 %v4905, %v4906
        %v4909 = vsel %vm4740, %v4901, %v4908
        %v4910 = vrot.slane %v4905, 4
        %v4912 = vshrl.u32 %v4727, 16
        %v4914 = vrot.slane %v4912, 7
        %v4915 = vshll.u32 %v4727, 16
        %v4917 = vor.u32 %v4914, %v4915
        %v4918 = vrot.slane %v4914, 4
        %v4920 = vshrl.u32 %v4728, 16
        %v4922 = vrot.slane %v4920, 7
        %v4923 = vshll.u32 %v4728, 16
        %v4925 = vor.u32 %v4922, %v4923
        %v4926 = vsel %vm4740, %v4918, %v4925
        %v4927 = vrot.slane %v4922, 4
        %v4929 = vshrl.u32 %v4729, 16
        %v4931 = vrot.slane %v4929, 7
        %v4932 = vshll.u32 %v4729, 16
        %v4934 = vor.u32 %v4931, %v4932
        %v4935 = vrot.slane %v4931, 4
        %v4937 = vshrl.u32 %v4730, 16
        %v4939 = vrot.slane %v4937, 7
        %v4940 = vshll.u32 %v4730, 16
        %v4942 = vor.u32 %v4939, %v4940
        %v4943 = vsel %vm4740, %v4935, %v4942
        %v4944 = vrot.slane %v4939, 4
        %v4946 = vshrl.u32 %v4731, 16
        %v4948 = vrot.slane %v4946, 7
        %v4949 = vshll.u32 %v4731, 16
        %v4951 = vor.u32 %v4948, %v4949
        %v4952 = vrot.slane %v4948, 4
        %v4954 = vshrl.u32 %v4732, 16
        %v4956 = vrot.slane %v4954, 7
        %v4957 = vshll.u32 %v4732, 16
        %v4959 = vor.u32 %v4956, %v4957
        %v4960 = vsel %vm4740, %v4952, %v4959
        %v4961 = vrot.slane %v4956, 4
        %v4963 = vshrl.u32 %v4733, 16
        %v4965 = vrot.slane %v4963, 7
        %v4966 = vshll.u32 %v4733, 16
        %v4968 = vor.u32 %v4965, %v4966
        %v4969 = vrot.slane %v4965, 4
        %v4971 = vshrl.u32 %v4734, 16
        %v4973 = vrot.slane %v4971, 7
        %v4974 = vshll.u32 %v4734, 16
        %v4976 = vor.u32 %v4973, %v4974
        %v4977 = vsel %vm4740, %v4969, %v4976
        %v4978 = vrot.slane %v4973, 4
        %v4980 = vshrl.u32 %v4735, 16
        %v4982 = vrot.slane %v4980, 7
        %v4983 = vshll.u32 %v4735, 16
        %v4985 = vor.u32 %v4982, %v4983
        %v4986 = vrot.slane %v4982, 4
        %v4988 = vshrl.u32 %v4736, 16
        %v4990 = vrot.slane %v4988, 7
        %v4991 = vshll.u32 %v4736, 16
        %v4993 = vor.u32 %v4990, %v4991
        %v4994 = vsel %vm4740, %v4986, %v4993
        %v4995 = vrot.slane %v4990, 4
        %v4997 = vshrl.u32 %v4737, 16
        %v4999 = vrot.slane %v4997, 7
        %v5000 = vshll.u32 %v4737, 16
        %v5002 = vor.u32 %v4999, %v5000
        %v5003 = vrot.slane %v4999, 4
        %v5005 = vshrl.u32 %v4738, 16
        %v5007 = vrot.slane %v5005, 7
        %v5008 = vshll.u32 %v4738, 16
        %v5010 = vor.u32 %v5007, %v5008
        %v5011 = vsel %vm4740, %v5003, %v5010
        %v5012 = vrot.slane %v5007, 4
        %vm5061 = vcmask 1043456
        %vm5062 = vmand %vm5061, %vm4609
        %v5063 = vld [vmem:[%s4557] sm:$0xf]
        %v5064 = vsel %vm5062, %v4747, %v5063
        %5065 = vst [vmem:[%s4557] sm:$0xf] %v5064
        %5066 = vst [vmem:[%s4557 + $0x4] sm:$0xf] %v4756
        %v5067 = vld [vmem:[%s4557 + $0x8] sm:$0x1]
        %v5068 = vsel %vm4560, %v4757, %v5067
        %5069 = vst [vmem:[%s4557 + $0x8] sm:$0x1] %v5068
        %v5070 = vld [vmem:[%s4557 + $0xc] sm:$0xf]
        %v5071 = vsel %vm5062, %v4764, %v5070
        %5072 = vst [vmem:[%s4557 + $0xc] sm:$0xf] %v5071
        %5073 = vst [vmem:[%s4557 + $0x10] sm:$0xf] %v4773
        %v5074 = vld [vmem:[%s4557 + $0x14] sm:$0x1]
        %v5075 = vsel %vm4560, %v4774, %v5074
        %5076 = vst [vmem:[%s4557 + $0x14] sm:$0x1] %v5075
        %v5077 = vld [vmem:[%s4557 + $0x18] sm:$0xf]
        %v5078 = vsel %vm5062, %v4781, %v5077
        %5079 = vst [vmem:[%s4557 + $0x18] sm:$0xf] %v5078
        %5080 = vst [vmem:[%s4557 + $0x1c] sm:$0xf] %v4790
        %v5081 = vld [vmem:[%s4557 + $0x20] sm:$0x1]
        %v5082 = vsel %vm4560, %v4791, %v5081
        %5083 = vst [vmem:[%s4557 + $0x20] sm:$0x1] %v5082
        %v5084 = vld [vmem:[%s4557 + $0x24] sm:$0xf]
        %v5085 = vsel %vm5062, %v4798, %v5084
        %5086 = vst [vmem:[%s4557 + $0x24] sm:$0xf] %v5085
        %5087 = vst [vmem:[%s4557 + $0x28] sm:$0xf] %v4807
        %v5088 = vld [vmem:[%s4557 + $0x2c] sm:$0x1]
        %v5089 = vsel %vm4560, %v4808, %v5088
        %5090 = vst [vmem:[%s4557 + $0x2c] sm:$0x1] %v5089
        %v5091 = vld [vmem:[%s4557 + $0x30] sm:$0xf]
        %v5092 = vsel %vm5062, %v4815, %v5091
        %5093 = vst [vmem:[%s4557 + $0x30] sm:$0xf] %v5092
        %5094 = vst [vmem:[%s4557 + $0x34] sm:$0xf] %v4824
        %v5095 = vld [vmem:[%s4557 + $0x38] sm:$0x1]
        %v5096 = vsel %vm4560, %v4825, %v5095
        %5097 = vst [vmem:[%s4557 + $0x38] sm:$0x1] %v5096
        %v5098 = vld [vmem:[%s4557 + $0x3c] sm:$0xf]
        %v5099 = vsel %vm5062, %v4832, %v5098
        %5100 = vst [vmem:[%s4557 + $0x3c] sm:$0xf] %v5099
        %5101 = vst [vmem:[%s4557 + $0x40] sm:$0xf] %v4841
        %v5102 = vld [vmem:[%s4557 + $0x44] sm:$0x1]
        %v5103 = vsel %vm4560, %v4842, %v5102
        %5104 = vst [vmem:[%s4557 + $0x44] sm:$0x1] %v5103
        %v5105 = vld [vmem:[%s4557 + $0x48] sm:$0xf]
        %v5106 = vsel %vm5062, %v4849, %v5105
        %5107 = vst [vmem:[%s4557 + $0x48] sm:$0xf] %v5106
        %5108 = vst [vmem:[%s4557 + $0x4c] sm:$0xf] %v4858
        %v5109 = vld [vmem:[%s4557 + $0x50] sm:$0x1]
        %v5110 = vsel %vm4560, %v4859, %v5109
        %5111 = vst [vmem:[%s4557 + $0x50] sm:$0x1] %v5110
        %v5112 = vld [vmem:[%s4557 + $0x54] sm:$0xf]
        %v5113 = vsel %vm5062, %v4866, %v5112
        %5114 = vst [vmem:[%s4557 + $0x54] sm:$0xf] %v5113
        %5115 = vst [vmem:[%s4557 + $0x58] sm:$0xf] %v4875
        %v5116 = vld [vmem:[%s4557 + $0x5c] sm:$0x1]
        %v5117 = vsel %vm4560, %v4876, %v5116
        %5118 = vst [vmem:[%s4557 + $0x5c] sm:$0x1] %v5117
        %v5119 = vld [vmem:[%s4557 + $0x60] sm:$0xf]
        %v5120 = vsel %vm5062, %v4883, %v5119
        %5121 = vst [vmem:[%s4557 + $0x60] sm:$0xf] %v5120
        %5122 = vst [vmem:[%s4557 + $0x64] sm:$0xf] %v4892
        %v5123 = vld [vmem:[%s4557 + $0x68] sm:$0x1]
        %v5124 = vsel %vm4560, %v4893, %v5123
        %5125 = vst [vmem:[%s4557 + $0x68] sm:$0x1] %v5124
        %v5126 = vld [vmem:[%s4557 + $0x6c] sm:$0xf]
        %v5127 = vsel %vm5062, %v4900, %v5126
        %5128 = vst [vmem:[%s4557 + $0x6c] sm:$0xf] %v5127
        %5129 = vst [vmem:[%s4557 + $0x70] sm:$0xf] %v4909
        %v5130 = vld [vmem:[%s4557 + $0x74] sm:$0x1]
        %v5131 = vsel %vm4560, %v4910, %v5130
        %5132 = vst [vmem:[%s4557 + $0x74] sm:$0x1] %v5131
        %v5133 = vld [vmem:[%s4557 + $0x78] sm:$0xf]
        %v5134 = vsel %vm5062, %v4917, %v5133
        %5135 = vst [vmem:[%s4557 + $0x78] sm:$0xf] %v5134
        %5136 = vst [vmem:[%s4557 + $0x7c] sm:$0xf] %v4926
        %v5137 = vld [vmem:[%s4557 + $0x80] sm:$0x1]
        %v5138 = vsel %vm4560, %v4927, %v5137
        %5139 = vst [vmem:[%s4557 + $0x80] sm:$0x1] %v5138
        %v5140 = vld [vmem:[%s4557 + $0x84] sm:$0xf]
        %v5141 = vsel %vm5062, %v4934, %v5140
        %5142 = vst [vmem:[%s4557 + $0x84] sm:$0xf] %v5141
        %5143 = vst [vmem:[%s4557 + $0x88] sm:$0xf] %v4943
        %v5144 = vld [vmem:[%s4557 + $0x8c] sm:$0x1]
        %v5145 = vsel %vm4560, %v4944, %v5144
        %5146 = vst [vmem:[%s4557 + $0x8c] sm:$0x1] %v5145
        %v5147 = vld [vmem:[%s4557 + $0x90] sm:$0xf]
        %v5148 = vsel %vm5062, %v4951, %v5147
        %5149 = vst [vmem:[%s4557 + $0x90] sm:$0xf] %v5148
        %5150 = vst [vmem:[%s4557 + $0x94] sm:$0xf] %v4960
        %v5151 = vld [vmem:[%s4557 + $0x98] sm:$0x1]
        %v5152 = vsel %vm4560, %v4961, %v5151
        %5153 = vst [vmem:[%s4557 + $0x98] sm:$0x1] %v5152
        %v5154 = vld [vmem:[%s4557 + $0x9c] sm:$0xf]
        %v5155 = vsel %vm5062, %v4968, %v5154
        %5156 = vst [vmem:[%s4557 + $0x9c] sm:$0xf] %v5155
        %5157 = vst [vmem:[%s4557 + $0xa0] sm:$0xf] %v4977
        %v5158 = vld [vmem:[%s4557 + $0xa4] sm:$0x1]
        %v5159 = vsel %vm4560, %v4978, %v5158
        %5160 = vst [vmem:[%s4557 + $0xa4] sm:$0x1] %v5159
        %v5161 = vld [vmem:[%s4557 + $0xa8] sm:$0xf]
        %v5162 = vsel %vm5062, %v4985, %v5161
        %5163 = vst [vmem:[%s4557 + $0xa8] sm:$0xf] %v5162
        %5164 = vst [vmem:[%s4557 + $0xac] sm:$0xf] %v4994
        %v5165 = vld [vmem:[%s4557 + $0xb0] sm:$0x1]
        %v5166 = vsel %vm4560, %v4995, %v5165
        %5167 = vst [vmem:[%s4557 + $0xb0] sm:$0x1] %v5166
        %v5168 = vld [vmem:[%s4557 + $0xb4] sm:$0xf]
        %v5169 = vsel %vm5062, %v5002, %v5168
        %5170 = vst [vmem:[%s4557 + $0xb4] sm:$0xf] %v5169
        %5171 = vst [vmem:[%s4557 + $0xb8] sm:$0xf] %v5011
        %v5172 = vld [vmem:[%s4557 + $0xbc] sm:$0x1]
        %v5173 = vsel %vm4560, %v5012, %v5172
        %5174 = vst [vmem:[%s4557 + $0xbc] sm:$0x1] %v5173
        %v5175 = vld [vmem:[#allocation2] sm:$0xf]
        %v5176 = vld [vmem:[#allocation2 + $0x4] sm:$0xf]
        %v5177 = vld [vmem:[#allocation2 + $0xc] sm:$0xf]
        %v5178 = vld [vmem:[#allocation2 + $0x10] sm:$0xf]
        %v5179 = vld [vmem:[#allocation2 + $0x18] sm:$0xf]
        %v5180 = vld [vmem:[#allocation2 + $0x1c] sm:$0xf]
        %v5181 = vld [vmem:[#allocation2 + $0x24] sm:$0xf]
        %v5182 = vld [vmem:[#allocation2 + $0x28] sm:$0xf]
        %v5183 = vld [vmem:[#allocation2 + $0x30] sm:$0xf]
        %v5184 = vld [vmem:[#allocation2 + $0x34] sm:$0xf]
        %v5185 = vld [vmem:[#allocation2 + $0x3c] sm:$0xf]
        %v5186 = vld [vmem:[#allocation2 + $0x40] sm:$0xf]
        %v5187 = vld [vmem:[#allocation2 + $0x48] sm:$0xf]
        %v5188 = vld [vmem:[#allocation2 + $0x4c] sm:$0xf]
        %v5189 = vld [vmem:[#allocation2 + $0x54] sm:$0xf]
        %v5190 = vld [vmem:[#allocation2 + $0x58] sm:$0xf]
        %v5191 = vld [vmem:[#allocation2 + $0x60] sm:$0xf]
        %v5192 = vld [vmem:[#allocation2 + $0x64] sm:$0xf]
        %v5193 = vld [vmem:[#allocation2 + $0x6c] sm:$0xf]
        %v5194 = vld [vmem:[#allocation2 + $0x70] sm:$0xf]
        %v5195 = vld [vmem:[#allocation2 + $0x78] sm:$0xf]
        %v5196 = vld [vmem:[#allocation2 + $0x7c] sm:$0xf]
        %v5197 = vld [vmem:[#allocation2 + $0x84] sm:$0xf]
        %v5198 = vld [vmem:[#allocation2 + $0x88] sm:$0xf]
        %v5199 = vld [vmem:[#allocation2 + $0x90] sm:$0xf]
        %v5200 = vld [vmem:[#allocation2 + $0x94] sm:$0xf]
        %v5201 = vld [vmem:[#allocation2 + $0x9c] sm:$0xf]
        %v5202 = vld [vmem:[#allocation2 + $0xa0] sm:$0xf]
        %v5203 = vld [vmem:[#allocation2 + $0xa8] sm:$0xf]
        %v5204 = vld [vmem:[#allocation2 + $0xac] sm:$0xf]
        %v5205 = vld [vmem:[#allocation2 + $0xb4] sm:$0xf]
        %v5206 = vld [vmem:[#allocation2 + $0xb8] sm:$0xf]
        %v5207 = vld [vmem:[%s4557] sm:$0xf]
        %v5208 = vld [vmem:[%s4557 + $0x4] sm:$0xf]
        %v5209 = vld [vmem:[%s4557 + $0xc] sm:$0xf]
        %v5210 = vld [vmem:[%s4557 + $0x10] sm:$0xf]
        %v5211 = vld [vmem:[%s4557 + $0x18] sm:$0xf]
        %v5212 = vld [vmem:[%s4557 + $0x1c] sm:$0xf]
        %v5213 = vld [vmem:[%s4557 + $0x24] sm:$0xf]
        %v5214 = vld [vmem:[%s4557 + $0x28] sm:$0xf]
        %v5215 = vld [vmem:[%s4557 + $0x30] sm:$0xf]
        %v5216 = vld [vmem:[%s4557 + $0x34] sm:$0xf]
        %v5217 = vld [vmem:[%s4557 + $0x3c] sm:$0xf]
        %v5218 = vld [vmem:[%s4557 + $0x40] sm:$0xf]
        %v5219 = vld [vmem:[%s4557 + $0x48] sm:$0xf]
        %v5220 = vld [vmem:[%s4557 + $0x4c] sm:$0xf]
        %v5221 = vld [vmem:[%s4557 + $0x54] sm:$0xf]
        %v5222 = vld [vmem:[%s4557 + $0x58] sm:$0xf]
        %v5223 = vld [vmem:[%s4557 + $0x60] sm:$0xf]
        %v5224 = vld [vmem:[%s4557 + $0x64] sm:$0xf]
        %v5225 = vld [vmem:[%s4557 + $0x6c] sm:$0xf]
        %v5226 = vld [vmem:[%s4557 + $0x70] sm:$0xf]
        %v5227 = vld [vmem:[%s4557 + $0x78] sm:$0xf]
        %v5228 = vld [vmem:[%s4557 + $0x7c] sm:$0xf]
        %v5229 = vld [vmem:[%s4557 + $0x84] sm:$0xf]
        %v5230 = vld [vmem:[%s4557 + $0x88] sm:$0xf]
        %v5231 = vld [vmem:[%s4557 + $0x90] sm:$0xf]
        %v5232 = vld [vmem:[%s4557 + $0x94] sm:$0xf]
        %v5233 = vld [vmem:[%s4557 + $0x9c] sm:$0xf]
        %v5234 = vld [vmem:[%s4557 + $0xa0] sm:$0xf]
        %v5235 = vld [vmem:[%s4557 + $0xa8] sm:$0xf]
        %v5236 = vld [vmem:[%s4557 + $0xac] sm:$0xf]
        %v5237 = vld [vmem:[%s4557 + $0xb4] sm:$0xf]
        %v5238 = vld [vmem:[%s4557 + $0xb8] sm:$0xf]
        %s5239 = scalar_lea.vmem [#allocation2], 24
        %v5240 = vld [vmem:[%s5239] sm:$0xf]
        %v5241 = vld [vmem:[%s5239 + $0x4] sm:$0xf]
        %v5242 = vld [vmem:[%s5239 + $0xc] sm:$0xf]
        %v5243 = vld [vmem:[%s5239 + $0x10] sm:$0xf]
        %v5244 = vld [vmem:[%s5239 + $0x18] sm:$0xf]
        %v5245 = vld [vmem:[%s5239 + $0x1c] sm:$0xf]
        %v5246 = vld [vmem:[%s5239 + $0x24] sm:$0xf]
        %v5247 = vld [vmem:[%s5239 + $0x28] sm:$0xf]
        %v5248 = vld [vmem:[%s5239 + $0x30] sm:$0xf]
        %v5249 = vld [vmem:[%s5239 + $0x34] sm:$0xf]
        %v5250 = vld [vmem:[%s5239 + $0x3c] sm:$0xf]
        %v5251 = vld [vmem:[%s5239 + $0x40] sm:$0xf]
        %v5252 = vld [vmem:[%s5239 + $0x48] sm:$0xf]
        %v5253 = vld [vmem:[%s5239 + $0x4c] sm:$0xf]
        %v5254 = vld [vmem:[%s5239 + $0x54] sm:$0xf]
        %v5255 = vld [vmem:[%s5239 + $0x58] sm:$0xf]
        %v5256 = vld [vmem:[%s5239 + $0x60] sm:$0xf]
        %v5257 = vld [vmem:[%s5239 + $0x64] sm:$0xf]
        %v5258 = vld [vmem:[%s5239 + $0x6c] sm:$0xf]
        %v5259 = vld [vmem:[%s5239 + $0x70] sm:$0xf]
        %v5260 = vld [vmem:[%s5239 + $0x78] sm:$0xf]
        %v5261 = vld [vmem:[%s5239 + $0x7c] sm:$0xf]
        %v5262 = vld [vmem:[%s5239 + $0x84] sm:$0xf]
        %v5263 = vld [vmem:[%s5239 + $0x88] sm:$0xf]
        %v5264 = vld [vmem:[%s5239 + $0x90] sm:$0xf]
        %v5265 = vld [vmem:[%s5239 + $0x94] sm:$0xf]
        %v5266 = vld [vmem:[%s5239 + $0x9c] sm:$0xf]
        %v5267 = vld [vmem:[%s5239 + $0xa0] sm:$0xf]
        %v5268 = vld [vmem:[%s5239 + $0xa8] sm:$0xf]
        %v5269 = vld [vmem:[%s5239 + $0xac] sm:$0xf]
        %v5270 = vld [vmem:[%s5239 + $0xb4] sm:$0xf]
        %v5271 = vld [vmem:[%s5239 + $0xb8] sm:$0xf]
        %v5304 = vunpack.c.l.b16 %v5175
        %v5305 = vunpack.c.l.b16 %v5176
        %v5306 = vunpack.c.l.b16 %v5177
        %v5307 = vunpack.c.l.b16 %v5178
        %v5308 = vunpack.c.l.b16 %v5179
        %v5309 = vunpack.c.l.b16 %v5180
        %v5310 = vunpack.c.l.b16 %v5181
        %v5311 = vunpack.c.l.b16 %v5182
        %v5312 = vunpack.c.l.b16 %v5183
        %v5313 = vunpack.c.l.b16 %v5184
        %v5314 = vunpack.c.l.b16 %v5185
        %v5315 = vunpack.c.l.b16 %v5186
        %v5316 = vunpack.c.l.b16 %v5187
        %v5317 = vunpack.c.l.b16 %v5188
        %v5318 = vunpack.c.l.b16 %v5189
        %v5319 = vunpack.c.l.b16 %v5190
        %v5320 = vunpack.c.l.b16 %v5191
        %v5321 = vunpack.c.l.b16 %v5192
        %v5322 = vunpack.c.l.b16 %v5193
        %v5323 = vunpack.c.l.b16 %v5194
        %v5324 = vunpack.c.l.b16 %v5195
        %v5325 = vunpack.c.l.b16 %v5196
        %v5326 = vunpack.c.l.b16 %v5197
        %v5327 = vunpack.c.l.b16 %v5198
        %v5328 = vunpack.c.l.b16 %v5199
        %v5329 = vunpack.c.l.b16 %v5200
        %v5330 = vunpack.c.l.b16 %v5201
        %v5331 = vunpack.c.l.b16 %v5202
        %v5332 = vunpack.c.l.b16 %v5203
        %v5333 = vunpack.c.l.b16 %v5204
        %v5334 = vunpack.c.l.b16 %v5205
        %v5335 = vunpack.c.l.b16 %v5206
        %v5336 = vpack.c.b16 %v5305, %v5304
        %v5337 = vpack.c.b16 %v5307, %v5306
        %v5338 = vpack.c.b16 %v5309, %v5308
        %v5339 = vpack.c.b16 %v5311, %v5310
        %v5340 = vpack.c.b16 %v5313, %v5312
        %v5341 = vpack.c.b16 %v5315, %v5314
        %v5342 = vpack.c.b16 %v5317, %v5316
        %v5343 = vpack.c.b16 %v5319, %v5318
        %v5344 = vpack.c.b16 %v5321, %v5320
        %v5345 = vpack.c.b16 %v5323, %v5322
        %v5346 = vpack.c.b16 %v5325, %v5324
        %v5347 = vpack.c.b16 %v5327, %v5326
        %v5348 = vpack.c.b16 %v5329, %v5328
        %v5349 = vpack.c.b16 %v5331, %v5330
        %v5350 = vpack.c.b16 %v5333, %v5332
        %v5351 = vpack.c.b16 %v5335, %v5334
        %v5400 = vunpack.c.l.b16 %v5207
        %v5401 = vunpack.c.l.b16 %v5208
        %v5402 = vunpack.c.l.b16 %v5209
        %v5403 = vunpack.c.l.b16 %v5210
        %v5404 = vunpack.c.l.b16 %v5211
        %v5405 = vunpack.c.l.b16 %v5212
        %v5406 = vunpack.c.l.b16 %v5213
        %v5407 = vunpack.c.l.b16 %v5214
        %v5408 = vunpack.c.l.b16 %v5215
        %v5409 = vunpack.c.l.b16 %v5216
        %v5410 = vunpack.c.l.b16 %v5217
        %v5411 = vunpack.c.l.b16 %v5218
        %v5412 = vunpack.c.l.b16 %v5219
        %v5413 = vunpack.c.l.b16 %v5220
        %v5414 = vunpack.c.l.b16 %v5221
        %v5415 = vunpack.c.l.b16 %v5222
        %v5416 = vunpack.c.l.b16 %v5223
        %v5417 = vunpack.c.l.b16 %v5224
        %v5418 = vunpack.c.l.b16 %v5225
        %v5419 = vunpack.c.l.b16 %v5226
        %v5420 = vunpack.c.l.b16 %v5227
        %v5421 = vunpack.c.l.b16 %v5228
        %v5422 = vunpack.c.l.b16 %v5229
        %v5423 = vunpack.c.l.b16 %v5230
        %v5424 = vunpack.c.l.b16 %v5231
        %v5425 = vunpack.c.l.b16 %v5232
        %v5426 = vunpack.c.l.b16 %v5233
        %v5427 = vunpack.c.l.b16 %v5234
        %v5428 = vunpack.c.l.b16 %v5235
        %v5429 = vunpack.c.l.b16 %v5236
        %v5430 = vunpack.c.l.b16 %v5237
        %v5431 = vunpack.c.l.b16 %v5238
        %v5432 = vpack.c.b16 %v5401, %v5400
        %v5433 = vpack.c.b16 %v5403, %v5402
        %v5434 = vpack.c.b16 %v5405, %v5404
        %v5435 = vpack.c.b16 %v5407, %v5406
        %v5436 = vpack.c.b16 %v5409, %v5408
        %v5437 = vpack.c.b16 %v5411, %v5410
        %v5438 = vpack.c.b16 %v5413, %v5412
        %v5439 = vpack.c.b16 %v5415, %v5414
        %v5440 = vpack.c.b16 %v5417, %v5416
        %v5441 = vpack.c.b16 %v5419, %v5418
        %v5442 = vpack.c.b16 %v5421, %v5420
        %v5443 = vpack.c.b16 %v5423, %v5422
        %v5444 = vpack.c.b16 %v5425, %v5424
        %v5445 = vpack.c.b16 %v5427, %v5426
        %v5446 = vpack.c.b16 %v5429, %v5428
        %v5447 = vpack.c.b16 %v5431, %v5430
        %v5496 = vunpack.c.l.b16 %v5240
        %v5497 = vunpack.c.l.b16 %v5241
        %v5498 = vunpack.c.l.b16 %v5242
        %v5499 = vunpack.c.l.b16 %v5243
        %v5500 = vunpack.c.l.b16 %v5244
        %v5501 = vunpack.c.l.b16 %v5245
        %v5502 = vunpack.c.l.b16 %v5246
        %v5503 = vunpack.c.l.b16 %v5247
        %v5504 = vunpack.c.l.b16 %v5248
        %v5505 = vunpack.c.l.b16 %v5249
        %v5506 = vunpack.c.l.b16 %v5250
        %v5507 = vunpack.c.l.b16 %v5251
        %v5508 = vunpack.c.l.b16 %v5252
        %v5509 = vunpack.c.l.b16 %v5253
        %v5510 = vunpack.c.l.b16 %v5254
        %v5511 = vunpack.c.l.b16 %v5255
        %v5512 = vunpack.c.l.b16 %v5256
        %v5513 = vunpack.c.l.b16 %v5257
        %v5514 = vunpack.c.l.b16 %v5258
        %v5515 = vunpack.c.l.b16 %v5259
        %v5516 = vunpack.c.l.b16 %v5260
        %v5517 = vunpack.c.l.b16 %v5261
        %v5518 = vunpack.c.l.b16 %v5262
        %v5519 = vunpack.c.l.b16 %v5263
        %v5520 = vunpack.c.l.b16 %v5264
        %v5521 = vunpack.c.l.b16 %v5265
        %v5522 = vunpack.c.l.b16 %v5266
        %v5523 = vunpack.c.l.b16 %v5267
        %v5524 = vunpack.c.l.b16 %v5268
        %v5525 = vunpack.c.l.b16 %v5269
        %v5526 = vunpack.c.l.b16 %v5270
        %v5527 = vunpack.c.l.b16 %v5271
        %v5528 = vpack.c.b16 %v5497, %v5496
        %v5529 = vpack.c.b16 %v5499, %v5498
        %v5530 = vpack.c.b16 %v5501, %v5500
        %v5531 = vpack.c.b16 %v5503, %v5502
        %v5532 = vpack.c.b16 %v5505, %v5504
        %v5533 = vpack.c.b16 %v5507, %v5506
        %v5534 = vpack.c.b16 %v5509, %v5508
        %v5535 = vpack.c.b16 %v5511, %v5510
        %v5536 = vpack.c.b16 %v5513, %v5512
        %v5537 = vpack.c.b16 %v5515, %v5514
        %v5538 = vpack.c.b16 %v5517, %v5516
        %v5539 = vpack.c.b16 %v5519, %v5518
        %v5540 = vpack.c.b16 %v5521, %v5520
        %v5541 = vpack.c.b16 %v5523, %v5522
        %v5542 = vpack.c.b16 %v5525, %v5524
        %v5543 = vpack.c.b16 %v5527, %v5526
        %v5560 = vld [vmem:[#allocation9] sm:$0xf]
        %v5561 = vld [vmem:[#allocation9 + $0x4] sm:$0xf]
        %v5562 = vld [vmem:[#allocation9 + $0x8] sm:$0xf]
        %v5563 = vld [vmem:[#allocation9 + $0xc] sm:$0xf]
        %v5564 = vld [vmem:[#allocation9 + $0x10] sm:$0xf]
        %v5565 = vld [vmem:[#allocation9 + $0x14] sm:$0xf]
        %v5566 = vld [vmem:[#allocation9 + $0x18] sm:$0xf]
        %v5567 = vld [vmem:[#allocation9 + $0x1c] sm:$0xf]
        %v5568 = vld [vmem:[#allocation9 + $0x20] sm:$0xf]
        %v5569 = vld [vmem:[#allocation9 + $0x24] sm:$0xf]
        %v5570 = vld [vmem:[#allocation9 + $0x28] sm:$0xf]
        %v5571 = vld [vmem:[#allocation9 + $0x2c] sm:$0xf]
        %v5572 = vld [vmem:[#allocation9 + $0x30] sm:$0xf]
        %v5573 = vld [vmem:[#allocation9 + $0x34] sm:$0xf]
        %v5574 = vld [vmem:[#allocation9 + $0x38] sm:$0xf]
        %v5575 = vld [vmem:[#allocation9 + $0x3c] sm:$0xf]
        %v5576 = vld [vmem:[#allocation9 + $0x40] sm:$0xf]
        %v5577 = vld [vmem:[#allocation9 + $0x44] sm:$0xf]
        %v5578 = vld [vmem:[#allocation9 + $0x48] sm:$0xf]
        %v5579 = vld [vmem:[#allocation9 + $0x4c] sm:$0xf]
        %v5580 = vld [vmem:[#allocation9 + $0x50] sm:$0xf]
        %v5581 = vld [vmem:[#allocation9 + $0x54] sm:$0xf]
        %v5582 = vld [vmem:[#allocation9 + $0x58] sm:$0xf]
        %v5583 = vld [vmem:[#allocation9 + $0x5c] sm:$0xf]
        %v5584 = vld [vmem:[#allocation9 + $0x60] sm:$0xf]
        %v5585 = vld [vmem:[#allocation9 + $0x64] sm:$0xf]
        %v5586 = vld [vmem:[#allocation9 + $0x68] sm:$0xf]
        %v5587 = vld [vmem:[#allocation9 + $0x6c] sm:$0xf]
        %v5588 = vld [vmem:[#allocation9 + $0x70] sm:$0xf]
        %v5589 = vld [vmem:[#allocation9 + $0x74] sm:$0xf]
        %v5590 = vld [vmem:[#allocation9 + $0x78] sm:$0xf]
        %v5591 = vld [vmem:[#allocation9 + $0x7c] sm:$0xf]
        %v5592 = vld [vmem:[#allocation9 + $0x80] sm:$0xf]
        %v5593 = vld [vmem:[#allocation9 + $0x84] sm:$0xf]
        %v5594 = vld [vmem:[#allocation9 + $0x88] sm:$0xf]
        %v5595 = vld [vmem:[#allocation9 + $0x8c] sm:$0xf]
        %v5596 = vld [vmem:[#allocation9 + $0x90] sm:$0xf]
        %v5597 = vld [vmem:[#allocation9 + $0x94] sm:$0xf]
        %v5598 = vld [vmem:[#allocation9 + $0x98] sm:$0xf]
        %v5599 = vld [vmem:[#allocation9 + $0x9c] sm:$0xf]
        %v5600 = vld [vmem:[#allocation9 + $0xa0] sm:$0xf]
        %v5601 = vld [vmem:[#allocation9 + $0xa4] sm:$0xf]
        %v5602 = vld [vmem:[#allocation9 + $0xa8] sm:$0xf]
        %v5603 = vld [vmem:[#allocation9 + $0xac] sm:$0xf]
        %v5604 = vld [vmem:[#allocation9 + $0xb0] sm:$0xf]
        %v5605 = vld [vmem:[#allocation9 + $0xb4] sm:$0xf]
        %v5606 = vld [vmem:[#allocation9 + $0xb8] sm:$0xf]
        %v5607 = vld [vmem:[#allocation9 + $0xbc] sm:$0xf]
        %v5608 = vld [vmem:[#allocation2 + $0x8] sm:$0x1]
        %v5609 = vld [vmem:[#allocation2 + $0x14] sm:$0x1]
        %v5610 = vld [vmem:[#allocation2 + $0x20] sm:$0x1]
        %v5611 = vld [vmem:[#allocation2 + $0x2c] sm:$0x1]
        %v5612 = vld [vmem:[#allocation2 + $0x38] sm:$0x1]
        %v5613 = vld [vmem:[#allocation2 + $0x44] sm:$0x1]
        %v5614 = vld [vmem:[#allocation2 + $0x50] sm:$0x1]
        %v5615 = vld [vmem:[#allocation2 + $0x5c] sm:$0x1]
        %v5616 = vld [vmem:[#allocation2 + $0x68] sm:$0x1]
        %v5617 = vld [vmem:[#allocation2 + $0x74] sm:$0x1]
        %v5618 = vld [vmem:[#allocation2 + $0x80] sm:$0x1]
        %v5619 = vld [vmem:[#allocation2 + $0x8c] sm:$0x1]
        %v5620 = vld [vmem:[#allocation2 + $0x98] sm:$0x1]
        %v5621 = vld [vmem:[#allocation2 + $0xa4] sm:$0x1]
        %v5622 = vld [vmem:[#allocation2 + $0xb0] sm:$0x1]
        %v5623 = vld [vmem:[#allocation2 + $0xbc] sm:$0x1]
        %v5625 = vshrl.u32 %v5175, 16
        %v5627 = vrot.slane %v5625, 4
        %v5628 = vshll.u32 %v5175, 16
        %v5630 = vrot.slane %v5628, 5
        %v5631 = vor.u32 %v5627, %v5630
        %v5632 = vrot.slane %v5631, 4
        %v5634 = vshll.u32 %v5176, 16
        %v5636 = vrot.slane %v5634, 5
        %v5637 = vsel %vm846, %v5632, %v5636
        %v5638 = vshrl.u32 %v5176, 16
        %v5640 = vrot.slane %v5638, 4
        %v5641 = vor.u32 %v5640, %v5636
        %v5642 = vrot.slane %v5641, 4
        %v5644 = vshll.u32 %v5608, 16
        %v5646 = vrot.slane %v5644, 5
        %v5647 = vsel %vm846, %v5642, %v5646
        %v5649 = vshrl.u32 %v5177, 16
        %v5651 = vrot.slane %v5649, 4
        %v5652 = vshll.u32 %v5177, 16
        %v5654 = vrot.slane %v5652, 5
        %v5655 = vor.u32 %v5651, %v5654
        %v5656 = vrot.slane %v5655, 4
        %v5658 = vshll.u32 %v5178, 16
        %v5660 = vrot.slane %v5658, 5
        %v5661 = vsel %vm846, %v5656, %v5660
        %v5662 = vshrl.u32 %v5178, 16
        %v5664 = vrot.slane %v5662, 4
        %v5665 = vor.u32 %v5664, %v5660
        %v5666 = vrot.slane %v5665, 4
        %v5668 = vshll.u32 %v5609, 16
        %v5670 = vrot.slane %v5668, 5
        %v5671 = vsel %vm846, %v5666, %v5670
        %v5673 = vshrl.u32 %v5179, 16
        %v5675 = vrot.slane %v5673, 4
        %v5676 = vshll.u32 %v5179, 16
        %v5678 = vrot.slane %v5676, 5
        %v5679 = vor.u32 %v5675, %v5678
        %v5680 = vrot.slane %v5679, 4
        %v5682 = vshll.u32 %v5180, 16
        %v5684 = vrot.slane %v5682, 5
        %v5685 = vsel %vm846, %v5680, %v5684
        %v5686 = vshrl.u32 %v5180, 16
        %v5688 = vrot.slane %v5686, 4
        %v5689 = vor.u32 %v5688, %v5684
        %v5690 = vrot.slane %v5689, 4
        %v5692 = vshll.u32 %v5610, 16
        %v5694 = vrot.slane %v5692, 5
        %v5695 = vsel %vm846, %v5690, %v5694
        %v5697 = vshrl.u32 %v5181, 16
        %v5699 = vrot.slane %v5697, 4
        %v5700 = vshll.u32 %v5181, 16
        %v5702 = vrot.slane %v5700, 5
        %v5703 = vor.u32 %v5699, %v5702
        %v5704 = vrot.slane %v5703, 4
        %v5706 = vshll.u32 %v5182, 16
        %v5708 = vrot.slane %v5706, 5
        %v5709 = vsel %vm846, %v5704, %v5708
        %v5710 = vshrl.u32 %v5182, 16
        %v5712 = vrot.slane %v5710, 4
        %v5713 = vor.u32 %v5712, %v5708
        %v5714 = vrot.slane %v5713, 4
        %v5716 = vshll.u32 %v5611, 16
        %v5718 = vrot.slane %v5716, 5
        %v5719 = vsel %vm846, %v5714, %v5718
        %v5721 = vshrl.u32 %v5183, 16
        %v5723 = vrot.slane %v5721, 4
        %v5724 = vshll.u32 %v5183, 16
        %v5726 = vrot.slane %v5724, 5
        %v5727 = vor.u32 %v5723, %v5726
        %v5728 = vrot.slane %v5727, 4
        %v5730 = vshll.u32 %v5184, 16
        %v5732 = vrot.slane %v5730, 5
        %v5733 = vsel %vm846, %v5728, %v5732
        %v5734 = vshrl.u32 %v5184, 16
        %v5736 = vrot.slane %v5734, 4
        %v5737 = vor.u32 %v5736, %v5732
        %v5738 = vrot.slane %v5737, 4
        %v5740 = vshll.u32 %v5612, 16
        %v5742 = vrot.slane %v5740, 5
        %v5743 = vsel %vm846, %v5738, %v5742
        %v5745 = vshrl.u32 %v5185, 16
        %v5747 = vrot.slane %v5745, 4
        %v5748 = vshll.u32 %v5185, 16
        %v5750 = vrot.slane %v5748, 5
        %v5751 = vor.u32 %v5747, %v5750
        %v5752 = vrot.slane %v5751, 4
        %v5754 = vshll.u32 %v5186, 16
        %v5756 = vrot.slane %v5754, 5
        %v5757 = vsel %vm846, %v5752, %v5756
        %v5758 = vshrl.u32 %v5186, 16
        %v5760 = vrot.slane %v5758, 4
        %v5761 = vor.u32 %v5760, %v5756
        %v5762 = vrot.slane %v5761, 4
        %v5764 = vshll.u32 %v5613, 16
        %v5766 = vrot.slane %v5764, 5
        %v5767 = vsel %vm846, %v5762, %v5766
        %v5769 = vshrl.u32 %v5187, 16
        %v5771 = vrot.slane %v5769, 4
        %v5772 = vshll.u32 %v5187, 16
        %v5774 = vrot.slane %v5772, 5
        %v5775 = vor.u32 %v5771, %v5774
        %v5776 = vrot.slane %v5775, 4
        %v5778 = vshll.u32 %v5188, 16
        %v5780 = vrot.slane %v5778, 5
        %v5781 = vsel %vm846, %v5776, %v5780
        %v5782 = vshrl.u32 %v5188, 16
        %v5784 = vrot.slane %v5782, 4
        %v5785 = vor.u32 %v5784, %v5780
        %v5786 = vrot.slane %v5785, 4
        %v5788 = vshll.u32 %v5614, 16
        %v5790 = vrot.slane %v5788, 5
        %v5791 = vsel %vm846, %v5786, %v5790
        %v5793 = vshrl.u32 %v5189, 16
        %v5795 = vrot.slane %v5793, 4
        %v5796 = vshll.u32 %v5189, 16
        %v5798 = vrot.slane %v5796, 5
        %v5799 = vor.u32 %v5795, %v5798
        %v5800 = vrot.slane %v5799, 4
        %v5802 = vshll.u32 %v5190, 16
        %v5804 = vrot.slane %v5802, 5
        %v5805 = vsel %vm846, %v5800, %v5804
        %v5806 = vshrl.u32 %v5190, 16
        %v5808 = vrot.slane %v5806, 4
        %v5809 = vor.u32 %v5808, %v5804
        %v5810 = vrot.slane %v5809, 4
        %v5812 = vshll.u32 %v5615, 16
        %v5814 = vrot.slane %v5812, 5
        %v5815 = vsel %vm846, %v5810, %v5814
        %v5817 = vshrl.u32 %v5191, 16
        %v5819 = vrot.slane %v5817, 4
        %v5820 = vshll.u32 %v5191, 16
        %v5822 = vrot.slane %v5820, 5
        %v5823 = vor.u32 %v5819, %v5822
        %v5824 = vrot.slane %v5823, 4
        %v5826 = vshll.u32 %v5192, 16
        %v5828 = vrot.slane %v5826, 5
        %v5829 = vsel %vm846, %v5824, %v5828
        %v5830 = vshrl.u32 %v5192, 16
        %v5832 = vrot.slane %v5830, 4
        %v5833 = vor.u32 %v5832, %v5828
        %v5834 = vrot.slane %v5833, 4
        %v5836 = vshll.u32 %v5616, 16
        %v5838 = vrot.slane %v5836, 5
        %v5839 = vsel %vm846, %v5834, %v5838
        %v5841 = vshrl.u32 %v5193, 16
        %v5843 = vrot.slane %v5841, 4
        %v5844 = vshll.u32 %v5193, 16
        %v5846 = vrot.slane %v5844, 5
        %v5847 = vor.u32 %v5843, %v5846
        %v5848 = vrot.slane %v5847, 4
        %v5850 = vshll.u32 %v5194, 16
        %v5852 = vrot.slane %v5850, 5
        %v5853 = vsel %vm846, %v5848, %v5852
        %v5854 = vshrl.u32 %v5194, 16
        %v5856 = vrot.slane %v5854, 4
        %v5857 = vor.u32 %v5856, %v5852
        %v5858 = vrot.slane %v5857, 4
        %v5860 = vshll.u32 %v5617, 16
        %v5862 = vrot.slane %v5860, 5
        %v5863 = vsel %vm846, %v5858, %v5862
        %v5865 = vshrl.u32 %v5195, 16
        %v5867 = vrot.slane %v5865, 4
        %v5868 = vshll.u32 %v5195, 16
        %v5870 = vrot.slane %v5868, 5
        %v5871 = vor.u32 %v5867, %v5870
        %v5872 = vrot.slane %v5871, 4
        %v5874 = vshll.u32 %v5196, 16
        %v5876 = vrot.slane %v5874, 5
        %v5877 = vsel %vm846, %v5872, %v5876
        %v5878 = vshrl.u32 %v5196, 16
        %v5880 = vrot.slane %v5878, 4
        %v5881 = vor.u32 %v5880, %v5876
        %v5882 = vrot.slane %v5881, 4
        %v5884 = vshll.u32 %v5618, 16
        %v5886 = vrot.slane %v5884, 5
        %v5887 = vsel %vm846, %v5882, %v5886
        %v5889 = vshrl.u32 %v5197, 16
        %v5891 = vrot.slane %v5889, 4
        %v5892 = vshll.u32 %v5197, 16
        %v5894 = vrot.slane %v5892, 5
        %v5895 = vor.u32 %v5891, %v5894
        %v5896 = vrot.slane %v5895, 4
        %v5898 = vshll.u32 %v5198, 16
        %v5900 = vrot.slane %v5898, 5
        %v5901 = vsel %vm846, %v5896, %v5900
        %v5902 = vshrl.u32 %v5198, 16
        %v5904 = vrot.slane %v5902, 4
        %v5905 = vor.u32 %v5904, %v5900
        %v5906 = vrot.slane %v5905, 4
        %v5908 = vshll.u32 %v5619, 16
        %v5910 = vrot.slane %v5908, 5
        %v5911 = vsel %vm846, %v5906, %v5910
        %v5913 = vshrl.u32 %v5199, 16
        %v5915 = vrot.slane %v5913, 4
        %v5916 = vshll.u32 %v5199, 16
        %v5918 = vrot.slane %v5916, 5
        %v5919 = vor.u32 %v5915, %v5918
        %v5920 = vrot.slane %v5919, 4
        %v5922 = vshll.u32 %v5200, 16
        %v5924 = vrot.slane %v5922, 5
        %v5925 = vsel %vm846, %v5920, %v5924
        %v5926 = vshrl.u32 %v5200, 16
        %v5928 = vrot.slane %v5926, 4
        %v5929 = vor.u32 %v5928, %v5924
        %v5930 = vrot.slane %v5929, 4
        %v5932 = vshll.u32 %v5620, 16
        %v5934 = vrot.slane %v5932, 5
        %v5935 = vsel %vm846, %v5930, %v5934
        %v5937 = vshrl.u32 %v5201, 16
        %v5939 = vrot.slane %v5937, 4
        %v5940 = vshll.u32 %v5201, 16
        %v5942 = vrot.slane %v5940, 5
        %v5943 = vor.u32 %v5939, %v5942
        %v5944 = vrot.slane %v5943, 4
        %v5946 = vshll.u32 %v5202, 16
        %v5948 = vrot.slane %v5946, 5
        %v5949 = vsel %vm846, %v5944, %v5948
        %v5950 = vshrl.u32 %v5202, 16
        %v5952 = vrot.slane %v5950, 4
        %v5953 = vor.u32 %v5952, %v5948
        %v5954 = vrot.slane %v5953, 4
        %v5956 = vshll.u32 %v5621, 16
        %v5958 = vrot.slane %v5956, 5
        %v5959 = vsel %vm846, %v5954, %v5958
        %v5961 = vshrl.u32 %v5203, 16
        %v5963 = vrot.slane %v5961, 4
        %v5964 = vshll.u32 %v5203, 16
        %v5966 = vrot.slane %v5964, 5
        %v5967 = vor.u32 %v5963, %v5966
        %v5968 = vrot.slane %v5967, 4
        %v5970 = vshll.u32 %v5204, 16
        %v5972 = vrot.slane %v5970, 5
        %v5973 = vsel %vm846, %v5968, %v5972
        %v5974 = vshrl.u32 %v5204, 16
        %v5976 = vrot.slane %v5974, 4
        %v5977 = vor.u32 %v5976, %v5972
        %v5978 = vrot.slane %v5977, 4
        %v5980 = vshll.u32 %v5622, 16
        %v5982 = vrot.slane %v5980, 5
        %v5983 = vsel %vm846, %v5978, %v5982
        %v5985 = vshrl.u32 %v5205, 16
        %v5987 = vrot.slane %v5985, 4
        %v5988 = vshll.u32 %v5205, 16
        %v5990 = vrot.slane %v5988, 5
        %v5991 = vor.u32 %v5987, %v5990
        %v5992 = vrot.slane %v5991, 4
        %v5994 = vshll.u32 %v5206, 16
        %v5996 = vrot.slane %v5994, 5
        %v5997 = vsel %vm846, %v5992, %v5996
        %v5998 = vshrl.u32 %v5206, 16
        %v6000 = vrot.slane %v5998, 4
        %v6001 = vor.u32 %v6000, %v5996
        %v6002 = vrot.slane %v6001, 4
        %v6004 = vshll.u32 %v5623, 16
        %v6006 = vrot.slane %v6004, 5
        %v6007 = vsel %vm846, %v6002, %v6006
        %v6008 = vld [vmem:[%s4557 + $0x8] sm:$0x1]
        %v6009 = vld [vmem:[%s4557 + $0x14] sm:$0x1]
        %v6010 = vld [vmem:[%s4557 + $0x20] sm:$0x1]
        %v6011 = vld [vmem:[%s4557 + $0x2c] sm:$0x1]
        %v6012 = vld [vmem:[%s4557 + $0x38] sm:$0x1]
        %v6013 = vld [vmem:[%s4557 + $0x44] sm:$0x1]
        %v6014 = vld [vmem:[%s4557 + $0x50] sm:$0x1]
        %v6015 = vld [vmem:[%s4557 + $0x5c] sm:$0x1]
        %v6016 = vld [vmem:[%s4557 + $0x68] sm:$0x1]
        %v6017 = vld [vmem:[%s4557 + $0x74] sm:$0x1]
        %v6018 = vld [vmem:[%s4557 + $0x80] sm:$0x1]
        %v6019 = vld [vmem:[%s4557 + $0x8c] sm:$0x1]
        %v6020 = vld [vmem:[%s4557 + $0x98] sm:$0x1]
        %v6021 = vld [vmem:[%s4557 + $0xa4] sm:$0x1]
        %v6022 = vld [vmem:[%s4557 + $0xb0] sm:$0x1]
        %v6023 = vld [vmem:[%s4557 + $0xbc] sm:$0x1]
        %v6025 = vshrl.u32 %v5207, 16
        %v6027 = vrot.slane %v6025, 4
        %v6028 = vshll.u32 %v5207, 16
        %v6030 = vrot.slane %v6028, 5
        %v6031 = vor.u32 %v6027, %v6030
        %v6032 = vrot.slane %v6031, 4
        %v6034 = vshll.u32 %v5208, 16
        %v6036 = vrot.slane %v6034, 5
        %v6037 = vsel %vm846, %v6032, %v6036
        %v6038 = vshrl.u32 %v5208, 16
        %v6040 = vrot.slane %v6038, 4
        %v6041 = vor.u32 %v6040, %v6036
        %v6042 = vrot.slane %v6041, 4
        %v6044 = vshll.u32 %v6008, 16
        %v6046 = vrot.slane %v6044, 5
        %v6047 = vsel %vm846, %v6042, %v6046
        %v6049 = vshrl.u32 %v5209, 16
        %v6051 = vrot.slane %v6049, 4
        %v6052 = vshll.u32 %v5209, 16
        %v6054 = vrot.slane %v6052, 5
        %v6055 = vor.u32 %v6051, %v6054
        %v6056 = vrot.slane %v6055, 4
        %v6058 = vshll.u32 %v5210, 16
        %v6060 = vrot.slane %v6058, 5
        %v6061 = vsel %vm846, %v6056, %v6060
        %v6062 = vshrl.u32 %v5210, 16
        %v6064 = vrot.slane %v6062, 4
        %v6065 = vor.u32 %v6064, %v6060
        %v6066 = vrot.slane %v6065, 4
        %v6068 = vshll.u32 %v6009, 16
        %v6070 = vrot.slane %v6068, 5
        %v6071 = vsel %vm846, %v6066, %v6070
        %v6073 = vshrl.u32 %v5211, 16
        %v6075 = vrot.slane %v6073, 4
        %v6076 = vshll.u32 %v5211, 16
        %v6078 = vrot.slane %v6076, 5
        %v6079 = vor.u32 %v6075, %v6078
        %v6080 = vrot.slane %v6079, 4
        %v6082 = vshll.u32 %v5212, 16
        %v6084 = vrot.slane %v6082, 5
        %v6085 = vsel %vm846, %v6080, %v6084
        %v6086 = vshrl.u32 %v5212, 16
        %v6088 = vrot.slane %v6086, 4
        %v6089 = vor.u32 %v6088, %v6084
        %v6090 = vrot.slane %v6089, 4
        %v6092 = vshll.u32 %v6010, 16
        %v6094 = vrot.slane %v6092, 5
        %v6095 = vsel %vm846, %v6090, %v6094
        %v6097 = vshrl.u32 %v5213, 16
        %v6099 = vrot.slane %v6097, 4
        %v6100 = vshll.u32 %v5213, 16
        %v6102 = vrot.slane %v6100, 5
        %v6103 = vor.u32 %v6099, %v6102
        %v6104 = vrot.slane %v6103, 4
        %v6106 = vshll.u32 %v5214, 16
        %v6108 = vrot.slane %v6106, 5
        %v6109 = vsel %vm846, %v6104, %v6108
        %v6110 = vshrl.u32 %v5214, 16
        %v6112 = vrot.slane %v6110, 4
        %v6113 = vor.u32 %v6112, %v6108
        %v6114 = vrot.slane %v6113, 4
        %v6116 = vshll.u32 %v6011, 16
        %v6118 = vrot.slane %v6116, 5
        %v6119 = vsel %vm846, %v6114, %v6118
        %v6121 = vshrl.u32 %v5215, 16
        %v6123 = vrot.slane %v6121, 4
        %v6124 = vshll.u32 %v5215, 16
        %v6126 = vrot.slane %v6124, 5
        %v6127 = vor.u32 %v6123, %v6126
        %v6128 = vrot.slane %v6127, 4
        %v6130 = vshll.u32 %v5216, 16
        %v6132 = vrot.slane %v6130, 5
        %v6133 = vsel %vm846, %v6128, %v6132
        %v6134 = vshrl.u32 %v5216, 16
        %v6136 = vrot.slane %v6134, 4
        %v6137 = vor.u32 %v6136, %v6132
        %v6138 = vrot.slane %v6137, 4
        %v6140 = vshll.u32 %v6012, 16
        %v6142 = vrot.slane %v6140, 5
        %v6143 = vsel %vm846, %v6138, %v6142
        %v6145 = vshrl.u32 %v5217, 16
        %v6147 = vrot.slane %v6145, 4
        %v6148 = vshll.u32 %v5217, 16
        %v6150 = vrot.slane %v6148, 5
        %v6151 = vor.u32 %v6147, %v6150
        %v6152 = vrot.slane %v6151, 4
        %v6154 = vshll.u32 %v5218, 16
        %v6156 = vrot.slane %v6154, 5
        %v6157 = vsel %vm846, %v6152, %v6156
        %v6158 = vshrl.u32 %v5218, 16
        %v6160 = vrot.slane %v6158, 4
        %v6161 = vor.u32 %v6160, %v6156
        %v6162 = vrot.slane %v6161, 4
        %v6164 = vshll.u32 %v6013, 16
        %v6166 = vrot.slane %v6164, 5
        %v6167 = vsel %vm846, %v6162, %v6166
        %v6169 = vshrl.u32 %v5219, 16
        %v6171 = vrot.slane %v6169, 4
        %v6172 = vshll.u32 %v5219, 16
        %v6174 = vrot.slane %v6172, 5
        %v6175 = vor.u32 %v6171, %v6174
        %v6176 = vrot.slane %v6175, 4
        %v6178 = vshll.u32 %v5220, 16
        %v6180 = vrot.slane %v6178, 5
        %v6181 = vsel %vm846, %v6176, %v6180
        %v6182 = vshrl.u32 %v5220, 16
        %v6184 = vrot.slane %v6182, 4
        %v6185 = vor.u32 %v6184, %v6180
        %v6186 = vrot.slane %v6185, 4
        %v6188 = vshll.u32 %v6014, 16
        %v6190 = vrot.slane %v6188, 5
        %v6191 = vsel %vm846, %v6186, %v6190
        %v6193 = vshrl.u32 %v5221, 16
        %v6195 = vrot.slane %v6193, 4
        %v6196 = vshll.u32 %v5221, 16
        %v6198 = vrot.slane %v6196, 5
        %v6199 = vor.u32 %v6195, %v6198
        %v6200 = vrot.slane %v6199, 4
        %v6202 = vshll.u32 %v5222, 16
        %v6204 = vrot.slane %v6202, 5
        %v6205 = vsel %vm846, %v6200, %v6204
        %v6206 = vshrl.u32 %v5222, 16
        %v6208 = vrot.slane %v6206, 4
        %v6209 = vor.u32 %v6208, %v6204
        %v6210 = vrot.slane %v6209, 4
        %v6212 = vshll.u32 %v6015, 16
        %v6214 = vrot.slane %v6212, 5
        %v6215 = vsel %vm846, %v6210, %v6214
        %v6217 = vshrl.u32 %v5223, 16
        %v6219 = vrot.slane %v6217, 4
        %v6220 = vshll.u32 %v5223, 16
        %v6222 = vrot.slane %v6220, 5
        %v6223 = vor.u32 %v6219, %v6222
        %v6224 = vrot.slane %v6223, 4
        %v6226 = vshll.u32 %v5224, 16
        %v6228 = vrot.slane %v6226, 5
        %v6229 = vsel %vm846, %v6224, %v6228
        %v6230 = vshrl.u32 %v5224, 16
        %v6232 = vrot.slane %v6230, 4
        %v6233 = vor.u32 %v6232, %v6228
        %v6234 = vrot.slane %v6233, 4
        %v6236 = vshll.u32 %v6016, 16
        %v6238 = vrot.slane %v6236, 5
        %v6239 = vsel %vm846, %v6234, %v6238
        %v6241 = vshrl.u32 %v5225, 16
        %v6243 = vrot.slane %v6241, 4
        %v6244 = vshll.u32 %v5225, 16
        %v6246 = vrot.slane %v6244, 5
        %v6247 = vor.u32 %v6243, %v6246
        %v6248 = vrot.slane %v6247, 4
        %v6250 = vshll.u32 %v5226, 16
        %v6252 = vrot.slane %v6250, 5
        %v6253 = vsel %vm846, %v6248, %v6252
        %v6254 = vshrl.u32 %v5226, 16
        %v6256 = vrot.slane %v6254, 4
        %v6257 = vor.u32 %v6256, %v6252
        %v6258 = vrot.slane %v6257, 4
        %v6260 = vshll.u32 %v6017, 16
        %v6262 = vrot.slane %v6260, 5
        %v6263 = vsel %vm846, %v6258, %v6262
        %v6265 = vshrl.u32 %v5227, 16
        %v6267 = vrot.slane %v6265, 4
        %v6268 = vshll.u32 %v5227, 16
        %v6270 = vrot.slane %v6268, 5
        %v6271 = vor.u32 %v6267, %v6270
        %v6272 = vrot.slane %v6271, 4
        %v6274 = vshll.u32 %v5228, 16
        %v6276 = vrot.slane %v6274, 5
        %v6277 = vsel %vm846, %v6272, %v6276
        %v6278 = vshrl.u32 %v5228, 16
        %v6280 = vrot.slane %v6278, 4
        %v6281 = vor.u32 %v6280, %v6276
        %v6282 = vrot.slane %v6281, 4
        %v6284 = vshll.u32 %v6018, 16
        %v6286 = vrot.slane %v6284, 5
        %v6287 = vsel %vm846, %v6282, %v6286
        %v6289 = vshrl.u32 %v5229, 16
        %v6291 = vrot.slane %v6289, 4
        %v6292 = vshll.u32 %v5229, 16
        %v6294 = vrot.slane %v6292, 5
        %v6295 = vor.u32 %v6291, %v6294
        %v6296 = vrot.slane %v6295, 4
        %v6298 = vshll.u32 %v5230, 16
        %v6300 = vrot.slane %v6298, 5
        %v6301 = vsel %vm846, %v6296, %v6300
        %v6302 = vshrl.u32 %v5230, 16
        %v6304 = vrot.slane %v6302, 4
        %v6305 = vor.u32 %v6304, %v6300
        %v6306 = vrot.slane %v6305, 4
        %v6308 = vshll.u32 %v6019, 16
        %v6310 = vrot.slane %v6308, 5
        %v6311 = vsel %vm846, %v6306, %v6310
        %v6313 = vshrl.u32 %v5231, 16
        %v6315 = vrot.slane %v6313, 4
        %v6316 = vshll.u32 %v5231, 16
        %v6318 = vrot.slane %v6316, 5
        %v6319 = vor.u32 %v6315, %v6318
        %v6320 = vrot.slane %v6319, 4
        %v6322 = vshll.u32 %v5232, 16
        %v6324 = vrot.slane %v6322, 5
        %v6325 = vsel %vm846, %v6320, %v6324
        %v6326 = vshrl.u32 %v5232, 16
        %v6328 = vrot.slane %v6326, 4
        %v6329 = vor.u32 %v6328, %v6324
        %v6330 = vrot.slane %v6329, 4
        %v6332 = vshll.u32 %v6020, 16
        %v6334 = vrot.slane %v6332, 5
        %v6335 = vsel %vm846, %v6330, %v6334
        %v6337 = vshrl.u32 %v5233, 16
        %v6339 = vrot.slane %v6337, 4
        %v6340 = vshll.u32 %v5233, 16
        %v6342 = vrot.slane %v6340, 5
        %v6343 = vor.u32 %v6339, %v6342
        %v6344 = vrot.slane %v6343, 4
        %v6346 = vshll.u32 %v5234, 16
        %v6348 = vrot.slane %v6346, 5
        %v6349 = vsel %vm846, %v6344, %v6348
        %v6350 = vshrl.u32 %v5234, 16
        %v6352 = vrot.slane %v6350, 4
        %v6353 = vor.u32 %v6352, %v6348
        %v6354 = vrot.slane %v6353, 4
        %v6356 = vshll.u32 %v6021, 16
        %v6358 = vrot.slane %v6356, 5
        %v6359 = vsel %vm846, %v6354, %v6358
        %v6361 = vshrl.u32 %v5235, 16
        %v6363 = vrot.slane %v6361, 4
        %v6364 = vshll.u32 %v5235, 16
        %v6366 = vrot.slane %v6364, 5
        %v6367 = vor.u32 %v6363, %v6366
        %v6368 = vrot.slane %v6367, 4
        %v6370 = vshll.u32 %v5236, 16
        %v6372 = vrot.slane %v6370, 5
        %v6373 = vsel %vm846, %v6368, %v6372
        %v6374 = vshrl.u32 %v5236, 16
        %v6376 = vrot.slane %v6374, 4
        %v6377 = vor.u32 %v6376, %v6372
        %v6378 = vrot.slane %v6377, 4
        %v6380 = vshll.u32 %v6022, 16
        %v6382 = vrot.slane %v6380, 5
        %v6383 = vsel %vm846, %v6378, %v6382
        %v6385 = vshrl.u32 %v5237, 16
        %v6387 = vrot.slane %v6385, 4
        %v6388 = vshll.u32 %v5237, 16
        %v6390 = vrot.slane %v6388, 5
        %v6391 = vor.u32 %v6387, %v6390
        %v6392 = vrot.slane %v6391, 4
        %v6394 = vshll.u32 %v5238, 16
        %v6396 = vrot.slane %v6394, 5
        %v6397 = vsel %vm846, %v6392, %v6396
        %v6398 = vshrl.u32 %v5238, 16
        %v6400 = vrot.slane %v6398, 4
        %v6401 = vor.u32 %v6400, %v6396
        %v6402 = vrot.slane %v6401, 4
        %v6404 = vshll.u32 %v6023, 16
        %v6406 = vrot.slane %v6404, 5
        %v6407 = vsel %vm846, %v6402, %v6406
        %v6408 = vld [vmem:[%s5239 + $0x8] sm:$0x1]
        %v6409 = vld [vmem:[%s5239 + $0x14] sm:$0x1]
        %v6410 = vld [vmem:[%s5239 + $0x20] sm:$0x1]
        %v6411 = vld [vmem:[%s5239 + $0x2c] sm:$0x1]
        %v6412 = vld [vmem:[%s5239 + $0x38] sm:$0x1]
        %v6413 = vld [vmem:[%s5239 + $0x44] sm:$0x1]
        %v6414 = vld [vmem:[%s5239 + $0x50] sm:$0x1]
        %v6415 = vld [vmem:[%s5239 + $0x5c] sm:$0x1]
        %v6416 = vld [vmem:[%s5239 + $0x68] sm:$0x1]
        %v6417 = vld [vmem:[%s5239 + $0x74] sm:$0x1]
        %v6418 = vld [vmem:[%s5239 + $0x80] sm:$0x1]
        %v6419 = vld [vmem:[%s5239 + $0x8c] sm:$0x1]
        %v6420 = vld [vmem:[%s5239 + $0x98] sm:$0x1]
        %v6421 = vld [vmem:[%s5239 + $0xa4] sm:$0x1]
        %v6422 = vld [vmem:[%s5239 + $0xb0] sm:$0x1]
        %v6423 = vld [vmem:[%s5239 + $0xbc] sm:$0x1]
        %v6425 = vshrl.u32 %v5240, 16
        %v6427 = vrot.slane %v6425, 4
        %v6428 = vshll.u32 %v5240, 16
        %v6430 = vrot.slane %v6428, 5
        %v6431 = vor.u32 %v6427, %v6430
        %v6432 = vrot.slane %v6431, 4
        %v6434 = vshll.u32 %v5241, 16
        %v6436 = vrot.slane %v6434, 5
        %v6437 = vsel %vm846, %v6432, %v6436
        %v6438 = vshrl.u32 %v5241, 16
        %v6440 = vrot.slane %v6438, 4
        %v6441 = vor.u32 %v6440, %v6436
        %v6442 = vrot.slane %v6441, 4
        %v6444 = vshll.u32 %v6408, 16
        %v6446 = vrot.slane %v6444, 5
        %v6447 = vsel %vm846, %v6442, %v6446
        %v6449 = vshrl.u32 %v5242, 16
        %v6451 = vrot.slane %v6449, 4
        %v6452 = vshll.u32 %v5242, 16
        %v6454 = vrot.slane %v6452, 5
        %v6455 = vor.u32 %v6451, %v6454
        %v6456 = vrot.slane %v6455, 4
        %v6458 = vshll.u32 %v5243, 16
        %v6460 = vrot.slane %v6458, 5
        %v6461 = vsel %vm846, %v6456, %v6460
        %v6462 = vshrl.u32 %v5243, 16
        %v6464 = vrot.slane %v6462, 4
        %v6465 = vor.u32 %v6464, %v6460
        %v6466 = vrot.slane %v6465, 4
        %v6468 = vshll.u32 %v6409, 16
        %v6470 = vrot.slane %v6468, 5
        %v6471 = vsel %vm846, %v6466, %v6470
        %v6473 = vshrl.u32 %v5244, 16
        %v6475 = vrot.slane %v6473, 4
        %v6476 = vshll.u32 %v5244, 16
        %v6478 = vrot.slane %v6476, 5
        %v6479 = vor.u32 %v6475, %v6478
        %v6480 = vrot.slane %v6479, 4
        %v6482 = vshll.u32 %v5245, 16
        %v6484 = vrot.slane %v6482, 5
        %v6485 = vsel %vm846, %v6480, %v6484
        %v6486 = vshrl.u32 %v5245, 16
        %v6488 = vrot.slane %v6486, 4
        %v6489 = vor.u32 %v6488, %v6484
        %v6490 = vrot.slane %v6489, 4
        %v6492 = vshll.u32 %v6410, 16
        %v6494 = vrot.slane %v6492, 5
        %v6495 = vsel %vm846, %v6490, %v6494
        %v6497 = vshrl.u32 %v5246, 16
        %v6499 = vrot.slane %v6497, 4
        %v6500 = vshll.u32 %v5246, 16
        %v6502 = vrot.slane %v6500, 5
        %v6503 = vor.u32 %v6499, %v6502
        %v6504 = vrot.slane %v6503, 4
        %v6506 = vshll.u32 %v5247, 16
        %v6508 = vrot.slane %v6506, 5
        %v6509 = vsel %vm846, %v6504, %v6508
        %v6510 = vshrl.u32 %v5247, 16
        %v6512 = vrot.slane %v6510, 4
        %v6513 = vor.u32 %v6512, %v6508
        %v6514 = vrot.slane %v6513, 4
        %v6516 = vshll.u32 %v6411, 16
        %v6518 = vrot.slane %v6516, 5
        %v6519 = vsel %vm846, %v6514, %v6518
        %v6521 = vshrl.u32 %v5248, 16
        %v6523 = vrot.slane %v6521, 4
        %v6524 = vshll.u32 %v5248, 16
        %v6526 = vrot.slane %v6524, 5
        %v6527 = vor.u32 %v6523, %v6526
        %v6528 = vrot.slane %v6527, 4
        %v6530 = vshll.u32 %v5249, 16
        %v6532 = vrot.slane %v6530, 5
        %v6533 = vsel %vm846, %v6528, %v6532
        %v6534 = vshrl.u32 %v5249, 16
        %v6536 = vrot.slane %v6534, 4
        %v6537 = vor.u32 %v6536, %v6532
        %v6538 = vrot.slane %v6537, 4
        %v6540 = vshll.u32 %v6412, 16
        %v6542 = vrot.slane %v6540, 5
        %v6543 = vsel %vm846, %v6538, %v6542
        %v6545 = vshrl.u32 %v5250, 16
        %v6547 = vrot.slane %v6545, 4
        %v6548 = vshll.u32 %v5250, 16
        %v6550 = vrot.slane %v6548, 5
        %v6551 = vor.u32 %v6547, %v6550
        %v6552 = vrot.slane %v6551, 4
        %v6554 = vshll.u32 %v5251, 16
        %v6556 = vrot.slane %v6554, 5
        %v6557 = vsel %vm846, %v6552, %v6556
        %v6558 = vshrl.u32 %v5251, 16
        %v6560 = vrot.slane %v6558, 4
        %v6561 = vor.u32 %v6560, %v6556
        %v6562 = vrot.slane %v6561, 4
        %v6564 = vshll.u32 %v6413, 16
        %v6566 = vrot.slane %v6564, 5
        %v6567 = vsel %vm846, %v6562, %v6566
        %v6569 = vshrl.u32 %v5252, 16
        %v6571 = vrot.slane %v6569, 4
        %v6572 = vshll.u32 %v5252, 16
        %v6574 = vrot.slane %v6572, 5
        %v6575 = vor.u32 %v6571, %v6574
        %v6576 = vrot.slane %v6575, 4
        %v6578 = vshll.u32 %v5253, 16
        %v6580 = vrot.slane %v6578, 5
        %v6581 = vsel %vm846, %v6576, %v6580
        %v6582 = vshrl.u32 %v5253, 16
        %v6584 = vrot.slane %v6582, 4
        %v6585 = vor.u32 %v6584, %v6580
        %v6586 = vrot.slane %v6585, 4
        %v6588 = vshll.u32 %v6414, 16
        %v6590 = vrot.slane %v6588, 5
        %v6591 = vsel %vm846, %v6586, %v6590
        %v6593 = vshrl.u32 %v5254, 16
        %v6595 = vrot.slane %v6593, 4
        %v6596 = vshll.u32 %v5254, 16
        %v6598 = vrot.slane %v6596, 5
        %v6599 = vor.u32 %v6595, %v6598
        %v6600 = vrot.slane %v6599, 4
        %v6602 = vshll.u32 %v5255, 16
        %v6604 = vrot.slane %v6602, 5
        %v6605 = vsel %vm846, %v6600, %v6604
        %v6606 = vshrl.u32 %v5255, 16
        %v6608 = vrot.slane %v6606, 4
        %v6609 = vor.u32 %v6608, %v6604
        %v6610 = vrot.slane %v6609, 4
        %v6612 = vshll.u32 %v6415, 16
        %v6614 = vrot.slane %v6612, 5
        %v6615 = vsel %vm846, %v6610, %v6614
        %v6617 = vshrl.u32 %v5256, 16
        %v6619 = vrot.slane %v6617, 4
        %v6620 = vshll.u32 %v5256, 16
        %v6622 = vrot.slane %v6620, 5
        %v6623 = vor.u32 %v6619, %v6622
        %v6624 = vrot.slane %v6623, 4
        %v6626 = vshll.u32 %v5257, 16
        %v6628 = vrot.slane %v6626, 5
        %v6629 = vsel %vm846, %v6624, %v6628
        %v6630 = vshrl.u32 %v5257, 16
        %v6632 = vrot.slane %v6630, 4
        %v6633 = vor.u32 %v6632, %v6628
        %v6634 = vrot.slane %v6633, 4
        %v6636 = vshll.u32 %v6416, 16
        %v6638 = vrot.slane %v6636, 5
        %v6639 = vsel %vm846, %v6634, %v6638
        %v6641 = vshrl.u32 %v5258, 16
        %v6643 = vrot.slane %v6641, 4
        %v6644 = vshll.u32 %v5258, 16
        %v6646 = vrot.slane %v6644, 5
        %v6647 = vor.u32 %v6643, %v6646
        %v6648 = vrot.slane %v6647, 4
        %v6650 = vshll.u32 %v5259, 16
        %v6652 = vrot.slane %v6650, 5
        %v6653 = vsel %vm846, %v6648, %v6652
        %v6654 = vshrl.u32 %v5259, 16
        %v6656 = vrot.slane %v6654, 4
        %v6657 = vor.u32 %v6656, %v6652
        %v6658 = vrot.slane %v6657, 4
        %v6660 = vshll.u32 %v6417, 16
        %v6662 = vrot.slane %v6660, 5
        %v6663 = vsel %vm846, %v6658, %v6662
        %v6665 = vshrl.u32 %v5260, 16
        %v6667 = vrot.slane %v6665, 4
        %v6668 = vshll.u32 %v5260, 16
        %v6670 = vrot.slane %v6668, 5
        %v6671 = vor.u32 %v6667, %v6670
        %v6672 = vrot.slane %v6671, 4
        %v6674 = vshll.u32 %v5261, 16
        %v6676 = vrot.slane %v6674, 5
        %v6677 = vsel %vm846, %v6672, %v6676
        %v6678 = vshrl.u32 %v5261, 16
        %v6680 = vrot.slane %v6678, 4
        %v6681 = vor.u32 %v6680, %v6676
        %v6682 = vrot.slane %v6681, 4
        %v6684 = vshll.u32 %v6418, 16
        %v6686 = vrot.slane %v6684, 5
        %v6687 = vsel %vm846, %v6682, %v6686
        %v6689 = vshrl.u32 %v5262, 16
        %v6691 = vrot.slane %v6689, 4
        %v6692 = vshll.u32 %v5262, 16
        %v6694 = vrot.slane %v6692, 5
        %v6695 = vor.u32 %v6691, %v6694
        %v6696 = vrot.slane %v6695, 4
        %v6698 = vshll.u32 %v5263, 16
        %v6700 = vrot.slane %v6698, 5
        %v6701 = vsel %vm846, %v6696, %v6700
        %v6702 = vshrl.u32 %v5263, 16
        %v6704 = vrot.slane %v6702, 4
        %v6705 = vor.u32 %v6704, %v6700
        %v6706 = vrot.slane %v6705, 4
        %v6708 = vshll.u32 %v6419, 16
        %v6710 = vrot.slane %v6708, 5
        %v6711 = vsel %vm846, %v6706, %v6710
        %v6713 = vshrl.u32 %v5264, 16
        %v6715 = vrot.slane %v6713, 4
        %v6716 = vshll.u32 %v5264, 16
        %v6718 = vrot.slane %v6716, 5
        %v6719 = vor.u32 %v6715, %v6718
        %v6720 = vrot.slane %v6719, 4
        %v6722 = vshll.u32 %v5265, 16
        %v6724 = vrot.slane %v6722, 5
        %v6725 = vsel %vm846, %v6720, %v6724
        %v6726 = vshrl.u32 %v5265, 16
        %v6728 = vrot.slane %v6726, 4
        %v6729 = vor.u32 %v6728, %v6724
        %v6730 = vrot.slane %v6729, 4
        %v6732 = vshll.u32 %v6420, 16
        %v6734 = vrot.slane %v6732, 5
        %v6735 = vsel %vm846, %v6730, %v6734
        %v6737 = vshrl.u32 %v5266, 16
        %v6739 = vrot.slane %v6737, 4
        %v6740 = vshll.u32 %v5266, 16
        %v6742 = vrot.slane %v6740, 5
        %v6743 = vor.u32 %v6739, %v6742
        %v6744 = vrot.slane %v6743, 4
        %v6746 = vshll.u32 %v5267, 16
        %v6748 = vrot.slane %v6746, 5
        %v6749 = vsel %vm846, %v6744, %v6748
        %v6750 = vshrl.u32 %v5267, 16
        %v6752 = vrot.slane %v6750, 4
        %v6753 = vor.u32 %v6752, %v6748
        %v6754 = vrot.slane %v6753, 4
        %v6756 = vshll.u32 %v6421, 16
        %v6758 = vrot.slane %v6756, 5
        %v6759 = vsel %vm846, %v6754, %v6758
        %v6761 = vshrl.u32 %v5268, 16
        %v6763 = vrot.slane %v6761, 4
        %v6764 = vshll.u32 %v5268, 16
        %v6766 = vrot.slane %v6764, 5
        %v6767 = vor.u32 %v6763, %v6766
        %v6768 = vrot.slane %v6767, 4
        %v6770 = vshll.u32 %v5269, 16
        %v6772 = vrot.slane %v6770, 5
        %v6773 = vsel %vm846, %v6768, %v6772
        %v6774 = vshrl.u32 %v5269, 16
        %v6776 = vrot.slane %v6774, 4
        %v6777 = vor.u32 %v6776, %v6772
        %v6778 = vrot.slane %v6777, 4
        %v6780 = vshll.u32 %v6422, 16
        %v6782 = vrot.slane %v6780, 5
        %v6783 = vsel %vm846, %v6778, %v6782
        %v6785 = vshrl.u32 %v5270, 16
        %v6787 = vrot.slane %v6785, 4
        %v6788 = vshll.u32 %v5270, 16
        %v6790 = vrot.slane %v6788, 5
        %v6791 = vor.u32 %v6787, %v6790
        %v6792 = vrot.slane %v6791, 4
        %v6794 = vshll.u32 %v5271, 16
        %v6796 = vrot.slane %v6794, 5
        %v6797 = vsel %vm846, %v6792, %v6796
        %v6798 = vshrl.u32 %v5271, 16
        %v6800 = vrot.slane %v6798, 4
        %v6801 = vor.u32 %v6800, %v6796
        %v6802 = vrot.slane %v6801, 4
        %v6804 = vshll.u32 %v6423, 16
        %v6806 = vrot.slane %v6804, 5
        %v6807 = vsel %vm846, %v6802, %v6806
        %v6808 = vunpack.c.l.b16 %v5637
        %v6809 = vunpack.c.l.b16 %v5647
        %v6810 = vunpack.c.l.b16 %v5661
        %v6811 = vunpack.c.l.b16 %v5671
        %v6812 = vunpack.c.l.b16 %v5685
        %v6813 = vunpack.c.l.b16 %v5695
        %v6814 = vunpack.c.l.b16 %v5709
        %v6815 = vunpack.c.l.b16 %v5719
        %v6816 = vunpack.c.l.b16 %v5733
        %v6817 = vunpack.c.l.b16 %v5743
        %v6818 = vunpack.c.l.b16 %v5757
        %v6819 = vunpack.c.l.b16 %v5767
        %v6820 = vunpack.c.l.b16 %v5781
        %v6821 = vunpack.c.l.b16 %v5791
        %v6822 = vunpack.c.l.b16 %v5805
        %v6823 = vunpack.c.l.b16 %v5815
        %v6824 = vunpack.c.l.b16 %v5829
        %v6825 = vunpack.c.l.b16 %v5839
        %v6826 = vunpack.c.l.b16 %v5853
        %v6827 = vunpack.c.l.b16 %v5863
        %v6828 = vunpack.c.l.b16 %v5877
        %v6829 = vunpack.c.l.b16 %v5887
        %v6830 = vunpack.c.l.b16 %v5901
        %v6831 = vunpack.c.l.b16 %v5911
        %v6832 = vunpack.c.l.b16 %v5925
        %v6833 = vunpack.c.l.b16 %v5935
        %v6834 = vunpack.c.l.b16 %v5949
        %v6835 = vunpack.c.l.b16 %v5959
        %v6836 = vunpack.c.l.b16 %v5973
        %v6837 = vunpack.c.l.b16 %v5983
        %v6838 = vunpack.c.l.b16 %v5997
        %v6839 = vunpack.c.l.b16 %v6007
        %v6840 = vpack.c.b16 %v6809, %v6808
        %v6841 = vpack.c.b16 %v6811, %v6810
        %v6842 = vpack.c.b16 %v6813, %v6812
        %v6843 = vpack.c.b16 %v6815, %v6814
        %v6844 = vpack.c.b16 %v6817, %v6816
        %v6845 = vpack.c.b16 %v6819, %v6818
        %v6846 = vpack.c.b16 %v6821, %v6820
        %v6847 = vpack.c.b16 %v6823, %v6822
        %v6848 = vpack.c.b16 %v6825, %v6824
        %v6849 = vpack.c.b16 %v6827, %v6826
        %v6850 = vpack.c.b16 %v6829, %v6828
        %v6851 = vpack.c.b16 %v6831, %v6830
        %v6852 = vpack.c.b16 %v6833, %v6832
        %v6853 = vpack.c.b16 %v6835, %v6834
        %v6854 = vpack.c.b16 %v6837, %v6836
        %v6855 = vpack.c.b16 %v6839, %v6838
        %v6872 = vunpack.c.l.b16 %v6037
        %v6873 = vunpack.c.l.b16 %v6047
        %v6874 = vunpack.c.l.b16 %v6061
        %v6875 = vunpack.c.l.b16 %v6071
        %v6876 = vunpack.c.l.b16 %v6085
        %v6877 = vunpack.c.l.b16 %v6095
        %v6878 = vunpack.c.l.b16 %v6109
        %v6879 = vunpack.c.l.b16 %v6119
        %v6880 = vunpack.c.l.b16 %v6133
        %v6881 = vunpack.c.l.b16 %v6143
        %v6882 = vunpack.c.l.b16 %v6157
        %v6883 = vunpack.c.l.b16 %v6167
        %v6884 = vunpack.c.l.b16 %v6181
        %v6885 = vunpack.c.l.b16 %v6191
        %v6886 = vunpack.c.l.b16 %v6205
        %v6887 = vunpack.c.l.b16 %v6215
        %v6888 = vunpack.c.l.b16 %v6229
        %v6889 = vunpack.c.l.b16 %v6239
        %v6890 = vunpack.c.l.b16 %v6253
        %v6891 = vunpack.c.l.b16 %v6263
        %v6892 = vunpack.c.l.b16 %v6277
        %v6893 = vunpack.c.l.b16 %v6287
        %v6894 = vunpack.c.l.b16 %v6301
        %v6895 = vunpack.c.l.b16 %v6311
        %v6896 = vunpack.c.l.b16 %v6325
        %v6897 = vunpack.c.l.b16 %v6335
        %v6898 = vunpack.c.l.b16 %v6349
        %v6899 = vunpack.c.l.b16 %v6359
        %v6900 = vunpack.c.l.b16 %v6373
        %v6901 = vunpack.c.l.b16 %v6383
        %v6902 = vunpack.c.l.b16 %v6397
        %v6903 = vunpack.c.l.b16 %v6407
        %v6904 = vpack.c.b16 %v6873, %v6872
        %v6905 = vpack.c.b16 %v6875, %v6874
        %v6906 = vpack.c.b16 %v6877, %v6876
        %v6907 = vpack.c.b16 %v6879, %v6878
        %v6908 = vpack.c.b16 %v6881, %v6880
        %v6909 = vpack.c.b16 %v6883, %v6882
        %v6910 = vpack.c.b16 %v6885, %v6884
        %v6911 = vpack.c.b16 %v6887, %v6886
        %v6912 = vpack.c.b16 %v6889, %v6888
        %v6913 = vpack.c.b16 %v6891, %v6890
        %v6914 = vpack.c.b16 %v6893, %v6892
        %v6915 = vpack.c.b16 %v6895, %v6894
        %v6916 = vpack.c.b16 %v6897, %v6896
        %v6917 = vpack.c.b16 %v6899, %v6898
        %v6918 = vpack.c.b16 %v6901, %v6900
        %v6919 = vpack.c.b16 %v6903, %v6902
        %v6936 = vunpack.c.l.b16 %v6437
        %v6937 = vunpack.c.l.b16 %v6447
        %v6938 = vunpack.c.l.b16 %v6461
        %v6939 = vunpack.c.l.b16 %v6471
        %v6940 = vunpack.c.l.b16 %v6485
        %v6941 = vunpack.c.l.b16 %v6495
        %v6942 = vunpack.c.l.b16 %v6509
        %v6943 = vunpack.c.l.b16 %v6519
        %v6944 = vunpack.c.l.b16 %v6533
        %v6945 = vunpack.c.l.b16 %v6543
        %v6946 = vunpack.c.l.b16 %v6557
        %v6947 = vunpack.c.l.b16 %v6567
        %v6948 = vunpack.c.l.b16 %v6581
        %v6949 = vunpack.c.l.b16 %v6591
        %v6950 = vunpack.c.l.b16 %v6605
        %v6951 = vunpack.c.l.b16 %v6615
        %v6952 = vunpack.c.l.b16 %v6629
        %v6953 = vunpack.c.l.b16 %v6639
        %v6954 = vunpack.c.l.b16 %v6653
        %v6955 = vunpack.c.l.b16 %v6663
        %v6956 = vunpack.c.l.b16 %v6677
        %v6957 = vunpack.c.l.b16 %v6687
        %v6958 = vunpack.c.l.b16 %v6701
        %v6959 = vunpack.c.l.b16 %v6711
        %v6960 = vunpack.c.l.b16 %v6725
        %v6961 = vunpack.c.l.b16 %v6735
        %v6962 = vunpack.c.l.b16 %v6749
        %v6963 = vunpack.c.l.b16 %v6759
        %v6964 = vunpack.c.l.b16 %v6773
        %v6965 = vunpack.c.l.b16 %v6783
        %v6966 = vunpack.c.l.b16 %v6797
        %v6967 = vunpack.c.l.b16 %v6807
        %v6968 = vpack.c.b16 %v6937, %v6936
        %v6969 = vpack.c.b16 %v6939, %v6938
        %v6970 = vpack.c.b16 %v6941, %v6940
        %v6971 = vpack.c.b16 %v6943, %v6942
        %v6972 = vpack.c.b16 %v6945, %v6944
        %v6973 = vpack.c.b16 %v6947, %v6946
        %v6974 = vpack.c.b16 %v6949, %v6948
        %v6975 = vpack.c.b16 %v6951, %v6950
        %v6976 = vpack.c.b16 %v6953, %v6952
        %v6977 = vpack.c.b16 %v6955, %v6954
        %v6978 = vpack.c.b16 %v6957, %v6956
        %v6979 = vpack.c.b16 %v6959, %v6958
        %v6980 = vpack.c.b16 %v6961, %v6960
        %v6981 = vpack.c.b16 %v6963, %v6962
        %v6982 = vpack.c.b16 %v6965, %v6964
        %v6983 = vpack.c.b16 %v6967, %v6966
        %v7000 = vld [vmem:[#allocation9 + $0xc0] sm:$0xf]
        %v7001 = vld [vmem:[#allocation9 + $0xc4] sm:$0xf]
        %v7002 = vld [vmem:[#allocation9 + $0xc8] sm:$0xf]
        %v7003 = vld [vmem:[#allocation9 + $0xcc] sm:$0xf]
        %v7004 = vld [vmem:[#allocation9 + $0xd0] sm:$0xf]
        %v7005 = vld [vmem:[#allocation9 + $0xd4] sm:$0xf]
        %v7006 = vld [vmem:[#allocation9 + $0xd8] sm:$0xf]
        %v7007 = vld [vmem:[#allocation9 + $0xdc] sm:$0xf]
        %v7008 = vld [vmem:[#allocation9 + $0xe0] sm:$0xf]
        %v7009 = vld [vmem:[#allocation9 + $0xe4] sm:$0xf]
        %v7010 = vld [vmem:[#allocation9 + $0xe8] sm:$0xf]
        %v7011 = vld [vmem:[#allocation9 + $0xec] sm:$0xf]
        %v7012 = vld [vmem:[#allocation9 + $0xf0] sm:$0xf]
        %v7013 = vld [vmem:[#allocation9 + $0xf4] sm:$0xf]
        %v7014 = vld [vmem:[#allocation9 + $0xf8] sm:$0xf]
        %v7015 = vld [vmem:[#allocation9 + $0xfc] sm:$0xf]
        %v7016 = vld [vmem:[#allocation9 + $0x100] sm:$0xf]
        %v7017 = vld [vmem:[#allocation9 + $0x104] sm:$0xf]
        %v7018 = vld [vmem:[#allocation9 + $0x108] sm:$0xf]
        %v7019 = vld [vmem:[#allocation9 + $0x10c] sm:$0xf]
        %v7020 = vld [vmem:[#allocation9 + $0x110] sm:$0xf]
        %v7021 = vld [vmem:[#allocation9 + $0x114] sm:$0xf]
        %v7022 = vld [vmem:[#allocation9 + $0x118] sm:$0xf]
        %v7023 = vld [vmem:[#allocation9 + $0x11c] sm:$0xf]
        %v7024 = vld [vmem:[#allocation9 + $0x120] sm:$0xf]
        %v7025 = vld [vmem:[#allocation9 + $0x124] sm:$0xf]
        %v7026 = vld [vmem:[#allocation9 + $0x128] sm:$0xf]
        %v7027 = vld [vmem:[#allocation9 + $0x12c] sm:$0xf]
        %v7028 = vld [vmem:[#allocation9 + $0x130] sm:$0xf]
        %v7029 = vld [vmem:[#allocation9 + $0x134] sm:$0xf]
        %v7030 = vld [vmem:[#allocation9 + $0x138] sm:$0xf]
        %v7031 = vld [vmem:[#allocation9 + $0x13c] sm:$0xf]
        %v7032 = vld [vmem:[#allocation9 + $0x140] sm:$0xf]
        %v7033 = vld [vmem:[#allocation9 + $0x144] sm:$0xf]
        %v7034 = vld [vmem:[#allocation9 + $0x148] sm:$0xf]
        %v7035 = vld [vmem:[#allocation9 + $0x14c] sm:$0xf]
        %v7036 = vld [vmem:[#allocation9 + $0x150] sm:$0xf]
        %v7037 = vld [vmem:[#allocation9 + $0x154] sm:$0xf]
        %v7038 = vld [vmem:[#allocation9 + $0x158] sm:$0xf]
        %v7039 = vld [vmem:[#allocation9 + $0x15c] sm:$0xf]
        %v7040 = vld [vmem:[#allocation9 + $0x160] sm:$0xf]
        %v7041 = vld [vmem:[#allocation9 + $0x164] sm:$0xf]
        %v7042 = vld [vmem:[#allocation9 + $0x168] sm:$0xf]
        %v7043 = vld [vmem:[#allocation9 + $0x16c] sm:$0xf]
        %v7044 = vld [vmem:[#allocation9 + $0x170] sm:$0xf]
        %v7045 = vld [vmem:[#allocation9 + $0x174] sm:$0xf]
        %v7046 = vld [vmem:[#allocation9 + $0x178] sm:$0xf]
        %v7047 = vld [vmem:[#allocation9 + $0x17c] sm:$0xf]
        %v7096 = vunpack.c.l.b16 %v7000
        %v7097 = vunpack.c.l.b16 %v7001
        %v7098 = vunpack.c.l.b16 %v7002
        %v7099 = vunpack.c.l.b16 %v7003
        %v7100 = vunpack.c.l.b16 %v7004
        %v7101 = vunpack.c.l.b16 %v7005
        %v7102 = vunpack.c.l.b16 %v7006
        %v7103 = vunpack.c.l.b16 %v7007
        %v7104 = vunpack.c.l.b16 %v7008
        %v7105 = vunpack.c.l.b16 %v7009
        %v7106 = vunpack.c.l.b16 %v7010
        %v7107 = vunpack.c.l.b16 %v7011
        %v7108 = vunpack.c.l.b16 %v7012
        %v7109 = vunpack.c.l.b16 %v7013
        %v7110 = vunpack.c.l.b16 %v7014
        %v7111 = vunpack.c.l.b16 %v7015
        %v7112 = vunpack.c.l.b16 %v7016
        %v7113 = vunpack.c.l.b16 %v7017
        %v7114 = vunpack.c.l.b16 %v7018
        %v7115 = vunpack.c.l.b16 %v7019
        %v7116 = vunpack.c.l.b16 %v7020
        %v7117 = vunpack.c.l.b16 %v7021
        %v7118 = vunpack.c.l.b16 %v7022
        %v7119 = vunpack.c.l.b16 %v7023
        %v7120 = vunpack.c.l.b16 %v7024
        %v7121 = vunpack.c.l.b16 %v7025
        %v7122 = vunpack.c.l.b16 %v7026
        %v7123 = vunpack.c.l.b16 %v7027
        %v7124 = vunpack.c.l.b16 %v7028
        %v7125 = vunpack.c.l.b16 %v7029
        %v7126 = vunpack.c.l.b16 %v7030
        %v7127 = vunpack.c.l.b16 %v7031
        %v7128 = vunpack.c.l.b16 %v7032
        %v7129 = vunpack.c.l.b16 %v7033
        %v7130 = vunpack.c.l.b16 %v7034
        %v7131 = vunpack.c.l.b16 %v7035
        %v7132 = vunpack.c.l.b16 %v7036
        %v7133 = vunpack.c.l.b16 %v7037
        %v7134 = vunpack.c.l.b16 %v7038
        %v7135 = vunpack.c.l.b16 %v7039
        %v7136 = vunpack.c.l.b16 %v7040
        %v7137 = vunpack.c.l.b16 %v7041
        %v7138 = vunpack.c.l.b16 %v7042
        %v7139 = vunpack.c.l.b16 %v7043
        %v7140 = vunpack.c.l.b16 %v7044
        %v7141 = vunpack.c.l.b16 %v7045
        %v7142 = vunpack.c.l.b16 %v7046
        %v7143 = vunpack.c.l.b16 %v7047
        %v7144 = vpack.c.b16 %v7097, %v7096
        %v7145 = vpack.c.b16 %v7099, %v7098
        %v7146 = vpack.c.b16 %v7101, %v7100
        %v7147 = vpack.c.b16 %v7103, %v7102
        %v7148 = vpack.c.b16 %v7105, %v7104
        %v7149 = vpack.c.b16 %v7107, %v7106
        %v7150 = vpack.c.b16 %v7109, %v7108
        %v7151 = vpack.c.b16 %v7111, %v7110
        %v7152 = vpack.c.b16 %v7113, %v7112
        %v7153 = vpack.c.b16 %v7115, %v7114
        %v7154 = vpack.c.b16 %v7117, %v7116
        %v7155 = vpack.c.b16 %v7119, %v7118
        %v7156 = vpack.c.b16 %v7121, %v7120
        %v7157 = vpack.c.b16 %v7123, %v7122
        %v7158 = vpack.c.b16 %v7125, %v7124
        %v7159 = vpack.c.b16 %v7127, %v7126
        %v7160 = vpack.c.b16 %v7129, %v7128
        %v7161 = vpack.c.b16 %v7131, %v7130
        %v7162 = vpack.c.b16 %v7133, %v7132
        %v7163 = vpack.c.b16 %v7135, %v7134
        %v7164 = vpack.c.b16 %v7137, %v7136
        %v7165 = vpack.c.b16 %v7139, %v7138
        %v7166 = vpack.c.b16 %v7141, %v7140
        %v7167 = vpack.c.b16 %v7143, %v7142
        %7192 = vmatprep.subr.bf16.mxu0 0
        %7193 = vmatpush1.bf16.msra.mxu0 %v7151
        %7194 = vmatprep.subr.bf16.mxu0 0
        %7195 = vmatpush1.bf16.msra.mxu0 %v7150
        %7196 = vmatprep.subr.bf16.mxu0 0
        %7197 = vmatpush1.bf16.msra.mxu0 %v7149
        %7198 = vmatprep.subr.bf16.mxu0 0
        %7199 = vmatpush1.bf16.msra.mxu0 %v7148
        %7200 = vmatprep.subr.bf16.mxu0 0
        %7201 = vmatpush1.bf16.msra.mxu0 %v7147
        %7202 = vmatprep.subr.bf16.mxu0 0
        %7203 = vmatpush1.bf16.msra.mxu0 %v7146
        %7204 = vmatprep.subr.bf16.mxu0 0
        %7205 = vmatpush1.bf16.msra.mxu0 %v7145
        %7206 = vmatprep.subr.bf16.mxu0 0
        %7207 = vmatpush1.bf16.msra.mxu0 %v7144
        %7208 = vmatprep.subr.bf16.mxu0 0
        %7209 = vmatpush2.bf16.msra.mxu0 %v7159
        %7210 = vmatprep.subr.bf16.mxu0 0
        %7211 = vmatpush2.bf16.msra.mxu0 %v7158
        %7212 = vmatprep.subr.bf16.mxu0 0
        %7213 = vmatpush2.bf16.msra.mxu0 %v7157
        %7214 = vmatprep.subr.bf16.mxu0 0
        %7215 = vmatpush2.bf16.msra.mxu0 %v7156
        %7216 = vmatprep.subr.bf16.mxu0 0
        %7217 = vmatpush2.bf16.msra.mxu0 %v7155
        %7218 = vmatprep.subr.bf16.mxu0 0
        %7219 = vmatpush2.bf16.msra.mxu0 %v7154
        %7220 = vmatprep.subr.bf16.mxu0 0
        %7221 = vmatpush2.bf16.msra.mxu0 %v7153
        %7222 = vmatprep.subr.bf16.mxu0 0
        %7223 = vmatpush2.bf16.msra.mxu0 %v7152
        %7224 = vmatprep.mubr.bf16.mxu0 %v6904
        %7225 = vmatmul.mubr.bf16.gmra.mxu0 %v6840
        %v7226 = vpop.f32.mrf.mxu0
        %v7227 = vadd.f32 0.0, %v7226
        %v7228 = vpop.f32.mrf.mxu0
        %v7229 = vpop.f32.mrf.mxu0
        %v7230 = vadd.f32 0.0, %v7229
        %v7231 = vpop.f32.mrf.mxu0
        %7232 = vmatprep.mubr.bf16.mxu0 %v6905
        %7233 = vmatmul.mubr.bf16.gmra.mxu0 %v6841
        %v7234 = vpop.f32.mrf.mxu0
        %v7235 = vadd.f32 0.0, %v7234
        %v7236 = vpop.f32.mrf.mxu0
        %v7237 = vpop.f32.mrf.mxu0
        %v7238 = vadd.f32 0.0, %v7237
        %v7239 = vpop.f32.mrf.mxu0
        %7240 = vmatprep.mubr.bf16.mxu0 %v6906
        %7241 = vmatmul.mubr.bf16.gmra.mxu0 %v6842
        %v7242 = vpop.f32.mrf.mxu0
        %v7243 = vadd.f32 0.0, %v7242
        %v7244 = vpop.f32.mrf.mxu0
        %v7245 = vpop.f32.mrf.mxu0
        %v7246 = vadd.f32 0.0, %v7245
        %v7247 = vpop.f32.mrf.mxu0
        %7248 = vmatprep.mubr.bf16.mxu0 %v6907
        %7249 = vmatmul.mubr.bf16.gmra.mxu0 %v6843
        %v7250 = vpop.f32.mrf.mxu0
        %v7251 = vadd.f32 0.0, %v7250
        %v7252 = vpop.f32.mrf.mxu0
        %v7253 = vpop.f32.mrf.mxu0
        %v7254 = vadd.f32 0.0, %v7253
        %v7255 = vpop.f32.mrf.mxu0
        %7256 = vmatprep.mubr.bf16.mxu0 %v6908
        %7257 = vmatmul.mubr.bf16.gmra.mxu0 %v6844
        %v7258 = vpop.f32.mrf.mxu0
        %v7259 = vadd.f32 0.0, %v7258
        %v7260 = vpop.f32.mrf.mxu0
        %v7261 = vpop.f32.mrf.mxu0
        %v7262 = vadd.f32 0.0, %v7261
        %v7263 = vpop.f32.mrf.mxu0
        %7264 = vmatprep.mubr.bf16.mxu0 %v6909
        %7265 = vmatmul.mubr.bf16.gmra.mxu0 %v6845
        %v7266 = vpop.f32.mrf.mxu0
        %v7267 = vadd.f32 0.0, %v7266
        %v7268 = vpop.f32.mrf.mxu0
        %v7269 = vpop.f32.mrf.mxu0
        %v7270 = vadd.f32 0.0, %v7269
        %v7271 = vpop.f32.mrf.mxu0
        %7272 = vmatprep.mubr.bf16.mxu0 %v6910
        %7273 = vmatmul.mubr.bf16.gmra.mxu0 %v6846
        %v7274 = vpop.f32.mrf.mxu0
        %v7275 = vadd.f32 0.0, %v7274
        %v7276 = vpop.f32.mrf.mxu0
        %v7277 = vpop.f32.mrf.mxu0
        %v7278 = vadd.f32 0.0, %v7277
        %v7279 = vpop.f32.mrf.mxu0
        %7280 = vmatprep.mubr.bf16.mxu0 %v6911
        %7281 = vmatmul.mubr.bf16.gmra.mxu0 %v6847
        %v7282 = vpop.f32.mrf.mxu0
        %v7283 = vadd.f32 0.0, %v7282
        %v7284 = vpop.f32.mrf.mxu0
        %v7285 = vpop.f32.mrf.mxu0
        %v7286 = vadd.f32 0.0, %v7285
        %v7287 = vpop.f32.mrf.mxu0
        %7288 = vmatprep.mubr.bf16.mxu0 %v6912
        %7289 = vmatmul.mubr.bf16.gmra.mxu0 %v6848
        %v7290 = vpop.f32.mrf.mxu0
        %v7291 = vadd.f32 0.0, %v7290
        %v7292 = vpop.f32.mrf.mxu0
        %v7293 = vpop.f32.mrf.mxu0
        %v7294 = vadd.f32 0.0, %v7293
        %v7295 = vpop.f32.mrf.mxu0
        %7296 = vmatprep.mubr.bf16.mxu0 %v6913
        %7297 = vmatmul.mubr.bf16.gmra.mxu0 %v6849
        %v7298 = vpop.f32.mrf.mxu0
        %v7299 = vadd.f32 0.0, %v7298
        %v7300 = vpop.f32.mrf.mxu0
        %v7301 = vpop.f32.mrf.mxu0
        %v7302 = vadd.f32 0.0, %v7301
        %v7303 = vpop.f32.mrf.mxu0
        %7304 = vmatprep.mubr.bf16.mxu0 %v6914
        %7305 = vmatmul.mubr.bf16.gmra.mxu0 %v6850
        %v7306 = vpop.f32.mrf.mxu0
        %v7307 = vadd.f32 0.0, %v7306
        %v7308 = vpop.f32.mrf.mxu0
        %v7309 = vpop.f32.mrf.mxu0
        %v7310 = vadd.f32 0.0, %v7309
        %v7311 = vpop.f32.mrf.mxu0
        %7312 = vmatprep.mubr.bf16.mxu0 %v6915
        %7313 = vmatmul.mubr.bf16.gmra.mxu0 %v6851
        %v7314 = vpop.f32.mrf.mxu0
        %v7315 = vadd.f32 0.0, %v7314
        %v7316 = vpop.f32.mrf.mxu0
        %v7317 = vpop.f32.mrf.mxu0
        %v7318 = vadd.f32 0.0, %v7317
        %v7319 = vpop.f32.mrf.mxu0
        %7320 = vmatprep.mubr.bf16.mxu0 %v6916
        %7321 = vmatmul.mubr.bf16.gmra.mxu0 %v6852
        %v7322 = vpop.f32.mrf.mxu0
        %v7323 = vadd.f32 0.0, %v7322
        %v7324 = vpop.f32.mrf.mxu0
        %v7325 = vpop.f32.mrf.mxu0
        %v7326 = vadd.f32 0.0, %v7325
        %v7327 = vpop.f32.mrf.mxu0
        %7328 = vmatprep.mubr.bf16.mxu0 %v6917
        %7329 = vmatmul.mubr.bf16.gmra.mxu0 %v6853
        %v7330 = vpop.f32.mrf.mxu0
        %v7331 = vadd.f32 0.0, %v7330
        %v7332 = vpop.f32.mrf.mxu0
        %v7333 = vpop.f32.mrf.mxu0
        %v7334 = vadd.f32 0.0, %v7333
        %v7335 = vpop.f32.mrf.mxu0
        %7336 = vmatprep.mubr.bf16.mxu0 %v6918
        %7337 = vmatmul.mubr.bf16.gmra.mxu0 %v6854
        %v7338 = vpop.f32.mrf.mxu0
        %v7339 = vadd.f32 0.0, %v7338
        %v7340 = vpop.f32.mrf.mxu0
        %v7341 = vpop.f32.mrf.mxu0
        %v7342 = vadd.f32 0.0, %v7341
        %v7343 = vpop.f32.mrf.mxu0
        %7344 = vmatprep.mubr.bf16.mxu0 %v6919
        %7345 = vmatmul.mubr.bf16.gmra.mxu0 %v6855
        %v7346 = vpop.f32.mrf.mxu0
        %v7347 = vadd.f32 0.0, %v7346
        %v7348 = vpop.f32.mrf.mxu0
        %v7349 = vpop.f32.mrf.mxu0
        %v7350 = vadd.f32 0.0, %v7349
        %v7351 = vpop.f32.mrf.mxu0
        %7352 = vdwg.mxu0
        %7353 = vmatprep.subr.bf16.mxu0 0
        %7354 = vmatpush1.bf16.msra.mxu0 %v7167
        %7355 = vmatprep.subr.bf16.mxu0 0
        %7356 = vmatpush1.bf16.msra.mxu0 %v7166
        %7357 = vmatprep.subr.bf16.mxu0 0
        %7358 = vmatpush1.bf16.msra.mxu0 %v7165
        %7359 = vmatprep.subr.bf16.mxu0 0
        %7360 = vmatpush1.bf16.msra.mxu0 %v7164
        %7361 = vmatprep.subr.bf16.mxu0 0
        %7362 = vmatpush1.bf16.msra.mxu0 %v7163
        %7363 = vmatprep.subr.bf16.mxu0 0
        %7364 = vmatpush1.bf16.msra.mxu0 %v7162
        %7365 = vmatprep.subr.bf16.mxu0 0
        %7366 = vmatpush1.bf16.msra.mxu0 %v7161
        %7367 = vmatprep.subr.bf16.mxu0 0
        %7368 = vmatpush1.bf16.msra.mxu0 %v7160
        %7369 = vmatprep.subr.bf16.mxu0 0
        %7370 = vmatpush2.bf16.msra.mxu0 0
        %7371 = vmatprep.subr.bf16.mxu0 0
        %7372 = vmatpush2.bf16.msra.mxu0 0
        %7373 = vmatprep.subr.bf16.mxu0 0
        %7374 = vmatpush2.bf16.msra.mxu0 0
        %7375 = vmatprep.subr.bf16.mxu0 0
        %7376 = vmatpush2.bf16.msra.mxu0 0
        %7377 = vmatprep.subr.bf16.mxu0 0
        %7378 = vmatpush2.bf16.msra.mxu0 0
        %7379 = vmatprep.subr.bf16.mxu0 0
        %7380 = vmatpush2.bf16.msra.mxu0 0
        %7381 = vmatprep.subr.bf16.mxu0 0
        %7382 = vmatpush2.bf16.msra.mxu0 0
        %7383 = vmatprep.subr.bf16.mxu0 0
        %7384 = vmatpush2.bf16.msra.mxu0 0
        %7385 = vmatprep.mubr.bf16.mxu0 0
        %7386 = vmatmul.mubr.bf16.gmra.mxu0 %v6968
        %v7387 = vpop.f32.mrf.mxu0
        %v7388 = vadd.f32 %v7227, %v7387
        %v7389 = vpop.f32.mrf.mxu0
        %v7390 = vpop.f32.mrf.mxu0
        %v7391 = vadd.f32 %v7230, %v7390
        %v7392 = vpop.f32.mrf.mxu0
        %7393 = vmatprep.mubr.bf16.mxu0 0
        %7394 = vmatmul.mubr.bf16.gmra.mxu0 %v6969
        %v7395 = vpop.f32.mrf.mxu0
        %v7396 = vadd.f32 %v7235, %v7395
        %v7397 = vpop.f32.mrf.mxu0
        %v7398 = vpop.f32.mrf.mxu0
        %v7399 = vadd.f32 %v7238, %v7398
        %v7400 = vpop.f32.mrf.mxu0
        %7401 = vmatprep.mubr.bf16.mxu0 0
        %7402 = vmatmul.mubr.bf16.gmra.mxu0 %v6970
        %v7403 = vpop.f32.mrf.mxu0
        %v7404 = vadd.f32 %v7243, %v7403
        %v7405 = vpop.f32.mrf.mxu0
        %v7406 = vpop.f32.mrf.mxu0
        %v7407 = vadd.f32 %v7246, %v7406
        %v7408 = vpop.f32.mrf.mxu0
        %7409 = vmatprep.mubr.bf16.mxu0 0
        %7410 = vmatmul.mubr.bf16.gmra.mxu0 %v6971
        %v7411 = vpop.f32.mrf.mxu0
        %v7412 = vadd.f32 %v7251, %v7411
        %v7413 = vpop.f32.mrf.mxu0
        %v7414 = vpop.f32.mrf.mxu0
        %v7415 = vadd.f32 %v7254, %v7414
        %v7416 = vpop.f32.mrf.mxu0
        %7417 = vmatprep.mubr.bf16.mxu0 0
        %7418 = vmatmul.mubr.bf16.gmra.mxu0 %v6972
        %v7419 = vpop.f32.mrf.mxu0
        %v7420 = vadd.f32 %v7259, %v7419
        %v7421 = vpop.f32.mrf.mxu0
        %v7422 = vpop.f32.mrf.mxu0
        %v7423 = vadd.f32 %v7262, %v7422
        %v7424 = vpop.f32.mrf.mxu0
        %7425 = vmatprep.mubr.bf16.mxu0 0
        %7426 = vmatmul.mubr.bf16.gmra.mxu0 %v6973
        %v7427 = vpop.f32.mrf.mxu0
        %v7428 = vadd.f32 %v7267, %v7427
        %v7429 = vpop.f32.mrf.mxu0
        %v7430 = vpop.f32.mrf.mxu0
        %v7431 = vadd.f32 %v7270, %v7430
        %v7432 = vpop.f32.mrf.mxu0
        %7433 = vmatprep.mubr.bf16.mxu0 0
        %7434 = vmatmul.mubr.bf16.gmra.mxu0 %v6974
        %v7435 = vpop.f32.mrf.mxu0
        %v7436 = vadd.f32 %v7275, %v7435
        %v7437 = vpop.f32.mrf.mxu0
        %v7438 = vpop.f32.mrf.mxu0
        %v7439 = vadd.f32 %v7278, %v7438
        %v7440 = vpop.f32.mrf.mxu0
        %7441 = vmatprep.mubr.bf16.mxu0 0
        %7442 = vmatmul.mubr.bf16.gmra.mxu0 %v6975
        %v7443 = vpop.f32.mrf.mxu0
        %v7444 = vadd.f32 %v7283, %v7443
        %v7445 = vpop.f32.mrf.mxu0
        %v7446 = vpop.f32.mrf.mxu0
        %v7447 = vadd.f32 %v7286, %v7446
        %v7448 = vpop.f32.mrf.mxu0
        %7449 = vmatprep.mubr.bf16.mxu0 0
        %7450 = vmatmul.mubr.bf16.gmra.mxu0 %v6976
        %v7451 = vpop.f32.mrf.mxu0
        %v7452 = vadd.f32 %v7291, %v7451
        %v7453 = vpop.f32.mrf.mxu0
        %v7454 = vpop.f32.mrf.mxu0
        %v7455 = vadd.f32 %v7294, %v7454
        %v7456 = vpop.f32.mrf.mxu0
        %7457 = vmatprep.mubr.bf16.mxu0 0
        %7458 = vmatmul.mubr.bf16.gmra.mxu0 %v6977
        %v7459 = vpop.f32.mrf.mxu0
        %v7460 = vadd.f32 %v7299, %v7459
        %v7461 = vpop.f32.mrf.mxu0
        %v7462 = vpop.f32.mrf.mxu0
        %v7463 = vadd.f32 %v7302, %v7462
        %v7464 = vpop.f32.mrf.mxu0
        %7465 = vmatprep.mubr.bf16.mxu0 0
        %7466 = vmatmul.mubr.bf16.gmra.mxu0 %v6978
        %v7467 = vpop.f32.mrf.mxu0
        %v7468 = vadd.f32 %v7307, %v7467
        %v7469 = vpop.f32.mrf.mxu0
        %v7470 = vpop.f32.mrf.mxu0
        %v7471 = vadd.f32 %v7310, %v7470
        %v7472 = vpop.f32.mrf.mxu0
        %7473 = vmatprep.mubr.bf16.mxu0 0
        %7474 = vmatmul.mubr.bf16.gmra.mxu0 %v6979
        %v7475 = vpop.f32.mrf.mxu0
        %v7476 = vadd.f32 %v7315, %v7475
        %v7477 = vpop.f32.mrf.mxu0
        %v7478 = vpop.f32.mrf.mxu0
        %v7479 = vadd.f32 %v7318, %v7478
        %v7480 = vpop.f32.mrf.mxu0
        %7481 = vmatprep.mubr.bf16.mxu0 0
        %7482 = vmatmul.mubr.bf16.gmra.mxu0 %v6980
        %v7483 = vpop.f32.mrf.mxu0
        %v7484 = vadd.f32 %v7323, %v7483
        %v7485 = vpop.f32.mrf.mxu0
        %v7486 = vpop.f32.mrf.mxu0
        %v7487 = vadd.f32 %v7326, %v7486
        %v7488 = vpop.f32.mrf.mxu0
        %7489 = vmatprep.mubr.bf16.mxu0 0
        %7490 = vmatmul.mubr.bf16.gmra.mxu0 %v6981
        %v7491 = vpop.f32.mrf.mxu0
        %v7492 = vadd.f32 %v7331, %v7491
        %v7493 = vpop.f32.mrf.mxu0
        %v7494 = vpop.f32.mrf.mxu0
        %v7495 = vadd.f32 %v7334, %v7494
        %v7496 = vpop.f32.mrf.mxu0
        %7497 = vmatprep.mubr.bf16.mxu0 0
        %7498 = vmatmul.mubr.bf16.gmra.mxu0 %v6982
        %v7499 = vpop.f32.mrf.mxu0
        %v7500 = vadd.f32 %v7339, %v7499
        %v7501 = vpop.f32.mrf.mxu0
        %v7502 = vpop.f32.mrf.mxu0
        %v7503 = vadd.f32 %v7342, %v7502
        %v7504 = vpop.f32.mrf.mxu0
        %7505 = vmatprep.mubr.bf16.mxu0 0
        %7506 = vmatmul.mubr.bf16.gmra.mxu0 %v6983
        %v7507 = vpop.f32.mrf.mxu0
        %v7508 = vadd.f32 %v7347, %v7507
        %v7509 = vpop.f32.mrf.mxu0
        %v7510 = vpop.f32.mrf.mxu0
        %v7511 = vadd.f32 %v7350, %v7510
        %v7512 = vpop.f32.mrf.mxu0
        %7513 = vdwg.mxu0
        %v7562 = vunpack.c.l.b16 %v5560
        %v7563 = vunpack.c.l.b16 %v5561
        %v7564 = vunpack.c.l.b16 %v5562
        %v7565 = vunpack.c.l.b16 %v5563
        %v7566 = vunpack.c.l.b16 %v5564
        %v7567 = vunpack.c.l.b16 %v5565
        %v7568 = vunpack.c.l.b16 %v5566
        %v7569 = vunpack.c.l.b16 %v5567
        %v7570 = vunpack.c.l.b16 %v5568
        %v7571 = vunpack.c.l.b16 %v5569
        %v7572 = vunpack.c.l.b16 %v5570
        %v7573 = vunpack.c.l.b16 %v5571
        %v7574 = vunpack.c.l.b16 %v5572
        %v7575 = vunpack.c.l.b16 %v5573
        %v7576 = vunpack.c.l.b16 %v5574
        %v7577 = vunpack.c.l.b16 %v5575
        %v7578 = vunpack.c.l.b16 %v5576
        %v7579 = vunpack.c.l.b16 %v5577
        %v7580 = vunpack.c.l.b16 %v5578
        %v7581 = vunpack.c.l.b16 %v5579
        %v7582 = vunpack.c.l.b16 %v5580
        %v7583 = vunpack.c.l.b16 %v5581
        %v7584 = vunpack.c.l.b16 %v5582
        %v7585 = vunpack.c.l.b16 %v5583
        %v7586 = vunpack.c.l.b16 %v5584
        %v7587 = vunpack.c.l.b16 %v5585
        %v7588 = vunpack.c.l.b16 %v5586
        %v7589 = vunpack.c.l.b16 %v5587
        %v7590 = vunpack.c.l.b16 %v5588
        %v7591 = vunpack.c.l.b16 %v5589
        %v7592 = vunpack.c.l.b16 %v5590
        %v7593 = vunpack.c.l.b16 %v5591
        %v7594 = vunpack.c.l.b16 %v5592
        %v7595 = vunpack.c.l.b16 %v5593
        %v7596 = vunpack.c.l.b16 %v5594
        %v7597 = vunpack.c.l.b16 %v5595
        %v7598 = vunpack.c.l.b16 %v5596
        %v7599 = vunpack.c.l.b16 %v5597
        %v7600 = vunpack.c.l.b16 %v5598
        %v7601 = vunpack.c.l.b16 %v5599
        %v7602 = vunpack.c.l.b16 %v5600
        %v7603 = vunpack.c.l.b16 %v5601
        %v7604 = vunpack.c.l.b16 %v5602
        %v7605 = vunpack.c.l.b16 %v5603
        %v7606 = vunpack.c.l.b16 %v5604
        %v7607 = vunpack.c.l.b16 %v5605
        %v7608 = vunpack.c.l.b16 %v5606
        %v7609 = vunpack.c.l.b16 %v5607
        %v7610 = vpack.c.b16 %v7563, %v7562
        %v7611 = vpack.c.b16 %v7565, %v7564
        %v7612 = vpack.c.b16 %v7567, %v7566
        %v7613 = vpack.c.b16 %v7569, %v7568
        %v7614 = vpack.c.b16 %v7571, %v7570
        %v7615 = vpack.c.b16 %v7573, %v7572
        %v7616 = vpack.c.b16 %v7575, %v7574
        %v7617 = vpack.c.b16 %v7577, %v7576
        %v7618 = vpack.c.b16 %v7579, %v7578
        %v7619 = vpack.c.b16 %v7581, %v7580
        %v7620 = vpack.c.b16 %v7583, %v7582
        %v7621 = vpack.c.b16 %v7585, %v7584
        %v7622 = vpack.c.b16 %v7587, %v7586
        %v7623 = vpack.c.b16 %v7589, %v7588
        %v7624 = vpack.c.b16 %v7591, %v7590
        %v7625 = vpack.c.b16 %v7593, %v7592
        %v7626 = vpack.c.b16 %v7595, %v7594
        %v7627 = vpack.c.b16 %v7597, %v7596
        %v7628 = vpack.c.b16 %v7599, %v7598
        %v7629 = vpack.c.b16 %v7601, %v7600
        %v7630 = vpack.c.b16 %v7603, %v7602
        %v7631 = vpack.c.b16 %v7605, %v7604
        %v7632 = vpack.c.b16 %v7607, %v7606
        %v7633 = vpack.c.b16 %v7609, %v7608
        %7658 = vmatprep.subr.bf16.mxu0 0
        %7659 = vmatpush1.bf16.msra.mxu0 %v7617
        %7660 = vmatprep.subr.bf16.mxu0 0
        %7661 = vmatpush1.bf16.msra.mxu0 %v7616
        %7662 = vmatprep.subr.bf16.mxu0 0
        %7663 = vmatpush1.bf16.msra.mxu0 %v7615
        %7664 = vmatprep.subr.bf16.mxu0 0
        %7665 = vmatpush1.bf16.msra.mxu0 %v7614
        %7666 = vmatprep.subr.bf16.mxu0 0
        %7667 = vmatpush1.bf16.msra.mxu0 %v7613
        %7668 = vmatprep.subr.bf16.mxu0 0
        %7669 = vmatpush1.bf16.msra.mxu0 %v7612
        %7670 = vmatprep.subr.bf16.mxu0 0
        %7671 = vmatpush1.bf16.msra.mxu0 %v7611
        %7672 = vmatprep.subr.bf16.mxu0 0
        %7673 = vmatpush1.bf16.msra.mxu0 %v7610
        %7674 = vmatprep.subr.bf16.mxu0 0
        %7675 = vmatpush2.bf16.msra.mxu0 %v7625
        %7676 = vmatprep.subr.bf16.mxu0 0
        %7677 = vmatpush2.bf16.msra.mxu0 %v7624
        %7678 = vmatprep.subr.bf16.mxu0 0
        %7679 = vmatpush2.bf16.msra.mxu0 %v7623
        %7680 = vmatprep.subr.bf16.mxu0 0
        %7681 = vmatpush2.bf16.msra.mxu0 %v7622
        %7682 = vmatprep.subr.bf16.mxu0 0
        %7683 = vmatpush2.bf16.msra.mxu0 %v7621
        %7684 = vmatprep.subr.bf16.mxu0 0
        %7685 = vmatpush2.bf16.msra.mxu0 %v7620
        %7686 = vmatprep.subr.bf16.mxu0 0
        %7687 = vmatpush2.bf16.msra.mxu0 %v7619
        %7688 = vmatprep.subr.bf16.mxu0 0
        %7689 = vmatpush2.bf16.msra.mxu0 %v7618
        %7690 = vmatprep.mubr.bf16.mxu0 %v5432
        %7691 = vmatmul.mubr.bf16.gmra.mxu0 %v5336
        %v7692 = vpop.f32.mrf.mxu0
        %v7693 = vadd.f32 %v7388, %v7692
        %v7694 = vpop.f32.mrf.mxu0
        %v7695 = vpop.f32.mrf.mxu0
        %v7696 = vadd.f32 %v7391, %v7695
        %v7697 = vpop.f32.mrf.mxu0
        %7698 = vmatprep.mubr.bf16.mxu0 %v5433
        %7699 = vmatmul.mubr.bf16.gmra.mxu0 %v5337
        %v7700 = vpop.f32.mrf.mxu0
        %v7701 = vadd.f32 %v7396, %v7700
        %v7702 = vpop.f32.mrf.mxu0
        %v7703 = vpop.f32.mrf.mxu0
        %v7704 = vadd.f32 %v7399, %v7703
        %v7705 = vpop.f32.mrf.mxu0
        %7706 = vmatprep.mubr.bf16.mxu0 %v5434
        %7707 = vmatmul.mubr.bf16.gmra.mxu0 %v5338
        %v7708 = vpop.f32.mrf.mxu0
        %v7709 = vadd.f32 %v7404, %v7708
        %v7710 = vpop.f32.mrf.mxu0
        %v7711 = vpop.f32.mrf.mxu0
        %v7712 = vadd.f32 %v7407, %v7711
        %v7713 = vpop.f32.mrf.mxu0
        %7714 = vmatprep.mubr.bf16.mxu0 %v5435
        %7715 = vmatmul.mubr.bf16.gmra.mxu0 %v5339
        %v7716 = vpop.f32.mrf.mxu0
        %v7717 = vadd.f32 %v7412, %v7716
        %v7718 = vpop.f32.mrf.mxu0
        %v7719 = vpop.f32.mrf.mxu0
        %v7720 = vadd.f32 %v7415, %v7719
        %v7721 = vpop.f32.mrf.mxu0
        %7722 = vmatprep.mubr.bf16.mxu0 %v5436
        %7723 = vmatmul.mubr.bf16.gmra.mxu0 %v5340
        %v7724 = vpop.f32.mrf.mxu0
        %v7725 = vadd.f32 %v7420, %v7724
        %v7726 = vpop.f32.mrf.mxu0
        %v7727 = vpop.f32.mrf.mxu0
        %v7728 = vadd.f32 %v7423, %v7727
        %v7729 = vpop.f32.mrf.mxu0
        %7730 = vmatprep.mubr.bf16.mxu0 %v5437
        %7731 = vmatmul.mubr.bf16.gmra.mxu0 %v5341
        %v7732 = vpop.f32.mrf.mxu0
        %v7733 = vadd.f32 %v7428, %v7732
        %v7734 = vpop.f32.mrf.mxu0
        %v7735 = vpop.f32.mrf.mxu0
        %v7736 = vadd.f32 %v7431, %v7735
        %v7737 = vpop.f32.mrf.mxu0
        %7738 = vmatprep.mubr.bf16.mxu0 %v5438
        %7739 = vmatmul.mubr.bf16.gmra.mxu0 %v5342
        %v7740 = vpop.f32.mrf.mxu0
        %v7741 = vadd.f32 %v7436, %v7740
        %v7742 = vpop.f32.mrf.mxu0
        %v7743 = vpop.f32.mrf.mxu0
        %v7744 = vadd.f32 %v7439, %v7743
        %v7745 = vpop.f32.mrf.mxu0
        %7746 = vmatprep.mubr.bf16.mxu0 %v5439
        %7747 = vmatmul.mubr.bf16.gmra.mxu0 %v5343
        %v7748 = vpop.f32.mrf.mxu0
        %v7749 = vadd.f32 %v7444, %v7748
        %v7750 = vpop.f32.mrf.mxu0
        %v7751 = vpop.f32.mrf.mxu0
        %v7752 = vadd.f32 %v7447, %v7751
        %v7753 = vpop.f32.mrf.mxu0
        %7754 = vmatprep.mubr.bf16.mxu0 %v5440
        %7755 = vmatmul.mubr.bf16.gmra.mxu0 %v5344
        %v7756 = vpop.f32.mrf.mxu0
        %v7757 = vadd.f32 %v7452, %v7756
        %v7758 = vpop.f32.mrf.mxu0
        %v7759 = vpop.f32.mrf.mxu0
        %v7760 = vadd.f32 %v7455, %v7759
        %v7761 = vpop.f32.mrf.mxu0
        %7762 = vmatprep.mubr.bf16.mxu0 %v5441
        %7763 = vmatmul.mubr.bf16.gmra.mxu0 %v5345
        %v7764 = vpop.f32.mrf.mxu0
        %v7765 = vadd.f32 %v7460, %v7764
        %v7766 = vpop.f32.mrf.mxu0
        %v7767 = vpop.f32.mrf.mxu0
        %v7768 = vadd.f32 %v7463, %v7767
        %v7769 = vpop.f32.mrf.mxu0
        %7770 = vmatprep.mubr.bf16.mxu0 %v5442
        %7771 = vmatmul.mubr.bf16.gmra.mxu0 %v5346
        %v7772 = vpop.f32.mrf.mxu0
        %v7773 = vadd.f32 %v7468, %v7772
        %v7774 = vpop.f32.mrf.mxu0
        %v7775 = vpop.f32.mrf.mxu0
        %v7776 = vadd.f32 %v7471, %v7775
        %v7777 = vpop.f32.mrf.mxu0
        %7778 = vmatprep.mubr.bf16.mxu0 %v5443
        %7779 = vmatmul.mubr.bf16.gmra.mxu0 %v5347
        %v7780 = vpop.f32.mrf.mxu0
        %v7781 = vadd.f32 %v7476, %v7780
        %v7782 = vpop.f32.mrf.mxu0
        %v7783 = vpop.f32.mrf.mxu0
        %v7784 = vadd.f32 %v7479, %v7783
        %v7785 = vpop.f32.mrf.mxu0
        %7786 = vmatprep.mubr.bf16.mxu0 %v5444
        %7787 = vmatmul.mubr.bf16.gmra.mxu0 %v5348
        %v7788 = vpop.f32.mrf.mxu0
        %v7789 = vadd.f32 %v7484, %v7788
        %v7790 = vpop.f32.mrf.mxu0
        %v7791 = vpop.f32.mrf.mxu0
        %v7792 = vadd.f32 %v7487, %v7791
        %v7793 = vpop.f32.mrf.mxu0
        %7794 = vmatprep.mubr.bf16.mxu0 %v5445
        %7795 = vmatmul.mubr.bf16.gmra.mxu0 %v5349
        %v7796 = vpop.f32.mrf.mxu0
        %v7797 = vadd.f32 %v7492, %v7796
        %v7798 = vpop.f32.mrf.mxu0
        %v7799 = vpop.f32.mrf.mxu0
        %v7800 = vadd.f32 %v7495, %v7799
        %v7801 = vpop.f32.mrf.mxu0
        %7802 = vmatprep.mubr.bf16.mxu0 %v5446
        %7803 = vmatmul.mubr.bf16.gmra.mxu0 %v5350
        %v7804 = vpop.f32.mrf.mxu0
        %v7805 = vadd.f32 %v7500, %v7804
        %v7806 = vpop.f32.mrf.mxu0
        %v7807 = vpop.f32.mrf.mxu0
        %v7808 = vadd.f32 %v7503, %v7807
        %v7809 = vpop.f32.mrf.mxu0
        %7810 = vmatprep.mubr.bf16.mxu0 %v5447
        %7811 = vmatmul.mubr.bf16.gmra.mxu0 %v5351
        %v7812 = vpop.f32.mrf.mxu0
        %v7813 = vadd.f32 %v7508, %v7812
        %v7814 = vpop.f32.mrf.mxu0
        %v7815 = vpop.f32.mrf.mxu0
        %v7816 = vadd.f32 %v7511, %v7815
        %v7817 = vpop.f32.mrf.mxu0
        %7818 = vdwg.mxu0
        %7819 = vmatprep.subr.bf16.mxu0 0
        %7820 = vmatpush1.bf16.msra.mxu0 %v7633
        %7821 = vmatprep.subr.bf16.mxu0 0
        %7822 = vmatpush1.bf16.msra.mxu0 %v7632
        %7823 = vmatprep.subr.bf16.mxu0 0
        %7824 = vmatpush1.bf16.msra.mxu0 %v7631
        %7825 = vmatprep.subr.bf16.mxu0 0
        %7826 = vmatpush1.bf16.msra.mxu0 %v7630
        %7827 = vmatprep.subr.bf16.mxu0 0
        %7828 = vmatpush1.bf16.msra.mxu0 %v7629
        %7829 = vmatprep.subr.bf16.mxu0 0
        %7830 = vmatpush1.bf16.msra.mxu0 %v7628
        %7831 = vmatprep.subr.bf16.mxu0 0
        %7832 = vmatpush1.bf16.msra.mxu0 %v7627
        %7833 = vmatprep.subr.bf16.mxu0 0
        %7834 = vmatpush1.bf16.msra.mxu0 %v7626
        %7835 = vmatprep.subr.bf16.mxu0 0
        %7836 = vmatpush2.bf16.msra.mxu0 0
        %7837 = vmatprep.subr.bf16.mxu0 0
        %7838 = vmatpush2.bf16.msra.mxu0 0
        %7839 = vmatprep.subr.bf16.mxu0 0
        %7840 = vmatpush2.bf16.msra.mxu0 0
        %7841 = vmatprep.subr.bf16.mxu0 0
        %7842 = vmatpush2.bf16.msra.mxu0 0
        %7843 = vmatprep.subr.bf16.mxu0 0
        %7844 = vmatpush2.bf16.msra.mxu0 0
        %7845 = vmatprep.subr.bf16.mxu0 0
        %7846 = vmatpush2.bf16.msra.mxu0 0
        %7847 = vmatprep.subr.bf16.mxu0 0
        %7848 = vmatpush2.bf16.msra.mxu0 0
        %7849 = vmatprep.subr.bf16.mxu0 0
        %7850 = vmatpush2.bf16.msra.mxu0 0
        %7851 = vmatprep.mubr.bf16.mxu0 0
        %7852 = vmatmul.mubr.bf16.gmra.mxu0 %v5528
        %v7853 = vpop.f32.mrf.mxu0
        %v7854 = vadd.f32 %v7693, %v7853
        %v7855 = vpop.f32.mrf.mxu0
        %v7856 = vpop.f32.mrf.mxu0
        %v7857 = vadd.f32 %v7696, %v7856
        %v7858 = vpop.f32.mrf.mxu0
        %7859 = vmatprep.mubr.bf16.mxu0 0
        %7860 = vmatmul.mubr.bf16.gmra.mxu0 %v5529
        %v7861 = vpop.f32.mrf.mxu0
        %v7862 = vadd.f32 %v7701, %v7861
        %v7863 = vpop.f32.mrf.mxu0
        %v7864 = vpop.f32.mrf.mxu0
        %v7865 = vadd.f32 %v7704, %v7864
        %v7866 = vpop.f32.mrf.mxu0
        %7867 = vmatprep.mubr.bf16.mxu0 0
        %7868 = vmatmul.mubr.bf16.gmra.mxu0 %v5530
        %v7869 = vpop.f32.mrf.mxu0
        %v7870 = vadd.f32 %v7709, %v7869
        %v7871 = vpop.f32.mrf.mxu0
        %v7872 = vpop.f32.mrf.mxu0
        %v7873 = vadd.f32 %v7712, %v7872
        %v7874 = vpop.f32.mrf.mxu0
        %7875 = vmatprep.mubr.bf16.mxu0 0
        %7876 = vmatmul.mubr.bf16.gmra.mxu0 %v5531
        %v7877 = vpop.f32.mrf.mxu0
        %v7878 = vadd.f32 %v7717, %v7877
        %v7879 = vpop.f32.mrf.mxu0
        %v7880 = vpop.f32.mrf.mxu0
        %v7881 = vadd.f32 %v7720, %v7880
        %v7882 = vpop.f32.mrf.mxu0
        %7883 = vmatprep.mubr.bf16.mxu0 0
        %7884 = vmatmul.mubr.bf16.gmra.mxu0 %v5532
        %v7885 = vpop.f32.mrf.mxu0
        %v7886 = vadd.f32 %v7725, %v7885
        %v7887 = vpop.f32.mrf.mxu0
        %v7888 = vpop.f32.mrf.mxu0
        %v7889 = vadd.f32 %v7728, %v7888
        %v7890 = vpop.f32.mrf.mxu0
        %7891 = vmatprep.mubr.bf16.mxu0 0
        %7892 = vmatmul.mubr.bf16.gmra.mxu0 %v5533
        %v7893 = vpop.f32.mrf.mxu0
        %v7894 = vadd.f32 %v7733, %v7893
        %v7895 = vpop.f32.mrf.mxu0
        %v7896 = vpop.f32.mrf.mxu0
        %v7897 = vadd.f32 %v7736, %v7896
        %v7898 = vpop.f32.mrf.mxu0
        %7899 = vmatprep.mubr.bf16.mxu0 0
        %7900 = vmatmul.mubr.bf16.gmra.mxu0 %v5534
        %v7901 = vpop.f32.mrf.mxu0
        %v7902 = vadd.f32 %v7741, %v7901
        %v7903 = vpop.f32.mrf.mxu0
        %v7904 = vpop.f32.mrf.mxu0
        %v7905 = vadd.f32 %v7744, %v7904
        %v7906 = vpop.f32.mrf.mxu0
        %7907 = vmatprep.mubr.bf16.mxu0 0
        %7908 = vmatmul.mubr.bf16.gmra.mxu0 %v5535
        %v7909 = vpop.f32.mrf.mxu0
        %v7910 = vadd.f32 %v7749, %v7909
        %v7911 = vpop.f32.mrf.mxu0
        %v7912 = vpop.f32.mrf.mxu0
        %v7913 = vadd.f32 %v7752, %v7912
        %v7914 = vpop.f32.mrf.mxu0
        %7915 = vmatprep.mubr.bf16.mxu0 0
        %7916 = vmatmul.mubr.bf16.gmra.mxu0 %v5536
        %v7917 = vpop.f32.mrf.mxu0
        %v7918 = vadd.f32 %v7757, %v7917
        %v7919 = vpop.f32.mrf.mxu0
        %v7920 = vpop.f32.mrf.mxu0
        %v7921 = vadd.f32 %v7760, %v7920
        %v7922 = vpop.f32.mrf.mxu0
        %7923 = vmatprep.mubr.bf16.mxu0 0
        %7924 = vmatmul.mubr.bf16.gmra.mxu0 %v5537
        %v7925 = vpop.f32.mrf.mxu0
        %v7926 = vadd.f32 %v7765, %v7925
        %v7927 = vpop.f32.mrf.mxu0
        %v7928 = vpop.f32.mrf.mxu0
        %v7929 = vadd.f32 %v7768, %v7928
        %v7930 = vpop.f32.mrf.mxu0
        %7931 = vmatprep.mubr.bf16.mxu0 0
        %7932 = vmatmul.mubr.bf16.gmra.mxu0 %v5538
        %v7933 = vpop.f32.mrf.mxu0
        %v7934 = vadd.f32 %v7773, %v7933
        %v7935 = vpop.f32.mrf.mxu0
        %v7936 = vpop.f32.mrf.mxu0
        %v7937 = vadd.f32 %v7776, %v7936
        %v7938 = vpop.f32.mrf.mxu0
        %7939 = vmatprep.mubr.bf16.mxu0 0
        %7940 = vmatmul.mubr.bf16.gmra.mxu0 %v5539
        %v7941 = vpop.f32.mrf.mxu0
        %v7942 = vadd.f32 %v7781, %v7941
        %v7943 = vpop.f32.mrf.mxu0
        %v7944 = vpop.f32.mrf.mxu0
        %v7945 = vadd.f32 %v7784, %v7944
        %v7946 = vpop.f32.mrf.mxu0
        %7947 = vmatprep.mubr.bf16.mxu0 0
        %7948 = vmatmul.mubr.bf16.gmra.mxu0 %v5540
        %v7949 = vpop.f32.mrf.mxu0
        %v7950 = vadd.f32 %v7789, %v7949
        %v7951 = vpop.f32.mrf.mxu0
        %v7952 = vpop.f32.mrf.mxu0
        %v7953 = vadd.f32 %v7792, %v7952
        %v7954 = vpop.f32.mrf.mxu0
        %7955 = vmatprep.mubr.bf16.mxu0 0
        %7956 = vmatmul.mubr.bf16.gmra.mxu0 %v5541
        %v7957 = vpop.f32.mrf.mxu0
        %v7958 = vadd.f32 %v7797, %v7957
        %v7959 = vpop.f32.mrf.mxu0
        %v7960 = vpop.f32.mrf.mxu0
        %v7961 = vadd.f32 %v7800, %v7960
        %v7962 = vpop.f32.mrf.mxu0
        %7963 = vmatprep.mubr.bf16.mxu0 0
        %7964 = vmatmul.mubr.bf16.gmra.mxu0 %v5542
        %v7965 = vpop.f32.mrf.mxu0
        %v7966 = vadd.f32 %v7805, %v7965
        %v7967 = vpop.f32.mrf.mxu0
        %v7968 = vpop.f32.mrf.mxu0
        %v7969 = vadd.f32 %v7808, %v7968
        %v7970 = vpop.f32.mrf.mxu0
        %7971 = vmatprep.mubr.bf16.mxu0 0
        %7972 = vmatmul.mubr.bf16.gmra.mxu0 %v5543
        %v7973 = vpop.f32.mrf.mxu0
        %v7974 = vadd.f32 %v7813, %v7973
        %v7975 = vpop.f32.mrf.mxu0
        %v7976 = vpop.f32.mrf.mxu0
        %v7977 = vadd.f32 %v7816, %v7976
        %v7978 = vpop.f32.mrf.mxu0
        %7979 = vdwg.mxu0
        %v7980 = vld [vmem:[#allocation2] sm:$0xe]
        %v7981 = vld [vmem:[#allocation2 + $0xc] sm:$0xe]
        %v7982 = vld [vmem:[#allocation2 + $0x18] sm:$0xe]
        %v7983 = vld [vmem:[#allocation2 + $0x24] sm:$0xe]
        %v7984 = vld [vmem:[#allocation2 + $0x30] sm:$0xe]
        %v7985 = vld [vmem:[#allocation2 + $0x3c] sm:$0xe]
        %v7986 = vld [vmem:[#allocation2 + $0x48] sm:$0xe]
        %v7987 = vld [vmem:[#allocation2 + $0x54] sm:$0xe]
        %v7988 = vld [vmem:[#allocation2 + $0x60] sm:$0xe]
        %v7989 = vld [vmem:[#allocation2 + $0x6c] sm:$0xe]
        %v7990 = vld [vmem:[#allocation2 + $0x78] sm:$0xe]
        %v7991 = vld [vmem:[#allocation2 + $0x84] sm:$0xe]
        %v7992 = vld [vmem:[#allocation2 + $0x90] sm:$0xe]
        %v7993 = vld [vmem:[#allocation2 + $0x9c] sm:$0xe]
        %v7994 = vld [vmem:[#allocation2 + $0xa8] sm:$0xe]
        %v7995 = vld [vmem:[#allocation2 + $0xb4] sm:$0xe]
        %v8028 = vrot.slane %v7980, 5
        %v8029 = vrot.slane %v8028, 4
        %v8030 = vrot.slane %v5176, 5
        %v8031 = vsel %vm3253, %v8029, %v8030
        %v8032 = vrot.slane %v8030, 4
        %v8033 = vrot.slane %v5608, 5
        %v8034 = vsel %vm3253, %v8032, %v8033
        %v8035 = vrot.slane %v7981, 5
        %v8036 = vrot.slane %v8035, 4
        %v8037 = vrot.slane %v5178, 5
        %v8038 = vsel %vm3253, %v8036, %v8037
        %v8039 = vrot.slane %v8037, 4
        %v8040 = vrot.slane %v5609, 5
        %v8041 = vsel %vm3253, %v8039, %v8040
        %v8042 = vrot.slane %v7982, 5
        %v8043 = vrot.slane %v8042, 4
        %v8044 = vrot.slane %v5180, 5
        %v8045 = vsel %vm3253, %v8043, %v8044
        %v8046 = vrot.slane %v8044, 4
        %v8047 = vrot.slane %v5610, 5
        %v8048 = vsel %vm3253, %v8046, %v8047
        %v8049 = vrot.slane %v7983, 5
        %v8050 = vrot.slane %v8049, 4
        %v8051 = vrot.slane %v5182, 5
        %v8052 = vsel %vm3253, %v8050, %v8051
        %v8053 = vrot.slane %v8051, 4
        %v8054 = vrot.slane %v5611, 5
        %v8055 = vsel %vm3253, %v8053, %v8054
        %v8056 = vrot.slane %v7984, 5
        %v8057 = vrot.slane %v8056, 4
        %v8058 = vrot.slane %v5184, 5
        %v8059 = vsel %vm3253, %v8057, %v8058
        %v8060 = vrot.slane %v8058, 4
        %v8061 = vrot.slane %v5612, 5
        %v8062 = vsel %vm3253, %v8060, %v8061
        %v8063 = vrot.slane %v7985, 5
        %v8064 = vrot.slane %v8063, 4
        %v8065 = vrot.slane %v5186, 5
        %v8066 = vsel %vm3253, %v8064, %v8065
        %v8067 = vrot.slane %v8065, 4
        %v8068 = vrot.slane %v5613, 5
        %v8069 = vsel %vm3253, %v8067, %v8068
        %v8070 = vrot.slane %v7986, 5
        %v8071 = vrot.slane %v8070, 4
        %v8072 = vrot.slane %v5188, 5
        %v8073 = vsel %vm3253, %v8071, %v8072
        %v8074 = vrot.slane %v8072, 4
        %v8075 = vrot.slane %v5614, 5
        %v8076 = vsel %vm3253, %v8074, %v8075
        %v8077 = vrot.slane %v7987, 5
        %v8078 = vrot.slane %v8077, 4
        %v8079 = vrot.slane %v5190, 5
        %v8080 = vsel %vm3253, %v8078, %v8079
        %v8081 = vrot.slane %v8079, 4
        %v8082 = vrot.slane %v5615, 5
        %v8083 = vsel %vm3253, %v8081, %v8082
        %v8084 = vrot.slane %v7988, 5
        %v8085 = vrot.slane %v8084, 4
        %v8086 = vrot.slane %v5192, 5
        %v8087 = vsel %vm3253, %v8085, %v8086
        %v8088 = vrot.slane %v8086, 4
        %v8089 = vrot.slane %v5616, 5
        %v8090 = vsel %vm3253, %v8088, %v8089
        %v8091 = vrot.slane %v7989, 5
        %v8092 = vrot.slane %v8091, 4
        %v8093 = vrot.slane %v5194, 5
        %v8094 = vsel %vm3253, %v8092, %v8093
        %v8095 = vrot.slane %v8093, 4
        %v8096 = vrot.slane %v5617, 5
        %v8097 = vsel %vm3253, %v8095, %v8096
        %v8098 = vrot.slane %v7990, 5
        %v8099 = vrot.slane %v8098, 4
        %v8100 = vrot.slane %v5196, 5
        %v8101 = vsel %vm3253, %v8099, %v8100
        %v8102 = vrot.slane %v8100, 4
        %v8103 = vrot.slane %v5618, 5
        %v8104 = vsel %vm3253, %v8102, %v8103
        %v8105 = vrot.slane %v7991, 5
        %v8106 = vrot.slane %v8105, 4
        %v8107 = vrot.slane %v5198, 5
        %v8108 = vsel %vm3253, %v8106, %v8107
        %v8109 = vrot.slane %v8107, 4
        %v8110 = vrot.slane %v5619, 5
        %v8111 = vsel %vm3253, %v8109, %v8110
        %v8112 = vrot.slane %v7992, 5
        %v8113 = vrot.slane %v8112, 4
        %v8114 = vrot.slane %v5200, 5
        %v8115 = vsel %vm3253, %v8113, %v8114
        %v8116 = vrot.slane %v8114, 4
        %v8117 = vrot.slane %v5620, 5
        %v8118 = vsel %vm3253, %v8116, %v8117
        %v8119 = vrot.slane %v7993, 5
        %v8120 = vrot.slane %v8119, 4
        %v8121 = vrot.slane %v5202, 5
        %v8122 = vsel %vm3253, %v8120, %v8121
        %v8123 = vrot.slane %v8121, 4
        %v8124 = vrot.slane %v5621, 5
        %v8125 = vsel %vm3253, %v8123, %v8124
        %v8126 = vrot.slane %v7994, 5
        %v8127 = vrot.slane %v8126, 4
        %v8128 = vrot.slane %v5204, 5
        %v8129 = vsel %vm3253, %v8127, %v8128
        %v8130 = vrot.slane %v8128, 4
        %v8131 = vrot.slane %v5622, 5
        %v8132 = vsel %vm3253, %v8130, %v8131
        %v8133 = vrot.slane %v7995, 5
        %v8134 = vrot.slane %v8133, 4
        %v8135 = vrot.slane %v5206, 5
        %v8136 = vsel %vm3253, %v8134, %v8135
        %v8137 = vrot.slane %v8135, 4
        %v8138 = vrot.slane %v5623, 5
        %v8139 = vsel %vm3253, %v8137, %v8138
        %v8140 = vld [vmem:[%s4557] sm:$0xe]
        %v8141 = vld [vmem:[%s4557 + $0xc] sm:$0xe]
        %v8142 = vld [vmem:[%s4557 + $0x18] sm:$0xe]
        %v8143 = vld [vmem:[%s4557 + $0x24] sm:$0xe]
        %v8144 = vld [vmem:[%s4557 + $0x30] sm:$0xe]
        %v8145 = vld [vmem:[%s4557 + $0x3c] sm:$0xe]
        %v8146 = vld [vmem:[%s4557 + $0x48] sm:$0xe]
        %v8147 = vld [vmem:[%s4557 + $0x54] sm:$0xe]
        %v8148 = vld [vmem:[%s4557 + $0x60] sm:$0xe]
        %v8149 = vld [vmem:[%s4557 + $0x6c] sm:$0xe]
        %v8150 = vld [vmem:[%s4557 + $0x78] sm:$0xe]
        %v8151 = vld [vmem:[%s4557 + $0x84] sm:$0xe]
        %v8152 = vld [vmem:[%s4557 + $0x90] sm:$0xe]
        %v8153 = vld [vmem:[%s4557 + $0x9c] sm:$0xe]
        %v8154 = vld [vmem:[%s4557 + $0xa8] sm:$0xe]
        %v8155 = vld [vmem:[%s4557 + $0xb4] sm:$0xe]
        %v8188 = vrot.slane %v8140, 5
        %v8189 = vrot.slane %v8188, 4
        %v8190 = vrot.slane %v5208, 5
        %v8191 = vsel %vm3253, %v8189, %v8190
        %v8192 = vrot.slane %v8190, 4
        %v8193 = vrot.slane %v6008, 5
        %v8194 = vsel %vm3253, %v8192, %v8193
        %v8195 = vrot.slane %v8141, 5
        %v8196 = vrot.slane %v8195, 4
        %v8197 = vrot.slane %v5210, 5
        %v8198 = vsel %vm3253, %v8196, %v8197
        %v8199 = vrot.slane %v8197, 4
        %v8200 = vrot.slane %v6009, 5
        %v8201 = vsel %vm3253, %v8199, %v8200
        %v8202 = vrot.slane %v8142, 5
        %v8203 = vrot.slane %v8202, 4
        %v8204 = vrot.slane %v5212, 5
        %v8205 = vsel %vm3253, %v8203, %v8204
        %v8206 = vrot.slane %v8204, 4
        %v8207 = vrot.slane %v6010, 5
        %v8208 = vsel %vm3253, %v8206, %v8207
        %v8209 = vrot.slane %v8143, 5
        %v8210 = vrot.slane %v8209, 4
        %v8211 = vrot.slane %v5214, 5
        %v8212 = vsel %vm3253, %v8210, %v8211
        %v8213 = vrot.slane %v8211, 4
        %v8214 = vrot.slane %v6011, 5
        %v8215 = vsel %vm3253, %v8213, %v8214
        %v8216 = vrot.slane %v8144, 5
        %v8217 = vrot.slane %v8216, 4
        %v8218 = vrot.slane %v5216, 5
        %v8219 = vsel %vm3253, %v8217, %v8218
        %v8220 = vrot.slane %v8218, 4
        %v8221 = vrot.slane %v6012, 5
        %v8222 = vsel %vm3253, %v8220, %v8221
        %v8223 = vrot.slane %v8145, 5
        %v8224 = vrot.slane %v8223, 4
        %v8225 = vrot.slane %v5218, 5
        %v8226 = vsel %vm3253, %v8224, %v8225
        %v8227 = vrot.slane %v8225, 4
        %v8228 = vrot.slane %v6013, 5
        %v8229 = vsel %vm3253, %v8227, %v8228
        %v8230 = vrot.slane %v8146, 5
        %v8231 = vrot.slane %v8230, 4
        %v8232 = vrot.slane %v5220, 5
        %v8233 = vsel %vm3253, %v8231, %v8232
        %v8234 = vrot.slane %v8232, 4
        %v8235 = vrot.slane %v6014, 5
        %v8236 = vsel %vm3253, %v8234, %v8235
        %v8237 = vrot.slane %v8147, 5
        %v8238 = vrot.slane %v8237, 4
        %v8239 = vrot.slane %v5222, 5
        %v8240 = vsel %vm3253, %v8238, %v8239
        %v8241 = vrot.slane %v8239, 4
        %v8242 = vrot.slane %v6015, 5
        %v8243 = vsel %vm3253, %v8241, %v8242
        %v8244 = vrot.slane %v8148, 5
        %v8245 = vrot.slane %v8244, 4
        %v8246 = vrot.slane %v5224, 5
        %v8247 = vsel %vm3253, %v8245, %v8246
        %v8248 = vrot.slane %v8246, 4
        %v8249 = vrot.slane %v6016, 5
        %v8250 = vsel %vm3253, %v8248, %v8249
        %v8251 = vrot.slane %v8149, 5
        %v8252 = vrot.slane %v8251, 4
        %v8253 = vrot.slane %v5226, 5
        %v8254 = vsel %vm3253, %v8252, %v8253
        %v8255 = vrot.slane %v8253, 4
        %v8256 = vrot.slane %v6017, 5
        %v8257 = vsel %vm3253, %v8255, %v8256
        %v8258 = vrot.slane %v8150, 5
        %v8259 = vrot.slane %v8258, 4
        %v8260 = vrot.slane %v5228, 5
        %v8261 = vsel %vm3253, %v8259, %v8260
        %v8262 = vrot.slane %v8260, 4
        %v8263 = vrot.slane %v6018, 5
        %v8264 = vsel %vm3253, %v8262, %v8263
        %v8265 = vrot.slane %v8151, 5
        %v8266 = vrot.slane %v8265, 4
        %v8267 = vrot.slane %v5230, 5
        %v8268 = vsel %vm3253, %v8266, %v8267
        %v8269 = vrot.slane %v8267, 4
        %v8270 = vrot.slane %v6019, 5
        %v8271 = vsel %vm3253, %v8269, %v8270
        %v8272 = vrot.slane %v8152, 5
        %v8273 = vrot.slane %v8272, 4
        %v8274 = vrot.slane %v5232, 5
        %v8275 = vsel %vm3253, %v8273, %v8274
        %v8276 = vrot.slane %v8274, 4
        %v8277 = vrot.slane %v6020, 5
        %v8278 = vsel %vm3253, %v8276, %v8277
        %v8279 = vrot.slane %v8153, 5
        %v8280 = vrot.slane %v8279, 4
        %v8281 = vrot.slane %v5234, 5
        %v8282 = vsel %vm3253, %v8280, %v8281
        %v8283 = vrot.slane %v8281, 4
        %v8284 = vrot.slane %v6021, 5
        %v8285 = vsel %vm3253, %v8283, %v8284
        %v8286 = vrot.slane %v8154, 5
        %v8287 = vrot.slane %v8286, 4
        %v8288 = vrot.slane %v5236, 5
        %v8289 = vsel %vm3253, %v8287, %v8288
        %v8290 = vrot.slane %v8288, 4
        %v8291 = vrot.slane %v6022, 5
        %v8292 = vsel %vm3253, %v8290, %v8291
        %v8293 = vrot.slane %v8155, 5
        %v8294 = vrot.slane %v8293, 4
        %v8295 = vrot.slane %v5238, 5
        %v8296 = vsel %vm3253, %v8294, %v8295
        %v8297 = vrot.slane %v8295, 4
        %v8298 = vrot.slane %v6023, 5
        %v8299 = vsel %vm3253, %v8297, %v8298
        %v8300 = vld [vmem:[%s5239] sm:$0xe]
        %v8301 = vld [vmem:[%s5239 + $0xc] sm:$0xe]
        %v8302 = vld [vmem:[%s5239 + $0x18] sm:$0xe]
        %v8303 = vld [vmem:[%s5239 + $0x24] sm:$0xe]
        %v8304 = vld [vmem:[%s5239 + $0x30] sm:$0xe]
        %v8305 = vld [vmem:[%s5239 + $0x3c] sm:$0xe]
        %v8306 = vld [vmem:[%s5239 + $0x48] sm:$0xe]
        %v8307 = vld [vmem:[%s5239 + $0x54] sm:$0xe]
        %v8308 = vld [vmem:[%s5239 + $0x60] sm:$0xe]
        %v8309 = vld [vmem:[%s5239 + $0x6c] sm:$0xe]
        %v8310 = vld [vmem:[%s5239 + $0x78] sm:$0xe]
        %v8311 = vld [vmem:[%s5239 + $0x84] sm:$0xe]
        %v8312 = vld [vmem:[%s5239 + $0x90] sm:$0xe]
        %v8313 = vld [vmem:[%s5239 + $0x9c] sm:$0xe]
        %v8314 = vld [vmem:[%s5239 + $0xa8] sm:$0xe]
        %v8315 = vld [vmem:[%s5239 + $0xb4] sm:$0xe]
        %v8348 = vrot.slane %v8300, 5
        %v8349 = vrot.slane %v8348, 4
        %v8350 = vrot.slane %v5241, 5
        %v8351 = vsel %vm3253, %v8349, %v8350
        %v8352 = vrot.slane %v8350, 4
        %v8353 = vrot.slane %v6408, 5
        %v8354 = vsel %vm3253, %v8352, %v8353
        %v8355 = vrot.slane %v8301, 5
        %v8356 = vrot.slane %v8355, 4
        %v8357 = vrot.slane %v5243, 5
        %v8358 = vsel %vm3253, %v8356, %v8357
        %v8359 = vrot.slane %v8357, 4
        %v8360 = vrot.slane %v6409, 5
        %v8361 = vsel %vm3253, %v8359, %v8360
        %v8362 = vrot.slane %v8302, 5
        %v8363 = vrot.slane %v8362, 4
        %v8364 = vrot.slane %v5245, 5
        %v8365 = vsel %vm3253, %v8363, %v8364
        %v8366 = vrot.slane %v8364, 4
        %v8367 = vrot.slane %v6410, 5
        %v8368 = vsel %vm3253, %v8366, %v8367
        %v8369 = vrot.slane %v8303, 5
        %v8370 = vrot.slane %v8369, 4
        %v8371 = vrot.slane %v5247, 5
        %v8372 = vsel %vm3253, %v8370, %v8371
        %v8373 = vrot.slane %v8371, 4
        %v8374 = vrot.slane %v6411, 5
        %v8375 = vsel %vm3253, %v8373, %v8374
        %v8376 = vrot.slane %v8304, 5
        %v8377 = vrot.slane %v8376, 4
        %v8378 = vrot.slane %v5249, 5
        %v8379 = vsel %vm3253, %v8377, %v8378
        %v8380 = vrot.slane %v8378, 4
        %v8381 = vrot.slane %v6412, 5
        %v8382 = vsel %vm3253, %v8380, %v8381
        %v8383 = vrot.slane %v8305, 5
        %v8384 = vrot.slane %v8383, 4
        %v8385 = vrot.slane %v5251, 5
        %v8386 = vsel %vm3253, %v8384, %v8385
        %v8387 = vrot.slane %v8385, 4
        %v8388 = vrot.slane %v6413, 5
        %v8389 = vsel %vm3253, %v8387, %v8388
        %v8390 = vrot.slane %v8306, 5
        %v8391 = vrot.slane %v8390, 4
        %v8392 = vrot.slane %v5253, 5
        %v8393 = vsel %vm3253, %v8391, %v8392
        %v8394 = vrot.slane %v8392, 4
        %v8395 = vrot.slane %v6414, 5
        %v8396 = vsel %vm3253, %v8394, %v8395
        %v8397 = vrot.slane %v8307, 5
        %v8398 = vrot.slane %v8397, 4
        %v8399 = vrot.slane %v5255, 5
        %v8400 = vsel %vm3253, %v8398, %v8399
        %v8401 = vrot.slane %v8399, 4
        %v8402 = vrot.slane %v6415, 5
        %v8403 = vsel %vm3253, %v8401, %v8402
        %v8404 = vrot.slane %v8308, 5
        %v8405 = vrot.slane %v8404, 4
        %v8406 = vrot.slane %v5257, 5
        %v8407 = vsel %vm3253, %v8405, %v8406
        %v8408 = vrot.slane %v8406, 4
        %v8409 = vrot.slane %v6416, 5
        %v8410 = vsel %vm3253, %v8408, %v8409
        %v8411 = vrot.slane %v8309, 5
        %v8412 = vrot.slane %v8411, 4
        %v8413 = vrot.slane %v5259, 5
        %v8414 = vsel %vm3253, %v8412, %v8413
        %v8415 = vrot.slane %v8413, 4
        %v8416 = vrot.slane %v6417, 5
        %v8417 = vsel %vm3253, %v8415, %v8416
        %v8418 = vrot.slane %v8310, 5
        %v8419 = vrot.slane %v8418, 4
        %v8420 = vrot.slane %v5261, 5
        %v8421 = vsel %vm3253, %v8419, %v8420
        %v8422 = vrot.slane %v8420, 4
        %v8423 = vrot.slane %v6418, 5
        %v8424 = vsel %vm3253, %v8422, %v8423
        %v8425 = vrot.slane %v8311, 5
        %v8426 = vrot.slane %v8425, 4
        %v8427 = vrot.slane %v5263, 5
        %v8428 = vsel %vm3253, %v8426, %v8427
        %v8429 = vrot.slane %v8427, 4
        %v8430 = vrot.slane %v6419, 5
        %v8431 = vsel %vm3253, %v8429, %v8430
        %v8432 = vrot.slane %v8312, 5
        %v8433 = vrot.slane %v8432, 4
        %v8434 = vrot.slane %v5265, 5
        %v8435 = vsel %vm3253, %v8433, %v8434
        %v8436 = vrot.slane %v8434, 4
        %v8437 = vrot.slane %v6420, 5
        %v8438 = vsel %vm3253, %v8436, %v8437
        %v8439 = vrot.slane %v8313, 5
        %v8440 = vrot.slane %v8439, 4
        %v8441 = vrot.slane %v5267, 5
        %v8442 = vsel %vm3253, %v8440, %v8441
        %v8443 = vrot.slane %v8441, 4
        %v8444 = vrot.slane %v6421, 5
        %v8445 = vsel %vm3253, %v8443, %v8444
        %v8446 = vrot.slane %v8314, 5
        %v8447 = vrot.slane %v8446, 4
        %v8448 = vrot.slane %v5269, 5
        %v8449 = vsel %vm3253, %v8447, %v8448
        %v8450 = vrot.slane %v8448, 4
        %v8451 = vrot.slane %v6422, 5
        %v8452 = vsel %vm3253, %v8450, %v8451
        %v8453 = vrot.slane %v8315, 5
        %v8454 = vrot.slane %v8453, 4
        %v8455 = vrot.slane %v5271, 5
        %v8456 = vsel %vm3253, %v8454, %v8455
        %v8457 = vrot.slane %v8455, 4
        %v8458 = vrot.slane %v6423, 5
        %v8459 = vsel %vm3253, %v8457, %v8458
        %v8460 = vunpack.c.l.b16 %v8031
        %v8461 = vunpack.c.l.b16 %v8034
        %v8462 = vunpack.c.l.b16 %v8038
        %v8463 = vunpack.c.l.b16 %v8041
        %v8464 = vunpack.c.l.b16 %v8045
        %v8465 = vunpack.c.l.b16 %v8048
        %v8466 = vunpack.c.l.b16 %v8052
        %v8467 = vunpack.c.l.b16 %v8055
        %v8468 = vunpack.c.l.b16 %v8059
        %v8469 = vunpack.c.l.b16 %v8062
        %v8470 = vunpack.c.l.b16 %v8066
        %v8471 = vunpack.c.l.b16 %v8069
        %v8472 = vunpack.c.l.b16 %v8073
        %v8473 = vunpack.c.l.b16 %v8076
        %v8474 = vunpack.c.l.b16 %v8080
        %v8475 = vunpack.c.l.b16 %v8083
        %v8476 = vunpack.c.l.b16 %v8087
        %v8477 = vunpack.c.l.b16 %v8090
        %v8478 = vunpack.c.l.b16 %v8094
        %v8479 = vunpack.c.l.b16 %v8097
        %v8480 = vunpack.c.l.b16 %v8101
        %v8481 = vunpack.c.l.b16 %v8104
        %v8482 = vunpack.c.l.b16 %v8108
        %v8483 = vunpack.c.l.b16 %v8111
        %v8484 = vunpack.c.l.b16 %v8115
        %v8485 = vunpack.c.l.b16 %v8118
        %v8486 = vunpack.c.l.b16 %v8122
        %v8487 = vunpack.c.l.b16 %v8125
        %v8488 = vunpack.c.l.b16 %v8129
        %v8489 = vunpack.c.l.b16 %v8132
        %v8490 = vunpack.c.l.b16 %v8136
        %v8491 = vunpack.c.l.b16 %v8139
        %v8492 = vpack.c.b16 %v8461, %v8460
        %v8493 = vpack.c.b16 %v8463, %v8462
        %v8494 = vpack.c.b16 %v8465, %v8464
        %v8495 = vpack.c.b16 %v8467, %v8466
        %v8496 = vpack.c.b16 %v8469, %v8468
        %v8497 = vpack.c.b16 %v8471, %v8470
        %v8498 = vpack.c.b16 %v8473, %v8472
        %v8499 = vpack.c.b16 %v8475, %v8474
        %v8500 = vpack.c.b16 %v8477, %v8476
        %v8501 = vpack.c.b16 %v8479, %v8478
        %v8502 = vpack.c.b16 %v8481, %v8480
        %v8503 = vpack.c.b16 %v8483, %v8482
        %v8504 = vpack.c.b16 %v8485, %v8484
        %v8505 = vpack.c.b16 %v8487, %v8486
        %v8506 = vpack.c.b16 %v8489, %v8488
        %v8507 = vpack.c.b16 %v8491, %v8490
        %v8524 = vunpack.c.l.b16 %v8191
        %v8525 = vunpack.c.l.b16 %v8194
        %v8526 = vunpack.c.l.b16 %v8198
        %v8527 = vunpack.c.l.b16 %v8201
        %v8528 = vunpack.c.l.b16 %v8205
        %v8529 = vunpack.c.l.b16 %v8208
        %v8530 = vunpack.c.l.b16 %v8212
        %v8531 = vunpack.c.l.b16 %v8215
        %v8532 = vunpack.c.l.b16 %v8219
        %v8533 = vunpack.c.l.b16 %v8222
        %v8534 = vunpack.c.l.b16 %v8226
        %v8535 = vunpack.c.l.b16 %v8229
        %v8536 = vunpack.c.l.b16 %v8233
        %v8537 = vunpack.c.l.b16 %v8236
        %v8538 = vunpack.c.l.b16 %v8240
        %v8539 = vunpack.c.l.b16 %v8243
        %v8540 = vunpack.c.l.b16 %v8247
        %v8541 = vunpack.c.l.b16 %v8250
        %v8542 = vunpack.c.l.b16 %v8254
        %v8543 = vunpack.c.l.b16 %v8257
        %v8544 = vunpack.c.l.b16 %v8261
        %v8545 = vunpack.c.l.b16 %v8264
        %v8546 = vunpack.c.l.b16 %v8268
        %v8547 = vunpack.c.l.b16 %v8271
        %v8548 = vunpack.c.l.b16 %v8275
        %v8549 = vunpack.c.l.b16 %v8278
        %v8550 = vunpack.c.l.b16 %v8282
        %v8551 = vunpack.c.l.b16 %v8285
        %v8552 = vunpack.c.l.b16 %v8289
        %v8553 = vunpack.c.l.b16 %v8292
        %v8554 = vunpack.c.l.b16 %v8296
        %v8555 = vunpack.c.l.b16 %v8299
        %v8556 = vpack.c.b16 %v8525, %v8524
        %v8557 = vpack.c.b16 %v8527, %v8526
        %v8558 = vpack.c.b16 %v8529, %v8528
        %v8559 = vpack.c.b16 %v8531, %v8530
        %v8560 = vpack.c.b16 %v8533, %v8532
        %v8561 = vpack.c.b16 %v8535, %v8534
        %v8562 = vpack.c.b16 %v8537, %v8536
        %v8563 = vpack.c.b16 %v8539, %v8538
        %v8564 = vpack.c.b16 %v8541, %v8540
        %v8565 = vpack.c.b16 %v8543, %v8542
        %v8566 = vpack.c.b16 %v8545, %v8544
        %v8567 = vpack.c.b16 %v8547, %v8546
        %v8568 = vpack.c.b16 %v8549, %v8548
        %v8569 = vpack.c.b16 %v8551, %v8550
        %v8570 = vpack.c.b16 %v8553, %v8552
        %v8571 = vpack.c.b16 %v8555, %v8554
        %v8588 = vunpack.c.l.b16 %v8351
        %v8589 = vunpack.c.l.b16 %v8354
        %v8590 = vunpack.c.l.b16 %v8358
        %v8591 = vunpack.c.l.b16 %v8361
        %v8592 = vunpack.c.l.b16 %v8365
        %v8593 = vunpack.c.l.b16 %v8368
        %v8594 = vunpack.c.l.b16 %v8372
        %v8595 = vunpack.c.l.b16 %v8375
        %v8596 = vunpack.c.l.b16 %v8379
        %v8597 = vunpack.c.l.b16 %v8382
        %v8598 = vunpack.c.l.b16 %v8386
        %v8599 = vunpack.c.l.b16 %v8389
        %v8600 = vunpack.c.l.b16 %v8393
        %v8601 = vunpack.c.l.b16 %v8396
        %v8602 = vunpack.c.l.b16 %v8400
        %v8603 = vunpack.c.l.b16 %v8403
        %v8604 = vunpack.c.l.b16 %v8407
        %v8605 = vunpack.c.l.b16 %v8410
        %v8606 = vunpack.c.l.b16 %v8414
        %v8607 = vunpack.c.l.b16 %v8417
        %v8608 = vunpack.c.l.b16 %v8421
        %v8609 = vunpack.c.l.b16 %v8424
        %v8610 = vunpack.c.l.b16 %v8428
        %v8611 = vunpack.c.l.b16 %v8431
        %v8612 = vunpack.c.l.b16 %v8435
        %v8613 = vunpack.c.l.b16 %v8438
        %v8614 = vunpack.c.l.b16 %v8442
        %v8615 = vunpack.c.l.b16 %v8445
        %v8616 = vunpack.c.l.b16 %v8449
        %v8617 = vunpack.c.l.b16 %v8452
        %v8618 = vunpack.c.l.b16 %v8456
        %v8619 = vunpack.c.l.b16 %v8459
        %v8620 = vpack.c.b16 %v8589, %v8588
        %v8621 = vpack.c.b16 %v8591, %v8590
        %v8622 = vpack.c.b16 %v8593, %v8592
        %v8623 = vpack.c.b16 %v8595, %v8594
        %v8624 = vpack.c.b16 %v8597, %v8596
        %v8625 = vpack.c.b16 %v8599, %v8598
        %v8626 = vpack.c.b16 %v8601, %v8600
        %v8627 = vpack.c.b16 %v8603, %v8602
        %v8628 = vpack.c.b16 %v8605, %v8604
        %v8629 = vpack.c.b16 %v8607, %v8606
        %v8630 = vpack.c.b16 %v8609, %v8608
        %v8631 = vpack.c.b16 %v8611, %v8610
        %v8632 = vpack.c.b16 %v8613, %v8612
        %v8633 = vpack.c.b16 %v8615, %v8614
        %v8634 = vpack.c.b16 %v8617, %v8616
        %v8635 = vpack.c.b16 %v8619, %v8618
        %v8652 = vld [vmem:[#allocation9 + $0x180] sm:$0xf]
        %v8653 = vld [vmem:[#allocation9 + $0x184] sm:$0xf]
        %v8654 = vld [vmem:[#allocation9 + $0x188] sm:$0xf]
        %v8655 = vld [vmem:[#allocation9 + $0x18c] sm:$0xf]
        %v8656 = vld [vmem:[#allocation9 + $0x190] sm:$0xf]
        %v8657 = vld [vmem:[#allocation9 + $0x194] sm:$0xf]
        %v8658 = vld [vmem:[#allocation9 + $0x198] sm:$0xf]
        %v8659 = vld [vmem:[#allocation9 + $0x19c] sm:$0xf]
        %v8660 = vld [vmem:[#allocation9 + $0x1a0] sm:$0xf]
        %v8661 = vld [vmem:[#allocation9 + $0x1a4] sm:$0xf]
        %v8662 = vld [vmem:[#allocation9 + $0x1a8] sm:$0xf]
        %v8663 = vld [vmem:[#allocation9 + $0x1ac] sm:$0xf]
        %v8664 = vld [vmem:[#allocation9 + $0x1b0] sm:$0xf]
        %v8665 = vld [vmem:[#allocation9 + $0x1b4] sm:$0xf]
        %v8666 = vld [vmem:[#allocation9 + $0x1b8] sm:$0xf]
        %v8667 = vld [vmem:[#allocation9 + $0x1bc] sm:$0xf]
        %v8668 = vld [vmem:[#allocation9 + $0x1c0] sm:$0xf]
        %v8669 = vld [vmem:[#allocation9 + $0x1c4] sm:$0xf]
        %v8670 = vld [vmem:[#allocation9 + $0x1c8] sm:$0xf]
        %v8671 = vld [vmem:[#allocation9 + $0x1cc] sm:$0xf]
        %v8672 = vld [vmem:[#allocation9 + $0x1d0] sm:$0xf]
        %v8673 = vld [vmem:[#allocation9 + $0x1d4] sm:$0xf]
        %v8674 = vld [vmem:[#allocation9 + $0x1d8] sm:$0xf]
        %v8675 = vld [vmem:[#allocation9 + $0x1dc] sm:$0xf]
        %v8676 = vld [vmem:[#allocation9 + $0x1e0] sm:$0xf]
        %v8677 = vld [vmem:[#allocation9 + $0x1e4] sm:$0xf]
        %v8678 = vld [vmem:[#allocation9 + $0x1e8] sm:$0xf]
        %v8679 = vld [vmem:[#allocation9 + $0x1ec] sm:$0xf]
        %v8680 = vld [vmem:[#allocation9 + $0x1f0] sm:$0xf]
        %v8681 = vld [vmem:[#allocation9 + $0x1f4] sm:$0xf]
        %v8682 = vld [vmem:[#allocation9 + $0x1f8] sm:$0xf]
        %v8683 = vld [vmem:[#allocation9 + $0x1fc] sm:$0xf]
        %v8684 = vld [vmem:[#allocation9 + $0x200] sm:$0xf]
        %v8685 = vld [vmem:[#allocation9 + $0x204] sm:$0xf]
        %v8686 = vld [vmem:[#allocation9 + $0x208] sm:$0xf]
        %v8687 = vld [vmem:[#allocation9 + $0x20c] sm:$0xf]
        %v8688 = vld [vmem:[#allocation9 + $0x210] sm:$0xf]
        %v8689 = vld [vmem:[#allocation9 + $0x214] sm:$0xf]
        %v8690 = vld [vmem:[#allocation9 + $0x218] sm:$0xf]
        %v8691 = vld [vmem:[#allocation9 + $0x21c] sm:$0xf]
        %v8692 = vld [vmem:[#allocation9 + $0x220] sm:$0xf]
        %v8693 = vld [vmem:[#allocation9 + $0x224] sm:$0xf]
        %v8694 = vld [vmem:[#allocation9 + $0x228] sm:$0xf]
        %v8695 = vld [vmem:[#allocation9 + $0x22c] sm:$0xf]
        %v8696 = vld [vmem:[#allocation9 + $0x230] sm:$0xf]
        %v8697 = vld [vmem:[#allocation9 + $0x234] sm:$0xf]
        %v8698 = vld [vmem:[#allocation9 + $0x238] sm:$0xf]
        %v8699 = vld [vmem:[#allocation9 + $0x23c] sm:$0xf]
        %v8748 = vunpack.c.l.b16 %v8652
        %v8749 = vunpack.c.l.b16 %v8653
        %v8750 = vunpack.c.l.b16 %v8654
        %v8751 = vunpack.c.l.b16 %v8655
        %v8752 = vunpack.c.l.b16 %v8656
        %v8753 = vunpack.c.l.b16 %v8657
        %v8754 = vunpack.c.l.b16 %v8658
        %v8755 = vunpack.c.l.b16 %v8659
        %v8756 = vunpack.c.l.b16 %v8660
        %v8757 = vunpack.c.l.b16 %v8661
        %v8758 = vunpack.c.l.b16 %v8662
        %v8759 = vunpack.c.l.b16 %v8663
        %v8760 = vunpack.c.l.b16 %v8664
        %v8761 = vunpack.c.l.b16 %v8665
        %v8762 = vunpack.c.l.b16 %v8666
        %v8763 = vunpack.c.l.b16 %v8667
        %v8764 = vunpack.c.l.b16 %v8668
        %v8765 = vunpack.c.l.b16 %v8669
        %v8766 = vunpack.c.l.b16 %v8670
        %v8767 = vunpack.c.l.b16 %v8671
        %v8768 = vunpack.c.l.b16 %v8672
        %v8769 = vunpack.c.l.b16 %v8673
        %v8770 = vunpack.c.l.b16 %v8674
        %v8771 = vunpack.c.l.b16 %v8675
        %v8772 = vunpack.c.l.b16 %v8676
        %v8773 = vunpack.c.l.b16 %v8677
        %v8774 = vunpack.c.l.b16 %v8678
        %v8775 = vunpack.c.l.b16 %v8679
        %v8776 = vunpack.c.l.b16 %v8680
        %v8777 = vunpack.c.l.b16 %v8681
        %v8778 = vunpack.c.l.b16 %v8682
        %v8779 = vunpack.c.l.b16 %v8683
        %v8780 = vunpack.c.l.b16 %v8684
        %v8781 = vunpack.c.l.b16 %v8685
        %v8782 = vunpack.c.l.b16 %v8686
        %v8783 = vunpack.c.l.b16 %v8687
        %v8784 = vunpack.c.l.b16 %v8688
        %v8785 = vunpack.c.l.b16 %v8689
        %v8786 = vunpack.c.l.b16 %v8690
        %v8787 = vunpack.c.l.b16 %v8691
        %v8788 = vunpack.c.l.b16 %v8692
        %v8789 = vunpack.c.l.b16 %v8693
        %v8790 = vunpack.c.l.b16 %v8694
        %v8791 = vunpack.c.l.b16 %v8695
        %v8792 = vunpack.c.l.b16 %v8696
        %v8793 = vunpack.c.l.b16 %v8697
        %v8794 = vunpack.c.l.b16 %v8698
        %v8795 = vunpack.c.l.b16 %v8699
        %v8796 = vpack.c.b16 %v8749, %v8748
        %v8797 = vpack.c.b16 %v8751, %v8750
        %v8798 = vpack.c.b16 %v8753, %v8752
        %v8799 = vpack.c.b16 %v8755, %v8754
        %v8800 = vpack.c.b16 %v8757, %v8756
        %v8801 = vpack.c.b16 %v8759, %v8758
        %v8802 = vpack.c.b16 %v8761, %v8760
        %v8803 = vpack.c.b16 %v8763, %v8762
        %v8804 = vpack.c.b16 %v8765, %v8764
        %v8805 = vpack.c.b16 %v8767, %v8766
        %v8806 = vpack.c.b16 %v8769, %v8768
        %v8807 = vpack.c.b16 %v8771, %v8770
        %v8808 = vpack.c.b16 %v8773, %v8772
        %v8809 = vpack.c.b16 %v8775, %v8774
        %v8810 = vpack.c.b16 %v8777, %v8776
        %v8811 = vpack.c.b16 %v8779, %v8778
        %v8812 = vpack.c.b16 %v8781, %v8780
        %v8813 = vpack.c.b16 %v8783, %v8782
        %v8814 = vpack.c.b16 %v8785, %v8784
        %v8815 = vpack.c.b16 %v8787, %v8786
        %v8816 = vpack.c.b16 %v8789, %v8788
        %v8817 = vpack.c.b16 %v8791, %v8790
        %v8818 = vpack.c.b16 %v8793, %v8792
        %v8819 = vpack.c.b16 %v8795, %v8794
        %8844 = vmatprep.subr.bf16.mxu0 0
        %8845 = vmatpush1.bf16.msra.mxu0 %v8803
        %8846 = vmatprep.subr.bf16.mxu0 0
        %8847 = vmatpush1.bf16.msra.mxu0 %v8802
        %8848 = vmatprep.subr.bf16.mxu0 0
        %8849 = vmatpush1.bf16.msra.mxu0 %v8801
        %8850 = vmatprep.subr.bf16.mxu0 0
        %8851 = vmatpush1.bf16.msra.mxu0 %v8800
        %8852 = vmatprep.subr.bf16.mxu0 0
        %8853 = vmatpush1.bf16.msra.mxu0 %v8799
        %8854 = vmatprep.subr.bf16.mxu0 0
        %8855 = vmatpush1.bf16.msra.mxu0 %v8798
        %8856 = vmatprep.subr.bf16.mxu0 0
        %8857 = vmatpush1.bf16.msra.mxu0 %v8797
        %8858 = vmatprep.subr.bf16.mxu0 0
        %8859 = vmatpush1.bf16.msra.mxu0 %v8796
        %8860 = vmatprep.subr.bf16.mxu0 0
        %8861 = vmatpush2.bf16.msra.mxu0 %v8811
        %8862 = vmatprep.subr.bf16.mxu0 0
        %8863 = vmatpush2.bf16.msra.mxu0 %v8810
        %8864 = vmatprep.subr.bf16.mxu0 0
        %8865 = vmatpush2.bf16.msra.mxu0 %v8809
        %8866 = vmatprep.subr.bf16.mxu0 0
        %8867 = vmatpush2.bf16.msra.mxu0 %v8808
        %8868 = vmatprep.subr.bf16.mxu0 0
        %8869 = vmatpush2.bf16.msra.mxu0 %v8807
        %8870 = vmatprep.subr.bf16.mxu0 0
        %8871 = vmatpush2.bf16.msra.mxu0 %v8806
        %8872 = vmatprep.subr.bf16.mxu0 0
        %8873 = vmatpush2.bf16.msra.mxu0 %v8805
        %8874 = vmatprep.subr.bf16.mxu0 0
        %8875 = vmatpush2.bf16.msra.mxu0 %v8804
        %8876 = vmatprep.mubr.bf16.mxu0 %v8556
        %8877 = vmatmul.mubr.bf16.gmra.mxu0 %v8492
        %v8878 = vpop.f32.mrf.mxu0
        %v8879 = vadd.f32 0.0, %v8878
        %v8880 = vpop.f32.mrf.mxu0
        %v8881 = vpop.f32.mrf.mxu0
        %v8882 = vadd.f32 0.0, %v8881
        %v8883 = vpop.f32.mrf.mxu0
        %8884 = vmatprep.mubr.bf16.mxu0 %v8557
        %8885 = vmatmul.mubr.bf16.gmra.mxu0 %v8493
        %v8886 = vpop.f32.mrf.mxu0
        %v8887 = vadd.f32 0.0, %v8886
        %v8888 = vpop.f32.mrf.mxu0
        %v8889 = vpop.f32.mrf.mxu0
        %v8890 = vadd.f32 0.0, %v8889
        %v8891 = vpop.f32.mrf.mxu0
        %8892 = vmatprep.mubr.bf16.mxu0 %v8558
        %8893 = vmatmul.mubr.bf16.gmra.mxu0 %v8494
        %v8894 = vpop.f32.mrf.mxu0
        %v8895 = vadd.f32 0.0, %v8894
        %v8896 = vpop.f32.mrf.mxu0
        %v8897 = vpop.f32.mrf.mxu0
        %v8898 = vadd.f32 0.0, %v8897
        %v8899 = vpop.f32.mrf.mxu0
        %8900 = vmatprep.mubr.bf16.mxu0 %v8559
        %8901 = vmatmul.mubr.bf16.gmra.mxu0 %v8495
        %v8902 = vpop.f32.mrf.mxu0
        %v8903 = vadd.f32 0.0, %v8902
        %v8904 = vpop.f32.mrf.mxu0
        %v8905 = vpop.f32.mrf.mxu0
        %v8906 = vadd.f32 0.0, %v8905
        %v8907 = vpop.f32.mrf.mxu0
        %8908 = vmatprep.mubr.bf16.mxu0 %v8560
        %8909 = vmatmul.mubr.bf16.gmra.mxu0 %v8496
        %v8910 = vpop.f32.mrf.mxu0
        %v8911 = vadd.f32 0.0, %v8910
        %v8912 = vpop.f32.mrf.mxu0
        %v8913 = vpop.f32.mrf.mxu0
        %v8914 = vadd.f32 0.0, %v8913
        %v8915 = vpop.f32.mrf.mxu0
        %8916 = vmatprep.mubr.bf16.mxu0 %v8561
        %8917 = vmatmul.mubr.bf16.gmra.mxu0 %v8497
        %v8918 = vpop.f32.mrf.mxu0
        %v8919 = vadd.f32 0.0, %v8918
        %v8920 = vpop.f32.mrf.mxu0
        %v8921 = vpop.f32.mrf.mxu0
        %v8922 = vadd.f32 0.0, %v8921
        %v8923 = vpop.f32.mrf.mxu0
        %8924 = vmatprep.mubr.bf16.mxu0 %v8562
        %8925 = vmatmul.mubr.bf16.gmra.mxu0 %v8498
        %v8926 = vpop.f32.mrf.mxu0
        %v8927 = vadd.f32 0.0, %v8926
        %v8928 = vpop.f32.mrf.mxu0
        %v8929 = vpop.f32.mrf.mxu0
        %v8930 = vadd.f32 0.0, %v8929
        %v8931 = vpop.f32.mrf.mxu0
        %8932 = vmatprep.mubr.bf16.mxu0 %v8563
        %8933 = vmatmul.mubr.bf16.gmra.mxu0 %v8499
        %v8934 = vpop.f32.mrf.mxu0
        %v8935 = vadd.f32 0.0, %v8934
        %v8936 = vpop.f32.mrf.mxu0
        %v8937 = vpop.f32.mrf.mxu0
        %v8938 = vadd.f32 0.0, %v8937
        %v8939 = vpop.f32.mrf.mxu0
        %8940 = vmatprep.mubr.bf16.mxu0 %v8564
        %8941 = vmatmul.mubr.bf16.gmra.mxu0 %v8500
        %v8942 = vpop.f32.mrf.mxu0
        %v8943 = vadd.f32 0.0, %v8942
        %v8944 = vpop.f32.mrf.mxu0
        %v8945 = vpop.f32.mrf.mxu0
        %v8946 = vadd.f32 0.0, %v8945
        %v8947 = vpop.f32.mrf.mxu0
        %8948 = vmatprep.mubr.bf16.mxu0 %v8565
        %8949 = vmatmul.mubr.bf16.gmra.mxu0 %v8501
        %v8950 = vpop.f32.mrf.mxu0
        %v8951 = vadd.f32 0.0, %v8950
        %v8952 = vpop.f32.mrf.mxu0
        %v8953 = vpop.f32.mrf.mxu0
        %v8954 = vadd.f32 0.0, %v8953
        %v8955 = vpop.f32.mrf.mxu0
        %8956 = vmatprep.mubr.bf16.mxu0 %v8566
        %8957 = vmatmul.mubr.bf16.gmra.mxu0 %v8502
        %v8958 = vpop.f32.mrf.mxu0
        %v8959 = vadd.f32 0.0, %v8958
        %v8960 = vpop.f32.mrf.mxu0
        %v8961 = vpop.f32.mrf.mxu0
        %v8962 = vadd.f32 0.0, %v8961
        %v8963 = vpop.f32.mrf.mxu0
        %8964 = vmatprep.mubr.bf16.mxu0 %v8567
        %8965 = vmatmul.mubr.bf16.gmra.mxu0 %v8503
        %v8966 = vpop.f32.mrf.mxu0
        %v8967 = vadd.f32 0.0, %v8966
        %v8968 = vpop.f32.mrf.mxu0
        %v8969 = vpop.f32.mrf.mxu0
        %v8970 = vadd.f32 0.0, %v8969
        %v8971 = vpop.f32.mrf.mxu0
        %8972 = vmatprep.mubr.bf16.mxu0 %v8568
        %8973 = vmatmul.mubr.bf16.gmra.mxu0 %v8504
        %v8974 = vpop.f32.mrf.mxu0
        %v8975 = vadd.f32 0.0, %v8974
        %v8976 = vpop.f32.mrf.mxu0
        %v8977 = vpop.f32.mrf.mxu0
        %v8978 = vadd.f32 0.0, %v8977
        %v8979 = vpop.f32.mrf.mxu0
        %8980 = vmatprep.mubr.bf16.mxu0 %v8569
        %8981 = vmatmul.mubr.bf16.gmra.mxu0 %v8505
        %v8982 = vpop.f32.mrf.mxu0
        %v8983 = vadd.f32 0.0, %v8982
        %v8984 = vpop.f32.mrf.mxu0
        %v8985 = vpop.f32.mrf.mxu0
        %v8986 = vadd.f32 0.0, %v8985
        %v8987 = vpop.f32.mrf.mxu0
        %8988 = vmatprep.mubr.bf16.mxu0 %v8570
        %8989 = vmatmul.mubr.bf16.gmra.mxu0 %v8506
        %v8990 = vpop.f32.mrf.mxu0
        %v8991 = vadd.f32 0.0, %v8990
        %v8992 = vpop.f32.mrf.mxu0
        %v8993 = vpop.f32.mrf.mxu0
        %v8994 = vadd.f32 0.0, %v8993
        %v8995 = vpop.f32.mrf.mxu0
        %8996 = vmatprep.mubr.bf16.mxu0 %v8571
        %8997 = vmatmul.mubr.bf16.gmra.mxu0 %v8507
        %v8998 = vpop.f32.mrf.mxu0
        %v8999 = vadd.f32 0.0, %v8998
        %v9000 = vpop.f32.mrf.mxu0
        %v9001 = vpop.f32.mrf.mxu0
        %v9002 = vadd.f32 0.0, %v9001
        %v9003 = vpop.f32.mrf.mxu0
        %9004 = vdwg.mxu0
        %9005 = vmatprep.subr.bf16.mxu0 0
        %9006 = vmatpush1.bf16.msra.mxu0 %v8819
        %9007 = vmatprep.subr.bf16.mxu0 0
        %9008 = vmatpush1.bf16.msra.mxu0 %v8818
        %9009 = vmatprep.subr.bf16.mxu0 0
        %9010 = vmatpush1.bf16.msra.mxu0 %v8817
        %9011 = vmatprep.subr.bf16.mxu0 0
        %9012 = vmatpush1.bf16.msra.mxu0 %v8816
        %9013 = vmatprep.subr.bf16.mxu0 0
        %9014 = vmatpush1.bf16.msra.mxu0 %v8815
        %9015 = vmatprep.subr.bf16.mxu0 0
        %9016 = vmatpush1.bf16.msra.mxu0 %v8814
        %9017 = vmatprep.subr.bf16.mxu0 0
        %9018 = vmatpush1.bf16.msra.mxu0 %v8813
        %9019 = vmatprep.subr.bf16.mxu0 0
        %9020 = vmatpush1.bf16.msra.mxu0 %v8812
        %9021 = vmatprep.subr.bf16.mxu0 0
        %9022 = vmatpush2.bf16.msra.mxu0 0
        %9023 = vmatprep.subr.bf16.mxu0 0
        %9024 = vmatpush2.bf16.msra.mxu0 0
        %9025 = vmatprep.subr.bf16.mxu0 0
        %9026 = vmatpush2.bf16.msra.mxu0 0
        %9027 = vmatprep.subr.bf16.mxu0 0
        %9028 = vmatpush2.bf16.msra.mxu0 0
        %9029 = vmatprep.subr.bf16.mxu0 0
        %9030 = vmatpush2.bf16.msra.mxu0 0
        %9031 = vmatprep.subr.bf16.mxu0 0
        %9032 = vmatpush2.bf16.msra.mxu0 0
        %9033 = vmatprep.subr.bf16.mxu0 0
        %9034 = vmatpush2.bf16.msra.mxu0 0
        %9035 = vmatprep.subr.bf16.mxu0 0
        %9036 = vmatpush2.bf16.msra.mxu0 0
        %9037 = vmatprep.mubr.bf16.mxu0 0
        %9038 = vmatmul.mubr.bf16.gmra.mxu0 %v8620
        %v9039 = vpop.f32.mrf.mxu0
        %v9040 = vadd.f32 %v8879, %v9039
        %v9041 = vpop.f32.mrf.mxu0
        %v9042 = vpop.f32.mrf.mxu0
        %v9043 = vadd.f32 %v8882, %v9042
        %v9044 = vpop.f32.mrf.mxu0
        %9045 = vmatprep.mubr.bf16.mxu0 0
        %9046 = vmatmul.mubr.bf16.gmra.mxu0 %v8621
        %v9047 = vpop.f32.mrf.mxu0
        %v9048 = vadd.f32 %v8887, %v9047
        %v9049 = vpop.f32.mrf.mxu0
        %v9050 = vpop.f32.mrf.mxu0
        %v9051 = vadd.f32 %v8890, %v9050
        %v9052 = vpop.f32.mrf.mxu0
        %9053 = vmatprep.mubr.bf16.mxu0 0
        %9054 = vmatmul.mubr.bf16.gmra.mxu0 %v8622
        %v9055 = vpop.f32.mrf.mxu0
        %v9056 = vadd.f32 %v8895, %v9055
        %v9057 = vpop.f32.mrf.mxu0
        %v9058 = vpop.f32.mrf.mxu0
        %v9059 = vadd.f32 %v8898, %v9058
        %v9060 = vpop.f32.mrf.mxu0
        %9061 = vmatprep.mubr.bf16.mxu0 0
        %9062 = vmatmul.mubr.bf16.gmra.mxu0 %v8623
        %v9063 = vpop.f32.mrf.mxu0
        %v9064 = vadd.f32 %v8903, %v9063
        %v9065 = vpop.f32.mrf.mxu0
        %v9066 = vpop.f32.mrf.mxu0
        %v9067 = vadd.f32 %v8906, %v9066
        %v9068 = vpop.f32.mrf.mxu0
        %9069 = vmatprep.mubr.bf16.mxu0 0
        %9070 = vmatmul.mubr.bf16.gmra.mxu0 %v8624
        %v9071 = vpop.f32.mrf.mxu0
        %v9072 = vadd.f32 %v8911, %v9071
        %v9073 = vpop.f32.mrf.mxu0
        %v9074 = vpop.f32.mrf.mxu0
        %v9075 = vadd.f32 %v8914, %v9074
        %v9076 = vpop.f32.mrf.mxu0
        %9077 = vmatprep.mubr.bf16.mxu0 0
        %9078 = vmatmul.mubr.bf16.gmra.mxu0 %v8625
        %v9079 = vpop.f32.mrf.mxu0
        %v9080 = vadd.f32 %v8919, %v9079
        %v9081 = vpop.f32.mrf.mxu0
        %v9082 = vpop.f32.mrf.mxu0
        %v9083 = vadd.f32 %v8922, %v9082
        %v9084 = vpop.f32.mrf.mxu0
        %9085 = vmatprep.mubr.bf16.mxu0 0
        %9086 = vmatmul.mubr.bf16.gmra.mxu0 %v8626
        %v9087 = vpop.f32.mrf.mxu0
        %v9088 = vadd.f32 %v8927, %v9087
        %v9089 = vpop.f32.mrf.mxu0
        %v9090 = vpop.f32.mrf.mxu0
        %v9091 = vadd.f32 %v8930, %v9090
        %v9092 = vpop.f32.mrf.mxu0
        %9093 = vmatprep.mubr.bf16.mxu0 0
        %9094 = vmatmul.mubr.bf16.gmra.mxu0 %v8627
        %v9095 = vpop.f32.mrf.mxu0
        %v9096 = vadd.f32 %v8935, %v9095
        %v9097 = vpop.f32.mrf.mxu0
        %v9098 = vpop.f32.mrf.mxu0
        %v9099 = vadd.f32 %v8938, %v9098
        %v9100 = vpop.f32.mrf.mxu0
        %9101 = vmatprep.mubr.bf16.mxu0 0
        %9102 = vmatmul.mubr.bf16.gmra.mxu0 %v8628
        %v9103 = vpop.f32.mrf.mxu0
        %v9104 = vadd.f32 %v8943, %v9103
        %v9105 = vpop.f32.mrf.mxu0
        %v9106 = vpop.f32.mrf.mxu0
        %v9107 = vadd.f32 %v8946, %v9106
        %v9108 = vpop.f32.mrf.mxu0
        %9109 = vmatprep.mubr.bf16.mxu0 0
        %9110 = vmatmul.mubr.bf16.gmra.mxu0 %v8629
        %v9111 = vpop.f32.mrf.mxu0
        %v9112 = vadd.f32 %v8951, %v9111
        %v9113 = vpop.f32.mrf.mxu0
        %v9114 = vpop.f32.mrf.mxu0
        %v9115 = vadd.f32 %v8954, %v9114
        %v9116 = vpop.f32.mrf.mxu0
        %9117 = vmatprep.mubr.bf16.mxu0 0
        %9118 = vmatmul.mubr.bf16.gmra.mxu0 %v8630
        %v9119 = vpop.f32.mrf.mxu0
        %v9120 = vadd.f32 %v8959, %v9119
        %v9121 = vpop.f32.mrf.mxu0
        %v9122 = vpop.f32.mrf.mxu0
        %v9123 = vadd.f32 %v8962, %v9122
        %v9124 = vpop.f32.mrf.mxu0
        %9125 = vmatprep.mubr.bf16.mxu0 0
        %9126 = vmatmul.mubr.bf16.gmra.mxu0 %v8631
        %v9127 = vpop.f32.mrf.mxu0
        %v9128 = vadd.f32 %v8967, %v9127
        %v9129 = vpop.f32.mrf.mxu0
        %v9130 = vpop.f32.mrf.mxu0
        %v9131 = vadd.f32 %v8970, %v9130
        %v9132 = vpop.f32.mrf.mxu0
        %9133 = vmatprep.mubr.bf16.mxu0 0
        %9134 = vmatmul.mubr.bf16.gmra.mxu0 %v8632
        %v9135 = vpop.f32.mrf.mxu0
        %v9136 = vadd.f32 %v8975, %v9135
        %v9137 = vpop.f32.mrf.mxu0
        %v9138 = vpop.f32.mrf.mxu0
        %v9139 = vadd.f32 %v8978, %v9138
        %v9140 = vpop.f32.mrf.mxu0
        %9141 = vmatprep.mubr.bf16.mxu0 0
        %9142 = vmatmul.mubr.bf16.gmra.mxu0 %v8633
        %v9143 = vpop.f32.mrf.mxu0
        %v9144 = vadd.f32 %v8983, %v9143
        %v9145 = vpop.f32.mrf.mxu0
        %v9146 = vpop.f32.mrf.mxu0
        %v9147 = vadd.f32 %v8986, %v9146
        %v9148 = vpop.f32.mrf.mxu0
        %9149 = vmatprep.mubr.bf16.mxu0 0
        %9150 = vmatmul.mubr.bf16.gmra.mxu0 %v8634
        %v9151 = vpop.f32.mrf.mxu0
        %v9152 = vadd.f32 %v8991, %v9151
        %v9153 = vpop.f32.mrf.mxu0
        %v9154 = vpop.f32.mrf.mxu0
        %v9155 = vadd.f32 %v8994, %v9154
        %v9156 = vpop.f32.mrf.mxu0
        %9157 = vmatprep.mubr.bf16.mxu0 0
        %9158 = vmatmul.mubr.bf16.gmra.mxu0 %v8635
        %v9159 = vpop.f32.mrf.mxu0
        %v9160 = vadd.f32 %v8999, %v9159
        %v9161 = vpop.f32.mrf.mxu0
        %v9162 = vpop.f32.mrf.mxu0
        %v9163 = vadd.f32 %v9002, %v9162
        %v9164 = vpop.f32.mrf.mxu0
        %9165 = vdwg.mxu0
        %v9166 = vadd.f32 %v7854, %v9040
        %v9167 = vadd.f32 %v7857, %v9043
        %v9168 = vadd.f32 %v7862, %v9048
        %v9169 = vadd.f32 %v7865, %v9051
        %v9170 = vadd.f32 %v7870, %v9056
        %v9171 = vadd.f32 %v7873, %v9059
        %v9172 = vadd.f32 %v7878, %v9064
        %v9173 = vadd.f32 %v7881, %v9067
        %v9174 = vadd.f32 %v7886, %v9072
        %v9175 = vadd.f32 %v7889, %v9075
        %v9176 = vadd.f32 %v7894, %v9080
        %v9177 = vadd.f32 %v7897, %v9083
        %v9178 = vadd.f32 %v7902, %v9088
        %v9179 = vadd.f32 %v7905, %v9091
        %v9180 = vadd.f32 %v7910, %v9096
        %v9181 = vadd.f32 %v7913, %v9099
        %v9182 = vadd.f32 %v7918, %v9104
        %v9183 = vadd.f32 %v7921, %v9107
        %v9184 = vadd.f32 %v7926, %v9112
        %v9185 = vadd.f32 %v7929, %v9115
        %v9186 = vadd.f32 %v7934, %v9120
        %v9187 = vadd.f32 %v7937, %v9123
        %v9188 = vadd.f32 %v7942, %v9128
        %v9189 = vadd.f32 %v7945, %v9131
        %v9190 = vadd.f32 %v7950, %v9136
        %v9191 = vadd.f32 %v7953, %v9139
        %v9192 = vadd.f32 %v7958, %v9144
        %v9193 = vadd.f32 %v7961, %v9147
        %v9194 = vadd.f32 %v7966, %v9152
        %v9195 = vadd.f32 %v7969, %v9155
        %v9196 = vadd.f32 %v7974, %v9160
        %v9197 = vadd.f32 %v7977, %v9163
        %v9198 = vld [vmem:[%s6] sm:$0x1]
        %v9200 = vlaneseq
        %v9201 = vshrl.u32 %v9200, 7
        %v9202 = vsub.s32 0, %v9201
        %v9203 = vrot.slane %v9198, %v9202
        %v9205 = vmul.f32 %v9166, %v9203
        %v9206 = vmul.f32 %v9167, %v9203
        %v9207 = vmul.f32 %v9168, %v9203
        %v9208 = vmul.f32 %v9169, %v9203
        %v9209 = vmul.f32 %v9170, %v9203
        %v9210 = vmul.f32 %v9171, %v9203
        %v9211 = vmul.f32 %v9172, %v9203
        %v9212 = vmul.f32 %v9173, %v9203
        %v9213 = vmul.f32 %v9174, %v9203
        %v9214 = vmul.f32 %v9175, %v9203
        %v9215 = vmul.f32 %v9176, %v9203
        %v9216 = vmul.f32 %v9177, %v9203
        %v9217 = vmul.f32 %v9178, %v9203
        %v9218 = vmul.f32 %v9179, %v9203
        %v9219 = vmul.f32 %v9180, %v9203
        %v9220 = vmul.f32 %v9181, %v9203
        %v9221 = vmul.f32 %v9182, %v9203
        %v9222 = vmul.f32 %v9183, %v9203
        %v9223 = vmul.f32 %v9184, %v9203
        %v9224 = vmul.f32 %v9185, %v9203
        %v9225 = vmul.f32 %v9186, %v9203
        %v9226 = vmul.f32 %v9187, %v9203
        %v9227 = vmul.f32 %v9188, %v9203
        %v9228 = vmul.f32 %v9189, %v9203
        %v9229 = vmul.f32 %v9190, %v9203
        %v9230 = vmul.f32 %v9191, %v9203
        %v9231 = vmul.f32 %v9192, %v9203
        %v9232 = vmul.f32 %v9193, %v9203
        %v9233 = vmul.f32 %v9194, %v9203
        %v9234 = vmul.f32 %v9195, %v9203
        %v9235 = vmul.f32 %v9196, %v9203
        %v9236 = vmul.f32 %v9197, %v9203
        %v9237 = vld [vmem:[%s7] sm:$0x1]
        %v9239 = vlaneseq
        %v9240 = vshrl.u32 %v9239, 7
        %v9241 = vsub.s32 0, %v9240
        %v9242 = vrot.slane %v9237, %v9241
        %v9244 = vadd.f32 %v9205, %v9242
        %v9245 = vadd.f32 %v9206, %v9242
        %v9246 = vadd.f32 %v9207, %v9242
        %v9247 = vadd.f32 %v9208, %v9242
        %v9248 = vadd.f32 %v9209, %v9242
        %v9249 = vadd.f32 %v9210, %v9242
        %v9250 = vadd.f32 %v9211, %v9242
        %v9251 = vadd.f32 %v9212, %v9242
        %v9252 = vadd.f32 %v9213, %v9242
        %v9253 = vadd.f32 %v9214, %v9242
        %v9254 = vadd.f32 %v9215, %v9242
        %v9255 = vadd.f32 %v9216, %v9242
        %v9256 = vadd.f32 %v9217, %v9242
        %v9257 = vadd.f32 %v9218, %v9242
        %v9258 = vadd.f32 %v9219, %v9242
        %v9259 = vadd.f32 %v9220, %v9242
        %v9260 = vadd.f32 %v9221, %v9242
        %v9261 = vadd.f32 %v9222, %v9242
        %v9262 = vadd.f32 %v9223, %v9242
        %v9263 = vadd.f32 %v9224, %v9242
        %v9264 = vadd.f32 %v9225, %v9242
        %v9265 = vadd.f32 %v9226, %v9242
        %v9266 = vadd.f32 %v9227, %v9242
        %v9267 = vadd.f32 %v9228, %v9242
        %v9268 = vadd.f32 %v9229, %v9242
        %v9269 = vadd.f32 %v9230, %v9242
        %v9270 = vadd.f32 %v9231, %v9242
        %v9271 = vadd.f32 %v9232, %v9242
        %v9272 = vadd.f32 %v9233, %v9242
        %v9273 = vadd.f32 %v9234, %v9242
        %v9274 = vadd.f32 %v9235, %v9242
        %v9275 = vadd.f32 %v9236, %v9242
        %v9276 = vld [vmem:[%s347] sm:$0xff]
        %v9277 = vld [vmem:[%s347 + $0x8] sm:$0xff]
        %v9278 = vld [vmem:[%s347 + $0x10] sm:$0xff]
        %v9279 = vld [vmem:[%s347 + $0x18] sm:$0xff]
        %v9280 = vld [vmem:[%s347 + $0x20] sm:$0xff]
        %v9281 = vld [vmem:[%s347 + $0x28] sm:$0xff]
        %v9282 = vld [vmem:[%s347 + $0x30] sm:$0xff]
        %v9283 = vld [vmem:[%s347 + $0x38] sm:$0xff]
        %v9284 = vld [vmem:[%s347 + $0x40] sm:$0xff]
        %v9285 = vld [vmem:[%s347 + $0x48] sm:$0xff]
        %v9286 = vld [vmem:[%s347 + $0x50] sm:$0xff]
        %v9287 = vld [vmem:[%s347 + $0x58] sm:$0xff]
        %v9288 = vld [vmem:[%s347 + $0x60] sm:$0xff]
        %v9289 = vld [vmem:[%s347 + $0x68] sm:$0xff]
        %v9290 = vld [vmem:[%s347 + $0x70] sm:$0xff]
        %v9291 = vld [vmem:[%s347 + $0x78] sm:$0xff]
        %v9292 = vld [vmem:[%s347 + $0x80] sm:$0xff]
        %v9293 = vld [vmem:[%s347 + $0x88] sm:$0xff]
        %v9294 = vld [vmem:[%s347 + $0x90] sm:$0xff]
        %v9295 = vld [vmem:[%s347 + $0x98] sm:$0xff]
        %v9296 = vld [vmem:[%s347 + $0xa0] sm:$0xff]
        %v9297 = vld [vmem:[%s347 + $0xa8] sm:$0xff]
        %v9298 = vld [vmem:[%s347 + $0xb0] sm:$0xff]
        %v9299 = vld [vmem:[%s347 + $0xb8] sm:$0xff]
        %v9300 = vld [vmem:[%s347 + $0xc0] sm:$0xff]
        %v9301 = vld [vmem:[%s347 + $0xc8] sm:$0xff]
        %v9302 = vld [vmem:[%s347 + $0xd0] sm:$0xff]
        %v9303 = vld [vmem:[%s347 + $0xd8] sm:$0xff]
        %v9304 = vld [vmem:[%s347 + $0xe0] sm:$0xff]
        %v9305 = vld [vmem:[%s347 + $0xe8] sm:$0xff]
        %v9306 = vld [vmem:[%s347 + $0xf0] sm:$0xff]
        %v9307 = vld [vmem:[%s347 + $0xf8] sm:$0xff]
        %v9308 = vadd.f32 %v9244, %v9276
        %v9309 = vadd.f32 %v9245, %v9277
        %v9310 = vadd.f32 %v9246, %v9278
        %v9311 = vadd.f32 %v9247, %v9279
        %v9312 = vadd.f32 %v9248, %v9280
        %v9313 = vadd.f32 %v9249, %v9281
        %v9314 = vadd.f32 %v9250, %v9282
        %v9315 = vadd.f32 %v9251, %v9283
        %v9316 = vadd.f32 %v9252, %v9284
        %v9317 = vadd.f32 %v9253, %v9285
        %v9318 = vadd.f32 %v9254, %v9286
        %v9319 = vadd.f32 %v9255, %v9287
        %v9320 = vadd.f32 %v9256, %v9288
        %v9321 = vadd.f32 %v9257, %v9289
        %v9322 = vadd.f32 %v9258, %v9290
        %v9323 = vadd.f32 %v9259, %v9291
        %v9324 = vadd.f32 %v9260, %v9292
        %v9325 = vadd.f32 %v9261, %v9293
        %v9326 = vadd.f32 %v9262, %v9294
        %v9327 = vadd.f32 %v9263, %v9295
        %v9328 = vadd.f32 %v9264, %v9296
        %v9329 = vadd.f32 %v9265, %v9297
        %v9330 = vadd.f32 %v9266, %v9298
        %v9331 = vadd.f32 %v9267, %v9299
        %v9332 = vadd.f32 %v9268, %v9300
        %v9333 = vadd.f32 %v9269, %v9301
        %v9334 = vadd.f32 %v9270, %v9302
        %v9335 = vadd.f32 %v9271, %v9303
        %v9336 = vadd.f32 %v9272, %v9304
        %v9337 = vadd.f32 %v9273, %v9305
        %v9338 = vadd.f32 %v9274, %v9306
        %v9339 = vadd.f32 %v9275, %v9307
        %v9340 = vmax.f32 %v9308, 0.0
        %v9341 = vmax.f32 %v9309, 0.0
        %v9342 = vmax.f32 %v9310, 0.0
        %v9343 = vmax.f32 %v9311, 0.0
        %v9344 = vmax.f32 %v9312, 0.0
        %v9345 = vmax.f32 %v9313, 0.0
        %v9346 = vmax.f32 %v9314, 0.0
        %v9347 = vmax.f32 %v9315, 0.0
        %v9348 = vmax.f32 %v9316, 0.0
        %v9349 = vmax.f32 %v9317, 0.0
        %v9350 = vmax.f32 %v9318, 0.0
        %v9351 = vmax.f32 %v9319, 0.0
        %v9352 = vmax.f32 %v9320, 0.0
        %v9353 = vmax.f32 %v9321, 0.0
        %v9354 = vmax.f32 %v9322, 0.0
        %v9355 = vmax.f32 %v9323, 0.0
        %v9356 = vmax.f32 %v9324, 0.0
        %v9357 = vmax.f32 %v9325, 0.0
        %v9358 = vmax.f32 %v9326, 0.0
        %v9359 = vmax.f32 %v9327, 0.0
        %v9360 = vmax.f32 %v9328, 0.0
        %v9361 = vmax.f32 %v9329, 0.0
        %v9362 = vmax.f32 %v9330, 0.0
        %v9363 = vmax.f32 %v9331, 0.0
        %v9364 = vmax.f32 %v9332, 0.0
        %v9365 = vmax.f32 %v9333, 0.0
        %v9366 = vmax.f32 %v9334, 0.0
        %v9367 = vmax.f32 %v9335, 0.0
        %v9368 = vmax.f32 %v9336, 0.0
        %v9369 = vmax.f32 %v9337, 0.0
        %v9370 = vmax.f32 %v9338, 0.0
        %v9371 = vmax.f32 %v9339, 0.0
        %9372 = vst [vmem:[%s392] sm:$0xff] %v9340
        %9373 = vst [vmem:[%s392 + $0x8] sm:$0xff] %v9341
        %9374 = vst [vmem:[%s392 + $0x10] sm:$0xff] %v9342
        %9375 = vst [vmem:[%s392 + $0x18] sm:$0xff] %v9343
        %9376 = vst [vmem:[%s392 + $0x20] sm:$0xff] %v9344
        %9377 = vst [vmem:[%s392 + $0x28] sm:$0xff] %v9345
        %9378 = vst [vmem:[%s392 + $0x30] sm:$0xff] %v9346
        %9379 = vst [vmem:[%s392 + $0x38] sm:$0xff] %v9347
        %9380 = vst [vmem:[%s392 + $0x40] sm:$0xff] %v9348
        %9381 = vst [vmem:[%s392 + $0x48] sm:$0xff] %v9349
        %9382 = vst [vmem:[%s392 + $0x50] sm:$0xff] %v9350
        %9383 = vst [vmem:[%s392 + $0x58] sm:$0xff] %v9351
        %9384 = vst [vmem:[%s392 + $0x60] sm:$0xff] %v9352
        %9385 = vst [vmem:[%s392 + $0x68] sm:$0xff] %v9353
        %9386 = vst [vmem:[%s392 + $0x70] sm:$0xff] %v9354
        %9387 = vst [vmem:[%s392 + $0x78] sm:$0xff] %v9355
        %9388 = vst [vmem:[%s392 + $0x80] sm:$0xff] %v9356
        %9389 = vst [vmem:[%s392 + $0x88] sm:$0xff] %v9357
        %9390 = vst [vmem:[%s392 + $0x90] sm:$0xff] %v9358
        %9391 = vst [vmem:[%s392 + $0x98] sm:$0xff] %v9359
        %9392 = vst [vmem:[%s392 + $0xa0] sm:$0xff] %v9360
        %9393 = vst [vmem:[%s392 + $0xa8] sm:$0xff] %v9361
        %9394 = vst [vmem:[%s392 + $0xb0] sm:$0xff] %v9362
        %9395 = vst [vmem:[%s392 + $0xb8] sm:$0xff] %v9363
        %9396 = vst [vmem:[%s392 + $0xc0] sm:$0xff] %v9364
        %9397 = vst [vmem:[%s392 + $0xc8] sm:$0xff] %v9365
        %9398 = vst [vmem:[%s392 + $0xd0] sm:$0xff] %v9366
        %9399 = vst [vmem:[%s392 + $0xd8] sm:$0xff] %v9367
        %9400 = vst [vmem:[%s392 + $0xe0] sm:$0xff] %v9368
        %9401 = vst [vmem:[%s392 + $0xe8] sm:$0xff] %v9369
        %9402 = vst [vmem:[%s392 + $0xf0] sm:$0xff] %v9370
        %9403 = vst [vmem:[%s392 + $0xf8] sm:$0xff] %v9371
        %s9404 = sand.u32 %s215, 1
        %s9405 = scalar_lea.sflag [#allocation5], %s9404
        %s9406 = sand.u32 %s215, 1
        %s9407 = smul.addr %s9406, 256
        %s9408 = scalar_lea.vmem [#allocation11], %s9407
        // Predicated region
        $region69: #{tpu_custom_call.1} parent=51 // pred_check
          %p9409 = pneg %p225
        $region70: #{tpu_custom_call.1} parent=51 // pred_check_branch
          %9411 = sbr.rel (%p9409) target = $region72
        $region71: #{tpu_custom_call.1} parent=51 // pred_region
          %s9413 = ssub.s32 4096, 4096
          %9414 = vsyncadd %s9405, %s9413
          %s9415 = smul.addr %s29, 32
          %s9416 = smul.addr %s9415, 128
          %s9417 = scalar_lea.hbm %s8, %s9416
          %s9418 = sshll.u32 %s9408, 4
          %s9419 = int_to_ptr.vmem [resolvable:$true] %s9418
          %9424 = dma.vmem_to_hbm [thread:$0]  %s9419, 4096, %s9417, %s9405, 128, 128, 8
        $region72: #{tpu_custom_call.1} parent=51 // pred_fallthru
          _
      $region52: #{tpu_custom_call.1} parent=5 // pred_fallthru
        _
      %p9425 = scmp.le.s32.totalorder 2, %s24
      // Predicated region
      $region73: #{tpu_custom_call.1} parent=5 // pred_check
        %p9426 = pneg %p9425
      $region74: #{tpu_custom_call.1} parent=5 // pred_check_branch
        %9428 = sbr.rel (%p9426) target = $region76
      $region75: #{tpu_custom_call.1} parent=5 // pred_region
        %s9429 = ssub.s32 %s24, 2
        // Predicated region
        $region77: #{tpu_custom_call.1} parent=75 // pred_check
          %p9430 = pneg %p231
        $region78: #{tpu_custom_call.1} parent=75 // pred_check_branch
          %9432 = sbr.rel (%p9430) target = $region80
        $region79: #{tpu_custom_call.1} parent=75 // pred_region
          %s9433 = sand.u32 %s216, 1
          %s9434 = scalar_lea.sflag [#allocation5], %s9433
          %s9435 = sand.u32 %s216, 1
          %s9436 = smul.addr %s9435, 256
          %s9437 = scalar_lea.vmem [#allocation11], %s9436
          %9438 = dma.done %s9434, 4096
        $region80: #{tpu_custom_call.1} parent=75 // pred_fallthru
          _
      $region76: #{tpu_custom_call.1} parent=5 // pred_fallthru
        _
    $region6: #{tpu_custom_call.1} parent=1 // loop_footer
      %s28 = sadd.s32 1, %s24
    $region7: #{tpu_custom_call.1} parent=1 // loop_footer_branch
      %23 = sbr.rel target = $region3
    $region8: #{tpu_custom_call.1} parent=1 // loop_exit
      _
    %9439 = vsyncpa [#allocation4], 1
    %s9440 = scalar_lea.sflag [#allocation4], 1
    %9441 = vsyncpa %s9440, 1
    %9442 = vsyncpa [#allocation7], 1
    %s9443 = scalar_lea.sflag [#allocation7], 1
    %9444 = vsyncpa %s9443, 1
    %9445 = vsyncpa [#allocation10], 1
    %9446 = vsyncpa [#allocation5], 1
    %s9447 = scalar_lea.sflag [#allocation5], 1
    %9448 = vsyncpa %s9447, 1

</llo_original>
